<compile_context>
chip_gen: v5e
topology: v5e:2x2
jax: 0.10.0
libtpu: 0.0.40
codegen_flags: <defaults>
</compile_context>

<pallas_src>
import math

import jax
import jax.numpy as jnp
from jax import lax
from jax.experimental import pallas as pl
from jax.experimental.pallas import tpu as pltpu

D_IN = 5
H1, H2, H3 = 32, 128, 256          # LSTM hidden sizes
H1P = 128                          # layer-1 hidden padded to a full lane tile
FC1, FC2, FC3 = 128, 32, 1         # MLP head sizes


# ---------------------------------------------------------------------------
# Kernel
# ---------------------------------------------------------------------------
def _make_kernel(T, B_pad):
    def kernel(x_ref,
               w1i_ref, b1_ref, w1h_ref,
               w2f_ref, b2_ref,
               w3f_ref, b3_ref,
               wd1_ref, bd1_ref, wd2_ref, bd2_ref, wd3_ref, bd3_ref,
               out_ref,
               xp_ref):
        wdt = w1i_ref.dtype  # matmul weight/activation dtype (f32 or bf16)

        # --- Hoisted layer-1 input projection for ALL timesteps at once. ---
        # (T*B_pad, D_IN) @ (D_IN, 4*H1P) + b1  -> VMEM scratch.
        xp_ref[...] = (
            jnp.dot(x_ref[...].astype(wdt), w1i_ref[...],
                    preferred_element_type=jnp.float32)
            + b1_ref[...])

        # Loop-invariant bias broadcasts (hoisted out of the time loop).
        b2b = jnp.broadcast_to(b2_ref[...], (B_pad, 4 * H2))
        b3b = jnp.broadcast_to(b3_ref[...], (B_pad, 4 * H3))

        def cell(gates, c_prev, hidden):
            # Gate order matches PyTorch nn.LSTM: i, f, g, o.
            i = jax.nn.sigmoid(gates[:, 0 * hidden:1 * hidden])
            f = jax.nn.sigmoid(gates[:, 1 * hidden:2 * hidden])
            g = jnp.tanh(gates[:, 2 * hidden:3 * hidden])
            o = jax.nn.sigmoid(gates[:, 3 * hidden:4 * hidden])
            c_new = f * c_prev + i * g
            h_new = o * jnp.tanh(c_new)
            return h_new, c_new

        def step(t, carry):
            h1, c1, h2, c2, h3, c3 = carry
            row = pl.multiple_of(t * B_pad, B_pad)

            # Layer 1: precomputed input projection + recurrent matmul only.
            g1 = (xp_ref[pl.ds(row, B_pad), :]
                  + jnp.dot(h1.astype(wdt), w1h_ref[...],
                            preferred_element_type=jnp.float32))
            h1, c1 = cell(g1, c1, H1P)

            # Layer 2: fused [h1, h2_prev] @ [[W_ih]; [W_hh]] (one matmul).
            in2 = jnp.concatenate([h1, h2], axis=-1)
            g2 = jnp.dot(in2.astype(wdt), w2f_ref[...],
                         preferred_element_type=jnp.float32) + b2b
            h2, c2 = cell(g2, c2, H2)

            # Layer 3: fused [h2, h3_prev] @ [[W_ih]; [W_hh]].
            in3 = jnp.concatenate([h2, h3], axis=-1)
            g3 = jnp.dot(in3.astype(wdt), w3f_ref[...],
                         preferred_element_type=jnp.float32) + b3b
            h3, c3 = cell(g3, c3, H3)

            return (h1, c1, h2, c2, h3, c3)

        zeros = lambda n: jnp.zeros((B_pad, n), jnp.float32)
        carry0 = (zeros(H1P), zeros(H1P), zeros(H2), zeros(H2),
                  zeros(H3), zeros(H3))
        h1, c1, h2, c2, h3, c3 = lax.fori_loop(0, T, step, carry0,
                                               unroll=(T <= 16))

        # MLP head on the last timestep's layer-3 output.
        z = jnp.dot(h3.astype(wdt), wd1_ref[...],
                    preferred_element_type=jnp.float32) + bd1_ref[...]
        z = jnp.maximum(z, 0.0)
        z = jnp.dot(z.astype(wdt), wd2_ref[...],
                    preferred_element_type=jnp.float32) + bd2_ref[...]
        z = jnp.maximum(z, 0.0)
        z = jnp.dot(z.astype(wdt), wd3_ref[...],
                    preferred_element_type=jnp.float32) + bd3_ref[...]
        out_ref[...] = z  # (B_pad, 1)

    return kernel


# ---------------------------------------------------------------------------
# Wrapper: weight packing (gate padding, ih/hh fusion) + pallas_call
# ---------------------------------------------------------------------------
def _pad_gate_cols(w, h, h_pad):
    """(..., 4*h) -> (..., 4*h_pad): each gate's h columns go to the start of
    its h_pad-wide slot (rest zero). Preserves PyTorch i,f,g,o gate order."""
    if h == h_pad:
        return w
    pad = [(0, 0)] * (w.ndim - 1) + [(0, h_pad - h)]
    return jnp.concatenate(
        [jnp.pad(w[..., g * h:(g + 1) * h], pad) for g in range(4)], axis=-1)


def _pad_rows(w, rows_pad):
    if w.shape[0] == rows_pad:
        return w
    return jnp.pad(w, ((0, rows_pad - w.shape[0]), (0, 0)))


def stock_lstm_forward(x_btd, params, *, weight_dtype=jnp.float32):
    """x_btd: (B, T, D_IN) float32 (PyTorch batch_first). Returns (B, 1, 1)."""
    B, T, D = x_btd.shape
    assert D == D_IN
    B_pad = max(8, ((B + 7) // 8) * 8)   # f32 sublane alignment

    # Time-major, batch-padded, flattened over (T, B_pad) for the hoisted
    # layer-1 input projection.
    x_tbd = jnp.transpose(x_btd, (1, 0, 2))
    x_tbd = jnp.pad(x_tbd, ((0, 0), (0, B_pad - B), (0, 0)))
    x2d = x_tbd.reshape(T * B_pad, D_IN)

    p = params
    wd = weight_dtype
    # Layer 1: pad the 32-wide gates to 128-lane slots (padded lanes stay 0).
    w1i_p = _pad_gate_cols(p["w1i"], H1, H1P).astype(wd)                  # (5, 512)
    b1_p = _pad_gate_cols(p["b1"], H1, H1P)                               # (1, 512)
    w1h_p = _pad_rows(_pad_gate_cols(p["w1h"], H1, H1P), H1P).astype(wd)  # (128, 512)
    # Layers 2/3: fuse W_ih and W_hh into a single matmul weight.
    w2f = jnp.concatenate([_pad_rows(p["w2i"], H1P), p["w2h"]],
                          axis=0).astype(wd)                              # (256, 512)
    w3f = jnp.concatenate([p["w3i"], p["w3h"]], axis=0).astype(wd)        # (384, 1024)

    weights = [
        w1i_p, b1_p, w1h_p,
        w2f, p["b2"],
        w3f, p["b3"],
        p["wd1"].astype(wd), p["bd1"],
        p["wd2"].astype(wd), p["bd2"],
        p["wd3"].astype(wd), p["bd3"],
    ]

    # Full-array, VMEM-resident blocks: weights are loop-invariant, so no
    # per-step pipelining / double-buffering.
    vmem_spec = pl.BlockSpec(memory_space=pltpu.MemorySpace.VMEM)

    out = pl.pallas_call(
        _make_kernel(T, B_pad),
        out_shape=jax.ShapeDtypeStruct((B_pad, FC3), jnp.float32),
        in_specs=[vmem_spec] * (1 + len(weights)),
        out_specs=vmem_spec,
        scratch_shapes=[pltpu.VMEM((T * B_pad, 4 * H1P), jnp.float32)],
    )(x2d, *weights)

    return out[:B].reshape(B, 1, FC3)


# ---------------------------------------------------------------------------
# Deterministic parameter init (shapes follow nn.LSTM / nn.Linear, transposed)
# ---------------------------------------------------------------------------
def init_params(key):
    def uni(k, shape, scale):
        return jax.random.uniform(k, shape, jnp.float32, -scale, scale)

    ks = list(jax.random.split(key, 24))
    k1, k2, k3 = 1.0 / math.sqrt(H1), 1.0 / math.sqrt(H2), 1.0 / math.sqrt(H3)
    kd1, kd2, kd3 = 1.0 / math.sqrt(H3), 1.0 / math.sqrt(FC1), 1.0 / math.sqrt(FC2)

    params = {
        # LSTM1: input D_IN -> H1
        "w1i": uni(ks[0], (D_IN, 4 * H1), k1),
        "w1h": uni(ks[1], (H1, 4 * H1), k1),
        "b1":  uni(ks[2], (1, 4 * H1), k1) + uni(ks[3], (1, 4 * H1), k1),  # b_ih+b_hh
        # LSTM2: H1 -> H2
        "w2i": uni(ks[4], (H1, 4 * H2), k2),
        "w2h": uni(ks[5], (H2, 4 * H2), k2),
        "b2":  uni(ks[6], (1, 4 * H2), k2) + uni(ks[7], (1, 4 * H2), k2),
        # LSTM3: H2 -> H3
        "w3i": uni(ks[8], (H2, 4 * H3), k3),
        "w3h": uni(ks[9], (H3, 4 * H3), k3),
        "b3":  uni(ks[10], (1, 4 * H3), k3) + uni(ks[11], (1, 4 * H3), k3),
        # MLP head
        "wd1": uni(ks[12], (H3, FC1), kd1),
        "bd1": uni(ks[13], (1, FC1), kd1),
        "wd2": uni(ks[14], (FC1, FC2), kd2),
        "bd2": uni(ks[15], (1, FC2), kd2),
        "wd3": uni(ks[16], (FC2, FC3), kd3),
        "bd3": uni(ks[17], (1, FC3), kd3),
    }
    return params


# ---------------------------------------------------------------------------
# Pure-JAX reference (lax.scan) for correctness checking
# ---------------------------------------------------------------------------
def _lstm_layer_ref(x_tbd, w_ih, w_hh, b, hidden):
    B = x_tbd.shape[1]

    def step(carry, x_t):
        h, c = carry
        gates = x_t @ w_ih + h @ w_hh + b
        i = jax.nn.sigmoid(gates[:, 0 * hidden:1 * hidden])
        f = jax.nn.sigmoid(gates[:, 1 * hidden:2 * hidden])
        g = jnp.tanh(gates[:, 2 * hidden:3 * hidden])
        o = jax.nn.sigmoid(gates[:, 3 * hidden:4 * hidden])
        c = f * c + i * g
        h = o * jnp.tanh(c)
        return (h, c), h

    init = (jnp.zeros((B, hidden), jnp.float32), jnp.zeros((B, hidden), jnp.float32))
    _, ys = jax.lax.scan(step, init, x_tbd)
    return ys  # (T, B, hidden)


def reference_forward(x_btd, p):
    x = jnp.transpose(x_btd, (1, 0, 2))
    x = _lstm_layer_ref(x, p["w1i"], p["w1h"], p["b1"], H1)
    x = _lstm_layer_ref(x, p["w2i"], p["w2h"], p["b2"], H2)
    x = _lstm_layer_ref(x, p["w3i"], p["w3h"], p["b3"], H3)
    last = x[-1]  # (B, H3)
    z = jnp.maximum(last @ p["wd1"] + p["bd1"], 0.0)
    z = jnp.maximum(z @ p["wd2"] + p["bd2"], 0.0)
    z = z @ p["wd3"] + p["bd3"]
    return z.reshape(z.shape[0], 1, FC3)


# ---------------------------------------------------------------------------
if __name__ == "__main__":
    key = jax.random.PRNGKey(0)
    kx, kp = jax.random.split(key)

    B, T = 2, 8
    x = jax.random.normal(kx, (B, T, D_IN), jnp.float32)
    params = init_params(kp)

    out = stock_lstm_forward(x, params)
    out = jax.block_until_ready(out)

    ref = reference_forward(x, params)
    assert out.shape == (B, 1, 1), out.shape
    if not jnp.allclose(out, ref, atol=1e-3, rtol=1e-3):
        raise RuntimeError(f"mismatch: kernel={out}, ref={ref}")

    print("KERNEL_OK")
</pallas_src>

<mosaic_0001>
module attributes {stable_mosaic.version = 11 : i64} {
  func.func @kernel(%arg0: memref<64x5xf32, #tpu.memory_space<vmem>>, %arg1: memref<5x512xf32, #tpu.memory_space<vmem>>, %arg2: memref<1x512xf32, #tpu.memory_space<vmem>>, %arg3: memref<128x512xf32, #tpu.memory_space<vmem>>, %arg4: memref<256x512xf32, #tpu.memory_space<vmem>>, %arg5: memref<1x512xf32, #tpu.memory_space<vmem>>, %arg6: memref<384x1024xf32, #tpu.memory_space<vmem>>, %arg7: memref<1x1024xf32, #tpu.memory_space<vmem>>, %arg8: memref<256x128xf32, #tpu.memory_space<vmem>>, %arg9: memref<1x128xf32, #tpu.memory_space<vmem>>, %arg10: memref<128x32xf32, #tpu.memory_space<vmem>>, %arg11: memref<1x32xf32, #tpu.memory_space<vmem>>, %arg12: memref<32x1xf32, #tpu.memory_space<vmem>>, %arg13: memref<1x1xf32, #tpu.memory_space<vmem>>, %arg14: memref<8x1xf32, #tpu.memory_space<vmem>>, %arg15: memref<64x512xf32, #tpu.memory_space<vmem>>) attributes {dimension_semantics = [], scalar_prefetch = 0 : i64, scratch_operands = 1 : i64, tpu.core_type = #tpu.core_type<tc>} {
    %c0 = arith.constant 0 : index
    %c0_0 = arith.constant 0 : index
    %0 = vector.load %arg0[%c0, %c0_0] : memref<64x5xf32, #tpu.memory_space<vmem>>, vector<64x5xf32>
    %c0_1 = arith.constant 0 : index
    %c0_2 = arith.constant 0 : index
    %1 = vector.load %arg1[%c0_1, %c0_2] : memref<5x512xf32, #tpu.memory_space<vmem>>, vector<5x512xf32>
    %cst = arith.constant dense<0.000000e+00> : vector<64x512xf32>
    %2 = tpu.matmul %0, %1, %cst {dimension_numbers = #tpu.dot_dimension_numbers<[1], [0], [0], [1], [0, 0, 1, 1], [], []>} : vector<64x5xf32>, vector<5x512xf32>, vector<64x512xf32> -> vector<64x512xf32>
    %c0_3 = arith.constant 0 : index
    %c0_4 = arith.constant 0 : index
    %3 = vector.load %arg2[%c0_3, %c0_4] : memref<1x512xf32, #tpu.memory_space<vmem>>, vector<1x512xf32>
    %4 = vector.broadcast %3 : vector<1x512xf32> to vector<64x512xf32>
    %5 = arith.addf %2, %4 : vector<64x512xf32>
    %c0_5 = arith.constant 0 : index
    %c0_6 = arith.constant 0 : index
    %6 = vector.load %arg15[%c0_5, %c0_6] : memref<64x512xf32, #tpu.memory_space<vmem>>, vector<64x512xf32>
    tpu.vector_store %arg15[%c0_5, %c0_6], %5 {strides = array<i32>} : memref<64x512xf32, #tpu.memory_space<vmem>>, vector<64x512xf32>,
    %c0_7 = arith.constant 0 : index
    %c0_8 = arith.constant 0 : index
    %7 = vector.load %arg5[%c0_7, %c0_8] : memref<1x512xf32, #tpu.memory_space<vmem>>, vector<1x512xf32>
    %8 = vector.shape_cast %7 : vector<1x512xf32> to vector<1x512xf32>
    %9 = vector.broadcast %8 : vector<1x512xf32> to vector<8x512xf32>
    %c0_9 = arith.constant 0 : index
    %c0_10 = arith.constant 0 : index
    %10 = vector.load %arg7[%c0_9, %c0_10] : memref<1x1024xf32, #tpu.memory_space<vmem>>, vector<1x1024xf32>
    %11 = vector.shape_cast %10 : vector<1x1024xf32> to vector<1x1024xf32>
    %12 = vector.broadcast %11 : vector<1x1024xf32> to vector<8x1024xf32>
    %cst_11 = arith.constant 0.000000e+00 : f32
    %13 = vector.broadcast %cst_11 : f32 to vector<8x128xf32>
    %cst_12 = arith.constant 0.000000e+00 : f32
    %14 = vector.broadcast %cst_12 : f32 to vector<8x128xf32>
    %cst_13 = arith.constant 0.000000e+00 : f32
    %15 = vector.broadcast %cst_13 : f32 to vector<8x128xf32>
    %cst_14 = arith.constant 0.000000e+00 : f32
    %16 = vector.broadcast %cst_14 : f32 to vector<8x128xf32>
    %cst_15 = arith.constant 0.000000e+00 : f32
    %17 = vector.broadcast %cst_15 : f32 to vector<8x256xf32>
    %cst_16 = arith.constant 0.000000e+00 : f32
    %18 = vector.broadcast %cst_16 : f32 to vector<8x256xf32>
    %c0_i32 = arith.constant 0 : i32
    %c8_i32 = arith.constant 8 : i32
    %19 = arith.muli %c0_i32, %c8_i32 : i32
    %20 = tpu.assume_multiple %19, 8 : i32
    %21 = arith.index_cast %20 : i32 to index
    %c0_17 = arith.constant 0 : index
    %22 = vector.load %arg15[%21, %c0_17] : memref<64x512xf32, #tpu.memory_space<vmem>>, vector<8x512xf32>
    %c0_18 = arith.constant 0 : index
    %c0_19 = arith.constant 0 : index
    %23 = vector.load %arg3[%c0_18, %c0_19] : memref<128x512xf32, #tpu.memory_space<vmem>>, vector<128x512xf32>
    %cst_20 = arith.constant dense<0.000000e+00> : vector<8x512xf32>
    %24 = tpu.matmul %13, %23, %cst_20 {dimension_numbers = #tpu.dot_dimension_numbers<[1], [0], [0], [1], [0, 0, 1, 1], [], []>} : vector<8x128xf32>, vector<128x512xf32>, vector<8x512xf32> -> vector<8x512xf32>
    %25 = arith.addf %22, %24 : vector<8x512xf32>
    %26 = vector.extract_strided_slice %25 {offsets = [0, 0], sizes = [8, 128], strides = [1, 1]} : vector<8x512xf32> to vector<8x128xf32>
    %27 = arith.negf %26 : vector<8x128xf32>
    %28 = math.exp %27 : vector<8x128xf32>
    %cst_21 = arith.constant 1.000000e+00 : f32
    %29 = vector.broadcast %cst_21 : f32 to vector<8x128xf32>
    %30 = arith.addf %29, %28 : vector<8x128xf32>
    %31 = arith.divf %29, %30 : vector<8x128xf32>
    %32 = vector.extract_strided_slice %25 {offsets = [0, 128], sizes = [8, 128], strides = [1, 1]} : vector<8x512xf32> to vector<8x128xf32>
    %33 = arith.negf %32 : vector<8x128xf32>
    %34 = math.exp %33 : vector<8x128xf32>
    %cst_22 = arith.constant 1.000000e+00 : f32
    %35 = vector.broadcast %cst_22 : f32 to vector<8x128xf32>
    %36 = arith.addf %35, %34 : vector<8x128xf32>
    %37 = arith.divf %35, %36 : vector<8x128xf32>
    %38 = vector.extract_strided_slice %25 {offsets = [0, 256], sizes = [8, 128], strides = [1, 1]} : vector<8x512xf32> to vector<8x128xf32>
    %39 = math.tanh %38 : vector<8x128xf32>
    %40 = vector.extract_strided_slice %25 {offsets = [0, 384], sizes = [8, 128], strides = [1, 1]} : vector<8x512xf32> to vector<8x128xf32>
    %41 = arith.negf %40 : vector<8x128xf32>
    %42 = math.exp %41 : vector<8x128xf32>
    %cst_23 = arith.constant 1.000000e+00 : f32
    %43 = vector.broadcast %cst_23 : f32 to vector<8x128xf32>
    %44 = arith.addf %43, %42 : vector<8x128xf32>
    %45 = arith.divf %43, %44 : vector<8x128xf32>
    %46 = arith.mulf %37, %14 : vector<8x128xf32>
    %47 = arith.mulf %31, %39 : vector<8x128xf32>
    %48 = arith.addf %46, %47 : vector<8x128xf32>
    %49 = math.tanh %48 : vector<8x128xf32>
    %50 = arith.mulf %45, %49 : vector<8x128xf32>
    %51 = tpu.concatenate %50, %15 in 1 : vector<8x128xf32>, vector<8x128xf32> -> vector<8x256xf32>
    %c0_24 = arith.constant 0 : index
    %c0_25 = arith.constant 0 : index
    %52 = vector.load %arg4[%c0_24, %c0_25] : memref<256x512xf32, #tpu.memory_space<vmem>>, vector<256x512xf32>
    %cst_26 = arith.constant dense<0.000000e+00> : vector<8x512xf32>
    %53 = tpu.matmul %51, %52, %cst_26 {dimension_numbers = #tpu.dot_dimension_numbers<[1], [0], [0], [1], [0, 0, 1, 1], [], []>} : vector<8x256xf32>, vector<256x512xf32>, vector<8x512xf32> -> vector<8x512xf32>
    %54 = arith.addf %53, %9 : vector<8x512xf32>
    %55 = vector.extract_strided_slice %54 {offsets = [0, 0], sizes = [8, 128], strides = [1, 1]} : vector<8x512xf32> to vector<8x128xf32>
    %56 = arith.negf %55 : vector<8x128xf32>
    %57 = math.exp %56 : vector<8x128xf32>
    %cst_27 = arith.constant 1.000000e+00 : f32
    %58 = vector.broadcast %cst_27 : f32 to vector<8x128xf32>
    %59 = arith.addf %58, %57 : vector<8x128xf32>
    %60 = arith.divf %58, %59 : vector<8x128xf32>
    %61 = vector.extract_strided_slice %54 {offsets = [0, 128], sizes = [8, 128], strides = [1, 1]} : vector<8x512xf32> to vector<8x128xf32>
    %62 = arith.negf %61 : vector<8x128xf32>
    %63 = math.exp %62 : vector<8x128xf32>
    %cst_28 = arith.constant 1.000000e+00 : f32
    %64 = vector.broadcast %cst_28 : f32 to vector<8x128xf32>
    %65 = arith.addf %64, %63 : vector<8x128xf32>
    %66 = arith.divf %64, %65 : vector<8x128xf32>
    %67 = vector.extract_strided_slice %54 {offsets = [0, 256], sizes = [8, 128], strides = [1, 1]} : vector<8x512xf32> to vector<8x128xf32>
    %68 = math.tanh %67 : vector<8x128xf32>
    %69 = vector.extract_strided_slice %54 {offsets = [0, 384], sizes = [8, 128], strides = [1, 1]} : vector<8x512xf32> to vector<8x128xf32>
    %70 = arith.negf %69 : vector<8x128xf32>
    %71 = math.exp %70 : vector<8x128xf32>
    %cst_29 = arith.constant 1.000000e+00 : f32
    %72 = vector.broadcast %cst_29 : f32 to vector<8x128xf32>
    %73 = arith.addf %72, %71 : vector<8x128xf32>
    %74 = arith.divf %72, %73 : vector<8x128xf32>
    %75 = arith.mulf %66, %16 : vector<8x128xf32>
    %76 = arith.mulf %60, %68 : vector<8x128xf32>
    %77 = arith.addf %75, %76 : vector<8x128xf32>
    %78 = math.tanh %77 : vector<8x128xf32>
    %79 = arith.mulf %74, %78 : vector<8x128xf32>
    %80 = tpu.concatenate %79, %17 in 1 : vector<8x128xf32>, vector<8x256xf32> -> vector<8x384xf32>
    %c0_30 = arith.constant 0 : index
    %c0_31 = arith.constant 0 : index
    %81 = vector.load %arg6[%c0_30, %c0_31] : memref<384x1024xf32, #tpu.memory_space<vmem>>, vector<384x1024xf32>
    %cst_32 = arith.constant dense<0.000000e+00> : vector<8x1024xf32>
    %82 = tpu.matmul %80, %81, %cst_32 {dimension_numbers = #tpu.dot_dimension_numbers<[1], [0], [0], [1], [0, 0, 1, 1], [], []>} : vector<8x384xf32>, vector<384x1024xf32>, vector<8x1024xf32> -> vector<8x1024xf32>
    %83 = arith.addf %82, %12 : vector<8x1024xf32>
    %84 = vector.extract_strided_slice %83 {offsets = [0, 0], sizes = [8, 256], strides = [1, 1]} : vector<8x1024xf32> to vector<8x256xf32>
    %85 = arith.negf %84 : vector<8x256xf32>
    %86 = math.exp %85 : vector<8x256xf32>
    %cst_33 = arith.constant 1.000000e+00 : f32
    %87 = vector.broadcast %cst_33 : f32 to vector<8x256xf32>
    %88 = arith.addf %87, %86 : vector<8x256xf32>
    %89 = arith.divf %87, %88 : vector<8x256xf32>
    %90 = vector.extract_strided_slice %83 {offsets = [0, 256], sizes = [8, 256], strides = [1, 1]} : vector<8x1024xf32> to vector<8x256xf32>
    %91 = arith.negf %90 : vector<8x256xf32>
    %92 = math.exp %91 : vector<8x256xf32>
    %cst_34 = arith.constant 1.000000e+00 : f32
    %93 = vector.broadcast %cst_34 : f32 to vector<8x256xf32>
    %94 = arith.addf %93, %92 : vector<8x256xf32>
    %95 = arith.divf %93, %94 : vector<8x256xf32>
    %96 = vector.extract_strided_slice %83 {offsets = [0, 512], sizes = [8, 256], strides = [1, 1]} : vector<8x1024xf32> to vector<8x256xf32>
    %97 = math.tanh %96 : vector<8x256xf32>
    %98 = vector.extract_strided_slice %83 {offsets = [0, 768], sizes = [8, 256], strides = [1, 1]} : vector<8x1024xf32> to vector<8x256xf32>
    %99 = arith.negf %98 : vector<8x256xf32>
    %100 = math.exp %99 : vector<8x256xf32>
    %cst_35 = arith.constant 1.000000e+00 : f32
    %101 = vector.broadcast %cst_35 : f32 to vector<8x256xf32>
    %102 = arith.addf %101, %100 : vector<8x256xf32>
    %103 = arith.divf %101, %102 : vector<8x256xf32>
    %104 = arith.mulf %95, %18 : vector<8x256xf32>
    %105 = arith.mulf %89, %97 : vector<8x256xf32>
    %106 = arith.addf %104, %105 : vector<8x256xf32>
    %107 = math.tanh %106 : vector<8x256xf32>
    %108 = arith.mulf %103, %107 : vector<8x256xf32>
    %c1_i32 = arith.constant 1 : i32
    %c8_i32_36 = arith.constant 8 : i32
    %109 = arith.muli %c1_i32, %c8_i32_36 : i32
    %110 = tpu.assume_multiple %109, 8 : i32
    %111 = arith.index_cast %110 : i32 to index
    %c0_37 = arith.constant 0 : index
    %112 = vector.load %arg15[%111, %c0_37] : memref<64x512xf32, #tpu.memory_space<vmem>>, vector<8x512xf32>
    %c0_38 = arith.constant 0 : index
    %c0_39 = arith.constant 0 : index
    %113 = vector.load %arg3[%c0_38, %c0_39] : memref<128x512xf32, #tpu.memory_space<vmem>>, vector<128x512xf32>
    %cst_40 = arith.constant dense<0.000000e+00> : vector<8x512xf32>
    %114 = tpu.matmul %50, %113, %cst_40 {dimension_numbers = #tpu.dot_dimension_numbers<[1], [0], [0], [1], [0, 0, 1, 1], [], []>} : vector<8x128xf32>, vector<128x512xf32>, vector<8x512xf32> -> vector<8x512xf32>
    %115 = arith.addf %112, %114 : vector<8x512xf32>
    %116 = vector.extract_strided_slice %115 {offsets = [0, 0], sizes = [8, 128], strides = [1, 1]} : vector<8x512xf32> to vector<8x128xf32>
    %117 = arith.negf %116 : vector<8x128xf32>
    %118 = math.exp %117 : vector<8x128xf32>
    %cst_41 = arith.constant 1.000000e+00 : f32
    %119 = vector.broadcast %cst_41 : f32 to vector<8x128xf32>
    %120 = arith.addf %119, %118 : vector<8x128xf32>
    %121 = arith.divf %119, %120 : vector<8x128xf32>
    %122 = vector.extract_strided_slice %115 {offsets = [0, 128], sizes = [8, 128], strides = [1, 1]} : vector<8x512xf32> to vector<8x128xf32>
    %123 = arith.negf %122 : vector<8x128xf32>
    %124 = math.exp %123 : vector<8x128xf32>
    %cst_42 = arith.constant 1.000000e+00 : f32
    %125 = vector.broadcast %cst_42 : f32 to vector<8x128xf32>
    %126 = arith.addf %125, %124 : vector<8x128xf32>
    %127 = arith.divf %125, %126 : vector<8x128xf32>
    %128 = vector.extract_strided_slice %115 {offsets = [0, 256], sizes = [8, 128], strides = [1, 1]} : vector<8x512xf32> to vector<8x128xf32>
    %129 = math.tanh %128 : vector<8x128xf32>
    %130 = vector.extract_strided_slice %115 {offsets = [0, 384], sizes = [8, 128], strides = [1, 1]} : vector<8x512xf32> to vector<8x128xf32>
    %131 = arith.negf %130 : vector<8x128xf32>
    %132 = math.exp %131 : vector<8x128xf32>
    %cst_43 = arith.constant 1.000000e+00 : f32
    %133 = vector.broadcast %cst_43 : f32 to vector<8x128xf32>
    %134 = arith.addf %133, %132 : vector<8x128xf32>
    %135 = arith.divf %133, %134 : vector<8x128xf32>
    %136 = arith.mulf %127, %48 : vector<8x128xf32>
    %137 = arith.mulf %121, %129 : vector<8x128xf32>
    %138 = arith.addf %136, %137 : vector<8x128xf32>
    %139 = math.tanh %138 : vector<8x128xf32>
    %140 = arith.mulf %135, %139 : vector<8x128xf32>
    %141 = tpu.concatenate %140, %79 in 1 : vector<8x128xf32>, vector<8x128xf32> -> vector<8x256xf32>
    %c0_44 = arith.constant 0 : index
    %c0_45 = arith.constant 0 : index
    %142 = vector.load %arg4[%c0_44, %c0_45] : memref<256x512xf32, #tpu.memory_space<vmem>>, vector<256x512xf32>
    %cst_46 = arith.constant dense<0.000000e+00> : vector<8x512xf32>
    %143 = tpu.matmul %141, %142, %cst_46 {dimension_numbers = #tpu.dot_dimension_numbers<[1], [0], [0], [1], [0, 0, 1, 1], [], []>} : vector<8x256xf32>, vector<256x512xf32>, vector<8x512xf32> -> vector<8x512xf32>
    %144 = arith.addf %143, %9 : vector<8x512xf32>
    %145 = vector.extract_strided_slice %144 {offsets = [0, 0], sizes = [8, 128], strides = [1, 1]} : vector<8x512xf32> to vector<8x128xf32>
    %146 = arith.negf %145 : vector<8x128xf32>
    %147 = math.exp %146 : vector<8x128xf32>
    %cst_47 = arith.constant 1.000000e+00 : f32
    %148 = vector.broadcast %cst_47 : f32 to vector<8x128xf32>
    %149 = arith.addf %148, %147 : vector<8x128xf32>
    %150 = arith.divf %148, %149 : vector<8x128xf32>
    %151 = vector.extract_strided_slice %144 {offsets = [0, 128], sizes = [8, 128], strides = [1, 1]} : vector<8x512xf32> to vector<8x128xf32>
    %152 = arith.negf %151 : vector<8x128xf32>
    %153 = math.exp %152 : vector<8x128xf32>
    %cst_48 = arith.constant 1.000000e+00 : f32
    %154 = vector.broadcast %cst_48 : f32 to vector<8x128xf32>
    %155 = arith.addf %154, %153 : vector<8x128xf32>
    %156 = arith.divf %154, %155 : vector<8x128xf32>
    %157 = vector.extract_strided_slice %144 {offsets = [0, 256], sizes = [8, 128], strides = [1, 1]} : vector<8x512xf32> to vector<8x128xf32>
    %158 = math.tanh %157 : vector<8x128xf32>
    %159 = vector.extract_strided_slice %144 {offsets = [0, 384], sizes = [8, 128], strides = [1, 1]} : vector<8x512xf32> to vector<8x128xf32>
    %160 = arith.negf %159 : vector<8x128xf32>
    %161 = math.exp %160 : vector<8x128xf32>
    %cst_49 = arith.constant 1.000000e+00 : f32
    %162 = vector.broadcast %cst_49 : f32 to vector<8x128xf32>
    %163 = arith.addf %162, %161 : vector<8x128xf32>
    %164 = arith.divf %162, %163 : vector<8x128xf32>
    %165 = arith.mulf %156, %77 : vector<8x128xf32>
    %166 = arith.mulf %150, %158 : vector<8x128xf32>
    %167 = arith.addf %165, %166 : vector<8x128xf32>
    %168 = math.tanh %167 : vector<8x128xf32>
    %169 = arith.mulf %164, %168 : vector<8x128xf32>
    %170 = tpu.concatenate %169, %108 in 1 : vector<8x128xf32>, vector<8x256xf32> -> vector<8x384xf32>
    %c0_50 = arith.constant 0 : index
    %c0_51 = arith.constant 0 : index
    %171 = vector.load %arg6[%c0_50, %c0_51] : memref<384x1024xf32, #tpu.memory_space<vmem>>, vector<384x1024xf32>
    %cst_52 = arith.constant dense<0.000000e+00> : vector<8x1024xf32>
    %172 = tpu.matmul %170, %171, %cst_52 {dimension_numbers = #tpu.dot_dimension_numbers<[1], [0], [0], [1], [0, 0, 1, 1], [], []>} : vector<8x384xf32>, vector<384x1024xf32>, vector<8x1024xf32> -> vector<8x1024xf32>
    %173 = arith.addf %172, %12 : vector<8x1024xf32>
    %174 = vector.extract_strided_slice %173 {offsets = [0, 0], sizes = [8, 256], strides = [1, 1]} : vector<8x1024xf32> to vector<8x256xf32>
    %175 = arith.negf %174 : vector<8x256xf32>
    %176 = math.exp %175 : vector<8x256xf32>
    %cst_53 = arith.constant 1.000000e+00 : f32
    %177 = vector.broadcast %cst_53 : f32 to vector<8x256xf32>
    %178 = arith.addf %177, %176 : vector<8x256xf32>
    %179 = arith.divf %177, %178 : vector<8x256xf32>
    %180 = vector.extract_strided_slice %173 {offsets = [0, 256], sizes = [8, 256], strides = [1, 1]} : vector<8x1024xf32> to vector<8x256xf32>
    %181 = arith.negf %180 : vector<8x256xf32>
    %182 = math.exp %181 : vector<8x256xf32>
    %cst_54 = arith.constant 1.000000e+00 : f32
    %183 = vector.broadcast %cst_54 : f32 to vector<8x256xf32>
    %184 = arith.addf %183, %182 : vector<8x256xf32>
    %185 = arith.divf %183, %184 : vector<8x256xf32>
    %186 = vector.extract_strided_slice %173 {offsets = [0, 512], sizes = [8, 256], strides = [1, 1]} : vector<8x1024xf32> to vector<8x256xf32>
    %187 = math.tanh %186 : vector<8x256xf32>
    %188 = vector.extract_strided_slice %173 {offsets = [0, 768], sizes = [8, 256], strides = [1, 1]} : vector<8x1024xf32> to vector<8x256xf32>
    %189 = arith.negf %188 : vector<8x256xf32>
    %190 = math.exp %189 : vector<8x256xf32>
    %cst_55 = arith.constant 1.000000e+00 : f32
    %191 = vector.broadcast %cst_55 : f32 to vector<8x256xf32>
    %192 = arith.addf %191, %190 : vector<8x256xf32>
    %193 = arith.divf %191, %192 : vector<8x256xf32>
    %194 = arith.mulf %185, %106 : vector<8x256xf32>
    %195 = arith.mulf %179, %187 : vector<8x256xf32>
    %196 = arith.addf %194, %195 : vector<8x256xf32>
    %197 = math.tanh %196 : vector<8x256xf32>
    %198 = arith.mulf %193, %197 : vector<8x256xf32>
    %c2_i32 = arith.constant 2 : i32
    %c8_i32_56 = arith.constant 8 : i32
    %199 = arith.muli %c2_i32, %c8_i32_56 : i32
    %200 = tpu.assume_multiple %199, 8 : i32
    %201 = arith.index_cast %200 : i32 to index
    %c0_57 = arith.constant 0 : index
    %202 = vector.load %arg15[%201, %c0_57] : memref<64x512xf32, #tpu.memory_space<vmem>>, vector<8x512xf32>
    %c0_58 = arith.constant 0 : index
    %c0_59 = arith.constant 0 : index
    %203 = vector.load %arg3[%c0_58, %c0_59] : memref<128x512xf32, #tpu.memory_space<vmem>>, vector<128x512xf32>
    %cst_60 = arith.constant dense<0.000000e+00> : vector<8x512xf32>
    %204 = tpu.matmul %140, %203, %cst_60 {dimension_numbers = #tpu.dot_dimension_numbers<[1], [0], [0], [1], [0, 0, 1, 1], [], []>} : vector<8x128xf32>, vector<128x512xf32>, vector<8x512xf32> -> vector<8x512xf32>
    %205 = arith.addf %202, %204 : vector<8x512xf32>
    %206 = vector.extract_strided_slice %205 {offsets = [0, 0], sizes = [8, 128], strides = [1, 1]} : vector<8x512xf32> to vector<8x128xf32>
    %207 = arith.negf %206 : vector<8x128xf32>
    %208 = math.exp %207 : vector<8x128xf32>
    %cst_61 = arith.constant 1.000000e+00 : f32
    %209 = vector.broadcast %cst_61 : f32 to vector<8x128xf32>
    %210 = arith.addf %209, %208 : vector<8x128xf32>
    %211 = arith.divf %209, %210 : vector<8x128xf32>
    %212 = vector.extract_strided_slice %205 {offsets = [0, 128], sizes = [8, 128], strides = [1, 1]} : vector<8x512xf32> to vector<8x128xf32>
    %213 = arith.negf %212 : vector<8x128xf32>
    %214 = math.exp %213 : vector<8x128xf32>
    %cst_62 = arith.constant 1.000000e+00 : f32
    %215 = vector.broadcast %cst_62 : f32 to vector<8x128xf32>
    %216 = arith.addf %215, %214 : vector<8x128xf32>
    %217 = arith.divf %215, %216 : vector<8x128xf32>
    %218 = vector.extract_strided_slice %205 {offsets = [0, 256], sizes = [8, 128], strides = [1, 1]} : vector<8x512xf32> to vector<8x128xf32>
    %219 = math.tanh %218 : vector<8x128xf32>
    %220 = vector.extract_strided_slice %205 {offsets = [0, 384], sizes = [8, 128], strides = [1, 1]} : vector<8x512xf32> to vector<8x128xf32>
    %221 = arith.negf %220 : vector<8x128xf32>
    %222 = math.exp %221 : vector<8x128xf32>
    %cst_63 = arith.constant 1.000000e+00 : f32
    %223 = vector.broadcast %cst_63 : f32 to vector<8x128xf32>
    %224 = arith.addf %223, %222 : vector<8x128xf32>
    %225 = arith.divf %223, %224 : vector<8x128xf32>
    %226 = arith.mulf %217, %138 : vector<8x128xf32>
    %227 = arith.mulf %211, %219 : vector<8x128xf32>
    %228 = arith.addf %226, %227 : vector<8x128xf32>
    %229 = math.tanh %228 : vector<8x128xf32>
    %230 = arith.mulf %225, %229 : vector<8x128xf32>
    %231 = tpu.concatenate %230, %169 in 1 : vector<8x128xf32>, vector<8x128xf32> -> vector<8x256xf32>
    %c0_64 = arith.constant 0 : index
    %c0_65 = arith.constant 0 : index
    %232 = vector.load %arg4[%c0_64, %c0_65] : memref<256x512xf32, #tpu.memory_space<vmem>>, vector<256x512xf32>
    %cst_66 = arith.constant dense<0.000000e+00> : vector<8x512xf32>
    %233 = tpu.matmul %231, %232, %cst_66 {dimension_numbers = #tpu.dot_dimension_numbers<[1], [0], [0], [1], [0, 0, 1, 1], [], []>} : vector<8x256xf32>, vector<256x512xf32>, vector<8x512xf32> -> vector<8x512xf32>
    %234 = arith.addf %233, %9 : vector<8x512xf32>
    %235 = vector.extract_strided_slice %234 {offsets = [0, 0], sizes = [8, 128], strides = [1, 1]} : vector<8x512xf32> to vector<8x128xf32>
    %236 = arith.negf %235 : vector<8x128xf32>
    %237 = math.exp %236 : vector<8x128xf32>
    %cst_67 = arith.constant 1.000000e+00 : f32
    %238 = vector.broadcast %cst_67 : f32 to vector<8x128xf32>
    %239 = arith.addf %238, %237 : vector<8x128xf32>
    %240 = arith.divf %238, %239 : vector<8x128xf32>
    %241 = vector.extract_strided_slice %234 {offsets = [0, 128], sizes = [8, 128], strides = [1, 1]} : vector<8x512xf32> to vector<8x128xf32>
    %242 = arith.negf %241 : vector<8x128xf32>
    %243 = math.exp %242 : vector<8x128xf32>
    %cst_68 = arith.constant 1.000000e+00 : f32
    %244 = vector.broadcast %cst_68 : f32 to vector<8x128xf32>
    %245 = arith.addf %244, %243 : vector<8x128xf32>
    %246 = arith.divf %244, %245 : vector<8x128xf32>
    %247 = vector.extract_strided_slice %234 {offsets = [0, 256], sizes = [8, 128], strides = [1, 1]} : vector<8x512xf32> to vector<8x128xf32>
    %248 = math.tanh %247 : vector<8x128xf32>
    %249 = vector.extract_strided_slice %234 {offsets = [0, 384], sizes = [8, 128], strides = [1, 1]} : vector<8x512xf32> to vector<8x128xf32>
    %250 = arith.negf %249 : vector<8x128xf32>
    %251 = math.exp %250 : vector<8x128xf32>
    %cst_69 = arith.constant 1.000000e+00 : f32
    %252 = vector.broadcast %cst_69 : f32 to vector<8x128xf32>
    %253 = arith.addf %252, %251 : vector<8x128xf32>
    %254 = arith.divf %252, %253 : vector<8x128xf32>
    %255 = arith.mulf %246, %167 : vector<8x128xf32>
    %256 = arith.mulf %240, %248 : vector<8x128xf32>
    %257 = arith.addf %255, %256 : vector<8x128xf32>
    %258 = math.tanh %257 : vector<8x128xf32>
    %259 = arith.mulf %254, %258 : vector<8x128xf32>
    %260 = tpu.concatenate %259, %198 in 1 : vector<8x128xf32>, vector<8x256xf32> -> vector<8x384xf32>
    %c0_70 = arith.constant 0 : index
    %c0_71 = arith.constant 0 : index
    %261 = vector.load %arg6[%c0_70, %c0_71] : memref<384x1024xf32, #tpu.memory_space<vmem>>, vector<384x1024xf32>
    %cst_72 = arith.constant dense<0.000000e+00> : vector<8x1024xf32>
    %262 = tpu.matmul %260, %261, %cst_72 {dimension_numbers = #tpu.dot_dimension_numbers<[1], [0], [0], [1], [0, 0, 1, 1], [], []>} : vector<8x384xf32>, vector<384x1024xf32>, vector<8x1024xf32> -> vector<8x1024xf32>
    %263 = arith.addf %262, %12 : vector<8x1024xf32>
    %264 = vector.extract_strided_slice %263 {offsets = [0, 0], sizes = [8, 256], strides = [1, 1]} : vector<8x1024xf32> to vector<8x256xf32>
    %265 = arith.negf %264 : vector<8x256xf32>
    %266 = math.exp %265 : vector<8x256xf32>
    %cst_73 = arith.constant 1.000000e+00 : f32
    %267 = vector.broadcast %cst_73 : f32 to vector<8x256xf32>
    %268 = arith.addf %267, %266 : vector<8x256xf32>
    %269 = arith.divf %267, %268 : vector<8x256xf32>
    %270 = vector.extract_strided_slice %263 {offsets = [0, 256], sizes = [8, 256], strides = [1, 1]} : vector<8x1024xf32> to vector<8x256xf32>
    %271 = arith.negf %270 : vector<8x256xf32>
    %272 = math.exp %271 : vector<8x256xf32>
    %cst_74 = arith.constant 1.000000e+00 : f32
    %273 = vector.broadcast %cst_74 : f32 to vector<8x256xf32>
    %274 = arith.addf %273, %272 : vector<8x256xf32>
    %275 = arith.divf %273, %274 : vector<8x256xf32>
    %276 = vector.extract_strided_slice %263 {offsets = [0, 512], sizes = [8, 256], strides = [1, 1]} : vector<8x1024xf32> to vector<8x256xf32>
    %277 = math.tanh %276 : vector<8x256xf32>
    %278 = vector.extract_strided_slice %263 {offsets = [0, 768], sizes = [8, 256], strides = [1, 1]} : vector<8x1024xf32> to vector<8x256xf32>
    %279 = arith.negf %278 : vector<8x256xf32>
    %280 = math.exp %279 : vector<8x256xf32>
    %cst_75 = arith.constant 1.000000e+00 : f32
    %281 = vector.broadcast %cst_75 : f32 to vector<8x256xf32>
    %282 = arith.addf %281, %280 : vector<8x256xf32>
    %283 = arith.divf %281, %282 : vector<8x256xf32>
    %284 = arith.mulf %275, %196 : vector<8x256xf32>
    %285 = arith.mulf %269, %277 : vector<8x256xf32>
    %286 = arith.addf %284, %285 : vector<8x256xf32>
    %287 = math.tanh %286 : vector<8x256xf32>
    %288 = arith.mulf %283, %287 : vector<8x256xf32>
    %c3_i32 = arith.constant 3 : i32
    %c8_i32_76 = arith.constant 8 : i32
    %289 = arith.muli %c3_i32, %c8_i32_76 : i32
    %290 = tpu.assume_multiple %289, 8 : i32
    %291 = arith.index_cast %290 : i32 to index
    %c0_77 = arith.constant 0 : index
    %292 = vector.load %arg15[%291, %c0_77] : memref<64x512xf32, #tpu.memory_space<vmem>>, vector<8x512xf32>
    %c0_78 = arith.constant 0 : index
    %c0_79 = arith.constant 0 : index
    %293 = vector.load %arg3[%c0_78, %c0_79] : memref<128x512xf32, #tpu.memory_space<vmem>>, vector<128x512xf32>
    %cst_80 = arith.constant dense<0.000000e+00> : vector<8x512xf32>
    %294 = tpu.matmul %230, %293, %cst_80 {dimension_numbers = #tpu.dot_dimension_numbers<[1], [0], [0], [1], [0, 0, 1, 1], [], []>} : vector<8x128xf32>, vector<128x512xf32>, vector<8x512xf32> -> vector<8x512xf32>
    %295 = arith.addf %292, %294 : vector<8x512xf32>
    %296 = vector.extract_strided_slice %295 {offsets = [0, 0], sizes = [8, 128], strides = [1, 1]} : vector<8x512xf32> to vector<8x128xf32>
    %297 = arith.negf %296 : vector<8x128xf32>
    %298 = math.exp %297 : vector<8x128xf32>
    %cst_81 = arith.constant 1.000000e+00 : f32
    %299 = vector.broadcast %cst_81 : f32 to vector<8x128xf32>
    %300 = arith.addf %299, %298 : vector<8x128xf32>
    %301 = arith.divf %299, %300 : vector<8x128xf32>
    %302 = vector.extract_strided_slice %295 {offsets = [0, 128], sizes = [8, 128], strides = [1, 1]} : vector<8x512xf32> to vector<8x128xf32>
    %303 = arith.negf %302 : vector<8x128xf32>
    %304 = math.exp %303 : vector<8x128xf32>
    %cst_82 = arith.constant 1.000000e+00 : f32
    %305 = vector.broadcast %cst_82 : f32 to vector<8x128xf32>
    %306 = arith.addf %305, %304 : vector<8x128xf32>
    %307 = arith.divf %305, %306 : vector<8x128xf32>
    %308 = vector.extract_strided_slice %295 {offsets = [0, 256], sizes = [8, 128], strides = [1, 1]} : vector<8x512xf32> to vector<8x128xf32>
    %309 = math.tanh %308 : vector<8x128xf32>
    %310 = vector.extract_strided_slice %295 {offsets = [0, 384], sizes = [8, 128], strides = [1, 1]} : vector<8x512xf32> to vector<8x128xf32>
    %311 = arith.negf %310 : vector<8x128xf32>
    %312 = math.exp %311 : vector<8x128xf32>
    %cst_83 = arith.constant 1.000000e+00 : f32
    %313 = vector.broadcast %cst_83 : f32 to vector<8x128xf32>
    %314 = arith.addf %313, %312 : vector<8x128xf32>
    %315 = arith.divf %313, %314 : vector<8x128xf32>
    %316 = arith.mulf %307, %228 : vector<8x128xf32>
    %317 = arith.mulf %301, %309 : vector<8x128xf32>
    %318 = arith.addf %316, %317 : vector<8x128xf32>
    %319 = math.tanh %318 : vector<8x128xf32>
    %320 = arith.mulf %315, %319 : vector<8x128xf32>
    %321 = tpu.concatenate %320, %259 in 1 : vector<8x128xf32>, vector<8x128xf32> -> vector<8x256xf32>
    %c0_84 = arith.constant 0 : index
    %c0_85 = arith.constant 0 : index
    %322 = vector.load %arg4[%c0_84, %c0_85] : memref<256x512xf32, #tpu.memory_space<vmem>>, vector<256x512xf32>
    %cst_86 = arith.constant dense<0.000000e+00> : vector<8x512xf32>
    %323 = tpu.matmul %321, %322, %cst_86 {dimension_numbers = #tpu.dot_dimension_numbers<[1], [0], [0], [1], [0, 0, 1, 1], [], []>} : vector<8x256xf32>, vector<256x512xf32>, vector<8x512xf32> -> vector<8x512xf32>
    %324 = arith.addf %323, %9 : vector<8x512xf32>
    %325 = vector.extract_strided_slice %324 {offsets = [0, 0], sizes = [8, 128], strides = [1, 1]} : vector<8x512xf32> to vector<8x128xf32>
    %326 = arith.negf %325 : vector<8x128xf32>
    %327 = math.exp %326 : vector<8x128xf32>
    %cst_87 = arith.constant 1.000000e+00 : f32
    %328 = vector.broadcast %cst_87 : f32 to vector<8x128xf32>
    %329 = arith.addf %328, %327 : vector<8x128xf32>
    %330 = arith.divf %328, %329 : vector<8x128xf32>
    %331 = vector.extract_strided_slice %324 {offsets = [0, 128], sizes = [8, 128], strides = [1, 1]} : vector<8x512xf32> to vector<8x128xf32>
    %332 = arith.negf %331 : vector<8x128xf32>
    %333 = math.exp %332 : vector<8x128xf32>
    %cst_88 = arith.constant 1.000000e+00 : f32
    %334 = vector.broadcast %cst_88 : f32 to vector<8x128xf32>
    %335 = arith.addf %334, %333 : vector<8x128xf32>
    %336 = arith.divf %334, %335 : vector<8x128xf32>
    %337 = vector.extract_strided_slice %324 {offsets = [0, 256], sizes = [8, 128], strides = [1, 1]} : vector<8x512xf32> to vector<8x128xf32>
    %338 = math.tanh %337 : vector<8x128xf32>
    %339 = vector.extract_strided_slice %324 {offsets = [0, 384], sizes = [8, 128], strides = [1, 1]} : vector<8x512xf32> to vector<8x128xf32>
    %340 = arith.negf %339 : vector<8x128xf32>
    %341 = math.exp %340 : vector<8x128xf32>
    %cst_89 = arith.constant 1.000000e+00 : f32
    %342 = vector.broadcast %cst_89 : f32 to vector<8x128xf32>
    %343 = arith.addf %342, %341 : vector<8x128xf32>
    %344 = arith.divf %342, %343 : vector<8x128xf32>
    %345 = arith.mulf %336, %257 : vector<8x128xf32>
    %346 = arith.mulf %330, %338 : vector<8x128xf32>
    %347 = arith.addf %345, %346 : vector<8x128xf32>
    %348 = math.tanh %347 : vector<8x128xf32>
    %349 = arith.mulf %344, %348 : vector<8x128xf32>
    %350 = tpu.concatenate %349, %288 in 1 : vector<8x128xf32>, vector<8x256xf32> -> vector<8x384xf32>
    %c0_90 = arith.constant 0 : index
    %c0_91 = arith.constant 0 : index
    %351 = vector.load %arg6[%c0_90, %c0_91] : memref<384x1024xf32, #tpu.memory_space<vmem>>, vector<384x1024xf32>
    %cst_92 = arith.constant dense<0.000000e+00> : vector<8x1024xf32>
    %352 = tpu.matmul %350, %351, %cst_92 {dimension_numbers = #tpu.dot_dimension_numbers<[1], [0], [0], [1], [0, 0, 1, 1], [], []>} : vector<8x384xf32>, vector<384x1024xf32>, vector<8x1024xf32> -> vector<8x1024xf32>
    %353 = arith.addf %352, %12 : vector<8x1024xf32>
    %354 = vector.extract_strided_slice %353 {offsets = [0, 0], sizes = [8, 256], strides = [1, 1]} : vector<8x1024xf32> to vector<8x256xf32>
    %355 = arith.negf %354 : vector<8x256xf32>
    %356 = math.exp %355 : vector<8x256xf32>
    %cst_93 = arith.constant 1.000000e+00 : f32
    %357 = vector.broadcast %cst_93 : f32 to vector<8x256xf32>
    %358 = arith.addf %357, %356 : vector<8x256xf32>
    %359 = arith.divf %357, %358 : vector<8x256xf32>
    %360 = vector.extract_strided_slice %353 {offsets = [0, 256], sizes = [8, 256], strides = [1, 1]} : vector<8x1024xf32> to vector<8x256xf32>
    %361 = arith.negf %360 : vector<8x256xf32>
    %362 = math.exp %361 : vector<8x256xf32>
    %cst_94 = arith.constant 1.000000e+00 : f32
    %363 = vector.broadcast %cst_94 : f32 to vector<8x256xf32>
    %364 = arith.addf %363, %362 : vector<8x256xf32>
    %365 = arith.divf %363, %364 : vector<8x256xf32>
    %366 = vector.extract_strided_slice %353 {offsets = [0, 512], sizes = [8, 256], strides = [1, 1]} : vector<8x1024xf32> to vector<8x256xf32>
    %367 = math.tanh %366 : vector<8x256xf32>
    %368 = vector.extract_strided_slice %353 {offsets = [0, 768], sizes = [8, 256], strides = [1, 1]} : vector<8x1024xf32> to vector<8x256xf32>
    %369 = arith.negf %368 : vector<8x256xf32>
    %370 = math.exp %369 : vector<8x256xf32>
    %cst_95 = arith.constant 1.000000e+00 : f32
    %371 = vector.broadcast %cst_95 : f32 to vector<8x256xf32>
    %372 = arith.addf %371, %370 : vector<8x256xf32>
    %373 = arith.divf %371, %372 : vector<8x256xf32>
    %374 = arith.mulf %365, %286 : vector<8x256xf32>
    %375 = arith.mulf %359, %367 : vector<8x256xf32>
    %376 = arith.addf %374, %375 : vector<8x256xf32>
    %377 = math.tanh %376 : vector<8x256xf32>
    %378 = arith.mulf %373, %377 : vector<8x256xf32>
    %c4_i32 = arith.constant 4 : i32
    %c8_i32_96 = arith.constant 8 : i32
    %379 = arith.muli %c4_i32, %c8_i32_96 : i32
    %380 = tpu.assume_multiple %379, 8 : i32
    %381 = arith.index_cast %380 : i32 to index
    %c0_97 = arith.constant 0 : index
    %382 = vector.load %arg15[%381, %c0_97] : memref<64x512xf32, #tpu.memory_space<vmem>>, vector<8x512xf32>
    %c0_98 = arith.constant 0 : index
    %c0_99 = arith.constant 0 : index
    %383 = vector.load %arg3[%c0_98, %c0_99] : memref<128x512xf32, #tpu.memory_space<vmem>>, vector<128x512xf32>
    %cst_100 = arith.constant dense<0.000000e+00> : vector<8x512xf32>
    %384 = tpu.matmul %320, %383, %cst_100 {dimension_numbers = #tpu.dot_dimension_numbers<[1], [0], [0], [1], [0, 0, 1, 1], [], []>} : vector<8x128xf32>, vector<128x512xf32>, vector<8x512xf32> -> vector<8x512xf32>
    %385 = arith.addf %382, %384 : vector<8x512xf32>
    %386 = vector.extract_strided_slice %385 {offsets = [0, 0], sizes = [8, 128], strides = [1, 1]} : vector<8x512xf32> to vector<8x128xf32>
    %387 = arith.negf %386 : vector<8x128xf32>
    %388 = math.exp %387 : vector<8x128xf32>
    %cst_101 = arith.constant 1.000000e+00 : f32
    %389 = vector.broadcast %cst_101 : f32 to vector<8x128xf32>
    %390 = arith.addf %389, %388 : vector<8x128xf32>
    %391 = arith.divf %389, %390 : vector<8x128xf32>
    %392 = vector.extract_strided_slice %385 {offsets = [0, 128], sizes = [8, 128], strides = [1, 1]} : vector<8x512xf32> to vector<8x128xf32>
    %393 = arith.negf %392 : vector<8x128xf32>
    %394 = math.exp %393 : vector<8x128xf32>
    %cst_102 = arith.constant 1.000000e+00 : f32
    %395 = vector.broadcast %cst_102 : f32 to vector<8x128xf32>
    %396 = arith.addf %395, %394 : vector<8x128xf32>
    %397 = arith.divf %395, %396 : vector<8x128xf32>
    %398 = vector.extract_strided_slice %385 {offsets = [0, 256], sizes = [8, 128], strides = [1, 1]} : vector<8x512xf32> to vector<8x128xf32>
    %399 = math.tanh %398 : vector<8x128xf32>
    %400 = vector.extract_strided_slice %385 {offsets = [0, 384], sizes = [8, 128], strides = [1, 1]} : vector<8x512xf32> to vector<8x128xf32>
    %401 = arith.negf %400 : vector<8x128xf32>
    %402 = math.exp %401 : vector<8x128xf32>
    %cst_103 = arith.constant 1.000000e+00 : f32
    %403 = vector.broadcast %cst_103 : f32 to vector<8x128xf32>
    %404 = arith.addf %403, %402 : vector<8x128xf32>
    %405 = arith.divf %403, %404 : vector<8x128xf32>
    %406 = arith.mulf %397, %318 : vector<8x128xf32>
    %407 = arith.mulf %391, %399 : vector<8x128xf32>
    %408 = arith.addf %406, %407 : vector<8x128xf32>
    %409 = math.tanh %408 : vector<8x128xf32>
    %410 = arith.mulf %405, %409 : vector<8x128xf32>
    %411 = tpu.concatenate %410, %349 in 1 : vector<8x128xf32>, vector<8x128xf32> -> vector<8x256xf32>
    %c0_104 = arith.constant 0 : index
    %c0_105 = arith.constant 0 : index
    %412 = vector.load %arg4[%c0_104, %c0_105] : memref<256x512xf32, #tpu.memory_space<vmem>>, vector<256x512xf32>
    %cst_106 = arith.constant dense<0.000000e+00> : vector<8x512xf32>
    %413 = tpu.matmul %411, %412, %cst_106 {dimension_numbers = #tpu.dot_dimension_numbers<[1], [0], [0], [1], [0, 0, 1, 1], [], []>} : vector<8x256xf32>, vector<256x512xf32>, vector<8x512xf32> -> vector<8x512xf32>
    %414 = arith.addf %413, %9 : vector<8x512xf32>
    %415 = vector.extract_strided_slice %414 {offsets = [0, 0], sizes = [8, 128], strides = [1, 1]} : vector<8x512xf32> to vector<8x128xf32>
    %416 = arith.negf %415 : vector<8x128xf32>
    %417 = math.exp %416 : vector<8x128xf32>
    %cst_107 = arith.constant 1.000000e+00 : f32
    %418 = vector.broadcast %cst_107 : f32 to vector<8x128xf32>
    %419 = arith.addf %418, %417 : vector<8x128xf32>
    %420 = arith.divf %418, %419 : vector<8x128xf32>
    %421 = vector.extract_strided_slice %414 {offsets = [0, 128], sizes = [8, 128], strides = [1, 1]} : vector<8x512xf32> to vector<8x128xf32>
    %422 = arith.negf %421 : vector<8x128xf32>
    %423 = math.exp %422 : vector<8x128xf32>
    %cst_108 = arith.constant 1.000000e+00 : f32
    %424 = vector.broadcast %cst_108 : f32 to vector<8x128xf32>
    %425 = arith.addf %424, %423 : vector<8x128xf32>
    %426 = arith.divf %424, %425 : vector<8x128xf32>
    %427 = vector.extract_strided_slice %414 {offsets = [0, 256], sizes = [8, 128], strides = [1, 1]} : vector<8x512xf32> to vector<8x128xf32>
    %428 = math.tanh %427 : vector<8x128xf32>
    %429 = vector.extract_strided_slice %414 {offsets = [0, 384], sizes = [8, 128], strides = [1, 1]} : vector<8x512xf32> to vector<8x128xf32>
    %430 = arith.negf %429 : vector<8x128xf32>
    %431 = math.exp %430 : vector<8x128xf32>
    %cst_109 = arith.constant 1.000000e+00 : f32
    %432 = vector.broadcast %cst_109 : f32 to vector<8x128xf32>
    %433 = arith.addf %432, %431 : vector<8x128xf32>
    %434 = arith.divf %432, %433 : vector<8x128xf32>
    %435 = arith.mulf %426, %347 : vector<8x128xf32>
    %436 = arith.mulf %420, %428 : vector<8x128xf32>
    %437 = arith.addf %435, %436 : vector<8x128xf32>
    %438 = math.tanh %437 : vector<8x128xf32>
    %439 = arith.mulf %434, %438 : vector<8x128xf32>
    %440 = tpu.concatenate %439, %378 in 1 : vector<8x128xf32>, vector<8x256xf32> -> vector<8x384xf32>
    %c0_110 = arith.constant 0 : index
    %c0_111 = arith.constant 0 : index
    %441 = vector.load %arg6[%c0_110, %c0_111] : memref<384x1024xf32, #tpu.memory_space<vmem>>, vector<384x1024xf32>
    %cst_112 = arith.constant dense<0.000000e+00> : vector<8x1024xf32>
    %442 = tpu.matmul %440, %441, %cst_112 {dimension_numbers = #tpu.dot_dimension_numbers<[1], [0], [0], [1], [0, 0, 1, 1], [], []>} : vector<8x384xf32>, vector<384x1024xf32>, vector<8x1024xf32> -> vector<8x1024xf32>
    %443 = arith.addf %442, %12 : vector<8x1024xf32>
    %444 = vector.extract_strided_slice %443 {offsets = [0, 0], sizes = [8, 256], strides = [1, 1]} : vector<8x1024xf32> to vector<8x256xf32>
    %445 = arith.negf %444 : vector<8x256xf32>
    %446 = math.exp %445 : vector<8x256xf32>
    %cst_113 = arith.constant 1.000000e+00 : f32
    %447 = vector.broadcast %cst_113 : f32 to vector<8x256xf32>
    %448 = arith.addf %447, %446 : vector<8x256xf32>
    %449 = arith.divf %447, %448 : vector<8x256xf32>
    %450 = vector.extract_strided_slice %443 {offsets = [0, 256], sizes = [8, 256], strides = [1, 1]} : vector<8x1024xf32> to vector<8x256xf32>
    %451 = arith.negf %450 : vector<8x256xf32>
    %452 = math.exp %451 : vector<8x256xf32>
    %cst_114 = arith.constant 1.000000e+00 : f32
    %453 = vector.broadcast %cst_114 : f32 to vector<8x256xf32>
    %454 = arith.addf %453, %452 : vector<8x256xf32>
    %455 = arith.divf %453, %454 : vector<8x256xf32>
    %456 = vector.extract_strided_slice %443 {offsets = [0, 512], sizes = [8, 256], strides = [1, 1]} : vector<8x1024xf32> to vector<8x256xf32>
    %457 = math.tanh %456 : vector<8x256xf32>
    %458 = vector.extract_strided_slice %443 {offsets = [0, 768], sizes = [8, 256], strides = [1, 1]} : vector<8x1024xf32> to vector<8x256xf32>
    %459 = arith.negf %458 : vector<8x256xf32>
    %460 = math.exp %459 : vector<8x256xf32>
    %cst_115 = arith.constant 1.000000e+00 : f32
    %461 = vector.broadcast %cst_115 : f32 to vector<8x256xf32>
    %462 = arith.addf %461, %460 : vector<8x256xf32>
    %463 = arith.divf %461, %462 : vector<8x256xf32>
    %464 = arith.mulf %455, %376 : vector<8x256xf32>
    %465 = arith.mulf %449, %457 : vector<8x256xf32>
    %466 = arith.addf %464, %465 : vector<8x256xf32>
    %467 = math.tanh %466 : vector<8x256xf32>
    %468 = arith.mulf %463, %467 : vector<8x256xf32>
    %c5_i32 = arith.constant 5 : i32
    %c8_i32_116 = arith.constant 8 : i32
    %469 = arith.muli %c5_i32, %c8_i32_116 : i32
    %470 = tpu.assume_multiple %469, 8 : i32
    %471 = arith.index_cast %470 : i32 to index
    %c0_117 = arith.constant 0 : index
    %472 = vector.load %arg15[%471, %c0_117] : memref<64x512xf32, #tpu.memory_space<vmem>>, vector<8x512xf32>
    %c0_118 = arith.constant 0 : index
    %c0_119 = arith.constant 0 : index
    %473 = vector.load %arg3[%c0_118, %c0_119] : memref<128x512xf32, #tpu.memory_space<vmem>>, vector<128x512xf32>
    %cst_120 = arith.constant dense<0.000000e+00> : vector<8x512xf32>
    %474 = tpu.matmul %410, %473, %cst_120 {dimension_numbers = #tpu.dot_dimension_numbers<[1], [0], [0], [1], [0, 0, 1, 1], [], []>} : vector<8x128xf32>, vector<128x512xf32>, vector<8x512xf32> -> vector<8x512xf32>
    %475 = arith.addf %472, %474 : vector<8x512xf32>
    %476 = vector.extract_strided_slice %475 {offsets = [0, 0], sizes = [8, 128], strides = [1, 1]} : vector<8x512xf32> to vector<8x128xf32>
    %477 = arith.negf %476 : vector<8x128xf32>
    %478 = math.exp %477 : vector<8x128xf32>
    %cst_121 = arith.constant 1.000000e+00 : f32
    %479 = vector.broadcast %cst_121 : f32 to vector<8x128xf32>
    %480 = arith.addf %479, %478 : vector<8x128xf32>
    %481 = arith.divf %479, %480 : vector<8x128xf32>
    %482 = vector.extract_strided_slice %475 {offsets = [0, 128], sizes = [8, 128], strides = [1, 1]} : vector<8x512xf32> to vector<8x128xf32>
    %483 = arith.negf %482 : vector<8x128xf32>
    %484 = math.exp %483 : vector<8x128xf32>
    %cst_122 = arith.constant 1.000000e+00 : f32
    %485 = vector.broadcast %cst_122 : f32 to vector<8x128xf32>
    %486 = arith.addf %485, %484 : vector<8x128xf32>
    %487 = arith.divf %485, %486 : vector<8x128xf32>
    %488 = vector.extract_strided_slice %475 {offsets = [0, 256], sizes = [8, 128], strides = [1, 1]} : vector<8x512xf32> to vector<8x128xf32>
    %489 = math.tanh %488 : vector<8x128xf32>
    %490 = vector.extract_strided_slice %475 {offsets = [0, 384], sizes = [8, 128], strides = [1, 1]} : vector<8x512xf32> to vector<8x128xf32>
    %491 = arith.negf %490 : vector<8x128xf32>
    %492 = math.exp %491 : vector<8x128xf32>
    %cst_123 = arith.constant 1.000000e+00 : f32
    %493 = vector.broadcast %cst_123 : f32 to vector<8x128xf32>
    %494 = arith.addf %493, %492 : vector<8x128xf32>
    %495 = arith.divf %493, %494 : vector<8x128xf32>
    %496 = arith.mulf %487, %408 : vector<8x128xf32>
    %497 = arith.mulf %481, %489 : vector<8x128xf32>
    %498 = arith.addf %496, %497 : vector<8x128xf32>
    %499 = math.tanh %498 : vector<8x128xf32>
    %500 = arith.mulf %495, %499 : vector<8x128xf32>
    %501 = tpu.concatenate %500, %439 in 1 : vector<8x128xf32>, vector<8x128xf32> -> vector<8x256xf32>
    %c0_124 = arith.constant 0 : index
    %c0_125 = arith.constant 0 : index
    %502 = vector.load %arg4[%c0_124, %c0_125] : memref<256x512xf32, #tpu.memory_space<vmem>>, vector<256x512xf32>
    %cst_126 = arith.constant dense<0.000000e+00> : vector<8x512xf32>
    %503 = tpu.matmul %501, %502, %cst_126 {dimension_numbers = #tpu.dot_dimension_numbers<[1], [0], [0], [1], [0, 0, 1, 1], [], []>} : vector<8x256xf32>, vector<256x512xf32>, vector<8x512xf32> -> vector<8x512xf32>
    %504 = arith.addf %503, %9 : vector<8x512xf32>
    %505 = vector.extract_strided_slice %504 {offsets = [0, 0], sizes = [8, 128], strides = [1, 1]} : vector<8x512xf32> to vector<8x128xf32>
    %506 = arith.negf %505 : vector<8x128xf32>
    %507 = math.exp %506 : vector<8x128xf32>
    %cst_127 = arith.constant 1.000000e+00 : f32
    %508 = vector.broadcast %cst_127 : f32 to vector<8x128xf32>
    %509 = arith.addf %508, %507 : vector<8x128xf32>
    %510 = arith.divf %508, %509 : vector<8x128xf32>
    %511 = vector.extract_strided_slice %504 {offsets = [0, 128], sizes = [8, 128], strides = [1, 1]} : vector<8x512xf32> to vector<8x128xf32>
    %512 = arith.negf %511 : vector<8x128xf32>
    %513 = math.exp %512 : vector<8x128xf32>
    %cst_128 = arith.constant 1.000000e+00 : f32
    %514 = vector.broadcast %cst_128 : f32 to vector<8x128xf32>
    %515 = arith.addf %514, %513 : vector<8x128xf32>
    %516 = arith.divf %514, %515 : vector<8x128xf32>
    %517 = vector.extract_strided_slice %504 {offsets = [0, 256], sizes = [8, 128], strides = [1, 1]} : vector<8x512xf32> to vector<8x128xf32>
    %518 = math.tanh %517 : vector<8x128xf32>
    %519 = vector.extract_strided_slice %504 {offsets = [0, 384], sizes = [8, 128], strides = [1, 1]} : vector<8x512xf32> to vector<8x128xf32>
    %520 = arith.negf %519 : vector<8x128xf32>
    %521 = math.exp %520 : vector<8x128xf32>
    %cst_129 = arith.constant 1.000000e+00 : f32
    %522 = vector.broadcast %cst_129 : f32 to vector<8x128xf32>
    %523 = arith.addf %522, %521 : vector<8x128xf32>
    %524 = arith.divf %522, %523 : vector<8x128xf32>
    %525 = arith.mulf %516, %437 : vector<8x128xf32>
    %526 = arith.mulf %510, %518 : vector<8x128xf32>
    %527 = arith.addf %525, %526 : vector<8x128xf32>
    %528 = math.tanh %527 : vector<8x128xf32>
    %529 = arith.mulf %524, %528 : vector<8x128xf32>
    %530 = tpu.concatenate %529, %468 in 1 : vector<8x128xf32>, vector<8x256xf32> -> vector<8x384xf32>
    %c0_130 = arith.constant 0 : index
    %c0_131 = arith.constant 0 : index
    %531 = vector.load %arg6[%c0_130, %c0_131] : memref<384x1024xf32, #tpu.memory_space<vmem>>, vector<384x1024xf32>
    %cst_132 = arith.constant dense<0.000000e+00> : vector<8x1024xf32>
    %532 = tpu.matmul %530, %531, %cst_132 {dimension_numbers = #tpu.dot_dimension_numbers<[1], [0], [0], [1], [0, 0, 1, 1], [], []>} : vector<8x384xf32>, vector<384x1024xf32>, vector<8x1024xf32> -> vector<8x1024xf32>
    %533 = arith.addf %532, %12 : vector<8x1024xf32>
    %534 = vector.extract_strided_slice %533 {offsets = [0, 0], sizes = [8, 256], strides = [1, 1]} : vector<8x1024xf32> to vector<8x256xf32>
    %535 = arith.negf %534 : vector<8x256xf32>
    %536 = math.exp %535 : vector<8x256xf32>
    %cst_133 = arith.constant 1.000000e+00 : f32
    %537 = vector.broadcast %cst_133 : f32 to vector<8x256xf32>
    %538 = arith.addf %537, %536 : vector<8x256xf32>
    %539 = arith.divf %537, %538 : vector<8x256xf32>
    %540 = vector.extract_strided_slice %533 {offsets = [0, 256], sizes = [8, 256], strides = [1, 1]} : vector<8x1024xf32> to vector<8x256xf32>
    %541 = arith.negf %540 : vector<8x256xf32>
    %542 = math.exp %541 : vector<8x256xf32>
    %cst_134 = arith.constant 1.000000e+00 : f32
    %543 = vector.broadcast %cst_134 : f32 to vector<8x256xf32>
    %544 = arith.addf %543, %542 : vector<8x256xf32>
    %545 = arith.divf %543, %544 : vector<8x256xf32>
    %546 = vector.extract_strided_slice %533 {offsets = [0, 512], sizes = [8, 256], strides = [1, 1]} : vector<8x1024xf32> to vector<8x256xf32>
    %547 = math.tanh %546 : vector<8x256xf32>
    %548 = vector.extract_strided_slice %533 {offsets = [0, 768], sizes = [8, 256], strides = [1, 1]} : vector<8x1024xf32> to vector<8x256xf32>
    %549 = arith.negf %548 : vector<8x256xf32>
    %550 = math.exp %549 : vector<8x256xf32>
    %cst_135 = arith.constant 1.000000e+00 : f32
    %551 = vector.broadcast %cst_135 : f32 to vector<8x256xf32>
    %552 = arith.addf %551, %550 : vector<8x256xf32>
    %553 = arith.divf %551, %552 : vector<8x256xf32>
    %554 = arith.mulf %545, %466 : vector<8x256xf32>
    %555 = arith.mulf %539, %547 : vector<8x256xf32>
    %556 = arith.addf %554, %555 : vector<8x256xf32>
    %557 = math.tanh %556 : vector<8x256xf32>
    %558 = arith.mulf %553, %557 : vector<8x256xf32>
    %c6_i32 = arith.constant 6 : i32
    %c8_i32_136 = arith.constant 8 : i32
    %559 = arith.muli %c6_i32, %c8_i32_136 : i32
    %560 = tpu.assume_multiple %559, 8 : i32
    %561 = arith.index_cast %560 : i32 to index
    %c0_137 = arith.constant 0 : index
    %562 = vector.load %arg15[%561, %c0_137] : memref<64x512xf32, #tpu.memory_space<vmem>>, vector<8x512xf32>
    %c0_138 = arith.constant 0 : index
    %c0_139 = arith.constant 0 : index
    %563 = vector.load %arg3[%c0_138, %c0_139] : memref<128x512xf32, #tpu.memory_space<vmem>>, vector<128x512xf32>
    %cst_140 = arith.constant dense<0.000000e+00> : vector<8x512xf32>
    %564 = tpu.matmul %500, %563, %cst_140 {dimension_numbers = #tpu.dot_dimension_numbers<[1], [0], [0], [1], [0, 0, 1, 1], [], []>} : vector<8x128xf32>, vector<128x512xf32>, vector<8x512xf32> -> vector<8x512xf32>
    %565 = arith.addf %562, %564 : vector<8x512xf32>
    %566 = vector.extract_strided_slice %565 {offsets = [0, 0], sizes = [8, 128], strides = [1, 1]} : vector<8x512xf32> to vector<8x128xf32>
    %567 = arith.negf %566 : vector<8x128xf32>
    %568 = math.exp %567 : vector<8x128xf32>
    %cst_141 = arith.constant 1.000000e+00 : f32
    %569 = vector.broadcast %cst_141 : f32 to vector<8x128xf32>
    %570 = arith.addf %569, %568 : vector<8x128xf32>
    %571 = arith.divf %569, %570 : vector<8x128xf32>
    %572 = vector.extract_strided_slice %565 {offsets = [0, 128], sizes = [8, 128], strides = [1, 1]} : vector<8x512xf32> to vector<8x128xf32>
    %573 = arith.negf %572 : vector<8x128xf32>
    %574 = math.exp %573 : vector<8x128xf32>
    %cst_142 = arith.constant 1.000000e+00 : f32
    %575 = vector.broadcast %cst_142 : f32 to vector<8x128xf32>
    %576 = arith.addf %575, %574 : vector<8x128xf32>
    %577 = arith.divf %575, %576 : vector<8x128xf32>
    %578 = vector.extract_strided_slice %565 {offsets = [0, 256], sizes = [8, 128], strides = [1, 1]} : vector<8x512xf32> to vector<8x128xf32>
    %579 = math.tanh %578 : vector<8x128xf32>
    %580 = vector.extract_strided_slice %565 {offsets = [0, 384], sizes = [8, 128], strides = [1, 1]} : vector<8x512xf32> to vector<8x128xf32>
    %581 = arith.negf %580 : vector<8x128xf32>
    %582 = math.exp %581 : vector<8x128xf32>
    %cst_143 = arith.constant 1.000000e+00 : f32
    %583 = vector.broadcast %cst_143 : f32 to vector<8x128xf32>
    %584 = arith.addf %583, %582 : vector<8x128xf32>
    %585 = arith.divf %583, %584 : vector<8x128xf32>
    %586 = arith.mulf %577, %498 : vector<8x128xf32>
    %587 = arith.mulf %571, %579 : vector<8x128xf32>
    %588 = arith.addf %586, %587 : vector<8x128xf32>
    %589 = math.tanh %588 : vector<8x128xf32>
    %590 = arith.mulf %585, %589 : vector<8x128xf32>
    %591 = tpu.concatenate %590, %529 in 1 : vector<8x128xf32>, vector<8x128xf32> -> vector<8x256xf32>
    %c0_144 = arith.constant 0 : index
    %c0_145 = arith.constant 0 : index
    %592 = vector.load %arg4[%c0_144, %c0_145] : memref<256x512xf32, #tpu.memory_space<vmem>>, vector<256x512xf32>
    %cst_146 = arith.constant dense<0.000000e+00> : vector<8x512xf32>
    %593 = tpu.matmul %591, %592, %cst_146 {dimension_numbers = #tpu.dot_dimension_numbers<[1], [0], [0], [1], [0, 0, 1, 1], [], []>} : vector<8x256xf32>, vector<256x512xf32>, vector<8x512xf32> -> vector<8x512xf32>
    %594 = arith.addf %593, %9 : vector<8x512xf32>
    %595 = vector.extract_strided_slice %594 {offsets = [0, 0], sizes = [8, 128], strides = [1, 1]} : vector<8x512xf32> to vector<8x128xf32>
    %596 = arith.negf %595 : vector<8x128xf32>
    %597 = math.exp %596 : vector<8x128xf32>
    %cst_147 = arith.constant 1.000000e+00 : f32
    %598 = vector.broadcast %cst_147 : f32 to vector<8x128xf32>
    %599 = arith.addf %598, %597 : vector<8x128xf32>
    %600 = arith.divf %598, %599 : vector<8x128xf32>
    %601 = vector.extract_strided_slice %594 {offsets = [0, 128], sizes = [8, 128], strides = [1, 1]} : vector<8x512xf32> to vector<8x128xf32>
    %602 = arith.negf %601 : vector<8x128xf32>
    %603 = math.exp %602 : vector<8x128xf32>
    %cst_148 = arith.constant 1.000000e+00 : f32
    %604 = vector.broadcast %cst_148 : f32 to vector<8x128xf32>
    %605 = arith.addf %604, %603 : vector<8x128xf32>
    %606 = arith.divf %604, %605 : vector<8x128xf32>
    %607 = vector.extract_strided_slice %594 {offsets = [0, 256], sizes = [8, 128], strides = [1, 1]} : vector<8x512xf32> to vector<8x128xf32>
    %608 = math.tanh %607 : vector<8x128xf32>
    %609 = vector.extract_strided_slice %594 {offsets = [0, 384], sizes = [8, 128], strides = [1, 1]} : vector<8x512xf32> to vector<8x128xf32>
    %610 = arith.negf %609 : vector<8x128xf32>
    %611 = math.exp %610 : vector<8x128xf32>
    %cst_149 = arith.constant 1.000000e+00 : f32
    %612 = vector.broadcast %cst_149 : f32 to vector<8x128xf32>
    %613 = arith.addf %612, %611 : vector<8x128xf32>
    %614 = arith.divf %612, %613 : vector<8x128xf32>
    %615 = arith.mulf %606, %527 : vector<8x128xf32>
    %616 = arith.mulf %600, %608 : vector<8x128xf32>
    %617 = arith.addf %615, %616 : vector<8x128xf32>
    %618 = math.tanh %617 : vector<8x128xf32>
    %619 = arith.mulf %614, %618 : vector<8x128xf32>
    %620 = tpu.concatenate %619, %558 in 1 : vector<8x128xf32>, vector<8x256xf32> -> vector<8x384xf32>
    %c0_150 = arith.constant 0 : index
    %c0_151 = arith.constant 0 : index
    %621 = vector.load %arg6[%c0_150, %c0_151] : memref<384x1024xf32, #tpu.memory_space<vmem>>, vector<384x1024xf32>
    %cst_152 = arith.constant dense<0.000000e+00> : vector<8x1024xf32>
    %622 = tpu.matmul %620, %621, %cst_152 {dimension_numbers = #tpu.dot_dimension_numbers<[1], [0], [0], [1], [0, 0, 1, 1], [], []>} : vector<8x384xf32>, vector<384x1024xf32>, vector<8x1024xf32> -> vector<8x1024xf32>
    %623 = arith.addf %622, %12 : vector<8x1024xf32>
    %624 = vector.extract_strided_slice %623 {offsets = [0, 0], sizes = [8, 256], strides = [1, 1]} : vector<8x1024xf32> to vector<8x256xf32>
    %625 = arith.negf %624 : vector<8x256xf32>
    %626 = math.exp %625 : vector<8x256xf32>
    %cst_153 = arith.constant 1.000000e+00 : f32
    %627 = vector.broadcast %cst_153 : f32 to vector<8x256xf32>
    %628 = arith.addf %627, %626 : vector<8x256xf32>
    %629 = arith.divf %627, %628 : vector<8x256xf32>
    %630 = vector.extract_strided_slice %623 {offsets = [0, 256], sizes = [8, 256], strides = [1, 1]} : vector<8x1024xf32> to vector<8x256xf32>
    %631 = arith.negf %630 : vector<8x256xf32>
    %632 = math.exp %631 : vector<8x256xf32>
    %cst_154 = arith.constant 1.000000e+00 : f32
    %633 = vector.broadcast %cst_154 : f32 to vector<8x256xf32>
    %634 = arith.addf %633, %632 : vector<8x256xf32>
    %635 = arith.divf %633, %634 : vector<8x256xf32>
    %636 = vector.extract_strided_slice %623 {offsets = [0, 512], sizes = [8, 256], strides = [1, 1]} : vector<8x1024xf32> to vector<8x256xf32>
    %637 = math.tanh %636 : vector<8x256xf32>
    %638 = vector.extract_strided_slice %623 {offsets = [0, 768], sizes = [8, 256], strides = [1, 1]} : vector<8x1024xf32> to vector<8x256xf32>
    %639 = arith.negf %638 : vector<8x256xf32>
    %640 = math.exp %639 : vector<8x256xf32>
    %cst_155 = arith.constant 1.000000e+00 : f32
    %641 = vector.broadcast %cst_155 : f32 to vector<8x256xf32>
    %642 = arith.addf %641, %640 : vector<8x256xf32>
    %643 = arith.divf %641, %642 : vector<8x256xf32>
    %644 = arith.mulf %635, %556 : vector<8x256xf32>
    %645 = arith.mulf %629, %637 : vector<8x256xf32>
    %646 = arith.addf %644, %645 : vector<8x256xf32>
    %647 = math.tanh %646 : vector<8x256xf32>
    %648 = arith.mulf %643, %647 : vector<8x256xf32>
    %c7_i32 = arith.constant 7 : i32
    %c8_i32_156 = arith.constant 8 : i32
    %649 = arith.muli %c7_i32, %c8_i32_156 : i32
    %650 = tpu.assume_multiple %649, 8 : i32
    %651 = arith.index_cast %650 : i32 to index
    %c0_157 = arith.constant 0 : index
    %652 = vector.load %arg15[%651, %c0_157] : memref<64x512xf32, #tpu.memory_space<vmem>>, vector<8x512xf32>
    %c0_158 = arith.constant 0 : index
    %c0_159 = arith.constant 0 : index
    %653 = vector.load %arg3[%c0_158, %c0_159] : memref<128x512xf32, #tpu.memory_space<vmem>>, vector<128x512xf32>
    %cst_160 = arith.constant dense<0.000000e+00> : vector<8x512xf32>
    %654 = tpu.matmul %590, %653, %cst_160 {dimension_numbers = #tpu.dot_dimension_numbers<[1], [0], [0], [1], [0, 0, 1, 1], [], []>} : vector<8x128xf32>, vector<128x512xf32>, vector<8x512xf32> -> vector<8x512xf32>
    %655 = arith.addf %652, %654 : vector<8x512xf32>
    %656 = vector.extract_strided_slice %655 {offsets = [0, 0], sizes = [8, 128], strides = [1, 1]} : vector<8x512xf32> to vector<8x128xf32>
    %657 = arith.negf %656 : vector<8x128xf32>
    %658 = math.exp %657 : vector<8x128xf32>
    %cst_161 = arith.constant 1.000000e+00 : f32
    %659 = vector.broadcast %cst_161 : f32 to vector<8x128xf32>
    %660 = arith.addf %659, %658 : vector<8x128xf32>
    %661 = arith.divf %659, %660 : vector<8x128xf32>
    %662 = vector.extract_strided_slice %655 {offsets = [0, 128], sizes = [8, 128], strides = [1, 1]} : vector<8x512xf32> to vector<8x128xf32>
    %663 = arith.negf %662 : vector<8x128xf32>
    %664 = math.exp %663 : vector<8x128xf32>
    %cst_162 = arith.constant 1.000000e+00 : f32
    %665 = vector.broadcast %cst_162 : f32 to vector<8x128xf32>
    %666 = arith.addf %665, %664 : vector<8x128xf32>
    %667 = arith.divf %665, %666 : vector<8x128xf32>
    %668 = vector.extract_strided_slice %655 {offsets = [0, 256], sizes = [8, 128], strides = [1, 1]} : vector<8x512xf32> to vector<8x128xf32>
    %669 = math.tanh %668 : vector<8x128xf32>
    %670 = vector.extract_strided_slice %655 {offsets = [0, 384], sizes = [8, 128], strides = [1, 1]} : vector<8x512xf32> to vector<8x128xf32>
    %671 = arith.negf %670 : vector<8x128xf32>
    %672 = math.exp %671 : vector<8x128xf32>
    %cst_163 = arith.constant 1.000000e+00 : f32
    %673 = vector.broadcast %cst_163 : f32 to vector<8x128xf32>
    %674 = arith.addf %673, %672 : vector<8x128xf32>
    %675 = arith.divf %673, %674 : vector<8x128xf32>
    %676 = arith.mulf %667, %588 : vector<8x128xf32>
    %677 = arith.mulf %661, %669 : vector<8x128xf32>
    %678 = arith.addf %676, %677 : vector<8x128xf32>
    %679 = math.tanh %678 : vector<8x128xf32>
    %680 = arith.mulf %675, %679 : vector<8x128xf32>
    %681 = tpu.concatenate %680, %619 in 1 : vector<8x128xf32>, vector<8x128xf32> -> vector<8x256xf32>
    %c0_164 = arith.constant 0 : index
    %c0_165 = arith.constant 0 : index
    %682 = vector.load %arg4[%c0_164, %c0_165] : memref<256x512xf32, #tpu.memory_space<vmem>>, vector<256x512xf32>
    %cst_166 = arith.constant dense<0.000000e+00> : vector<8x512xf32>
    %683 = tpu.matmul %681, %682, %cst_166 {dimension_numbers = #tpu.dot_dimension_numbers<[1], [0], [0], [1], [0, 0, 1, 1], [], []>} : vector<8x256xf32>, vector<256x512xf32>, vector<8x512xf32> -> vector<8x512xf32>
    %684 = arith.addf %683, %9 : vector<8x512xf32>
    %685 = vector.extract_strided_slice %684 {offsets = [0, 0], sizes = [8, 128], strides = [1, 1]} : vector<8x512xf32> to vector<8x128xf32>
    %686 = arith.negf %685 : vector<8x128xf32>
    %687 = math.exp %686 : vector<8x128xf32>
    %cst_167 = arith.constant 1.000000e+00 : f32
    %688 = vector.broadcast %cst_167 : f32 to vector<8x128xf32>
    %689 = arith.addf %688, %687 : vector<8x128xf32>
    %690 = arith.divf %688, %689 : vector<8x128xf32>
    %691 = vector.extract_strided_slice %684 {offsets = [0, 128], sizes = [8, 128], strides = [1, 1]} : vector<8x512xf32> to vector<8x128xf32>
    %692 = arith.negf %691 : vector<8x128xf32>
    %693 = math.exp %692 : vector<8x128xf32>
    %cst_168 = arith.constant 1.000000e+00 : f32
    %694 = vector.broadcast %cst_168 : f32 to vector<8x128xf32>
    %695 = arith.addf %694, %693 : vector<8x128xf32>
    %696 = arith.divf %694, %695 : vector<8x128xf32>
    %697 = vector.extract_strided_slice %684 {offsets = [0, 256], sizes = [8, 128], strides = [1, 1]} : vector<8x512xf32> to vector<8x128xf32>
    %698 = math.tanh %697 : vector<8x128xf32>
    %699 = vector.extract_strided_slice %684 {offsets = [0, 384], sizes = [8, 128], strides = [1, 1]} : vector<8x512xf32> to vector<8x128xf32>
    %700 = arith.negf %699 : vector<8x128xf32>
    %701 = math.exp %700 : vector<8x128xf32>
    %cst_169 = arith.constant 1.000000e+00 : f32
    %702 = vector.broadcast %cst_169 : f32 to vector<8x128xf32>
    %703 = arith.addf %702, %701 : vector<8x128xf32>
    %704 = arith.divf %702, %703 : vector<8x128xf32>
    %705 = arith.mulf %696, %617 : vector<8x128xf32>
    %706 = arith.mulf %690, %698 : vector<8x128xf32>
    %707 = arith.addf %705, %706 : vector<8x128xf32>
    %708 = math.tanh %707 : vector<8x128xf32>
    %709 = arith.mulf %704, %708 : vector<8x128xf32>
    %710 = tpu.concatenate %709, %648 in 1 : vector<8x128xf32>, vector<8x256xf32> -> vector<8x384xf32>
    %c0_170 = arith.constant 0 : index
    %c0_171 = arith.constant 0 : index
    %711 = vector.load %arg6[%c0_170, %c0_171] : memref<384x1024xf32, #tpu.memory_space<vmem>>, vector<384x1024xf32>
    %cst_172 = arith.constant dense<0.000000e+00> : vector<8x1024xf32>
    %712 = tpu.matmul %710, %711, %cst_172 {dimension_numbers = #tpu.dot_dimension_numbers<[1], [0], [0], [1], [0, 0, 1, 1], [], []>} : vector<8x384xf32>, vector<384x1024xf32>, vector<8x1024xf32> -> vector<8x1024xf32>
    %713 = arith.addf %712, %12 : vector<8x1024xf32>
    %714 = vector.extract_strided_slice %713 {offsets = [0, 0], sizes = [8, 256], strides = [1, 1]} : vector<8x1024xf32> to vector<8x256xf32>
    %715 = arith.negf %714 : vector<8x256xf32>
    %716 = math.exp %715 : vector<8x256xf32>
    %cst_173 = arith.constant 1.000000e+00 : f32
    %717 = vector.broadcast %cst_173 : f32 to vector<8x256xf32>
    %718 = arith.addf %717, %716 : vector<8x256xf32>
    %719 = arith.divf %717, %718 : vector<8x256xf32>
    %720 = vector.extract_strided_slice %713 {offsets = [0, 256], sizes = [8, 256], strides = [1, 1]} : vector<8x1024xf32> to vector<8x256xf32>
    %721 = arith.negf %720 : vector<8x256xf32>
    %722 = math.exp %721 : vector<8x256xf32>
    %cst_174 = arith.constant 1.000000e+00 : f32
    %723 = vector.broadcast %cst_174 : f32 to vector<8x256xf32>
    %724 = arith.addf %723, %722 : vector<8x256xf32>
    %725 = arith.divf %723, %724 : vector<8x256xf32>
    %726 = vector.extract_strided_slice %713 {offsets = [0, 512], sizes = [8, 256], strides = [1, 1]} : vector<8x1024xf32> to vector<8x256xf32>
    %727 = math.tanh %726 : vector<8x256xf32>
    %728 = vector.extract_strided_slice %713 {offsets = [0, 768], sizes = [8, 256], strides = [1, 1]} : vector<8x1024xf32> to vector<8x256xf32>
    %729 = arith.negf %728 : vector<8x256xf32>
    %730 = math.exp %729 : vector<8x256xf32>
    %cst_175 = arith.constant 1.000000e+00 : f32
    %731 = vector.broadcast %cst_175 : f32 to vector<8x256xf32>
    %732 = arith.addf %731, %730 : vector<8x256xf32>
    %733 = arith.divf %731, %732 : vector<8x256xf32>
    %734 = arith.mulf %725, %646 : vector<8x256xf32>
    %735 = arith.mulf %719, %727 : vector<8x256xf32>
    %736 = arith.addf %734, %735 : vector<8x256xf32>
    %737 = math.tanh %736 : vector<8x256xf32>
    %738 = arith.mulf %733, %737 : vector<8x256xf32>
    %c8_i32_176 = arith.constant 8 : i32
    %c0_177 = arith.constant 0 : index
    %c0_178 = arith.constant 0 : index
    %739 = vector.load %arg8[%c0_177, %c0_178] : memref<256x128xf32, #tpu.memory_space<vmem>>, vector<256x128xf32>
    %cst_179 = arith.constant dense<0.000000e+00> : vector<8x128xf32>
    %740 = tpu.matmul %738, %739, %cst_179 {dimension_numbers = #tpu.dot_dimension_numbers<[1], [0], [0], [1], [0, 0, 1, 1], [], []>} : vector<8x256xf32>, vector<256x128xf32>, vector<8x128xf32> -> vector<8x128xf32>
    %c0_180 = arith.constant 0 : index
    %c0_181 = arith.constant 0 : index
    %741 = vector.load %arg9[%c0_180, %c0_181] : memref<1x128xf32, #tpu.memory_space<vmem>>, vector<1x128xf32>
    %742 = vector.broadcast %741 : vector<1x128xf32> to vector<8x128xf32>
    %743 = arith.addf %740, %742 : vector<8x128xf32>
    %cst_182 = arith.constant 0.000000e+00 : f32
    %744 = vector.broadcast %cst_182 : f32 to vector<8x128xf32>
    %745 = arith.maximumf %743, %744 : vector<8x128xf32>
    %c0_183 = arith.constant 0 : index
    %c0_184 = arith.constant 0 : index
    %746 = vector.load %arg10[%c0_183, %c0_184] : memref<128x32xf32, #tpu.memory_space<vmem>>, vector<128x32xf32>
    %cst_185 = arith.constant dense<0.000000e+00> : vector<8x32xf32>
    %747 = tpu.matmul %745, %746, %cst_185 {dimension_numbers = #tpu.dot_dimension_numbers<[1], [0], [0], [1], [0, 0, 1, 1], [], []>} : vector<8x128xf32>, vector<128x32xf32>, vector<8x32xf32> -> vector<8x32xf32>
    %c0_186 = arith.constant 0 : index
    %c0_187 = arith.constant 0 : index
    %748 = vector.load %arg11[%c0_186, %c0_187] : memref<1x32xf32, #tpu.memory_space<vmem>>, vector<1x32xf32>
    %749 = vector.broadcast %748 : vector<1x32xf32> to vector<8x32xf32>
    %750 = arith.addf %747, %749 : vector<8x32xf32>
    %cst_188 = arith.constant 0.000000e+00 : f32
    %751 = vector.broadcast %cst_188 : f32 to vector<8x32xf32>
    %752 = arith.maximumf %750, %751 : vector<8x32xf32>
    %c0_189 = arith.constant 0 : index
    %c0_190 = arith.constant 0 : index
    %753 = vector.load %arg12[%c0_189, %c0_190] : memref<32x1xf32, #tpu.memory_space<vmem>>, vector<32x1xf32>
    %cst_191 = arith.constant dense<0.000000e+00> : vector<8x1xf32>
    %754 = tpu.matmul %752, %753, %cst_191 {dimension_numbers = #tpu.dot_dimension_numbers<[1], [0], [0], [1], [0, 0, 1, 1], [], []>} : vector<8x32xf32>, vector<32x1xf32>, vector<8x1xf32> -> vector<8x1xf32>
    %c0_192 = arith.constant 0 : index
    %c0_193 = arith.constant 0 : index
    %755 = vector.load %arg13[%c0_192, %c0_193] : memref<1x1xf32, #tpu.memory_space<vmem>>, vector<1x1xf32>
    %756 = vector.broadcast %755 : vector<1x1xf32> to vector<8x1xf32>
    %757 = arith.addf %754, %756 : vector<8x1xf32>
    %c0_194 = arith.constant 0 : index
    %c0_195 = arith.constant 0 : index
    %758 = vector.load %arg14[%c0_194, %c0_195] : memref<8x1xf32, #tpu.memory_space<vmem>>, vector<8x1xf32>
    tpu.vector_store %arg14[%c0_194, %c0_195], %757 {strides = array<i32>} : memref<8x1xf32, #tpu.memory_space<vmem>>, vector<8x1xf32>,
    return
  }
}

</mosaic_0001>

<llo_original>
// kernel: tpu_custom_call.1
$region0: #{tpu_custom_call.1}
  #allocation0 [shape = 'u32[]', space=smem, size = 0x4, offset = 0x4, fixed_abs, tag = 'smem constant byte address 0x4 - core index']
  #allocation1 [shape = 'u32[72,128]{1,0:T(1,128)}', space=vmem, size = 0x9000, scoped, tag = 'internal scratch']
  #allocation2 [shape = 'f32[64,512]{1,0:T(8,128)}', space=vmem, size = 0x20000, scoped, tag = 'scratch operand']
  #allocation3 [shape = 'f32[1,1]{1,0:T(1,128)S(1)}', space=vmem, size = 0x200, scoped, tag = 'scoped memory for tpu_custom_call.1']
  %s0 = inlined_call_operand.vmem [shape: f32[64,5], index: 0, kind: input, shape index: {}]
  %s1 = inlined_call_operand.hbm [shape: f32[5,512], index: 1, kind: input, shape index: {}]
  %s2 = inlined_call_operand.hbm [shape: f32[1,512], index: 2, kind: input, shape index: {}]
  %s3 = inlined_call_operand.hbm [shape: f32[128,512], index: 3, kind: input, shape index: {}]
  %s4 = inlined_call_operand.hbm [shape: f32[256,512], index: 4, kind: input, shape index: {}]
  %s5 = inlined_call_operand.hbm [shape: f32[1,512], index: 5, kind: input, shape index: {}]
  %s6 = inlined_call_operand.hbm [shape: f32[384,1024], index: 6, kind: input, shape index: {}]
  %s7 = inlined_call_operand.hbm [shape: f32[1,1024], index: 7, kind: input, shape index: {}]
  %s8 = inlined_call_operand.hbm [shape: f32[256,128], index: 8, kind: input, shape index: {}]
  %s9 = inlined_call_operand.hbm [shape: f32[1,128], index: 9, kind: input, shape index: {}]
  %s10 = inlined_call_operand.vmem [shape: f32[128,32], index: 10, kind: input, shape index: {}]
  %s11 = inlined_call_operand.hbm [shape: f32[1,32], index: 11, kind: input, shape index: {}]
  %s12 = inlined_call_operand.vmem [shape: f32[32,1], index: 12, kind: input, shape index: {}]
  %s13 = inlined_call_operand.<no memory space> [shape: f32[1,1], index: 13, kind: input, shape index: {}]
  %s14 = inlined_call_operand.vmem [shape: f32[8,1], index: 14, kind: output, shape index: {}]
  %s15 = sld [smem:[#allocation0]]
  $region106: #{tpu_custom_call.1} parent=0
    _
  %s17 = ssub.s32 1, %s15
  %s18 = scalar_select 0, %s17, %s15
  %v19 = vstv %s13
  %20 = vst [vmem:[#allocation3] sm:$0x1] %v19
  $region1: #{tpu_custom_call.1} parent=0
    #allocation4 [shape = 'u8[16384]{0}', space=vmem, size = 0x4000, scoped, tag = 'input window, operand 1, single buffered']
    #allocation5 [shape = 's32[1]{0}', space=sflag, size = 0x4, scoped, tag = 'scoped memory for tpu_custom_call.1']
    #allocation6 [shape = 'u8[2048]{0}', space=vmem, size = 0x800, scoped, tag = 'input window, operand 2, single buffered']
    #allocation7 [shape = 's32[1]{0}', space=sflag, size = 0x4, scoped, tag = 'scoped memory for tpu_custom_call.1']
    #allocation8 [shape = 'u8[262144]{0}', space=vmem, size = 0x40000, scoped, tag = 'input window, operand 3, single buffered']
    #allocation9 [shape = 'u8[524288]{0}', space=vmem, size = 0x80000, scoped, tag = 'input window, operand 4, single buffered']
    #allocation10 [shape = 's32[1]{0}', space=sflag, size = 0x4, scoped, tag = 'scoped memory for tpu_custom_call.1']
    #allocation11 [shape = 'u8[2048]{0}', space=vmem, size = 0x800, scoped, tag = 'input window, operand 5, single buffered']
    #allocation12 [shape = 'u8[1572864]{0}', space=vmem, size = 0x180000, scoped, tag = 'input window, operand 6, single buffered']
    #allocation13 [shape = 's32[1]{0}', space=sflag, size = 0x4, scoped, tag = 'scoped memory for tpu_custom_call.1']
    #allocation14 [shape = 'u8[4096]{0}', space=vmem, size = 0x1000, scoped, tag = 'input window, operand 7, single buffered']
    #allocation15 [shape = 'u8[131072]{0}', space=vmem, size = 0x20000, scoped, tag = 'input window, operand 8, single buffered']
    #allocation16 [shape = 's32[1]{0}', space=sflag, size = 0x4, scoped, tag = 'scoped memory for tpu_custom_call.1']
    #allocation17 [shape = 'u8[512]{0}', space=vmem, size = 0x400, scoped, tag = 'input window, operand 9, single buffered']
    #allocation18 [shape = 'u8[512]{0}', space=vmem, size = 0x400, scoped, tag = 'input window, operand 11, single buffered']
    #allocation19 [shape = 's32[1]{0}', space=sflag, size = 0x4, scoped, tag = 'scoped memory for tpu_custom_call.1']
    %21 = vsyncpa [#allocation5], 0
    %22 = vsyncpa [#allocation7], 0
    %23 = vsyncpa [#allocation10], 0
    %24 = vsyncpa [#allocation13], 0
    %25 = vsyncpa [#allocation16], 0
    %26 = vsyncpa [#allocation19], 0
    // Predicated region
    $region2: #{tpu_custom_call.1} parent=1 // pred_check
      _
    $region3: #{tpu_custom_call.1} parent=1 // pred_check_branch
      %28 = sbr.rel (0) target = $region5
    $region4: #{tpu_custom_call.1} parent=1 // pred_region
      _
    $region5: #{tpu_custom_call.1} parent=1 // pred_fallthru
      _
    // Predicated region
    $region6: #{tpu_custom_call.1} parent=1 // pred_check
      _
    $region7: #{tpu_custom_call.1} parent=1 // pred_check_branch
      %30 = sbr.rel (0) target = $region9
    $region8: #{tpu_custom_call.1} parent=1 // pred_region
      %32 = vsyncadd [#allocation5], 0
      %s34 = sshll.u32 %s1, 4
      %s35 = int_to_ptr.hbm [resolvable:$true] %s34
      %s36 = sshll.u32 [#allocation4], 4
      %s37 = int_to_ptr.vmem [resolvable:$true] %s36
      %39 = dma.hbm_to_vmem [thread:$0]  %s35, 512, %s37, [#allocation5]
    $region9: #{tpu_custom_call.1} parent=1 // pred_fallthru
      _
    // Predicated region
    $region10: #{tpu_custom_call.1} parent=1 // pred_check
      _
    $region11: #{tpu_custom_call.1} parent=1 // pred_check_branch
      %41 = sbr.rel (0) target = $region13
    $region12: #{tpu_custom_call.1} parent=1 // pred_region
      %43 = vsyncadd [#allocation7], 0
      %s45 = sshll.u32 %s2, 4
      %s46 = int_to_ptr.hbm [resolvable:$true] %s45
      %s47 = sshll.u32 [#allocation6], 4
      %s48 = int_to_ptr.vmem [resolvable:$true] %s47
      %50 = dma.hbm_to_vmem [thread:$0]  %s46, 64, %s48, [#allocation7]
    $region13: #{tpu_custom_call.1} parent=1 // pred_fallthru
      _
    // Predicated region
    $region14: #{tpu_custom_call.1} parent=1 // pred_check
      _
    $region15: #{tpu_custom_call.1} parent=1 // pred_check_branch
      %52 = sbr.rel (0) target = $region17
    $region16: #{tpu_custom_call.1} parent=1 // pred_region
      %54 = vsyncadd [#allocation7], 0
      %s55 = sshll.u32 %s3, 4
      %s56 = int_to_ptr.hbm [resolvable:$true] %s55
      %s57 = sshll.u32 [#allocation8], 4
      %s58 = int_to_ptr.vmem [resolvable:$true] %s57
      %63 = dma.hbm_to_vmem [thread:$0]  %s56, 8192, %s58, [#allocation7], 512, 512, 32
    $region17: #{tpu_custom_call.1} parent=1 // pred_fallthru
      _
    // Predicated region
    $region18: #{tpu_custom_call.1} parent=1 // pred_check
      _
    $region19: #{tpu_custom_call.1} parent=1 // pred_check_branch
      %65 = sbr.rel (0) target = $region21
    $region20: #{tpu_custom_call.1} parent=1 // pred_region
      %67 = vsyncadd [#allocation10], 0
      %s68 = sshll.u32 %s4, 4
      %s69 = int_to_ptr.hbm [resolvable:$true] %s68
      %s70 = sshll.u32 [#allocation9], 4
      %s71 = int_to_ptr.vmem [resolvable:$true] %s70
      %76 = dma.hbm_to_vmem [thread:$0]  %s69, 16384, %s71, [#allocation10], 512, 512, 32
    $region21: #{tpu_custom_call.1} parent=1 // pred_fallthru
      _
    // Predicated region
    $region22: #{tpu_custom_call.1} parent=1 // pred_check
      _
    $region23: #{tpu_custom_call.1} parent=1 // pred_check_branch
      %78 = sbr.rel (0) target = $region25
    $region24: #{tpu_custom_call.1} parent=1 // pred_region
      %80 = vsyncadd [#allocation10], 0
      %s82 = sshll.u32 %s5, 4
      %s83 = int_to_ptr.hbm [resolvable:$true] %s82
      %s84 = sshll.u32 [#allocation11], 4
      %s85 = int_to_ptr.vmem [resolvable:$true] %s84
      %87 = dma.hbm_to_vmem [thread:$0]  %s83, 64, %s85, [#allocation10]
    $region25: #{tpu_custom_call.1} parent=1 // pred_fallthru
      _
    // Predicated region
    $region26: #{tpu_custom_call.1} parent=1 // pred_check
      _
    $region27: #{tpu_custom_call.1} parent=1 // pred_check_branch
      %89 = sbr.rel (0) target = $region29
    $region28: #{tpu_custom_call.1} parent=1 // pred_region
      %91 = vsyncadd [#allocation13], 0
      %s92 = sshll.u32 %s6, 4
      %s93 = int_to_ptr.hbm [resolvable:$true] %s92
      %s94 = sshll.u32 [#allocation12], 4
      %s95 = int_to_ptr.vmem [resolvable:$true] %s94
      %100 = dma.hbm_to_vmem [thread:$0]  %s93, 49152, %s95, [#allocation13], 1024, 1024, 64
    $region29: #{tpu_custom_call.1} parent=1 // pred_fallthru
      _
    // Predicated region
    $region30: #{tpu_custom_call.1} parent=1 // pred_check
      _
    $region31: #{tpu_custom_call.1} parent=1 // pred_check_branch
      %102 = sbr.rel (0) target = $region33
    $region32: #{tpu_custom_call.1} parent=1 // pred_region
      %104 = vsyncadd [#allocation13], 0
      %s106 = sshll.u32 %s7, 4
      %s107 = int_to_ptr.hbm [resolvable:$true] %s106
      %s108 = sshll.u32 [#allocation14], 4
      %s109 = int_to_ptr.vmem [resolvable:$true] %s108
      %111 = dma.hbm_to_vmem [thread:$0]  %s107, 128, %s109, [#allocation13]
    $region33: #{tpu_custom_call.1} parent=1 // pred_fallthru
      _
    // Predicated region
    $region34: #{tpu_custom_call.1} parent=1 // pred_check
      _
    $region35: #{tpu_custom_call.1} parent=1 // pred_check_branch
      %113 = sbr.rel (0) target = $region37
    $region36: #{tpu_custom_call.1} parent=1 // pred_region
      %115 = vsyncadd [#allocation16], 0
      %s116 = sshll.u32 %s8, 4
      %s117 = int_to_ptr.hbm [resolvable:$true] %s116
      %s118 = sshll.u32 [#allocation15], 4
      %s119 = int_to_ptr.vmem [resolvable:$true] %s118
      %124 = dma.hbm_to_vmem [thread:$0]  %s117, 4096, %s119, [#allocation16], 128, 128, 8
    $region37: #{tpu_custom_call.1} parent=1 // pred_fallthru
      _
    // Predicated region
    $region38: #{tpu_custom_call.1} parent=1 // pred_check
      _
    $region39: #{tpu_custom_call.1} parent=1 // pred_check_branch
      %126 = sbr.rel (0) target = $region41
    $region40: #{tpu_custom_call.1} parent=1 // pred_region
      %128 = vsyncadd [#allocation16], 0
      %s130 = sshll.u32 %s9, 4
      %s131 = int_to_ptr.hbm [resolvable:$true] %s130
      %s132 = sshll.u32 [#allocation17], 4
      %s133 = int_to_ptr.vmem [resolvable:$true] %s132
      %135 = dma.hbm_to_vmem [thread:$0]  %s131, 16, %s133, [#allocation16]
    $region41: #{tpu_custom_call.1} parent=1 // pred_fallthru
      _
    // Predicated region
    $region42: #{tpu_custom_call.1} parent=1 // pred_check
      _
    $region43: #{tpu_custom_call.1} parent=1 // pred_check_branch
      %137 = sbr.rel (0) target = $region45
    $region44: #{tpu_custom_call.1} parent=1 // pred_region
      _
    $region45: #{tpu_custom_call.1} parent=1 // pred_fallthru
      _
    // Predicated region
    $region46: #{tpu_custom_call.1} parent=1 // pred_check
      _
    $region47: #{tpu_custom_call.1} parent=1 // pred_check_branch
      %139 = sbr.rel (0) target = $region49
    $region48: #{tpu_custom_call.1} parent=1 // pred_region
      %141 = vsyncadd [#allocation19], 0
      %s143 = sshll.u32 %s11, 4
      %s144 = int_to_ptr.hbm [resolvable:$true] %s143
      %s145 = sshll.u32 [#allocation18], 4
      %s146 = int_to_ptr.vmem [resolvable:$true] %s145
      %148 = dma.hbm_to_vmem [thread:$0]  %s144, 16, %s146, [#allocation19]
    $region49: #{tpu_custom_call.1} parent=1 // pred_fallthru
      _
    // Predicated region
    $region50: #{tpu_custom_call.1} parent=1 // pred_check
      _
    $region51: #{tpu_custom_call.1} parent=1 // pred_check_branch
      %150 = sbr.rel (0) target = $region53
    $region52: #{tpu_custom_call.1} parent=1 // pred_region
      _
    $region53: #{tpu_custom_call.1} parent=1 // pred_fallthru
      _
    // Predicated region
    $region54: #{tpu_custom_call.1} parent=1 // pred_check
      _
    $region55: #{tpu_custom_call.1} parent=1 // pred_check_branch
      %152 = sbr.rel (0) target = $region57
    $region56: #{tpu_custom_call.1} parent=1 // pred_region
      _
    $region57: #{tpu_custom_call.1} parent=1 // pred_fallthru
      _
    // Predicated region
    $region58: #{tpu_custom_call.1} parent=1 // pred_check
      _
    $region59: #{tpu_custom_call.1} parent=1 // pred_check_branch
      %154 = sbr.rel (0) target = $region61
    $region60: #{tpu_custom_call.1} parent=1 // pred_region
      %156 = dma.done [#allocation5], 512
    $region61: #{tpu_custom_call.1} parent=1 // pred_fallthru
      _
    // Predicated region
    $region62: #{tpu_custom_call.1} parent=1 // pred_check
      _
    $region63: #{tpu_custom_call.1} parent=1 // pred_check_branch
      %158 = sbr.rel (0) target = $region65
    $region64: #{tpu_custom_call.1} parent=1 // pred_region
      %160 = dma.done [#allocation7], 64
    $region65: #{tpu_custom_call.1} parent=1 // pred_fallthru
      _
    // Predicated region
    $region66: #{tpu_custom_call.1} parent=1 // pred_check
      _
    $region67: #{tpu_custom_call.1} parent=1 // pred_check_branch
      %162 = sbr.rel (0) target = $region69
    $region68: #{tpu_custom_call.1} parent=1 // pred_region
      %164 = dma.done [#allocation7], 8192
    $region69: #{tpu_custom_call.1} parent=1 // pred_fallthru
      _
    // Predicated region
    $region70: #{tpu_custom_call.1} parent=1 // pred_check
      _
    $region71: #{tpu_custom_call.1} parent=1 // pred_check_branch
      %166 = sbr.rel (0) target = $region73
    $region72: #{tpu_custom_call.1} parent=1 // pred_region
      %168 = dma.done [#allocation10], 16384
    $region73: #{tpu_custom_call.1} parent=1 // pred_fallthru
      _
    // Predicated region
    $region74: #{tpu_custom_call.1} parent=1 // pred_check
      _
    $region75: #{tpu_custom_call.1} parent=1 // pred_check_branch
      %170 = sbr.rel (0) target = $region77
    $region76: #{tpu_custom_call.1} parent=1 // pred_region
      %172 = dma.done [#allocation10], 64
    $region77: #{tpu_custom_call.1} parent=1 // pred_fallthru
      _
    // Predicated region
    $region78: #{tpu_custom_call.1} parent=1 // pred_check
      _
    $region79: #{tpu_custom_call.1} parent=1 // pred_check_branch
      %174 = sbr.rel (0) target = $region81
    $region80: #{tpu_custom_call.1} parent=1 // pred_region
      %176 = dma.done [#allocation13], 49152
    $region81: #{tpu_custom_call.1} parent=1 // pred_fallthru
      _
    // Predicated region
    $region82: #{tpu_custom_call.1} parent=1 // pred_check
      _
    $region83: #{tpu_custom_call.1} parent=1 // pred_check_branch
      %178 = sbr.rel (0) target = $region85
    $region84: #{tpu_custom_call.1} parent=1 // pred_region
      %180 = dma.done [#allocation13], 128
    $region85: #{tpu_custom_call.1} parent=1 // pred_fallthru
      _
    // Predicated region
    $region86: #{tpu_custom_call.1} parent=1 // pred_check
      _
    $region87: #{tpu_custom_call.1} parent=1 // pred_check_branch
      %182 = sbr.rel (0) target = $region89
    $region88: #{tpu_custom_call.1} parent=1 // pred_region
      %184 = dma.done [#allocation16], 4096
    $region89: #{tpu_custom_call.1} parent=1 // pred_fallthru
      _
    // Predicated region
    $region90: #{tpu_custom_call.1} parent=1 // pred_check
      _
    $region91: #{tpu_custom_call.1} parent=1 // pred_check_branch
      %186 = sbr.rel (0) target = $region93
    $region92: #{tpu_custom_call.1} parent=1 // pred_region
      %188 = dma.done [#allocation16], 16
    $region93: #{tpu_custom_call.1} parent=1 // pred_fallthru
      _
    // Predicated region
    $region94: #{tpu_custom_call.1} parent=1 // pred_check
      _
    $region95: #{tpu_custom_call.1} parent=1 // pred_check_branch
      %190 = sbr.rel (0) target = $region97
    $region96: #{tpu_custom_call.1} parent=1 // pred_region
      %192 = dma.done [#allocation19], 16
    $region97: #{tpu_custom_call.1} parent=1 // pred_fallthru
      _
    %v193 = vld [vmem:[%s0] sm:$0xff]
    %v194 = vld [vmem:[%s0 + $0x8] sm:$0xff]
    %v195 = vld [vmem:[%s0 + $0x10] sm:$0xff]
    %v196 = vld [vmem:[%s0 + $0x18] sm:$0xff]
    %v197 = vld [vmem:[%s0 + $0x20] sm:$0xff]
    %v198 = vld [vmem:[%s0 + $0x28] sm:$0xff]
    %v199 = vld [vmem:[%s0 + $0x30] sm:$0xff]
    %v200 = vld [vmem:[%s0 + $0x38] sm:$0xff]
    %v201 = vld [vmem:[#allocation4] sm:$0x1f]
    %v202 = vld [vmem:[#allocation4 + $0x8] sm:$0x1f]
    %v203 = vld [vmem:[#allocation4 + $0x10] sm:$0x1f]
    %v204 = vld [vmem:[#allocation4 + $0x18] sm:$0x1f]
    %v205 = vld [vmem:[#allocation6] sm:$0xf]
    %v207 = vperm.slane %v205, 0
    %v208 = vperm.slane %v205, 1
    %v209 = vperm.slane %v205, 2
    %v210 = vperm.slane %v205, 3
    %vm215 = vcmask 39936
    %v217 = vsel %vm215, %v193, 0
    %v220 = vsel %vm215, %v194, 0
    %v223 = vsel %vm215, %v195, 0
    %v226 = vsel %vm215, %v196, 0
    %v229 = vsel %vm215, %v197, 0
    %v232 = vsel %vm215, %v198, 0
    %v235 = vsel %vm215, %v199, 0
    %v238 = vsel %vm215, %v200, 0
    %vm240 = vcmask 1044480
    %v242 = vsel %vm240, %v201, 0
    %v245 = vsel %vm240, %v202, 0
    %v248 = vsel %vm240, %v203, 0
    %v251 = vsel %vm240, %v204, 0
    %253 = vmatpush.msra.mxu0 0.0
    %254 = vmatpush.msra.mxu0 0.0
    %255 = vmatpush.msra.mxu0 0.0
    %256 = vmatpush.msra.mxu0 0.0
    %257 = vmatpush.msra.mxu0 0.0
    %258 = vmatpush.msra.mxu0 0.0
    %259 = vmatpush.msra.mxu0 0.0
    %260 = vmatpush.msra.mxu0 0.0
    %261 = vmatpush.msra.mxu0 0.0
    %262 = vmatpush.msra.mxu0 0.0
    %263 = vmatpush.msra.mxu0 0.0
    %264 = vmatpush.msra.mxu0 0.0
    %265 = vmatpush.msra.mxu0 0.0
    %266 = vmatpush.msra.mxu0 0.0
    %267 = vmatpush.msra.mxu0 0.0
    %268 = vmatpush.msra.mxu0 %v242
    %269 = vmatmul.f32.gmra.mxu0 %v217
    %v270 = vpop.f32.mrf.mxu0
    %v271 = vadd.f32 %v207, %v270
    %272 = vmatmul.f32.gmra.mxu0 %v220
    %v273 = vpop.f32.mrf.mxu0
    %v274 = vadd.f32 %v207, %v273
    %275 = vmatmul.f32.gmra.mxu0 %v223
    %v276 = vpop.f32.mrf.mxu0
    %v277 = vadd.f32 %v207, %v276
    %278 = vmatmul.f32.gmra.mxu0 %v226
    %v279 = vpop.f32.mrf.mxu0
    %v280 = vadd.f32 %v207, %v279
    %281 = vmatmul.f32.gmra.mxu0 %v229
    %v282 = vpop.f32.mrf.mxu0
    %v283 = vadd.f32 %v207, %v282
    %284 = vmatmul.f32.gmra.mxu0 %v232
    %v285 = vpop.f32.mrf.mxu0
    %v286 = vadd.f32 %v207, %v285
    %287 = vmatmul.f32.gmra.mxu0 %v235
    %v288 = vpop.f32.mrf.mxu0
    %v289 = vadd.f32 %v207, %v288
    %290 = vmatmul.f32.gmra.mxu0 %v238
    %v291 = vpop.f32.mrf.mxu0
    %v292 = vadd.f32 %v207, %v291
    %293 = vdwg.mxu0
    %294 = vmatpush.msra.mxu0 0.0
    %295 = vmatpush.msra.mxu0 0.0
    %296 = vmatpush.msra.mxu0 0.0
    %297 = vmatpush.msra.mxu0 0.0
    %298 = vmatpush.msra.mxu0 0.0
    %299 = vmatpush.msra.mxu0 0.0
    %300 = vmatpush.msra.mxu0 0.0
    %301 = vmatpush.msra.mxu0 0.0
    %302 = vmatpush.msra.mxu0 0.0
    %303 = vmatpush.msra.mxu0 0.0
    %304 = vmatpush.msra.mxu0 0.0
    %305 = vmatpush.msra.mxu0 0.0
    %306 = vmatpush.msra.mxu0 0.0
    %307 = vmatpush.msra.mxu0 0.0
    %308 = vmatpush.msra.mxu0 0.0
    %309 = vmatpush.msra.mxu0 %v245
    %310 = vmatmul.f32.gmra.mxu0 %v217
    %v311 = vpop.f32.mrf.mxu0
    %v312 = vadd.f32 %v208, %v311
    %313 = vmatmul.f32.gmra.mxu0 %v220
    %v314 = vpop.f32.mrf.mxu0
    %v315 = vadd.f32 %v208, %v314
    %316 = vmatmul.f32.gmra.mxu0 %v223
    %v317 = vpop.f32.mrf.mxu0
    %v318 = vadd.f32 %v208, %v317
    %319 = vmatmul.f32.gmra.mxu0 %v226
    %v320 = vpop.f32.mrf.mxu0
    %v321 = vadd.f32 %v208, %v320
    %322 = vmatmul.f32.gmra.mxu0 %v229
    %v323 = vpop.f32.mrf.mxu0
    %v324 = vadd.f32 %v208, %v323
    %325 = vmatmul.f32.gmra.mxu0 %v232
    %v326 = vpop.f32.mrf.mxu0
    %v327 = vadd.f32 %v208, %v326
    %328 = vmatmul.f32.gmra.mxu0 %v235
    %v329 = vpop.f32.mrf.mxu0
    %v330 = vadd.f32 %v208, %v329
    %331 = vmatmul.f32.gmra.mxu0 %v238
    %v332 = vpop.f32.mrf.mxu0
    %v333 = vadd.f32 %v208, %v332
    %334 = vdwg.mxu0
    %335 = vmatpush.msra.mxu0 0.0
    %336 = vmatpush.msra.mxu0 0.0
    %337 = vmatpush.msra.mxu0 0.0
    %338 = vmatpush.msra.mxu0 0.0
    %339 = vmatpush.msra.mxu0 0.0
    %340 = vmatpush.msra.mxu0 0.0
    %341 = vmatpush.msra.mxu0 0.0
    %342 = vmatpush.msra.mxu0 0.0
    %343 = vmatpush.msra.mxu0 0.0
    %344 = vmatpush.msra.mxu0 0.0
    %345 = vmatpush.msra.mxu0 0.0
    %346 = vmatpush.msra.mxu0 0.0
    %347 = vmatpush.msra.mxu0 0.0
    %348 = vmatpush.msra.mxu0 0.0
    %349 = vmatpush.msra.mxu0 0.0
    %350 = vmatpush.msra.mxu0 %v248
    %351 = vmatmul.f32.gmra.mxu0 %v217
    %v352 = vpop.f32.mrf.mxu0
    %v353 = vadd.f32 %v209, %v352
    %354 = vmatmul.f32.gmra.mxu0 %v220
    %v355 = vpop.f32.mrf.mxu0
    %v356 = vadd.f32 %v209, %v355
    %357 = vmatmul.f32.gmra.mxu0 %v223
    %v358 = vpop.f32.mrf.mxu0
    %v359 = vadd.f32 %v209, %v358
    %360 = vmatmul.f32.gmra.mxu0 %v226
    %v361 = vpop.f32.mrf.mxu0
    %v362 = vadd.f32 %v209, %v361
    %363 = vmatmul.f32.gmra.mxu0 %v229
    %v364 = vpop.f32.mrf.mxu0
    %v365 = vadd.f32 %v209, %v364
    %366 = vmatmul.f32.gmra.mxu0 %v232
    %v367 = vpop.f32.mrf.mxu0
    %v368 = vadd.f32 %v209, %v367
    %369 = vmatmul.f32.gmra.mxu0 %v235
    %v370 = vpop.f32.mrf.mxu0
    %v371 = vadd.f32 %v209, %v370
    %372 = vmatmul.f32.gmra.mxu0 %v238
    %v373 = vpop.f32.mrf.mxu0
    %v374 = vadd.f32 %v209, %v373
    %375 = vdwg.mxu0
    %376 = vmatpush.msra.mxu0 0.0
    %377 = vmatpush.msra.mxu0 0.0
    %378 = vmatpush.msra.mxu0 0.0
    %379 = vmatpush.msra.mxu0 0.0
    %380 = vmatpush.msra.mxu0 0.0
    %381 = vmatpush.msra.mxu0 0.0
    %382 = vmatpush.msra.mxu0 0.0
    %383 = vmatpush.msra.mxu0 0.0
    %384 = vmatpush.msra.mxu0 0.0
    %385 = vmatpush.msra.mxu0 0.0
    %386 = vmatpush.msra.mxu0 0.0
    %387 = vmatpush.msra.mxu0 0.0
    %388 = vmatpush.msra.mxu0 0.0
    %389 = vmatpush.msra.mxu0 0.0
    %390 = vmatpush.msra.mxu0 0.0
    %391 = vmatpush.msra.mxu0 %v251
    %392 = vmatmul.f32.gmra.mxu0 %v217
    %v393 = vpop.f32.mrf.mxu0
    %v394 = vadd.f32 %v210, %v393
    %395 = vmatmul.f32.gmra.mxu0 %v220
    %v396 = vpop.f32.mrf.mxu0
    %v397 = vadd.f32 %v210, %v396
    %398 = vmatmul.f32.gmra.mxu0 %v223
    %v399 = vpop.f32.mrf.mxu0
    %v400 = vadd.f32 %v210, %v399
    %401 = vmatmul.f32.gmra.mxu0 %v226
    %v402 = vpop.f32.mrf.mxu0
    %v403 = vadd.f32 %v210, %v402
    %404 = vmatmul.f32.gmra.mxu0 %v229
    %v405 = vpop.f32.mrf.mxu0
    %v406 = vadd.f32 %v210, %v405
    %407 = vmatmul.f32.gmra.mxu0 %v232
    %v408 = vpop.f32.mrf.mxu0
    %v409 = vadd.f32 %v210, %v408
    %410 = vmatmul.f32.gmra.mxu0 %v235
    %v411 = vpop.f32.mrf.mxu0
    %v412 = vadd.f32 %v210, %v411
    %413 = vmatmul.f32.gmra.mxu0 %v238
    %v414 = vpop.f32.mrf.mxu0
    %v415 = vadd.f32 %v210, %v414
    %416 = vdwg.mxu0
    %417 = vst [vmem:[#allocation2] sm:$0xff] %v271
    %418 = vst [vmem:[#allocation2 + $0x8] sm:$0xff] %v312
    %419 = vst [vmem:[#allocation2 + $0x10] sm:$0xff] %v353
    %420 = vst [vmem:[#allocation2 + $0x18] sm:$0xff] %v394
    %421 = vst [vmem:[#allocation2 + $0x20] sm:$0xff] %v274
    %422 = vst [vmem:[#allocation2 + $0x28] sm:$0xff] %v315
    %423 = vst [vmem:[#allocation2 + $0x30] sm:$0xff] %v356
    %424 = vst [vmem:[#allocation2 + $0x38] sm:$0xff] %v397
    %425 = vst [vmem:[#allocation2 + $0x40] sm:$0xff] %v277
    %426 = vst [vmem:[#allocation2 + $0x48] sm:$0xff] %v318
    %427 = vst [vmem:[#allocation2 + $0x50] sm:$0xff] %v359
    %428 = vst [vmem:[#allocation2 + $0x58] sm:$0xff] %v400
    %429 = vst [vmem:[#allocation2 + $0x60] sm:$0xff] %v280
    %430 = vst [vmem:[#allocation2 + $0x68] sm:$0xff] %v321
    %431 = vst [vmem:[#allocation2 + $0x70] sm:$0xff] %v362
    %432 = vst [vmem:[#allocation2 + $0x78] sm:$0xff] %v403
    %433 = vst [vmem:[#allocation2 + $0x80] sm:$0xff] %v283
    %434 = vst [vmem:[#allocation2 + $0x88] sm:$0xff] %v324
    %435 = vst [vmem:[#allocation2 + $0x90] sm:$0xff] %v365
    %436 = vst [vmem:[#allocation2 + $0x98] sm:$0xff] %v406
    %437 = vst [vmem:[#allocation2 + $0xa0] sm:$0xff] %v286
    %438 = vst [vmem:[#allocation2 + $0xa8] sm:$0xff] %v327
    %439 = vst [vmem:[#allocation2 + $0xb0] sm:$0xff] %v368
    %440 = vst [vmem:[#allocation2 + $0xb8] sm:$0xff] %v409
    %441 = vst [vmem:[#allocation2 + $0xc0] sm:$0xff] %v289
    %442 = vst [vmem:[#allocation2 + $0xc8] sm:$0xff] %v330
    %443 = vst [vmem:[#allocation2 + $0xd0] sm:$0xff] %v371
    %444 = vst [vmem:[#allocation2 + $0xd8] sm:$0xff] %v412
    %445 = vst [vmem:[#allocation2 + $0xe0] sm:$0xff] %v292
    %446 = vst [vmem:[#allocation2 + $0xe8] sm:$0xff] %v333
    %447 = vst [vmem:[#allocation2 + $0xf0] sm:$0xff] %v374
    %448 = vst [vmem:[#allocation2 + $0xf8] sm:$0xff] %v415
    %v449 = vld [vmem:[#allocation11] sm:$0xf]
    %v451 = vperm.slane %v449, 0
    %v452 = vperm.slane %v449, 1
    %v453 = vperm.slane %v449, 2
    %v454 = vperm.slane %v449, 3
    %v459 = vld [vmem:[#allocation14] sm:$0xff]
    %v461 = vperm.slane %v459, 0
    %v462 = vperm.slane %v459, 1
    %v463 = vperm.slane %v459, 2
    %v464 = vperm.slane %v459, 3
    %v465 = vperm.slane %v459, 4
    %v466 = vperm.slane %v459, 5
    %v467 = vperm.slane %v459, 6
    %v468 = vperm.slane %v459, 7
    %s477 = smul.u32 0, 4
    %s478 = smul.addr %s477, 8
    %s479 = scalar_lea.vmem [#allocation2], %s478
    %v480 = vld [vmem:[%s479] sm:$0xff]
    %v481 = vld [vmem:[%s479 + $0x8] sm:$0xff]
    %v482 = vld [vmem:[%s479 + $0x10] sm:$0xff]
    %v483 = vld [vmem:[%s479 + $0x18] sm:$0xff]
    %v484 = vld [vmem:[#allocation8] sm:$0xff]
    %v485 = vld [vmem:[#allocation8 + $0x8] sm:$0xff]
    %v486 = vld [vmem:[#allocation8 + $0x10] sm:$0xff]
    %v487 = vld [vmem:[#allocation8 + $0x18] sm:$0xff]
    %v488 = vld [vmem:[#allocation8 + $0x20] sm:$0xff]
    %v489 = vld [vmem:[#allocation8 + $0x28] sm:$0xff]
    %v490 = vld [vmem:[#allocation8 + $0x30] sm:$0xff]
    %v491 = vld [vmem:[#allocation8 + $0x38] sm:$0xff]
    %v492 = vld [vmem:[#allocation8 + $0x40] sm:$0xff]
    %v493 = vld [vmem:[#allocation8 + $0x48] sm:$0xff]
    %v494 = vld [vmem:[#allocation8 + $0x50] sm:$0xff]
    %v495 = vld [vmem:[#allocation8 + $0x58] sm:$0xff]
    %v496 = vld [vmem:[#allocation8 + $0x60] sm:$0xff]
    %v497 = vld [vmem:[#allocation8 + $0x68] sm:$0xff]
    %v498 = vld [vmem:[#allocation8 + $0x70] sm:$0xff]
    %v499 = vld [vmem:[#allocation8 + $0x78] sm:$0xff]
    %v500 = vld [vmem:[#allocation8 + $0x80] sm:$0xff]
    %v501 = vld [vmem:[#allocation8 + $0x88] sm:$0xff]
    %v502 = vld [vmem:[#allocation8 + $0x90] sm:$0xff]
    %v503 = vld [vmem:[#allocation8 + $0x98] sm:$0xff]
    %v504 = vld [vmem:[#allocation8 + $0xa0] sm:$0xff]
    %v505 = vld [vmem:[#allocation8 + $0xa8] sm:$0xff]
    %v506 = vld [vmem:[#allocation8 + $0xb0] sm:$0xff]
    %v507 = vld [vmem:[#allocation8 + $0xb8] sm:$0xff]
    %v508 = vld [vmem:[#allocation8 + $0xc0] sm:$0xff]
    %v509 = vld [vmem:[#allocation8 + $0xc8] sm:$0xff]
    %v510 = vld [vmem:[#allocation8 + $0xd0] sm:$0xff]
    %v511 = vld [vmem:[#allocation8 + $0xd8] sm:$0xff]
    %v512 = vld [vmem:[#allocation8 + $0xe0] sm:$0xff]
    %v513 = vld [vmem:[#allocation8 + $0xe8] sm:$0xff]
    %v514 = vld [vmem:[#allocation8 + $0xf0] sm:$0xff]
    %v515 = vld [vmem:[#allocation8 + $0xf8] sm:$0xff]
    %v516 = vld [vmem:[#allocation8 + $0x100] sm:$0xff]
    %v517 = vld [vmem:[#allocation8 + $0x108] sm:$0xff]
    %v518 = vld [vmem:[#allocation8 + $0x110] sm:$0xff]
    %v519 = vld [vmem:[#allocation8 + $0x118] sm:$0xff]
    %v520 = vld [vmem:[#allocation8 + $0x120] sm:$0xff]
    %v521 = vld [vmem:[#allocation8 + $0x128] sm:$0xff]
    %v522 = vld [vmem:[#allocation8 + $0x130] sm:$0xff]
    %v523 = vld [vmem:[#allocation8 + $0x138] sm:$0xff]
    %v524 = vld [vmem:[#allocation8 + $0x140] sm:$0xff]
    %v525 = vld [vmem:[#allocation8 + $0x148] sm:$0xff]
    %v526 = vld [vmem:[#allocation8 + $0x150] sm:$0xff]
    %v527 = vld [vmem:[#allocation8 + $0x158] sm:$0xff]
    %v528 = vld [vmem:[#allocation8 + $0x160] sm:$0xff]
    %v529 = vld [vmem:[#allocation8 + $0x168] sm:$0xff]
    %v530 = vld [vmem:[#allocation8 + $0x170] sm:$0xff]
    %v531 = vld [vmem:[#allocation8 + $0x178] sm:$0xff]
    %v532 = vld [vmem:[#allocation8 + $0x180] sm:$0xff]
    %v533 = vld [vmem:[#allocation8 + $0x188] sm:$0xff]
    %v534 = vld [vmem:[#allocation8 + $0x190] sm:$0xff]
    %v535 = vld [vmem:[#allocation8 + $0x198] sm:$0xff]
    %v536 = vld [vmem:[#allocation8 + $0x1a0] sm:$0xff]
    %v537 = vld [vmem:[#allocation8 + $0x1a8] sm:$0xff]
    %v538 = vld [vmem:[#allocation8 + $0x1b0] sm:$0xff]
    %v539 = vld [vmem:[#allocation8 + $0x1b8] sm:$0xff]
    %v540 = vld [vmem:[#allocation8 + $0x1c0] sm:$0xff]
    %v541 = vld [vmem:[#allocation8 + $0x1c8] sm:$0xff]
    %v542 = vld [vmem:[#allocation8 + $0x1d0] sm:$0xff]
    %v543 = vld [vmem:[#allocation8 + $0x1d8] sm:$0xff]
    %v544 = vld [vmem:[#allocation8 + $0x1e0] sm:$0xff]
    %v545 = vld [vmem:[#allocation8 + $0x1e8] sm:$0xff]
    %v546 = vld [vmem:[#allocation8 + $0x1f0] sm:$0xff]
    %v547 = vld [vmem:[#allocation8 + $0x1f8] sm:$0xff]
    %548 = vmatpush.msra.mxu0 %v544
    %549 = vmatpush.msra.mxu0 %v540
    %550 = vmatpush.msra.mxu0 %v536
    %551 = vmatpush.msra.mxu0 %v532
    %552 = vmatpush.msra.mxu0 %v528
    %553 = vmatpush.msra.mxu0 %v524
    %554 = vmatpush.msra.mxu0 %v520
    %555 = vmatpush.msra.mxu0 %v516
    %556 = vmatpush.msra.mxu0 %v512
    %557 = vmatpush.msra.mxu0 %v508
    %558 = vmatpush.msra.mxu0 %v504
    %559 = vmatpush.msra.mxu0 %v500
    %560 = vmatpush.msra.mxu0 %v496
    %561 = vmatpush.msra.mxu0 %v492
    %562 = vmatpush.msra.mxu0 %v488
    %563 = vmatpush.msra.mxu0 %v484
    %564 = vmatmul.f32.gmra.mxu0 0.0
    %v565 = vpop.f32.mrf.mxu0
    %v566 = vadd.f32 0.0, %v565
    %567 = vdwg.mxu0
    %568 = vmatpush.msra.mxu0 %v545
    %569 = vmatpush.msra.mxu0 %v541
    %570 = vmatpush.msra.mxu0 %v537
    %571 = vmatpush.msra.mxu0 %v533
    %572 = vmatpush.msra.mxu0 %v529
    %573 = vmatpush.msra.mxu0 %v525
    %574 = vmatpush.msra.mxu0 %v521
    %575 = vmatpush.msra.mxu0 %v517
    %576 = vmatpush.msra.mxu0 %v513
    %577 = vmatpush.msra.mxu0 %v509
    %578 = vmatpush.msra.mxu0 %v505
    %579 = vmatpush.msra.mxu0 %v501
    %580 = vmatpush.msra.mxu0 %v497
    %581 = vmatpush.msra.mxu0 %v493
    %582 = vmatpush.msra.mxu0 %v489
    %583 = vmatpush.msra.mxu0 %v485
    %584 = vmatmul.f32.gmra.mxu0 0.0
    %v585 = vpop.f32.mrf.mxu0
    %v586 = vadd.f32 0.0, %v585
    %587 = vdwg.mxu0
    %588 = vmatpush.msra.mxu0 %v546
    %589 = vmatpush.msra.mxu0 %v542
    %590 = vmatpush.msra.mxu0 %v538
    %591 = vmatpush.msra.mxu0 %v534
    %592 = vmatpush.msra.mxu0 %v530
    %593 = vmatpush.msra.mxu0 %v526
    %594 = vmatpush.msra.mxu0 %v522
    %595 = vmatpush.msra.mxu0 %v518
    %596 = vmatpush.msra.mxu0 %v514
    %597 = vmatpush.msra.mxu0 %v510
    %598 = vmatpush.msra.mxu0 %v506
    %599 = vmatpush.msra.mxu0 %v502
    %600 = vmatpush.msra.mxu0 %v498
    %601 = vmatpush.msra.mxu0 %v494
    %602 = vmatpush.msra.mxu0 %v490
    %603 = vmatpush.msra.mxu0 %v486
    %604 = vmatmul.f32.gmra.mxu0 0.0
    %v605 = vpop.f32.mrf.mxu0
    %v606 = vadd.f32 0.0, %v605
    %607 = vdwg.mxu0
    %608 = vmatpush.msra.mxu0 %v547
    %609 = vmatpush.msra.mxu0 %v543
    %610 = vmatpush.msra.mxu0 %v539
    %611 = vmatpush.msra.mxu0 %v535
    %612 = vmatpush.msra.mxu0 %v531
    %613 = vmatpush.msra.mxu0 %v527
    %614 = vmatpush.msra.mxu0 %v523
    %615 = vmatpush.msra.mxu0 %v519
    %616 = vmatpush.msra.mxu0 %v515
    %617 = vmatpush.msra.mxu0 %v511
    %618 = vmatpush.msra.mxu0 %v507
    %619 = vmatpush.msra.mxu0 %v503
    %620 = vmatpush.msra.mxu0 %v499
    %621 = vmatpush.msra.mxu0 %v495
    %622 = vmatpush.msra.mxu0 %v491
    %623 = vmatpush.msra.mxu0 %v487
    %624 = vmatmul.f32.gmra.mxu0 0.0
    %v625 = vpop.f32.mrf.mxu0
    %v626 = vadd.f32 0.0, %v625
    %627 = vdwg.mxu0
    %v628 = vadd.f32 %v480, %v566
    %v629 = vadd.f32 %v481, %v586
    %v630 = vadd.f32 %v482, %v606
    %v631 = vadd.f32 %v483, %v626
    %v632 = vxor.u32 %v628, 2147483648
    %v633 = vmul.f32 %v632, 1.442695
    %v634 = vpow.pop %v633
    %v635 = vadd.f32 %v634, 1.0
    %v636 = vrcp.pop %v635
    %v637 = vmul.f32 %v635, %v636
    %v638 = vsub.f32 1.0, %v637
    %v639 = vmul.f32 %v636, %v638
    %v640 = vadd.f32 %v636, %v639
    %vm641 = vweird.f32 %v635
    %vm642 = vweird.f32 %v636
    %vm643 = vmor %vm641, %vm642
    %v644 = vsel %vm643, %v636, %v640
    %v645 = vand.u32 2147483647, %v635
    %vm646 = vcmp.eq.f32.partialorder %v645, 8.507059e+37
    %v647 = vand.u32 %v635, 2147483648
    %v648 = vor.u32 1.1754944e-38, %v647
    %v649 = vsel %vm646, %v648, %v644
    %v650 = vmul.f32 1.0, %v649
    %v651 = vxor.u32 %v629, 2147483648
    %v652 = vmul.f32 %v651, 1.442695
    %v653 = vpow.pop %v652
    %v654 = vadd.f32 %v653, 1.0
    %v655 = vrcp.pop %v654
    %v656 = vmul.f32 %v654, %v655
    %v657 = vsub.f32 1.0, %v656
    %v658 = vmul.f32 %v655, %v657
    %v659 = vadd.f32 %v655, %v658
    %vm660 = vweird.f32 %v654
    %vm661 = vweird.f32 %v655
    %vm662 = vmor %vm660, %vm661
    %v663 = vsel %vm662, %v655, %v659
    %v664 = vand.u32 2147483647, %v654
    %vm665 = vcmp.eq.f32.partialorder %v664, 8.507059e+37
    %v666 = vand.u32 %v654, 2147483648
    %v667 = vor.u32 1.1754944e-38, %v666
    %v668 = vsel %vm665, %v667, %v663
    %v669 = vmul.f32 1.0, %v668
    %v670 = vtanh.pop %v630
    %v671 = vxor.u32 %v631, 2147483648
    %v672 = vmul.f32 %v671, 1.442695
    %v673 = vpow.pop %v672
    %v674 = vadd.f32 %v673, 1.0
    %v675 = vrcp.pop %v674
    %v676 = vmul.f32 %v674, %v675
    %v677 = vsub.f32 1.0, %v676
    %v678 = vmul.f32 %v675, %v677
    %v679 = vadd.f32 %v675, %v678
    %vm680 = vweird.f32 %v674
    %vm681 = vweird.f32 %v675
    %vm682 = vmor %vm680, %vm681
    %v683 = vsel %vm682, %v675, %v679
    %v684 = vand.u32 2147483647, %v674
    %vm685 = vcmp.eq.f32.partialorder %v684, 8.507059e+37
    %v686 = vand.u32 %v674, 2147483648
    %v687 = vor.u32 1.1754944e-38, %v686
    %v688 = vsel %vm685, %v687, %v683
    %v689 = vmul.f32 1.0, %v688
    %v690 = vmul.f32 %v669, 0.0
    %v691 = vmul.f32 %v650, %v670
    %v692 = vadd.f32 %v690, %v691
    %v693 = vtanh.pop %v692
    %v694 = vmul.f32 %v689, %v693
    %v695 = vld [vmem:[#allocation9] sm:$0xff]
    %v696 = vld [vmem:[#allocation9 + $0x8] sm:$0xff]
    %v697 = vld [vmem:[#allocation9 + $0x10] sm:$0xff]
    %v698 = vld [vmem:[#allocation9 + $0x18] sm:$0xff]
    %v699 = vld [vmem:[#allocation9 + $0x20] sm:$0xff]
    %v700 = vld [vmem:[#allocation9 + $0x28] sm:$0xff]
    %v701 = vld [vmem:[#allocation9 + $0x30] sm:$0xff]
    %v702 = vld [vmem:[#allocation9 + $0x38] sm:$0xff]
    %v703 = vld [vmem:[#allocation9 + $0x40] sm:$0xff]
    %v704 = vld [vmem:[#allocation9 + $0x48] sm:$0xff]
    %v705 = vld [vmem:[#allocation9 + $0x50] sm:$0xff]
    %v706 = vld [vmem:[#allocation9 + $0x58] sm:$0xff]
    %v707 = vld [vmem:[#allocation9 + $0x60] sm:$0xff]
    %v708 = vld [vmem:[#allocation9 + $0x68] sm:$0xff]
    %v709 = vld [vmem:[#allocation9 + $0x70] sm:$0xff]
    %v710 = vld [vmem:[#allocation9 + $0x78] sm:$0xff]
    %v711 = vld [vmem:[#allocation9 + $0x80] sm:$0xff]
    %v712 = vld [vmem:[#allocation9 + $0x88] sm:$0xff]
    %v713 = vld [vmem:[#allocation9 + $0x90] sm:$0xff]
    %v714 = vld [vmem:[#allocation9 + $0x98] sm:$0xff]
    %v715 = vld [vmem:[#allocation9 + $0xa0] sm:$0xff]
    %v716 = vld [vmem:[#allocation9 + $0xa8] sm:$0xff]
    %v717 = vld [vmem:[#allocation9 + $0xb0] sm:$0xff]
    %v718 = vld [vmem:[#allocation9 + $0xb8] sm:$0xff]
    %v719 = vld [vmem:[#allocation9 + $0xc0] sm:$0xff]
    %v720 = vld [vmem:[#allocation9 + $0xc8] sm:$0xff]
    %v721 = vld [vmem:[#allocation9 + $0xd0] sm:$0xff]
    %v722 = vld [vmem:[#allocation9 + $0xd8] sm:$0xff]
    %v723 = vld [vmem:[#allocation9 + $0xe0] sm:$0xff]
    %v724 = vld [vmem:[#allocation9 + $0xe8] sm:$0xff]
    %v725 = vld [vmem:[#allocation9 + $0xf0] sm:$0xff]
    %v726 = vld [vmem:[#allocation9 + $0xf8] sm:$0xff]
    %v727 = vld [vmem:[#allocation9 + $0x100] sm:$0xff]
    %v728 = vld [vmem:[#allocation9 + $0x108] sm:$0xff]
    %v729 = vld [vmem:[#allocation9 + $0x110] sm:$0xff]
    %v730 = vld [vmem:[#allocation9 + $0x118] sm:$0xff]
    %v731 = vld [vmem:[#allocation9 + $0x120] sm:$0xff]
    %v732 = vld [vmem:[#allocation9 + $0x128] sm:$0xff]
    %v733 = vld [vmem:[#allocation9 + $0x130] sm:$0xff]
    %v734 = vld [vmem:[#allocation9 + $0x138] sm:$0xff]
    %v735 = vld [vmem:[#allocation9 + $0x140] sm:$0xff]
    %v736 = vld [vmem:[#allocation9 + $0x148] sm:$0xff]
    %v737 = vld [vmem:[#allocation9 + $0x150] sm:$0xff]
    %v738 = vld [vmem:[#allocation9 + $0x158] sm:$0xff]
    %v739 = vld [vmem:[#allocation9 + $0x160] sm:$0xff]
    %v740 = vld [vmem:[#allocation9 + $0x168] sm:$0xff]
    %v741 = vld [vmem:[#allocation9 + $0x170] sm:$0xff]
    %v742 = vld [vmem:[#allocation9 + $0x178] sm:$0xff]
    %v743 = vld [vmem:[#allocation9 + $0x180] sm:$0xff]
    %v744 = vld [vmem:[#allocation9 + $0x188] sm:$0xff]
    %v745 = vld [vmem:[#allocation9 + $0x190] sm:$0xff]
    %v746 = vld [vmem:[#allocation9 + $0x198] sm:$0xff]
    %v747 = vld [vmem:[#allocation9 + $0x1a0] sm:$0xff]
    %v748 = vld [vmem:[#allocation9 + $0x1a8] sm:$0xff]
    %v749 = vld [vmem:[#allocation9 + $0x1b0] sm:$0xff]
    %v750 = vld [vmem:[#allocation9 + $0x1b8] sm:$0xff]
    %v751 = vld [vmem:[#allocation9 + $0x1c0] sm:$0xff]
    %v752 = vld [vmem:[#allocation9 + $0x1c8] sm:$0xff]
    %v753 = vld [vmem:[#allocation9 + $0x1d0] sm:$0xff]
    %v754 = vld [vmem:[#allocation9 + $0x1d8] sm:$0xff]
    %v755 = vld [vmem:[#allocation9 + $0x1e0] sm:$0xff]
    %v756 = vld [vmem:[#allocation9 + $0x1e8] sm:$0xff]
    %v757 = vld [vmem:[#allocation9 + $0x1f0] sm:$0xff]
    %v758 = vld [vmem:[#allocation9 + $0x1f8] sm:$0xff]
    %v759 = vld [vmem:[#allocation9 + $0x200] sm:$0xff]
    %v760 = vld [vmem:[#allocation9 + $0x208] sm:$0xff]
    %v761 = vld [vmem:[#allocation9 + $0x210] sm:$0xff]
    %v762 = vld [vmem:[#allocation9 + $0x218] sm:$0xff]
    %v763 = vld [vmem:[#allocation9 + $0x220] sm:$0xff]
    %v764 = vld [vmem:[#allocation9 + $0x228] sm:$0xff]
    %v765 = vld [vmem:[#allocation9 + $0x230] sm:$0xff]
    %v766 = vld [vmem:[#allocation9 + $0x238] sm:$0xff]
    %v767 = vld [vmem:[#allocation9 + $0x240] sm:$0xff]
    %v768 = vld [vmem:[#allocation9 + $0x248] sm:$0xff]
    %v769 = vld [vmem:[#allocation9 + $0x250] sm:$0xff]
    %v770 = vld [vmem:[#allocation9 + $0x258] sm:$0xff]
    %v771 = vld [vmem:[#allocation9 + $0x260] sm:$0xff]
    %v772 = vld [vmem:[#allocation9 + $0x268] sm:$0xff]
    %v773 = vld [vmem:[#allocation9 + $0x270] sm:$0xff]
    %v774 = vld [vmem:[#allocation9 + $0x278] sm:$0xff]
    %v775 = vld [vmem:[#allocation9 + $0x280] sm:$0xff]
    %v776 = vld [vmem:[#allocation9 + $0x288] sm:$0xff]
    %v777 = vld [vmem:[#allocation9 + $0x290] sm:$0xff]
    %v778 = vld [vmem:[#allocation9 + $0x298] sm:$0xff]
    %v779 = vld [vmem:[#allocation9 + $0x2a0] sm:$0xff]
    %v780 = vld [vmem:[#allocation9 + $0x2a8] sm:$0xff]
    %v781 = vld [vmem:[#allocation9 + $0x2b0] sm:$0xff]
    %v782 = vld [vmem:[#allocation9 + $0x2b8] sm:$0xff]
    %v783 = vld [vmem:[#allocation9 + $0x2c0] sm:$0xff]
    %v784 = vld [vmem:[#allocation9 + $0x2c8] sm:$0xff]
    %v785 = vld [vmem:[#allocation9 + $0x2d0] sm:$0xff]
    %v786 = vld [vmem:[#allocation9 + $0x2d8] sm:$0xff]
    %v787 = vld [vmem:[#allocation9 + $0x2e0] sm:$0xff]
    %v788 = vld [vmem:[#allocation9 + $0x2e8] sm:$0xff]
    %v789 = vld [vmem:[#allocation9 + $0x2f0] sm:$0xff]
    %v790 = vld [vmem:[#allocation9 + $0x2f8] sm:$0xff]
    %v791 = vld [vmem:[#allocation9 + $0x300] sm:$0xff]
    %v792 = vld [vmem:[#allocation9 + $0x308] sm:$0xff]
    %v793 = vld [vmem:[#allocation9 + $0x310] sm:$0xff]
    %v794 = vld [vmem:[#allocation9 + $0x318] sm:$0xff]
    %v795 = vld [vmem:[#allocation9 + $0x320] sm:$0xff]
    %v796 = vld [vmem:[#allocation9 + $0x328] sm:$0xff]
    %v797 = vld [vmem:[#allocation9 + $0x330] sm:$0xff]
    %v798 = vld [vmem:[#allocation9 + $0x338] sm:$0xff]
    %v799 = vld [vmem:[#allocation9 + $0x340] sm:$0xff]
    %v800 = vld [vmem:[#allocation9 + $0x348] sm:$0xff]
    %v801 = vld [vmem:[#allocation9 + $0x350] sm:$0xff]
    %v802 = vld [vmem:[#allocation9 + $0x358] sm:$0xff]
    %v803 = vld [vmem:[#allocation9 + $0x360] sm:$0xff]
    %v804 = vld [vmem:[#allocation9 + $0x368] sm:$0xff]
    %v805 = vld [vmem:[#allocation9 + $0x370] sm:$0xff]
    %v806 = vld [vmem:[#allocation9 + $0x378] sm:$0xff]
    %v807 = vld [vmem:[#allocation9 + $0x380] sm:$0xff]
    %v808 = vld [vmem:[#allocation9 + $0x388] sm:$0xff]
    %v809 = vld [vmem:[#allocation9 + $0x390] sm:$0xff]
    %v810 = vld [vmem:[#allocation9 + $0x398] sm:$0xff]
    %v811 = vld [vmem:[#allocation9 + $0x3a0] sm:$0xff]
    %v812 = vld [vmem:[#allocation9 + $0x3a8] sm:$0xff]
    %v813 = vld [vmem:[#allocation9 + $0x3b0] sm:$0xff]
    %v814 = vld [vmem:[#allocation9 + $0x3b8] sm:$0xff]
    %v815 = vld [vmem:[#allocation9 + $0x3c0] sm:$0xff]
    %v816 = vld [vmem:[#allocation9 + $0x3c8] sm:$0xff]
    %v817 = vld [vmem:[#allocation9 + $0x3d0] sm:$0xff]
    %v818 = vld [vmem:[#allocation9 + $0x3d8] sm:$0xff]
    %v819 = vld [vmem:[#allocation9 + $0x3e0] sm:$0xff]
    %v820 = vld [vmem:[#allocation9 + $0x3e8] sm:$0xff]
    %v821 = vld [vmem:[#allocation9 + $0x3f0] sm:$0xff]
    %v822 = vld [vmem:[#allocation9 + $0x3f8] sm:$0xff]
    %823 = vmatpush.msra.mxu0 %v755
    %824 = vmatpush.msra.mxu0 %v751
    %825 = vmatpush.msra.mxu0 %v747
    %826 = vmatpush.msra.mxu0 %v743
    %827 = vmatpush.msra.mxu0 %v739
    %828 = vmatpush.msra.mxu0 %v735
    %829 = vmatpush.msra.mxu0 %v731
    %830 = vmatpush.msra.mxu0 %v727
    %831 = vmatpush.msra.mxu0 %v723
    %832 = vmatpush.msra.mxu0 %v719
    %833 = vmatpush.msra.mxu0 %v715
    %834 = vmatpush.msra.mxu0 %v711
    %835 = vmatpush.msra.mxu0 %v707
    %836 = vmatpush.msra.mxu0 %v703
    %837 = vmatpush.msra.mxu0 %v699
    %838 = vmatpush.msra.mxu0 %v695
    %839 = vmatmul.f32.gmra.mxu0 %v694
    %v840 = vpop.f32.mrf.mxu0
    %v841 = vadd.f32 %v451, %v840
    %842 = vdwg.mxu0
    %843 = vmatpush.msra.mxu0 %v819
    %844 = vmatpush.msra.mxu0 %v815
    %845 = vmatpush.msra.mxu0 %v811
    %846 = vmatpush.msra.mxu0 %v807
    %847 = vmatpush.msra.mxu0 %v803
    %848 = vmatpush.msra.mxu0 %v799
    %849 = vmatpush.msra.mxu0 %v795
    %850 = vmatpush.msra.mxu0 %v791
    %851 = vmatpush.msra.mxu0 %v787
    %852 = vmatpush.msra.mxu0 %v783
    %853 = vmatpush.msra.mxu0 %v779
    %854 = vmatpush.msra.mxu0 %v775
    %855 = vmatpush.msra.mxu0 %v771
    %856 = vmatpush.msra.mxu0 %v767
    %857 = vmatpush.msra.mxu0 %v763
    %858 = vmatpush.msra.mxu0 %v759
    %859 = vmatmul.f32.gmra.mxu0 0.0
    %v860 = vpop.f32.mrf.mxu0
    %v861 = vadd.f32 %v841, %v860
    %862 = vdwg.mxu0
    %863 = vmatpush.msra.mxu0 %v756
    %864 = vmatpush.msra.mxu0 %v752
    %865 = vmatpush.msra.mxu0 %v748
    %866 = vmatpush.msra.mxu0 %v744
    %867 = vmatpush.msra.mxu0 %v740
    %868 = vmatpush.msra.mxu0 %v736
    %869 = vmatpush.msra.mxu0 %v732
    %870 = vmatpush.msra.mxu0 %v728
    %871 = vmatpush.msra.mxu0 %v724
    %872 = vmatpush.msra.mxu0 %v720
    %873 = vmatpush.msra.mxu0 %v716
    %874 = vmatpush.msra.mxu0 %v712
    %875 = vmatpush.msra.mxu0 %v708
    %876 = vmatpush.msra.mxu0 %v704
    %877 = vmatpush.msra.mxu0 %v700
    %878 = vmatpush.msra.mxu0 %v696
    %879 = vmatmul.f32.gmra.mxu0 %v694
    %v880 = vpop.f32.mrf.mxu0
    %v881 = vadd.f32 %v452, %v880
    %882 = vdwg.mxu0
    %883 = vmatpush.msra.mxu0 %v820
    %884 = vmatpush.msra.mxu0 %v816
    %885 = vmatpush.msra.mxu0 %v812
    %886 = vmatpush.msra.mxu0 %v808
    %887 = vmatpush.msra.mxu0 %v804
    %888 = vmatpush.msra.mxu0 %v800
    %889 = vmatpush.msra.mxu0 %v796
    %890 = vmatpush.msra.mxu0 %v792
    %891 = vmatpush.msra.mxu0 %v788
    %892 = vmatpush.msra.mxu0 %v784
    %893 = vmatpush.msra.mxu0 %v780
    %894 = vmatpush.msra.mxu0 %v776
    %895 = vmatpush.msra.mxu0 %v772
    %896 = vmatpush.msra.mxu0 %v768
    %897 = vmatpush.msra.mxu0 %v764
    %898 = vmatpush.msra.mxu0 %v760
    %899 = vmatmul.f32.gmra.mxu0 0.0
    %v900 = vpop.f32.mrf.mxu0
    %v901 = vadd.f32 %v881, %v900
    %902 = vdwg.mxu0
    %903 = vmatpush.msra.mxu0 %v757
    %904 = vmatpush.msra.mxu0 %v753
    %905 = vmatpush.msra.mxu0 %v749
    %906 = vmatpush.msra.mxu0 %v745
    %907 = vmatpush.msra.mxu0 %v741
    %908 = vmatpush.msra.mxu0 %v737
    %909 = vmatpush.msra.mxu0 %v733
    %910 = vmatpush.msra.mxu0 %v729
    %911 = vmatpush.msra.mxu0 %v725
    %912 = vmatpush.msra.mxu0 %v721
    %913 = vmatpush.msra.mxu0 %v717
    %914 = vmatpush.msra.mxu0 %v713
    %915 = vmatpush.msra.mxu0 %v709
    %916 = vmatpush.msra.mxu0 %v705
    %917 = vmatpush.msra.mxu0 %v701
    %918 = vmatpush.msra.mxu0 %v697
    %919 = vmatmul.f32.gmra.mxu0 %v694
    %v920 = vpop.f32.mrf.mxu0
    %v921 = vadd.f32 %v453, %v920
    %922 = vdwg.mxu0
    %923 = vmatpush.msra.mxu0 %v821
    %924 = vmatpush.msra.mxu0 %v817
    %925 = vmatpush.msra.mxu0 %v813
    %926 = vmatpush.msra.mxu0 %v809
    %927 = vmatpush.msra.mxu0 %v805
    %928 = vmatpush.msra.mxu0 %v801
    %929 = vmatpush.msra.mxu0 %v797
    %930 = vmatpush.msra.mxu0 %v793
    %931 = vmatpush.msra.mxu0 %v789
    %932 = vmatpush.msra.mxu0 %v785
    %933 = vmatpush.msra.mxu0 %v781
    %934 = vmatpush.msra.mxu0 %v777
    %935 = vmatpush.msra.mxu0 %v773
    %936 = vmatpush.msra.mxu0 %v769
    %937 = vmatpush.msra.mxu0 %v765
    %938 = vmatpush.msra.mxu0 %v761
    %939 = vmatmul.f32.gmra.mxu0 0.0
    %v940 = vpop.f32.mrf.mxu0
    %v941 = vadd.f32 %v921, %v940
    %942 = vdwg.mxu0
    %943 = vmatpush.msra.mxu0 %v758
    %944 = vmatpush.msra.mxu0 %v754
    %945 = vmatpush.msra.mxu0 %v750
    %946 = vmatpush.msra.mxu0 %v746
    %947 = vmatpush.msra.mxu0 %v742
    %948 = vmatpush.msra.mxu0 %v738
    %949 = vmatpush.msra.mxu0 %v734
    %950 = vmatpush.msra.mxu0 %v730
    %951 = vmatpush.msra.mxu0 %v726
    %952 = vmatpush.msra.mxu0 %v722
    %953 = vmatpush.msra.mxu0 %v718
    %954 = vmatpush.msra.mxu0 %v714
    %955 = vmatpush.msra.mxu0 %v710
    %956 = vmatpush.msra.mxu0 %v706
    %957 = vmatpush.msra.mxu0 %v702
    %958 = vmatpush.msra.mxu0 %v698
    %959 = vmatmul.f32.gmra.mxu0 %v694
    %v960 = vpop.f32.mrf.mxu0
    %v961 = vadd.f32 %v454, %v960
    %962 = vdwg.mxu0
    %963 = vmatpush.msra.mxu0 %v822
    %964 = vmatpush.msra.mxu0 %v818
    %965 = vmatpush.msra.mxu0 %v814
    %966 = vmatpush.msra.mxu0 %v810
    %967 = vmatpush.msra.mxu0 %v806
    %968 = vmatpush.msra.mxu0 %v802
    %969 = vmatpush.msra.mxu0 %v798
    %970 = vmatpush.msra.mxu0 %v794
    %971 = vmatpush.msra.mxu0 %v790
    %972 = vmatpush.msra.mxu0 %v786
    %973 = vmatpush.msra.mxu0 %v782
    %974 = vmatpush.msra.mxu0 %v778
    %975 = vmatpush.msra.mxu0 %v774
    %976 = vmatpush.msra.mxu0 %v770
    %977 = vmatpush.msra.mxu0 %v766
    %978 = vmatpush.msra.mxu0 %v762
    %979 = vmatmul.f32.gmra.mxu0 0.0
    %v980 = vpop.f32.mrf.mxu0
    %v981 = vadd.f32 %v961, %v980
    %982 = vdwg.mxu0
    %v983 = vxor.u32 %v861, 2147483648
    %v984 = vmul.f32 %v983, 1.442695
    %v985 = vpow.pop %v984
    %v986 = vadd.f32 %v985, 1.0
    %v987 = vrcp.pop %v986
    %v988 = vmul.f32 %v986, %v987
    %v989 = vsub.f32 1.0, %v988
    %v990 = vmul.f32 %v987, %v989
    %v991 = vadd.f32 %v987, %v990
    %vm992 = vweird.f32 %v986
    %vm993 = vweird.f32 %v987
    %vm994 = vmor %vm992, %vm993
    %v995 = vsel %vm994, %v987, %v991
    %v996 = vand.u32 2147483647, %v986
    %vm997 = vcmp.eq.f32.partialorder %v996, 8.507059e+37
    %v998 = vand.u32 %v986, 2147483648
    %v999 = vor.u32 1.1754944e-38, %v998
    %v1000 = vsel %vm997, %v999, %v995
    %v1001 = vmul.f32 1.0, %v1000
    %v1002 = vxor.u32 %v901, 2147483648
    %v1003 = vmul.f32 %v1002, 1.442695
    %v1004 = vpow.pop %v1003
    %v1005 = vadd.f32 %v1004, 1.0
    %v1006 = vrcp.pop %v1005
    %v1007 = vmul.f32 %v1005, %v1006
    %v1008 = vsub.f32 1.0, %v1007
    %v1009 = vmul.f32 %v1006, %v1008
    %v1010 = vadd.f32 %v1006, %v1009
    %vm1011 = vweird.f32 %v1005
    %vm1012 = vweird.f32 %v1006
    %vm1013 = vmor %vm1011, %vm1012
    %v1014 = vsel %vm1013, %v1006, %v1010
    %v1015 = vand.u32 2147483647, %v1005
    %vm1016 = vcmp.eq.f32.partialorder %v1015, 8.507059e+37
    %v1017 = vand.u32 %v1005, 2147483648
    %v1018 = vor.u32 1.1754944e-38, %v1017
    %v1019 = vsel %vm1016, %v1018, %v1014
    %v1020 = vmul.f32 1.0, %v1019
    %v1021 = vtanh.pop %v941
    %v1022 = vxor.u32 %v981, 2147483648
    %v1023 = vmul.f32 %v1022, 1.442695
    %v1024 = vpow.pop %v1023
    %v1025 = vadd.f32 %v1024, 1.0
    %v1026 = vrcp.pop %v1025
    %v1027 = vmul.f32 %v1025, %v1026
    %v1028 = vsub.f32 1.0, %v1027
    %v1029 = vmul.f32 %v1026, %v1028
    %v1030 = vadd.f32 %v1026, %v1029
    %vm1031 = vweird.f32 %v1025
    %vm1032 = vweird.f32 %v1026
    %vm1033 = vmor %vm1031, %vm1032
    %v1034 = vsel %vm1033, %v1026, %v1030
    %v1035 = vand.u32 2147483647, %v1025
    %vm1036 = vcmp.eq.f32.partialorder %v1035, 8.507059e+37
    %v1037 = vand.u32 %v1025, 2147483648
    %v1038 = vor.u32 1.1754944e-38, %v1037
    %v1039 = vsel %vm1036, %v1038, %v1034
    %v1040 = vmul.f32 1.0, %v1039
    %v1041 = vmul.f32 %v1020, 0.0
    %v1042 = vmul.f32 %v1001, %v1021
    %v1043 = vadd.f32 %v1041, %v1042
    %v1044 = vtanh.pop %v1043
    %v1045 = vmul.f32 %v1040, %v1044
    %v1046 = vld [vmem:[#allocation12] sm:$0xff]
    %v1047 = vld [vmem:[#allocation12 + $0x8] sm:$0xff]
    %v1048 = vld [vmem:[#allocation12 + $0x10] sm:$0xff]
    %v1049 = vld [vmem:[#allocation12 + $0x18] sm:$0xff]
    %v1050 = vld [vmem:[#allocation12 + $0x20] sm:$0xff]
    %v1051 = vld [vmem:[#allocation12 + $0x28] sm:$0xff]
    %v1052 = vld [vmem:[#allocation12 + $0x30] sm:$0xff]
    %v1053 = vld [vmem:[#allocation12 + $0x38] sm:$0xff]
    %v1054 = vld [vmem:[#allocation12 + $0x40] sm:$0xff]
    %v1055 = vld [vmem:[#allocation12 + $0x48] sm:$0xff]
    %v1056 = vld [vmem:[#allocation12 + $0x50] sm:$0xff]
    %v1057 = vld [vmem:[#allocation12 + $0x58] sm:$0xff]
    %v1058 = vld [vmem:[#allocation12 + $0x60] sm:$0xff]
    %v1059 = vld [vmem:[#allocation12 + $0x68] sm:$0xff]
    %v1060 = vld [vmem:[#allocation12 + $0x70] sm:$0xff]
    %v1061 = vld [vmem:[#allocation12 + $0x78] sm:$0xff]
    %v1062 = vld [vmem:[#allocation12 + $0x80] sm:$0xff]
    %v1063 = vld [vmem:[#allocation12 + $0x88] sm:$0xff]
    %v1064 = vld [vmem:[#allocation12 + $0x90] sm:$0xff]
    %v1065 = vld [vmem:[#allocation12 + $0x98] sm:$0xff]
    %v1066 = vld [vmem:[#allocation12 + $0xa0] sm:$0xff]
    %v1067 = vld [vmem:[#allocation12 + $0xa8] sm:$0xff]
    %v1068 = vld [vmem:[#allocation12 + $0xb0] sm:$0xff]
    %v1069 = vld [vmem:[#allocation12 + $0xb8] sm:$0xff]
    %v1070 = vld [vmem:[#allocation12 + $0xc0] sm:$0xff]
    %v1071 = vld [vmem:[#allocation12 + $0xc8] sm:$0xff]
    %v1072 = vld [vmem:[#allocation12 + $0xd0] sm:$0xff]
    %v1073 = vld [vmem:[#allocation12 + $0xd8] sm:$0xff]
    %v1074 = vld [vmem:[#allocation12 + $0xe0] sm:$0xff]
    %v1075 = vld [vmem:[#allocation12 + $0xe8] sm:$0xff]
    %v1076 = vld [vmem:[#allocation12 + $0xf0] sm:$0xff]
    %v1077 = vld [vmem:[#allocation12 + $0xf8] sm:$0xff]
    %v1078 = vld [vmem:[#allocation12 + $0x100] sm:$0xff]
    %v1079 = vld [vmem:[#allocation12 + $0x108] sm:$0xff]
    %v1080 = vld [vmem:[#allocation12 + $0x110] sm:$0xff]
    %v1081 = vld [vmem:[#allocation12 + $0x118] sm:$0xff]
    %v1082 = vld [vmem:[#allocation12 + $0x120] sm:$0xff]
    %v1083 = vld [vmem:[#allocation12 + $0x128] sm:$0xff]
    %v1084 = vld [vmem:[#allocation12 + $0x130] sm:$0xff]
    %v1085 = vld [vmem:[#allocation12 + $0x138] sm:$0xff]
    %v1086 = vld [vmem:[#allocation12 + $0x140] sm:$0xff]
    %v1087 = vld [vmem:[#allocation12 + $0x148] sm:$0xff]
    %v1088 = vld [vmem:[#allocation12 + $0x150] sm:$0xff]
    %v1089 = vld [vmem:[#allocation12 + $0x158] sm:$0xff]
    %v1090 = vld [vmem:[#allocation12 + $0x160] sm:$0xff]
    %v1091 = vld [vmem:[#allocation12 + $0x168] sm:$0xff]
    %v1092 = vld [vmem:[#allocation12 + $0x170] sm:$0xff]
    %v1093 = vld [vmem:[#allocation12 + $0x178] sm:$0xff]
    %v1094 = vld [vmem:[#allocation12 + $0x180] sm:$0xff]
    %v1095 = vld [vmem:[#allocation12 + $0x188] sm:$0xff]
    %v1096 = vld [vmem:[#allocation12 + $0x190] sm:$0xff]
    %v1097 = vld [vmem:[#allocation12 + $0x198] sm:$0xff]
    %v1098 = vld [vmem:[#allocation12 + $0x1a0] sm:$0xff]
    %v1099 = vld [vmem:[#allocation12 + $0x1a8] sm:$0xff]
    %v1100 = vld [vmem:[#allocation12 + $0x1b0] sm:$0xff]
    %v1101 = vld [vmem:[#allocation12 + $0x1b8] sm:$0xff]
    %v1102 = vld [vmem:[#allocation12 + $0x1c0] sm:$0xff]
    %v1103 = vld [vmem:[#allocation12 + $0x1c8] sm:$0xff]
    %v1104 = vld [vmem:[#allocation12 + $0x1d0] sm:$0xff]
    %v1105 = vld [vmem:[#allocation12 + $0x1d8] sm:$0xff]
    %v1106 = vld [vmem:[#allocation12 + $0x1e0] sm:$0xff]
    %v1107 = vld [vmem:[#allocation12 + $0x1e8] sm:$0xff]
    %v1108 = vld [vmem:[#allocation12 + $0x1f0] sm:$0xff]
    %v1109 = vld [vmem:[#allocation12 + $0x1f8] sm:$0xff]
    %v1110 = vld [vmem:[#allocation12 + $0x200] sm:$0xff]
    %v1111 = vld [vmem:[#allocation12 + $0x208] sm:$0xff]
    %v1112 = vld [vmem:[#allocation12 + $0x210] sm:$0xff]
    %v1113 = vld [vmem:[#allocation12 + $0x218] sm:$0xff]
    %v1114 = vld [vmem:[#allocation12 + $0x220] sm:$0xff]
    %v1115 = vld [vmem:[#allocation12 + $0x228] sm:$0xff]
    %v1116 = vld [vmem:[#allocation12 + $0x230] sm:$0xff]
    %v1117 = vld [vmem:[#allocation12 + $0x238] sm:$0xff]
    %v1118 = vld [vmem:[#allocation12 + $0x240] sm:$0xff]
    %v1119 = vld [vmem:[#allocation12 + $0x248] sm:$0xff]
    %v1120 = vld [vmem:[#allocation12 + $0x250] sm:$0xff]
    %v1121 = vld [vmem:[#allocation12 + $0x258] sm:$0xff]
    %v1122 = vld [vmem:[#allocation12 + $0x260] sm:$0xff]
    %v1123 = vld [vmem:[#allocation12 + $0x268] sm:$0xff]
    %v1124 = vld [vmem:[#allocation12 + $0x270] sm:$0xff]
    %v1125 = vld [vmem:[#allocation12 + $0x278] sm:$0xff]
    %v1126 = vld [vmem:[#allocation12 + $0x280] sm:$0xff]
    %v1127 = vld [vmem:[#allocation12 + $0x288] sm:$0xff]
    %v1128 = vld [vmem:[#allocation12 + $0x290] sm:$0xff]
    %v1129 = vld [vmem:[#allocation12 + $0x298] sm:$0xff]
    %v1130 = vld [vmem:[#allocation12 + $0x2a0] sm:$0xff]
    %v1131 = vld [vmem:[#allocation12 + $0x2a8] sm:$0xff]
    %v1132 = vld [vmem:[#allocation12 + $0x2b0] sm:$0xff]
    %v1133 = vld [vmem:[#allocation12 + $0x2b8] sm:$0xff]
    %v1134 = vld [vmem:[#allocation12 + $0x2c0] sm:$0xff]
    %v1135 = vld [vmem:[#allocation12 + $0x2c8] sm:$0xff]
    %v1136 = vld [vmem:[#allocation12 + $0x2d0] sm:$0xff]
    %v1137 = vld [vmem:[#allocation12 + $0x2d8] sm:$0xff]
    %v1138 = vld [vmem:[#allocation12 + $0x2e0] sm:$0xff]
    %v1139 = vld [vmem:[#allocation12 + $0x2e8] sm:$0xff]
    %v1140 = vld [vmem:[#allocation12 + $0x2f0] sm:$0xff]
    %v1141 = vld [vmem:[#allocation12 + $0x2f8] sm:$0xff]
    %v1142 = vld [vmem:[#allocation12 + $0x300] sm:$0xff]
    %v1143 = vld [vmem:[#allocation12 + $0x308] sm:$0xff]
    %v1144 = vld [vmem:[#allocation12 + $0x310] sm:$0xff]
    %v1145 = vld [vmem:[#allocation12 + $0x318] sm:$0xff]
    %v1146 = vld [vmem:[#allocation12 + $0x320] sm:$0xff]
    %v1147 = vld [vmem:[#allocation12 + $0x328] sm:$0xff]
    %v1148 = vld [vmem:[#allocation12 + $0x330] sm:$0xff]
    %v1149 = vld [vmem:[#allocation12 + $0x338] sm:$0xff]
    %v1150 = vld [vmem:[#allocation12 + $0x340] sm:$0xff]
    %v1151 = vld [vmem:[#allocation12 + $0x348] sm:$0xff]
    %v1152 = vld [vmem:[#allocation12 + $0x350] sm:$0xff]
    %v1153 = vld [vmem:[#allocation12 + $0x358] sm:$0xff]
    %v1154 = vld [vmem:[#allocation12 + $0x360] sm:$0xff]
    %v1155 = vld [vmem:[#allocation12 + $0x368] sm:$0xff]
    %v1156 = vld [vmem:[#allocation12 + $0x370] sm:$0xff]
    %v1157 = vld [vmem:[#allocation12 + $0x378] sm:$0xff]
    %v1158 = vld [vmem:[#allocation12 + $0x380] sm:$0xff]
    %v1159 = vld [vmem:[#allocation12 + $0x388] sm:$0xff]
    %v1160 = vld [vmem:[#allocation12 + $0x390] sm:$0xff]
    %v1161 = vld [vmem:[#allocation12 + $0x398] sm:$0xff]
    %v1162 = vld [vmem:[#allocation12 + $0x3a0] sm:$0xff]
    %v1163 = vld [vmem:[#allocation12 + $0x3a8] sm:$0xff]
    %v1164 = vld [vmem:[#allocation12 + $0x3b0] sm:$0xff]
    %v1165 = vld [vmem:[#allocation12 + $0x3b8] sm:$0xff]
    %v1166 = vld [vmem:[#allocation12 + $0x3c0] sm:$0xff]
    %v1167 = vld [vmem:[#allocation12 + $0x3c8] sm:$0xff]
    %v1168 = vld [vmem:[#allocation12 + $0x3d0] sm:$0xff]
    %v1169 = vld [vmem:[#allocation12 + $0x3d8] sm:$0xff]
    %v1170 = vld [vmem:[#allocation12 + $0x3e0] sm:$0xff]
    %v1171 = vld [vmem:[#allocation12 + $0x3e8] sm:$0xff]
    %v1172 = vld [vmem:[#allocation12 + $0x3f0] sm:$0xff]
    %v1173 = vld [vmem:[#allocation12 + $0x3f8] sm:$0xff]
    %v1174 = vld [vmem:[#allocation12 + $0x400] sm:$0xff]
    %v1175 = vld [vmem:[#allocation12 + $0x408] sm:$0xff]
    %v1176 = vld [vmem:[#allocation12 + $0x410] sm:$0xff]
    %v1177 = vld [vmem:[#allocation12 + $0x418] sm:$0xff]
    %v1178 = vld [vmem:[#allocation12 + $0x420] sm:$0xff]
    %v1179 = vld [vmem:[#allocation12 + $0x428] sm:$0xff]
    %v1180 = vld [vmem:[#allocation12 + $0x430] sm:$0xff]
    %v1181 = vld [vmem:[#allocation12 + $0x438] sm:$0xff]
    %v1182 = vld [vmem:[#allocation12 + $0x440] sm:$0xff]
    %v1183 = vld [vmem:[#allocation12 + $0x448] sm:$0xff]
    %v1184 = vld [vmem:[#allocation12 + $0x450] sm:$0xff]
    %v1185 = vld [vmem:[#allocation12 + $0x458] sm:$0xff]
    %v1186 = vld [vmem:[#allocation12 + $0x460] sm:$0xff]
    %v1187 = vld [vmem:[#allocation12 + $0x468] sm:$0xff]
    %v1188 = vld [vmem:[#allocation12 + $0x470] sm:$0xff]
    %v1189 = vld [vmem:[#allocation12 + $0x478] sm:$0xff]
    %v1190 = vld [vmem:[#allocation12 + $0x480] sm:$0xff]
    %v1191 = vld [vmem:[#allocation12 + $0x488] sm:$0xff]
    %v1192 = vld [vmem:[#allocation12 + $0x490] sm:$0xff]
    %v1193 = vld [vmem:[#allocation12 + $0x498] sm:$0xff]
    %v1194 = vld [vmem:[#allocation12 + $0x4a0] sm:$0xff]
    %v1195 = vld [vmem:[#allocation12 + $0x4a8] sm:$0xff]
    %v1196 = vld [vmem:[#allocation12 + $0x4b0] sm:$0xff]
    %v1197 = vld [vmem:[#allocation12 + $0x4b8] sm:$0xff]
    %v1198 = vld [vmem:[#allocation12 + $0x4c0] sm:$0xff]
    %v1199 = vld [vmem:[#allocation12 + $0x4c8] sm:$0xff]
    %v1200 = vld [vmem:[#allocation12 + $0x4d0] sm:$0xff]
    %v1201 = vld [vmem:[#allocation12 + $0x4d8] sm:$0xff]
    %v1202 = vld [vmem:[#allocation12 + $0x4e0] sm:$0xff]
    %v1203 = vld [vmem:[#allocation12 + $0x4e8] sm:$0xff]
    %v1204 = vld [vmem:[#allocation12 + $0x4f0] sm:$0xff]
    %v1205 = vld [vmem:[#allocation12 + $0x4f8] sm:$0xff]
    %v1206 = vld [vmem:[#allocation12 + $0x500] sm:$0xff]
    %v1207 = vld [vmem:[#allocation12 + $0x508] sm:$0xff]
    %v1208 = vld [vmem:[#allocation12 + $0x510] sm:$0xff]
    %v1209 = vld [vmem:[#allocation12 + $0x518] sm:$0xff]
    %v1210 = vld [vmem:[#allocation12 + $0x520] sm:$0xff]
    %v1211 = vld [vmem:[#allocation12 + $0x528] sm:$0xff]
    %v1212 = vld [vmem:[#allocation12 + $0x530] sm:$0xff]
    %v1213 = vld [vmem:[#allocation12 + $0x538] sm:$0xff]
    %v1214 = vld [vmem:[#allocation12 + $0x540] sm:$0xff]
    %v1215 = vld [vmem:[#allocation12 + $0x548] sm:$0xff]
    %v1216 = vld [vmem:[#allocation12 + $0x550] sm:$0xff]
    %v1217 = vld [vmem:[#allocation12 + $0x558] sm:$0xff]
    %v1218 = vld [vmem:[#allocation12 + $0x560] sm:$0xff]
    %v1219 = vld [vmem:[#allocation12 + $0x568] sm:$0xff]
    %v1220 = vld [vmem:[#allocation12 + $0x570] sm:$0xff]
    %v1221 = vld [vmem:[#allocation12 + $0x578] sm:$0xff]
    %v1222 = vld [vmem:[#allocation12 + $0x580] sm:$0xff]
    %v1223 = vld [vmem:[#allocation12 + $0x588] sm:$0xff]
    %v1224 = vld [vmem:[#allocation12 + $0x590] sm:$0xff]
    %v1225 = vld [vmem:[#allocation12 + $0x598] sm:$0xff]
    %v1226 = vld [vmem:[#allocation12 + $0x5a0] sm:$0xff]
    %v1227 = vld [vmem:[#allocation12 + $0x5a8] sm:$0xff]
    %v1228 = vld [vmem:[#allocation12 + $0x5b0] sm:$0xff]
    %v1229 = vld [vmem:[#allocation12 + $0x5b8] sm:$0xff]
    %v1230 = vld [vmem:[#allocation12 + $0x5c0] sm:$0xff]
    %v1231 = vld [vmem:[#allocation12 + $0x5c8] sm:$0xff]
    %v1232 = vld [vmem:[#allocation12 + $0x5d0] sm:$0xff]
    %v1233 = vld [vmem:[#allocation12 + $0x5d8] sm:$0xff]
    %v1234 = vld [vmem:[#allocation12 + $0x5e0] sm:$0xff]
    %v1235 = vld [vmem:[#allocation12 + $0x5e8] sm:$0xff]
    %v1236 = vld [vmem:[#allocation12 + $0x5f0] sm:$0xff]
    %v1237 = vld [vmem:[#allocation12 + $0x5f8] sm:$0xff]
    %v1238 = vld [vmem:[#allocation12 + $0x600] sm:$0xff]
    %v1239 = vld [vmem:[#allocation12 + $0x608] sm:$0xff]
    %v1240 = vld [vmem:[#allocation12 + $0x610] sm:$0xff]
    %v1241 = vld [vmem:[#allocation12 + $0x618] sm:$0xff]
    %v1242 = vld [vmem:[#allocation12 + $0x620] sm:$0xff]
    %v1243 = vld [vmem:[#allocation12 + $0x628] sm:$0xff]
    %v1244 = vld [vmem:[#allocation12 + $0x630] sm:$0xff]
    %v1245 = vld [vmem:[#allocation12 + $0x638] sm:$0xff]
    %v1246 = vld [vmem:[#allocation12 + $0x640] sm:$0xff]
    %v1247 = vld [vmem:[#allocation12 + $0x648] sm:$0xff]
    %v1248 = vld [vmem:[#allocation12 + $0x650] sm:$0xff]
    %v1249 = vld [vmem:[#allocation12 + $0x658] sm:$0xff]
    %v1250 = vld [vmem:[#allocation12 + $0x660] sm:$0xff]
    %v1251 = vld [vmem:[#allocation12 + $0x668] sm:$0xff]
    %v1252 = vld [vmem:[#allocation12 + $0x670] sm:$0xff]
    %v1253 = vld [vmem:[#allocation12 + $0x678] sm:$0xff]
    %v1254 = vld [vmem:[#allocation12 + $0x680] sm:$0xff]
    %v1255 = vld [vmem:[#allocation12 + $0x688] sm:$0xff]
    %v1256 = vld [vmem:[#allocation12 + $0x690] sm:$0xff]
    %v1257 = vld [vmem:[#allocation12 + $0x698] sm:$0xff]
    %v1258 = vld [vmem:[#allocation12 + $0x6a0] sm:$0xff]
    %v1259 = vld [vmem:[#allocation12 + $0x6a8] sm:$0xff]
    %v1260 = vld [vmem:[#allocation12 + $0x6b0] sm:$0xff]
    %v1261 = vld [vmem:[#allocation12 + $0x6b8] sm:$0xff]
    %v1262 = vld [vmem:[#allocation12 + $0x6c0] sm:$0xff]
    %v1263 = vld [vmem:[#allocation12 + $0x6c8] sm:$0xff]
    %v1264 = vld [vmem:[#allocation12 + $0x6d0] sm:$0xff]
    %v1265 = vld [vmem:[#allocation12 + $0x6d8] sm:$0xff]
    %v1266 = vld [vmem:[#allocation12 + $0x6e0] sm:$0xff]
    %v1267 = vld [vmem:[#allocation12 + $0x6e8] sm:$0xff]
    %v1268 = vld [vmem:[#allocation12 + $0x6f0] sm:$0xff]
    %v1269 = vld [vmem:[#allocation12 + $0x6f8] sm:$0xff]
    %v1270 = vld [vmem:[#allocation12 + $0x700] sm:$0xff]
    %v1271 = vld [vmem:[#allocation12 + $0x708] sm:$0xff]
    %v1272 = vld [vmem:[#allocation12 + $0x710] sm:$0xff]
    %v1273 = vld [vmem:[#allocation12 + $0x718] sm:$0xff]
    %v1274 = vld [vmem:[#allocation12 + $0x720] sm:$0xff]
    %v1275 = vld [vmem:[#allocation12 + $0x728] sm:$0xff]
    %v1276 = vld [vmem:[#allocation12 + $0x730] sm:$0xff]
    %v1277 = vld [vmem:[#allocation12 + $0x738] sm:$0xff]
    %v1278 = vld [vmem:[#allocation12 + $0x740] sm:$0xff]
    %v1279 = vld [vmem:[#allocation12 + $0x748] sm:$0xff]
    %v1280 = vld [vmem:[#allocation12 + $0x750] sm:$0xff]
    %v1281 = vld [vmem:[#allocation12 + $0x758] sm:$0xff]
    %v1282 = vld [vmem:[#allocation12 + $0x760] sm:$0xff]
    %v1283 = vld [vmem:[#allocation12 + $0x768] sm:$0xff]
    %v1284 = vld [vmem:[#allocation12 + $0x770] sm:$0xff]
    %v1285 = vld [vmem:[#allocation12 + $0x778] sm:$0xff]
    %v1286 = vld [vmem:[#allocation12 + $0x780] sm:$0xff]
    %v1287 = vld [vmem:[#allocation12 + $0x788] sm:$0xff]
    %v1288 = vld [vmem:[#allocation12 + $0x790] sm:$0xff]
    %v1289 = vld [vmem:[#allocation12 + $0x798] sm:$0xff]
    %v1290 = vld [vmem:[#allocation12 + $0x7a0] sm:$0xff]
    %v1291 = vld [vmem:[#allocation12 + $0x7a8] sm:$0xff]
    %v1292 = vld [vmem:[#allocation12 + $0x7b0] sm:$0xff]
    %v1293 = vld [vmem:[#allocation12 + $0x7b8] sm:$0xff]
    %v1294 = vld [vmem:[#allocation12 + $0x7c0] sm:$0xff]
    %v1295 = vld [vmem:[#allocation12 + $0x7c8] sm:$0xff]
    %v1296 = vld [vmem:[#allocation12 + $0x7d0] sm:$0xff]
    %v1297 = vld [vmem:[#allocation12 + $0x7d8] sm:$0xff]
    %v1298 = vld [vmem:[#allocation12 + $0x7e0] sm:$0xff]
    %v1299 = vld [vmem:[#allocation12 + $0x7e8] sm:$0xff]
    %v1300 = vld [vmem:[#allocation12 + $0x7f0] sm:$0xff]
    %v1301 = vld [vmem:[#allocation12 + $0x7f8] sm:$0xff]
    %v1302 = vld [vmem:[#allocation12 + $0x800] sm:$0xff]
    %v1303 = vld [vmem:[#allocation12 + $0x808] sm:$0xff]
    %v1304 = vld [vmem:[#allocation12 + $0x810] sm:$0xff]
    %v1305 = vld [vmem:[#allocation12 + $0x818] sm:$0xff]
    %v1306 = vld [vmem:[#allocation12 + $0x820] sm:$0xff]
    %v1307 = vld [vmem:[#allocation12 + $0x828] sm:$0xff]
    %v1308 = vld [vmem:[#allocation12 + $0x830] sm:$0xff]
    %v1309 = vld [vmem:[#allocation12 + $0x838] sm:$0xff]
    %v1310 = vld [vmem:[#allocation12 + $0x840] sm:$0xff]
    %v1311 = vld [vmem:[#allocation12 + $0x848] sm:$0xff]
    %v1312 = vld [vmem:[#allocation12 + $0x850] sm:$0xff]
    %v1313 = vld [vmem:[#allocation12 + $0x858] sm:$0xff]
    %v1314 = vld [vmem:[#allocation12 + $0x860] sm:$0xff]
    %v1315 = vld [vmem:[#allocation12 + $0x868] sm:$0xff]
    %v1316 = vld [vmem:[#allocation12 + $0x870] sm:$0xff]
    %v1317 = vld [vmem:[#allocation12 + $0x878] sm:$0xff]
    %v1318 = vld [vmem:[#allocation12 + $0x880] sm:$0xff]
    %v1319 = vld [vmem:[#allocation12 + $0x888] sm:$0xff]
    %v1320 = vld [vmem:[#allocation12 + $0x890] sm:$0xff]
    %v1321 = vld [vmem:[#allocation12 + $0x898] sm:$0xff]
    %v1322 = vld [vmem:[#allocation12 + $0x8a0] sm:$0xff]
    %v1323 = vld [vmem:[#allocation12 + $0x8a8] sm:$0xff]
    %v1324 = vld [vmem:[#allocation12 + $0x8b0] sm:$0xff]
    %v1325 = vld [vmem:[#allocation12 + $0x8b8] sm:$0xff]
    %v1326 = vld [vmem:[#allocation12 + $0x8c0] sm:$0xff]
    %v1327 = vld [vmem:[#allocation12 + $0x8c8] sm:$0xff]
    %v1328 = vld [vmem:[#allocation12 + $0x8d0] sm:$0xff]
    %v1329 = vld [vmem:[#allocation12 + $0x8d8] sm:$0xff]
    %v1330 = vld [vmem:[#allocation12 + $0x8e0] sm:$0xff]
    %v1331 = vld [vmem:[#allocation12 + $0x8e8] sm:$0xff]
    %v1332 = vld [vmem:[#allocation12 + $0x8f0] sm:$0xff]
    %v1333 = vld [vmem:[#allocation12 + $0x8f8] sm:$0xff]
    %v1334 = vld [vmem:[#allocation12 + $0x900] sm:$0xff]
    %v1335 = vld [vmem:[#allocation12 + $0x908] sm:$0xff]
    %v1336 = vld [vmem:[#allocation12 + $0x910] sm:$0xff]
    %v1337 = vld [vmem:[#allocation12 + $0x918] sm:$0xff]
    %v1338 = vld [vmem:[#allocation12 + $0x920] sm:$0xff]
    %v1339 = vld [vmem:[#allocation12 + $0x928] sm:$0xff]
    %v1340 = vld [vmem:[#allocation12 + $0x930] sm:$0xff]
    %v1341 = vld [vmem:[#allocation12 + $0x938] sm:$0xff]
    %v1342 = vld [vmem:[#allocation12 + $0x940] sm:$0xff]
    %v1343 = vld [vmem:[#allocation12 + $0x948] sm:$0xff]
    %v1344 = vld [vmem:[#allocation12 + $0x950] sm:$0xff]
    %v1345 = vld [vmem:[#allocation12 + $0x958] sm:$0xff]
    %v1346 = vld [vmem:[#allocation12 + $0x960] sm:$0xff]
    %v1347 = vld [vmem:[#allocation12 + $0x968] sm:$0xff]
    %v1348 = vld [vmem:[#allocation12 + $0x970] sm:$0xff]
    %v1349 = vld [vmem:[#allocation12 + $0x978] sm:$0xff]
    %v1350 = vld [vmem:[#allocation12 + $0x980] sm:$0xff]
    %v1351 = vld [vmem:[#allocation12 + $0x988] sm:$0xff]
    %v1352 = vld [vmem:[#allocation12 + $0x990] sm:$0xff]
    %v1353 = vld [vmem:[#allocation12 + $0x998] sm:$0xff]
    %v1354 = vld [vmem:[#allocation12 + $0x9a0] sm:$0xff]
    %v1355 = vld [vmem:[#allocation12 + $0x9a8] sm:$0xff]
    %v1356 = vld [vmem:[#allocation12 + $0x9b0] sm:$0xff]
    %v1357 = vld [vmem:[#allocation12 + $0x9b8] sm:$0xff]
    %v1358 = vld [vmem:[#allocation12 + $0x9c0] sm:$0xff]
    %v1359 = vld [vmem:[#allocation12 + $0x9c8] sm:$0xff]
    %v1360 = vld [vmem:[#allocation12 + $0x9d0] sm:$0xff]
    %v1361 = vld [vmem:[#allocation12 + $0x9d8] sm:$0xff]
    %v1362 = vld [vmem:[#allocation12 + $0x9e0] sm:$0xff]
    %v1363 = vld [vmem:[#allocation12 + $0x9e8] sm:$0xff]
    %v1364 = vld [vmem:[#allocation12 + $0x9f0] sm:$0xff]
    %v1365 = vld [vmem:[#allocation12 + $0x9f8] sm:$0xff]
    %v1366 = vld [vmem:[#allocation12 + $0xa00] sm:$0xff]
    %v1367 = vld [vmem:[#allocation12 + $0xa08] sm:$0xff]
    %v1368 = vld [vmem:[#allocation12 + $0xa10] sm:$0xff]
    %v1369 = vld [vmem:[#allocation12 + $0xa18] sm:$0xff]
    %v1370 = vld [vmem:[#allocation12 + $0xa20] sm:$0xff]
    %v1371 = vld [vmem:[#allocation12 + $0xa28] sm:$0xff]
    %v1372 = vld [vmem:[#allocation12 + $0xa30] sm:$0xff]
    %v1373 = vld [vmem:[#allocation12 + $0xa38] sm:$0xff]
    %v1374 = vld [vmem:[#allocation12 + $0xa40] sm:$0xff]
    %v1375 = vld [vmem:[#allocation12 + $0xa48] sm:$0xff]
    %v1376 = vld [vmem:[#allocation12 + $0xa50] sm:$0xff]
    %v1377 = vld [vmem:[#allocation12 + $0xa58] sm:$0xff]
    %v1378 = vld [vmem:[#allocation12 + $0xa60] sm:$0xff]
    %v1379 = vld [vmem:[#allocation12 + $0xa68] sm:$0xff]
    %v1380 = vld [vmem:[#allocation12 + $0xa70] sm:$0xff]
    %v1381 = vld [vmem:[#allocation12 + $0xa78] sm:$0xff]
    %v1382 = vld [vmem:[#allocation12 + $0xa80] sm:$0xff]
    %v1383 = vld [vmem:[#allocation12 + $0xa88] sm:$0xff]
    %v1384 = vld [vmem:[#allocation12 + $0xa90] sm:$0xff]
    %v1385 = vld [vmem:[#allocation12 + $0xa98] sm:$0xff]
    %v1386 = vld [vmem:[#allocation12 + $0xaa0] sm:$0xff]
    %v1387 = vld [vmem:[#allocation12 + $0xaa8] sm:$0xff]
    %v1388 = vld [vmem:[#allocation12 + $0xab0] sm:$0xff]
    %v1389 = vld [vmem:[#allocation12 + $0xab8] sm:$0xff]
    %v1390 = vld [vmem:[#allocation12 + $0xac0] sm:$0xff]
    %v1391 = vld [vmem:[#allocation12 + $0xac8] sm:$0xff]
    %v1392 = vld [vmem:[#allocation12 + $0xad0] sm:$0xff]
    %v1393 = vld [vmem:[#allocation12 + $0xad8] sm:$0xff]
    %v1394 = vld [vmem:[#allocation12 + $0xae0] sm:$0xff]
    %v1395 = vld [vmem:[#allocation12 + $0xae8] sm:$0xff]
    %v1396 = vld [vmem:[#allocation12 + $0xaf0] sm:$0xff]
    %v1397 = vld [vmem:[#allocation12 + $0xaf8] sm:$0xff]
    %v1398 = vld [vmem:[#allocation12 + $0xb00] sm:$0xff]
    %v1399 = vld [vmem:[#allocation12 + $0xb08] sm:$0xff]
    %v1400 = vld [vmem:[#allocation12 + $0xb10] sm:$0xff]
    %v1401 = vld [vmem:[#allocation12 + $0xb18] sm:$0xff]
    %v1402 = vld [vmem:[#allocation12 + $0xb20] sm:$0xff]
    %v1403 = vld [vmem:[#allocation12 + $0xb28] sm:$0xff]
    %v1404 = vld [vmem:[#allocation12 + $0xb30] sm:$0xff]
    %v1405 = vld [vmem:[#allocation12 + $0xb38] sm:$0xff]
    %v1406 = vld [vmem:[#allocation12 + $0xb40] sm:$0xff]
    %v1407 = vld [vmem:[#allocation12 + $0xb48] sm:$0xff]
    %v1408 = vld [vmem:[#allocation12 + $0xb50] sm:$0xff]
    %v1409 = vld [vmem:[#allocation12 + $0xb58] sm:$0xff]
    %v1410 = vld [vmem:[#allocation12 + $0xb60] sm:$0xff]
    %v1411 = vld [vmem:[#allocation12 + $0xb68] sm:$0xff]
    %v1412 = vld [vmem:[#allocation12 + $0xb70] sm:$0xff]
    %v1413 = vld [vmem:[#allocation12 + $0xb78] sm:$0xff]
    %v1414 = vld [vmem:[#allocation12 + $0xb80] sm:$0xff]
    %v1415 = vld [vmem:[#allocation12 + $0xb88] sm:$0xff]
    %v1416 = vld [vmem:[#allocation12 + $0xb90] sm:$0xff]
    %v1417 = vld [vmem:[#allocation12 + $0xb98] sm:$0xff]
    %v1418 = vld [vmem:[#allocation12 + $0xba0] sm:$0xff]
    %v1419 = vld [vmem:[#allocation12 + $0xba8] sm:$0xff]
    %v1420 = vld [vmem:[#allocation12 + $0xbb0] sm:$0xff]
    %v1421 = vld [vmem:[#allocation12 + $0xbb8] sm:$0xff]
    %v1422 = vld [vmem:[#allocation12 + $0xbc0] sm:$0xff]
    %v1423 = vld [vmem:[#allocation12 + $0xbc8] sm:$0xff]
    %v1424 = vld [vmem:[#allocation12 + $0xbd0] sm:$0xff]
    %v1425 = vld [vmem:[#allocation12 + $0xbd8] sm:$0xff]
    %v1426 = vld [vmem:[#allocation12 + $0xbe0] sm:$0xff]
    %v1427 = vld [vmem:[#allocation12 + $0xbe8] sm:$0xff]
    %v1428 = vld [vmem:[#allocation12 + $0xbf0] sm:$0xff]
    %v1429 = vld [vmem:[#allocation12 + $0xbf8] sm:$0xff]
    %1430 = vmatpush.msra.mxu0 %v1166
    %1431 = vmatpush.msra.mxu0 %v1158
    %1432 = vmatpush.msra.mxu0 %v1150
    %1433 = vmatpush.msra.mxu0 %v1142
    %1434 = vmatpush.msra.mxu0 %v1134
    %1435 = vmatpush.msra.mxu0 %v1126
    %1436 = vmatpush.msra.mxu0 %v1118
    %1437 = vmatpush.msra.mxu0 %v1110
    %1438 = vmatpush.msra.mxu0 %v1102
    %1439 = vmatpush.msra.mxu0 %v1094
    %1440 = vmatpush.msra.mxu0 %v1086
    %1441 = vmatpush.msra.mxu0 %v1078
    %1442 = vmatpush.msra.mxu0 %v1070
    %1443 = vmatpush.msra.mxu0 %v1062
    %1444 = vmatpush.msra.mxu0 %v1054
    %1445 = vmatpush.msra.mxu0 %v1046
    %1446 = vmatmul.f32.gmra.mxu0 %v1045
    %v1447 = vpop.f32.mrf.mxu0
    %v1448 = vadd.f32 %v461, %v1447
    %1449 = vdwg.mxu0
    %1450 = vmatpush.msra.mxu0 %v1294
    %1451 = vmatpush.msra.mxu0 %v1286
    %1452 = vmatpush.msra.mxu0 %v1278
    %1453 = vmatpush.msra.mxu0 %v1270
    %1454 = vmatpush.msra.mxu0 %v1262
    %1455 = vmatpush.msra.mxu0 %v1254
    %1456 = vmatpush.msra.mxu0 %v1246
    %1457 = vmatpush.msra.mxu0 %v1238
    %1458 = vmatpush.msra.mxu0 %v1230
    %1459 = vmatpush.msra.mxu0 %v1222
    %1460 = vmatpush.msra.mxu0 %v1214
    %1461 = vmatpush.msra.mxu0 %v1206
    %1462 = vmatpush.msra.mxu0 %v1198
    %1463 = vmatpush.msra.mxu0 %v1190
    %1464 = vmatpush.msra.mxu0 %v1182
    %1465 = vmatpush.msra.mxu0 %v1174
    %1466 = vmatmul.f32.gmra.mxu0 0.0
    %v1467 = vpop.f32.mrf.mxu0
    %v1468 = vadd.f32 %v1448, %v1467
    %1469 = vdwg.mxu0
    %1470 = vmatpush.msra.mxu0 %v1422
    %1471 = vmatpush.msra.mxu0 %v1414
    %1472 = vmatpush.msra.mxu0 %v1406
    %1473 = vmatpush.msra.mxu0 %v1398
    %1474 = vmatpush.msra.mxu0 %v1390
    %1475 = vmatpush.msra.mxu0 %v1382
    %1476 = vmatpush.msra.mxu0 %v1374
    %1477 = vmatpush.msra.mxu0 %v1366
    %1478 = vmatpush.msra.mxu0 %v1358
    %1479 = vmatpush.msra.mxu0 %v1350
    %1480 = vmatpush.msra.mxu0 %v1342
    %1481 = vmatpush.msra.mxu0 %v1334
    %1482 = vmatpush.msra.mxu0 %v1326
    %1483 = vmatpush.msra.mxu0 %v1318
    %1484 = vmatpush.msra.mxu0 %v1310
    %1485 = vmatpush.msra.mxu0 %v1302
    %1486 = vmatmul.f32.gmra.mxu0 0.0
    %v1487 = vpop.f32.mrf.mxu0
    %v1488 = vadd.f32 %v1468, %v1487
    %1489 = vdwg.mxu0
    %1490 = vmatpush.msra.mxu0 %v1167
    %1491 = vmatpush.msra.mxu0 %v1159
    %1492 = vmatpush.msra.mxu0 %v1151
    %1493 = vmatpush.msra.mxu0 %v1143
    %1494 = vmatpush.msra.mxu0 %v1135
    %1495 = vmatpush.msra.mxu0 %v1127
    %1496 = vmatpush.msra.mxu0 %v1119
    %1497 = vmatpush.msra.mxu0 %v1111
    %1498 = vmatpush.msra.mxu0 %v1103
    %1499 = vmatpush.msra.mxu0 %v1095
    %1500 = vmatpush.msra.mxu0 %v1087
    %1501 = vmatpush.msra.mxu0 %v1079
    %1502 = vmatpush.msra.mxu0 %v1071
    %1503 = vmatpush.msra.mxu0 %v1063
    %1504 = vmatpush.msra.mxu0 %v1055
    %1505 = vmatpush.msra.mxu0 %v1047
    %1506 = vmatmul.f32.gmra.mxu0 %v1045
    %v1507 = vpop.f32.mrf.mxu0
    %v1508 = vadd.f32 %v462, %v1507
    %1509 = vdwg.mxu0
    %1510 = vmatpush.msra.mxu0 %v1295
    %1511 = vmatpush.msra.mxu0 %v1287
    %1512 = vmatpush.msra.mxu0 %v1279
    %1513 = vmatpush.msra.mxu0 %v1271
    %1514 = vmatpush.msra.mxu0 %v1263
    %1515 = vmatpush.msra.mxu0 %v1255
    %1516 = vmatpush.msra.mxu0 %v1247
    %1517 = vmatpush.msra.mxu0 %v1239
    %1518 = vmatpush.msra.mxu0 %v1231
    %1519 = vmatpush.msra.mxu0 %v1223
    %1520 = vmatpush.msra.mxu0 %v1215
    %1521 = vmatpush.msra.mxu0 %v1207
    %1522 = vmatpush.msra.mxu0 %v1199
    %1523 = vmatpush.msra.mxu0 %v1191
    %1524 = vmatpush.msra.mxu0 %v1183
    %1525 = vmatpush.msra.mxu0 %v1175
    %1526 = vmatmul.f32.gmra.mxu0 0.0
    %v1527 = vpop.f32.mrf.mxu0
    %v1528 = vadd.f32 %v1508, %v1527
    %1529 = vdwg.mxu0
    %1530 = vmatpush.msra.mxu0 %v1423
    %1531 = vmatpush.msra.mxu0 %v1415
    %1532 = vmatpush.msra.mxu0 %v1407
    %1533 = vmatpush.msra.mxu0 %v1399
    %1534 = vmatpush.msra.mxu0 %v1391
    %1535 = vmatpush.msra.mxu0 %v1383
    %1536 = vmatpush.msra.mxu0 %v1375
    %1537 = vmatpush.msra.mxu0 %v1367
    %1538 = vmatpush.msra.mxu0 %v1359
    %1539 = vmatpush.msra.mxu0 %v1351
    %1540 = vmatpush.msra.mxu0 %v1343
    %1541 = vmatpush.msra.mxu0 %v1335
    %1542 = vmatpush.msra.mxu0 %v1327
    %1543 = vmatpush.msra.mxu0 %v1319
    %1544 = vmatpush.msra.mxu0 %v1311
    %1545 = vmatpush.msra.mxu0 %v1303
    %1546 = vmatmul.f32.gmra.mxu0 0.0
    %v1547 = vpop.f32.mrf.mxu0
    %v1548 = vadd.f32 %v1528, %v1547
    %1549 = vdwg.mxu0
    %1550 = vmatpush.msra.mxu0 %v1168
    %1551 = vmatpush.msra.mxu0 %v1160
    %1552 = vmatpush.msra.mxu0 %v1152
    %1553 = vmatpush.msra.mxu0 %v1144
    %1554 = vmatpush.msra.mxu0 %v1136
    %1555 = vmatpush.msra.mxu0 %v1128
    %1556 = vmatpush.msra.mxu0 %v1120
    %1557 = vmatpush.msra.mxu0 %v1112
    %1558 = vmatpush.msra.mxu0 %v1104
    %1559 = vmatpush.msra.mxu0 %v1096
    %1560 = vmatpush.msra.mxu0 %v1088
    %1561 = vmatpush.msra.mxu0 %v1080
    %1562 = vmatpush.msra.mxu0 %v1072
    %1563 = vmatpush.msra.mxu0 %v1064
    %1564 = vmatpush.msra.mxu0 %v1056
    %1565 = vmatpush.msra.mxu0 %v1048
    %1566 = vmatmul.f32.gmra.mxu0 %v1045
    %v1567 = vpop.f32.mrf.mxu0
    %v1568 = vadd.f32 %v463, %v1567
    %1569 = vdwg.mxu0
    %1570 = vmatpush.msra.mxu0 %v1296
    %1571 = vmatpush.msra.mxu0 %v1288
    %1572 = vmatpush.msra.mxu0 %v1280
    %1573 = vmatpush.msra.mxu0 %v1272
    %1574 = vmatpush.msra.mxu0 %v1264
    %1575 = vmatpush.msra.mxu0 %v1256
    %1576 = vmatpush.msra.mxu0 %v1248
    %1577 = vmatpush.msra.mxu0 %v1240
    %1578 = vmatpush.msra.mxu0 %v1232
    %1579 = vmatpush.msra.mxu0 %v1224
    %1580 = vmatpush.msra.mxu0 %v1216
    %1581 = vmatpush.msra.mxu0 %v1208
    %1582 = vmatpush.msra.mxu0 %v1200
    %1583 = vmatpush.msra.mxu0 %v1192
    %1584 = vmatpush.msra.mxu0 %v1184
    %1585 = vmatpush.msra.mxu0 %v1176
    %1586 = vmatmul.f32.gmra.mxu0 0.0
    %v1587 = vpop.f32.mrf.mxu0
    %v1588 = vadd.f32 %v1568, %v1587
    %1589 = vdwg.mxu0
    %1590 = vmatpush.msra.mxu0 %v1424
    %1591 = vmatpush.msra.mxu0 %v1416
    %1592 = vmatpush.msra.mxu0 %v1408
    %1593 = vmatpush.msra.mxu0 %v1400
    %1594 = vmatpush.msra.mxu0 %v1392
    %1595 = vmatpush.msra.mxu0 %v1384
    %1596 = vmatpush.msra.mxu0 %v1376
    %1597 = vmatpush.msra.mxu0 %v1368
    %1598 = vmatpush.msra.mxu0 %v1360
    %1599 = vmatpush.msra.mxu0 %v1352
    %1600 = vmatpush.msra.mxu0 %v1344
    %1601 = vmatpush.msra.mxu0 %v1336
    %1602 = vmatpush.msra.mxu0 %v1328
    %1603 = vmatpush.msra.mxu0 %v1320
    %1604 = vmatpush.msra.mxu0 %v1312
    %1605 = vmatpush.msra.mxu0 %v1304
    %1606 = vmatmul.f32.gmra.mxu0 0.0
    %v1607 = vpop.f32.mrf.mxu0
    %v1608 = vadd.f32 %v1588, %v1607
    %1609 = vdwg.mxu0
    %1610 = vmatpush.msra.mxu0 %v1169
    %1611 = vmatpush.msra.mxu0 %v1161
    %1612 = vmatpush.msra.mxu0 %v1153
    %1613 = vmatpush.msra.mxu0 %v1145
    %1614 = vmatpush.msra.mxu0 %v1137
    %1615 = vmatpush.msra.mxu0 %v1129
    %1616 = vmatpush.msra.mxu0 %v1121
    %1617 = vmatpush.msra.mxu0 %v1113
    %1618 = vmatpush.msra.mxu0 %v1105
    %1619 = vmatpush.msra.mxu0 %v1097
    %1620 = vmatpush.msra.mxu0 %v1089
    %1621 = vmatpush.msra.mxu0 %v1081
    %1622 = vmatpush.msra.mxu0 %v1073
    %1623 = vmatpush.msra.mxu0 %v1065
    %1624 = vmatpush.msra.mxu0 %v1057
    %1625 = vmatpush.msra.mxu0 %v1049
    %1626 = vmatmul.f32.gmra.mxu0 %v1045
    %v1627 = vpop.f32.mrf.mxu0
    %v1628 = vadd.f32 %v464, %v1627
    %1629 = vdwg.mxu0
    %1630 = vmatpush.msra.mxu0 %v1297
    %1631 = vmatpush.msra.mxu0 %v1289
    %1632 = vmatpush.msra.mxu0 %v1281
    %1633 = vmatpush.msra.mxu0 %v1273
    %1634 = vmatpush.msra.mxu0 %v1265
    %1635 = vmatpush.msra.mxu0 %v1257
    %1636 = vmatpush.msra.mxu0 %v1249
    %1637 = vmatpush.msra.mxu0 %v1241
    %1638 = vmatpush.msra.mxu0 %v1233
    %1639 = vmatpush.msra.mxu0 %v1225
    %1640 = vmatpush.msra.mxu0 %v1217
    %1641 = vmatpush.msra.mxu0 %v1209
    %1642 = vmatpush.msra.mxu0 %v1201
    %1643 = vmatpush.msra.mxu0 %v1193
    %1644 = vmatpush.msra.mxu0 %v1185
    %1645 = vmatpush.msra.mxu0 %v1177
    %1646 = vmatmul.f32.gmra.mxu0 0.0
    %v1647 = vpop.f32.mrf.mxu0
    %v1648 = vadd.f32 %v1628, %v1647
    %1649 = vdwg.mxu0
    %1650 = vmatpush.msra.mxu0 %v1425
    %1651 = vmatpush.msra.mxu0 %v1417
    %1652 = vmatpush.msra.mxu0 %v1409
    %1653 = vmatpush.msra.mxu0 %v1401
    %1654 = vmatpush.msra.mxu0 %v1393
    %1655 = vmatpush.msra.mxu0 %v1385
    %1656 = vmatpush.msra.mxu0 %v1377
    %1657 = vmatpush.msra.mxu0 %v1369
    %1658 = vmatpush.msra.mxu0 %v1361
    %1659 = vmatpush.msra.mxu0 %v1353
    %1660 = vmatpush.msra.mxu0 %v1345
    %1661 = vmatpush.msra.mxu0 %v1337
    %1662 = vmatpush.msra.mxu0 %v1329
    %1663 = vmatpush.msra.mxu0 %v1321
    %1664 = vmatpush.msra.mxu0 %v1313
    %1665 = vmatpush.msra.mxu0 %v1305
    %1666 = vmatmul.f32.gmra.mxu0 0.0
    %v1667 = vpop.f32.mrf.mxu0
    %v1668 = vadd.f32 %v1648, %v1667
    %1669 = vdwg.mxu0
    %1670 = vmatpush.msra.mxu0 %v1170
    %1671 = vmatpush.msra.mxu0 %v1162
    %1672 = vmatpush.msra.mxu0 %v1154
    %1673 = vmatpush.msra.mxu0 %v1146
    %1674 = vmatpush.msra.mxu0 %v1138
    %1675 = vmatpush.msra.mxu0 %v1130
    %1676 = vmatpush.msra.mxu0 %v1122
    %1677 = vmatpush.msra.mxu0 %v1114
    %1678 = vmatpush.msra.mxu0 %v1106
    %1679 = vmatpush.msra.mxu0 %v1098
    %1680 = vmatpush.msra.mxu0 %v1090
    %1681 = vmatpush.msra.mxu0 %v1082
    %1682 = vmatpush.msra.mxu0 %v1074
    %1683 = vmatpush.msra.mxu0 %v1066
    %1684 = vmatpush.msra.mxu0 %v1058
    %1685 = vmatpush.msra.mxu0 %v1050
    %1686 = vmatmul.f32.gmra.mxu0 %v1045
    %v1687 = vpop.f32.mrf.mxu0
    %v1688 = vadd.f32 %v465, %v1687
    %1689 = vdwg.mxu0
    %1690 = vmatpush.msra.mxu0 %v1298
    %1691 = vmatpush.msra.mxu0 %v1290
    %1692 = vmatpush.msra.mxu0 %v1282
    %1693 = vmatpush.msra.mxu0 %v1274
    %1694 = vmatpush.msra.mxu0 %v1266
    %1695 = vmatpush.msra.mxu0 %v1258
    %1696 = vmatpush.msra.mxu0 %v1250
    %1697 = vmatpush.msra.mxu0 %v1242
    %1698 = vmatpush.msra.mxu0 %v1234
    %1699 = vmatpush.msra.mxu0 %v1226
    %1700 = vmatpush.msra.mxu0 %v1218
    %1701 = vmatpush.msra.mxu0 %v1210
    %1702 = vmatpush.msra.mxu0 %v1202
    %1703 = vmatpush.msra.mxu0 %v1194
    %1704 = vmatpush.msra.mxu0 %v1186
    %1705 = vmatpush.msra.mxu0 %v1178
    %1706 = vmatmul.f32.gmra.mxu0 0.0
    %v1707 = vpop.f32.mrf.mxu0
    %v1708 = vadd.f32 %v1688, %v1707
    %1709 = vdwg.mxu0
    %1710 = vmatpush.msra.mxu0 %v1426
    %1711 = vmatpush.msra.mxu0 %v1418
    %1712 = vmatpush.msra.mxu0 %v1410
    %1713 = vmatpush.msra.mxu0 %v1402
    %1714 = vmatpush.msra.mxu0 %v1394
    %1715 = vmatpush.msra.mxu0 %v1386
    %1716 = vmatpush.msra.mxu0 %v1378
    %1717 = vmatpush.msra.mxu0 %v1370
    %1718 = vmatpush.msra.mxu0 %v1362
    %1719 = vmatpush.msra.mxu0 %v1354
    %1720 = vmatpush.msra.mxu0 %v1346
    %1721 = vmatpush.msra.mxu0 %v1338
    %1722 = vmatpush.msra.mxu0 %v1330
    %1723 = vmatpush.msra.mxu0 %v1322
    %1724 = vmatpush.msra.mxu0 %v1314
    %1725 = vmatpush.msra.mxu0 %v1306
    %1726 = vmatmul.f32.gmra.mxu0 0.0
    %v1727 = vpop.f32.mrf.mxu0
    %v1728 = vadd.f32 %v1708, %v1727
    %1729 = vdwg.mxu0
    %1730 = vmatpush.msra.mxu0 %v1171
    %1731 = vmatpush.msra.mxu0 %v1163
    %1732 = vmatpush.msra.mxu0 %v1155
    %1733 = vmatpush.msra.mxu0 %v1147
    %1734 = vmatpush.msra.mxu0 %v1139
    %1735 = vmatpush.msra.mxu0 %v1131
    %1736 = vmatpush.msra.mxu0 %v1123
    %1737 = vmatpush.msra.mxu0 %v1115
    %1738 = vmatpush.msra.mxu0 %v1107
    %1739 = vmatpush.msra.mxu0 %v1099
    %1740 = vmatpush.msra.mxu0 %v1091
    %1741 = vmatpush.msra.mxu0 %v1083
    %1742 = vmatpush.msra.mxu0 %v1075
    %1743 = vmatpush.msra.mxu0 %v1067
    %1744 = vmatpush.msra.mxu0 %v1059
    %1745 = vmatpush.msra.mxu0 %v1051
    %1746 = vmatmul.f32.gmra.mxu0 %v1045
    %v1747 = vpop.f32.mrf.mxu0
    %v1748 = vadd.f32 %v466, %v1747
    %1749 = vdwg.mxu0
    %1750 = vmatpush.msra.mxu0 %v1299
    %1751 = vmatpush.msra.mxu0 %v1291
    %1752 = vmatpush.msra.mxu0 %v1283
    %1753 = vmatpush.msra.mxu0 %v1275
    %1754 = vmatpush.msra.mxu0 %v1267
    %1755 = vmatpush.msra.mxu0 %v1259
    %1756 = vmatpush.msra.mxu0 %v1251
    %1757 = vmatpush.msra.mxu0 %v1243
    %1758 = vmatpush.msra.mxu0 %v1235
    %1759 = vmatpush.msra.mxu0 %v1227
    %1760 = vmatpush.msra.mxu0 %v1219
    %1761 = vmatpush.msra.mxu0 %v1211
    %1762 = vmatpush.msra.mxu0 %v1203
    %1763 = vmatpush.msra.mxu0 %v1195
    %1764 = vmatpush.msra.mxu0 %v1187
    %1765 = vmatpush.msra.mxu0 %v1179
    %1766 = vmatmul.f32.gmra.mxu0 0.0
    %v1767 = vpop.f32.mrf.mxu0
    %v1768 = vadd.f32 %v1748, %v1767
    %1769 = vdwg.mxu0
    %1770 = vmatpush.msra.mxu0 %v1427
    %1771 = vmatpush.msra.mxu0 %v1419
    %1772 = vmatpush.msra.mxu0 %v1411
    %1773 = vmatpush.msra.mxu0 %v1403
    %1774 = vmatpush.msra.mxu0 %v1395
    %1775 = vmatpush.msra.mxu0 %v1387
    %1776 = vmatpush.msra.mxu0 %v1379
    %1777 = vmatpush.msra.mxu0 %v1371
    %1778 = vmatpush.msra.mxu0 %v1363
    %1779 = vmatpush.msra.mxu0 %v1355
    %1780 = vmatpush.msra.mxu0 %v1347
    %1781 = vmatpush.msra.mxu0 %v1339
    %1782 = vmatpush.msra.mxu0 %v1331
    %1783 = vmatpush.msra.mxu0 %v1323
    %1784 = vmatpush.msra.mxu0 %v1315
    %1785 = vmatpush.msra.mxu0 %v1307
    %1786 = vmatmul.f32.gmra.mxu0 0.0
    %v1787 = vpop.f32.mrf.mxu0
    %v1788 = vadd.f32 %v1768, %v1787
    %1789 = vdwg.mxu0
    %1790 = vmatpush.msra.mxu0 %v1172
    %1791 = vmatpush.msra.mxu0 %v1164
    %1792 = vmatpush.msra.mxu0 %v1156
    %1793 = vmatpush.msra.mxu0 %v1148
    %1794 = vmatpush.msra.mxu0 %v1140
    %1795 = vmatpush.msra.mxu0 %v1132
    %1796 = vmatpush.msra.mxu0 %v1124
    %1797 = vmatpush.msra.mxu0 %v1116
    %1798 = vmatpush.msra.mxu0 %v1108
    %1799 = vmatpush.msra.mxu0 %v1100
    %1800 = vmatpush.msra.mxu0 %v1092
    %1801 = vmatpush.msra.mxu0 %v1084
    %1802 = vmatpush.msra.mxu0 %v1076
    %1803 = vmatpush.msra.mxu0 %v1068
    %1804 = vmatpush.msra.mxu0 %v1060
    %1805 = vmatpush.msra.mxu0 %v1052
    %1806 = vmatmul.f32.gmra.mxu0 %v1045
    %v1807 = vpop.f32.mrf.mxu0
    %v1808 = vadd.f32 %v467, %v1807
    %1809 = vdwg.mxu0
    %1810 = vmatpush.msra.mxu0 %v1300
    %1811 = vmatpush.msra.mxu0 %v1292
    %1812 = vmatpush.msra.mxu0 %v1284
    %1813 = vmatpush.msra.mxu0 %v1276
    %1814 = vmatpush.msra.mxu0 %v1268
    %1815 = vmatpush.msra.mxu0 %v1260
    %1816 = vmatpush.msra.mxu0 %v1252
    %1817 = vmatpush.msra.mxu0 %v1244
    %1818 = vmatpush.msra.mxu0 %v1236
    %1819 = vmatpush.msra.mxu0 %v1228
    %1820 = vmatpush.msra.mxu0 %v1220
    %1821 = vmatpush.msra.mxu0 %v1212
    %1822 = vmatpush.msra.mxu0 %v1204
    %1823 = vmatpush.msra.mxu0 %v1196
    %1824 = vmatpush.msra.mxu0 %v1188
    %1825 = vmatpush.msra.mxu0 %v1180
    %1826 = vmatmul.f32.gmra.mxu0 0.0
    %v1827 = vpop.f32.mrf.mxu0
    %v1828 = vadd.f32 %v1808, %v1827
    %1829 = vdwg.mxu0
    %1830 = vmatpush.msra.mxu0 %v1428
    %1831 = vmatpush.msra.mxu0 %v1420
    %1832 = vmatpush.msra.mxu0 %v1412
    %1833 = vmatpush.msra.mxu0 %v1404
    %1834 = vmatpush.msra.mxu0 %v1396
    %1835 = vmatpush.msra.mxu0 %v1388
    %1836 = vmatpush.msra.mxu0 %v1380
    %1837 = vmatpush.msra.mxu0 %v1372
    %1838 = vmatpush.msra.mxu0 %v1364
    %1839 = vmatpush.msra.mxu0 %v1356
    %1840 = vmatpush.msra.mxu0 %v1348
    %1841 = vmatpush.msra.mxu0 %v1340
    %1842 = vmatpush.msra.mxu0 %v1332
    %1843 = vmatpush.msra.mxu0 %v1324
    %1844 = vmatpush.msra.mxu0 %v1316
    %1845 = vmatpush.msra.mxu0 %v1308
    %1846 = vmatmul.f32.gmra.mxu0 0.0
    %v1847 = vpop.f32.mrf.mxu0
    %v1848 = vadd.f32 %v1828, %v1847
    %1849 = vdwg.mxu0
    %1850 = vmatpush.msra.mxu0 %v1173
    %1851 = vmatpush.msra.mxu0 %v1165
    %1852 = vmatpush.msra.mxu0 %v1157
    %1853 = vmatpush.msra.mxu0 %v1149
    %1854 = vmatpush.msra.mxu0 %v1141
    %1855 = vmatpush.msra.mxu0 %v1133
    %1856 = vmatpush.msra.mxu0 %v1125
    %1857 = vmatpush.msra.mxu0 %v1117
    %1858 = vmatpush.msra.mxu0 %v1109
    %1859 = vmatpush.msra.mxu0 %v1101
    %1860 = vmatpush.msra.mxu0 %v1093
    %1861 = vmatpush.msra.mxu0 %v1085
    %1862 = vmatpush.msra.mxu0 %v1077
    %1863 = vmatpush.msra.mxu0 %v1069
    %1864 = vmatpush.msra.mxu0 %v1061
    %1865 = vmatpush.msra.mxu0 %v1053
    %1866 = vmatmul.f32.gmra.mxu0 %v1045
    %v1867 = vpop.f32.mrf.mxu0
    %v1868 = vadd.f32 %v468, %v1867
    %1869 = vdwg.mxu0
    %1870 = vmatpush.msra.mxu0 %v1301
    %1871 = vmatpush.msra.mxu0 %v1293
    %1872 = vmatpush.msra.mxu0 %v1285
    %1873 = vmatpush.msra.mxu0 %v1277
    %1874 = vmatpush.msra.mxu0 %v1269
    %1875 = vmatpush.msra.mxu0 %v1261
    %1876 = vmatpush.msra.mxu0 %v1253
    %1877 = vmatpush.msra.mxu0 %v1245
    %1878 = vmatpush.msra.mxu0 %v1237
    %1879 = vmatpush.msra.mxu0 %v1229
    %1880 = vmatpush.msra.mxu0 %v1221
    %1881 = vmatpush.msra.mxu0 %v1213
    %1882 = vmatpush.msra.mxu0 %v1205
    %1883 = vmatpush.msra.mxu0 %v1197
    %1884 = vmatpush.msra.mxu0 %v1189
    %1885 = vmatpush.msra.mxu0 %v1181
    %1886 = vmatmul.f32.gmra.mxu0 0.0
    %v1887 = vpop.f32.mrf.mxu0
    %v1888 = vadd.f32 %v1868, %v1887
    %1889 = vdwg.mxu0
    %1890 = vmatpush.msra.mxu0 %v1429
    %1891 = vmatpush.msra.mxu0 %v1421
    %1892 = vmatpush.msra.mxu0 %v1413
    %1893 = vmatpush.msra.mxu0 %v1405
    %1894 = vmatpush.msra.mxu0 %v1397
    %1895 = vmatpush.msra.mxu0 %v1389
    %1896 = vmatpush.msra.mxu0 %v1381
    %1897 = vmatpush.msra.mxu0 %v1373
    %1898 = vmatpush.msra.mxu0 %v1365
    %1899 = vmatpush.msra.mxu0 %v1357
    %1900 = vmatpush.msra.mxu0 %v1349
    %1901 = vmatpush.msra.mxu0 %v1341
    %1902 = vmatpush.msra.mxu0 %v1333
    %1903 = vmatpush.msra.mxu0 %v1325
    %1904 = vmatpush.msra.mxu0 %v1317
    %1905 = vmatpush.msra.mxu0 %v1309
    %1906 = vmatmul.f32.gmra.mxu0 0.0
    %v1907 = vpop.f32.mrf.mxu0
    %v1908 = vadd.f32 %v1888, %v1907
    %1909 = vdwg.mxu0
    %v1910 = vxor.u32 %v1488, 2147483648
    %v1911 = vxor.u32 %v1548, 2147483648
    %v1912 = vmul.f32 %v1910, 1.442695
    %v1913 = vpow.pop %v1912
    %v1914 = vmul.f32 %v1911, 1.442695
    %v1915 = vpow.pop %v1914
    %v1916 = vadd.f32 %v1913, 1.0
    %v1917 = vadd.f32 %v1915, 1.0
    %v1918 = vrcp.pop %v1916
    %v1919 = vmul.f32 %v1916, %v1918
    %v1920 = vsub.f32 1.0, %v1919
    %v1921 = vmul.f32 %v1918, %v1920
    %v1922 = vadd.f32 %v1918, %v1921
    %vm1923 = vweird.f32 %v1916
    %vm1924 = vweird.f32 %v1918
    %vm1925 = vmor %vm1923, %vm1924
    %v1926 = vsel %vm1925, %v1918, %v1922
    %v1927 = vand.u32 2147483647, %v1916
    %vm1928 = vcmp.eq.f32.partialorder %v1927, 8.507059e+37
    %v1929 = vand.u32 %v1916, 2147483648
    %v1930 = vor.u32 1.1754944e-38, %v1929
    %v1931 = vsel %vm1928, %v1930, %v1926
    %v1932 = vmul.f32 1.0, %v1931
    %v1933 = vrcp.pop %v1917
    %v1934 = vmul.f32 %v1917, %v1933
    %v1935 = vsub.f32 1.0, %v1934
    %v1936 = vmul.f32 %v1933, %v1935
    %v1937 = vadd.f32 %v1933, %v1936
    %vm1938 = vweird.f32 %v1917
    %vm1939 = vweird.f32 %v1933
    %vm1940 = vmor %vm1938, %vm1939
    %v1941 = vsel %vm1940, %v1933, %v1937
    %v1942 = vand.u32 2147483647, %v1917
    %vm1943 = vcmp.eq.f32.partialorder %v1942, 8.507059e+37
    %v1944 = vand.u32 %v1917, 2147483648
    %v1945 = vor.u32 1.1754944e-38, %v1944
    %v1946 = vsel %vm1943, %v1945, %v1941
    %v1947 = vmul.f32 1.0, %v1946
    %v1948 = vxor.u32 %v1608, 2147483648
    %v1949 = vxor.u32 %v1668, 2147483648
    %v1950 = vmul.f32 %v1948, 1.442695
    %v1951 = vpow.pop %v1950
    %v1952 = vmul.f32 %v1949, 1.442695
    %v1953 = vpow.pop %v1952
    %v1954 = vadd.f32 %v1951, 1.0
    %v1955 = vadd.f32 %v1953, 1.0
    %v1956 = vrcp.pop %v1954
    %v1957 = vmul.f32 %v1954, %v1956
    %v1958 = vsub.f32 1.0, %v1957
    %v1959 = vmul.f32 %v1956, %v1958
    %v1960 = vadd.f32 %v1956, %v1959
    %vm1961 = vweird.f32 %v1954
    %vm1962 = vweird.f32 %v1956
    %vm1963 = vmor %vm1961, %vm1962
    %v1964 = vsel %vm1963, %v1956, %v1960
    %v1965 = vand.u32 2147483647, %v1954
    %vm1966 = vcmp.eq.f32.partialorder %v1965, 8.507059e+37
    %v1967 = vand.u32 %v1954, 2147483648
    %v1968 = vor.u32 1.1754944e-38, %v1967
    %v1969 = vsel %vm1966, %v1968, %v1964
    %v1970 = vmul.f32 1.0, %v1969
    %v1971 = vrcp.pop %v1955
    %v1972 = vmul.f32 %v1955, %v1971
    %v1973 = vsub.f32 1.0, %v1972
    %v1974 = vmul.f32 %v1971, %v1973
    %v1975 = vadd.f32 %v1971, %v1974
    %vm1976 = vweird.f32 %v1955
    %vm1977 = vweird.f32 %v1971
    %vm1978 = vmor %vm1976, %vm1977
    %v1979 = vsel %vm1978, %v1971, %v1975
    %v1980 = vand.u32 2147483647, %v1955
    %vm1981 = vcmp.eq.f32.partialorder %v1980, 8.507059e+37
    %v1982 = vand.u32 %v1955, 2147483648
    %v1983 = vor.u32 1.1754944e-38, %v1982
    %v1984 = vsel %vm1981, %v1983, %v1979
    %v1985 = vmul.f32 1.0, %v1984
    %v1986 = vtanh.pop %v1728
    %v1987 = vtanh.pop %v1788
    %v1988 = vxor.u32 %v1848, 2147483648
    %v1989 = vxor.u32 %v1908, 2147483648
    %v1990 = vmul.f32 %v1988, 1.442695
    %v1991 = vpow.pop %v1990
    %v1992 = vmul.f32 %v1989, 1.442695
    %v1993 = vpow.pop %v1992
    %v1994 = vadd.f32 %v1991, 1.0
    %v1995 = vadd.f32 %v1993, 1.0
    %v1996 = vrcp.pop %v1994
    %v1997 = vmul.f32 %v1994, %v1996
    %v1998 = vsub.f32 1.0, %v1997
    %v1999 = vmul.f32 %v1996, %v1998
    %v2000 = vadd.f32 %v1996, %v1999
    %vm2001 = vweird.f32 %v1994
    %vm2002 = vweird.f32 %v1996
    %vm2003 = vmor %vm2001, %vm2002
    %v2004 = vsel %vm2003, %v1996, %v2000
    %v2005 = vand.u32 2147483647, %v1994
    %vm2006 = vcmp.eq.f32.partialorder %v2005, 8.507059e+37
    %v2007 = vand.u32 %v1994, 2147483648
    %v2008 = vor.u32 1.1754944e-38, %v2007
    %v2009 = vsel %vm2006, %v2008, %v2004
    %v2010 = vmul.f32 1.0, %v2009
    %v2011 = vrcp.pop %v1995
    %v2012 = vmul.f32 %v1995, %v2011
    %v2013 = vsub.f32 1.0, %v2012
    %v2014 = vmul.f32 %v2011, %v2013
    %v2015 = vadd.f32 %v2011, %v2014
    %vm2016 = vweird.f32 %v1995
    %vm2017 = vweird.f32 %v2011
    %vm2018 = vmor %vm2016, %vm2017
    %v2019 = vsel %vm2018, %v2011, %v2015
    %v2020 = vand.u32 2147483647, %v1995
    %vm2021 = vcmp.eq.f32.partialorder %v2020, 8.507059e+37
    %v2022 = vand.u32 %v1995, 2147483648
    %v2023 = vor.u32 1.1754944e-38, %v2022
    %v2024 = vsel %vm2021, %v2023, %v2019
    %v2025 = vmul.f32 1.0, %v2024
    %v2026 = vmul.f32 %v1970, 0.0
    %v2027 = vmul.f32 %v1985, 0.0
    %v2028 = vmul.f32 %v1932, %v1986
    %v2029 = vmul.f32 %v1947, %v1987
    %v2030 = vadd.f32 %v2026, %v2028
    %v2031 = vadd.f32 %v2027, %v2029
    %v2032 = vtanh.pop %v2030
    %v2033 = vtanh.pop %v2031
    %v2034 = vmul.f32 %v2010, %v2032
    %v2035 = vmul.f32 %v2025, %v2033
    %s2036 = smul.u32 1, 4
    %s2037 = smul.addr %s2036, 8
    %s2038 = scalar_lea.vmem [#allocation2], %s2037
    %v2039 = vld [vmem:[%s2038] sm:$0xff]
    %v2040 = vld [vmem:[%s2038 + $0x8] sm:$0xff]
    %v2041 = vld [vmem:[%s2038 + $0x10] sm:$0xff]
    %v2042 = vld [vmem:[%s2038 + $0x18] sm:$0xff]
    %2043 = vmatpush.msra.mxu0 %v544
    %2044 = vmatpush.msra.mxu0 %v540
    %2045 = vmatpush.msra.mxu0 %v536
    %2046 = vmatpush.msra.mxu0 %v532
    %2047 = vmatpush.msra.mxu0 %v528
    %2048 = vmatpush.msra.mxu0 %v524
    %2049 = vmatpush.msra.mxu0 %v520
    %2050 = vmatpush.msra.mxu0 %v516
    %2051 = vmatpush.msra.mxu0 %v512
    %2052 = vmatpush.msra.mxu0 %v508
    %2053 = vmatpush.msra.mxu0 %v504
    %2054 = vmatpush.msra.mxu0 %v500
    %2055 = vmatpush.msra.mxu0 %v496
    %2056 = vmatpush.msra.mxu0 %v492
    %2057 = vmatpush.msra.mxu0 %v488
    %2058 = vmatpush.msra.mxu0 %v484
    %2059 = vmatmul.f32.gmra.mxu0 %v694
    %v2060 = vpop.f32.mrf.mxu0
    %v2061 = vadd.f32 0.0, %v2060
    %2062 = vdwg.mxu0
    %2063 = vmatpush.msra.mxu0 %v545
    %2064 = vmatpush.msra.mxu0 %v541
    %2065 = vmatpush.msra.mxu0 %v537
    %2066 = vmatpush.msra.mxu0 %v533
    %2067 = vmatpush.msra.mxu0 %v529
    %2068 = vmatpush.msra.mxu0 %v525
    %2069 = vmatpush.msra.mxu0 %v521
    %2070 = vmatpush.msra.mxu0 %v517
    %2071 = vmatpush.msra.mxu0 %v513
    %2072 = vmatpush.msra.mxu0 %v509
    %2073 = vmatpush.msra.mxu0 %v505
    %2074 = vmatpush.msra.mxu0 %v501
    %2075 = vmatpush.msra.mxu0 %v497
    %2076 = vmatpush.msra.mxu0 %v493
    %2077 = vmatpush.msra.mxu0 %v489
    %2078 = vmatpush.msra.mxu0 %v485
    %2079 = vmatmul.f32.gmra.mxu0 %v694
    %v2080 = vpop.f32.mrf.mxu0
    %v2081 = vadd.f32 0.0, %v2080
    %2082 = vdwg.mxu0
    %2083 = vmatpush.msra.mxu0 %v546
    %2084 = vmatpush.msra.mxu0 %v542
    %2085 = vmatpush.msra.mxu0 %v538
    %2086 = vmatpush.msra.mxu0 %v534
    %2087 = vmatpush.msra.mxu0 %v530
    %2088 = vmatpush.msra.mxu0 %v526
    %2089 = vmatpush.msra.mxu0 %v522
    %2090 = vmatpush.msra.mxu0 %v518
    %2091 = vmatpush.msra.mxu0 %v514
    %2092 = vmatpush.msra.mxu0 %v510
    %2093 = vmatpush.msra.mxu0 %v506
    %2094 = vmatpush.msra.mxu0 %v502
    %2095 = vmatpush.msra.mxu0 %v498
    %2096 = vmatpush.msra.mxu0 %v494
    %2097 = vmatpush.msra.mxu0 %v490
    %2098 = vmatpush.msra.mxu0 %v486
    %2099 = vmatmul.f32.gmra.mxu0 %v694
    %v2100 = vpop.f32.mrf.mxu0
    %v2101 = vadd.f32 0.0, %v2100
    %2102 = vdwg.mxu0
    %2103 = vmatpush.msra.mxu0 %v547
    %2104 = vmatpush.msra.mxu0 %v543
    %2105 = vmatpush.msra.mxu0 %v539
    %2106 = vmatpush.msra.mxu0 %v535
    %2107 = vmatpush.msra.mxu0 %v531
    %2108 = vmatpush.msra.mxu0 %v527
    %2109 = vmatpush.msra.mxu0 %v523
    %2110 = vmatpush.msra.mxu0 %v519
    %2111 = vmatpush.msra.mxu0 %v515
    %2112 = vmatpush.msra.mxu0 %v511
    %2113 = vmatpush.msra.mxu0 %v507
    %2114 = vmatpush.msra.mxu0 %v503
    %2115 = vmatpush.msra.mxu0 %v499
    %2116 = vmatpush.msra.mxu0 %v495
    %2117 = vmatpush.msra.mxu0 %v491
    %2118 = vmatpush.msra.mxu0 %v487
    %2119 = vmatmul.f32.gmra.mxu0 %v694
    %v2120 = vpop.f32.mrf.mxu0
    %v2121 = vadd.f32 0.0, %v2120
    %2122 = vdwg.mxu0
    %v2123 = vadd.f32 %v2039, %v2061
    %v2124 = vadd.f32 %v2040, %v2081
    %v2125 = vadd.f32 %v2041, %v2101
    %v2126 = vadd.f32 %v2042, %v2121
    %v2127 = vxor.u32 %v2123, 2147483648
    %v2128 = vmul.f32 %v2127, 1.442695
    %v2129 = vpow.pop %v2128
    %v2130 = vadd.f32 %v2129, 1.0
    %v2131 = vrcp.pop %v2130
    %v2132 = vmul.f32 %v2130, %v2131
    %v2133 = vsub.f32 1.0, %v2132
    %v2134 = vmul.f32 %v2131, %v2133
    %v2135 = vadd.f32 %v2131, %v2134
    %vm2136 = vweird.f32 %v2130
    %vm2137 = vweird.f32 %v2131
    %vm2138 = vmor %vm2136, %vm2137
    %v2139 = vsel %vm2138, %v2131, %v2135
    %v2140 = vand.u32 2147483647, %v2130
    %vm2141 = vcmp.eq.f32.partialorder %v2140, 8.507059e+37
    %v2142 = vand.u32 %v2130, 2147483648
    %v2143 = vor.u32 1.1754944e-38, %v2142
    %v2144 = vsel %vm2141, %v2143, %v2139
    %v2145 = vmul.f32 1.0, %v2144
    %v2146 = vxor.u32 %v2124, 2147483648
    %v2147 = vmul.f32 %v2146, 1.442695
    %v2148 = vpow.pop %v2147
    %v2149 = vadd.f32 %v2148, 1.0
    %v2150 = vrcp.pop %v2149
    %v2151 = vmul.f32 %v2149, %v2150
    %v2152 = vsub.f32 1.0, %v2151
    %v2153 = vmul.f32 %v2150, %v2152
    %v2154 = vadd.f32 %v2150, %v2153
    %vm2155 = vweird.f32 %v2149
    %vm2156 = vweird.f32 %v2150
    %vm2157 = vmor %vm2155, %vm2156
    %v2158 = vsel %vm2157, %v2150, %v2154
    %v2159 = vand.u32 2147483647, %v2149
    %vm2160 = vcmp.eq.f32.partialorder %v2159, 8.507059e+37
    %v2161 = vand.u32 %v2149, 2147483648
    %v2162 = vor.u32 1.1754944e-38, %v2161
    %v2163 = vsel %vm2160, %v2162, %v2158
    %v2164 = vmul.f32 1.0, %v2163
    %v2165 = vtanh.pop %v2125
    %v2166 = vxor.u32 %v2126, 2147483648
    %v2167 = vmul.f32 %v2166, 1.442695
    %v2168 = vpow.pop %v2167
    %v2169 = vadd.f32 %v2168, 1.0
    %v2170 = vrcp.pop %v2169
    %v2171 = vmul.f32 %v2169, %v2170
    %v2172 = vsub.f32 1.0, %v2171
    %v2173 = vmul.f32 %v2170, %v2172
    %v2174 = vadd.f32 %v2170, %v2173
    %vm2175 = vweird.f32 %v2169
    %vm2176 = vweird.f32 %v2170
    %vm2177 = vmor %vm2175, %vm2176
    %v2178 = vsel %vm2177, %v2170, %v2174
    %v2179 = vand.u32 2147483647, %v2169
    %vm2180 = vcmp.eq.f32.partialorder %v2179, 8.507059e+37
    %v2181 = vand.u32 %v2169, 2147483648
    %v2182 = vor.u32 1.1754944e-38, %v2181
    %v2183 = vsel %vm2180, %v2182, %v2178
    %v2184 = vmul.f32 1.0, %v2183
    %v2185 = vmul.f32 %v2164, %v692
    %v2186 = vmul.f32 %v2145, %v2165
    %v2187 = vadd.f32 %v2185, %v2186
    %v2188 = vtanh.pop %v2187
    %v2189 = vmul.f32 %v2184, %v2188
    %2190 = vmatpush.msra.mxu0 %v755
    %2191 = vmatpush.msra.mxu0 %v751
    %2192 = vmatpush.msra.mxu0 %v747
    %2193 = vmatpush.msra.mxu0 %v743
    %2194 = vmatpush.msra.mxu0 %v739
    %2195 = vmatpush.msra.mxu0 %v735
    %2196 = vmatpush.msra.mxu0 %v731
    %2197 = vmatpush.msra.mxu0 %v727
    %2198 = vmatpush.msra.mxu0 %v723
    %2199 = vmatpush.msra.mxu0 %v719
    %2200 = vmatpush.msra.mxu0 %v715
    %2201 = vmatpush.msra.mxu0 %v711
    %2202 = vmatpush.msra.mxu0 %v707
    %2203 = vmatpush.msra.mxu0 %v703
    %2204 = vmatpush.msra.mxu0 %v699
    %2205 = vmatpush.msra.mxu0 %v695
    %2206 = vmatmul.f32.gmra.mxu0 %v2189
    %v2207 = vpop.f32.mrf.mxu0
    %v2208 = vadd.f32 %v451, %v2207
    %2209 = vdwg.mxu0
    %2210 = vmatpush.msra.mxu0 %v819
    %2211 = vmatpush.msra.mxu0 %v815
    %2212 = vmatpush.msra.mxu0 %v811
    %2213 = vmatpush.msra.mxu0 %v807
    %2214 = vmatpush.msra.mxu0 %v803
    %2215 = vmatpush.msra.mxu0 %v799
    %2216 = vmatpush.msra.mxu0 %v795
    %2217 = vmatpush.msra.mxu0 %v791
    %2218 = vmatpush.msra.mxu0 %v787
    %2219 = vmatpush.msra.mxu0 %v783
    %2220 = vmatpush.msra.mxu0 %v779
    %2221 = vmatpush.msra.mxu0 %v775
    %2222 = vmatpush.msra.mxu0 %v771
    %2223 = vmatpush.msra.mxu0 %v767
    %2224 = vmatpush.msra.mxu0 %v763
    %2225 = vmatpush.msra.mxu0 %v759
    %2226 = vmatmul.f32.gmra.mxu0 %v1045
    %v2227 = vpop.f32.mrf.mxu0
    %v2228 = vadd.f32 %v2208, %v2227
    %2229 = vdwg.mxu0
    %2230 = vmatpush.msra.mxu0 %v756
    %2231 = vmatpush.msra.mxu0 %v752
    %2232 = vmatpush.msra.mxu0 %v748
    %2233 = vmatpush.msra.mxu0 %v744
    %2234 = vmatpush.msra.mxu0 %v740
    %2235 = vmatpush.msra.mxu0 %v736
    %2236 = vmatpush.msra.mxu0 %v732
    %2237 = vmatpush.msra.mxu0 %v728
    %2238 = vmatpush.msra.mxu0 %v724
    %2239 = vmatpush.msra.mxu0 %v720
    %2240 = vmatpush.msra.mxu0 %v716
    %2241 = vmatpush.msra.mxu0 %v712
    %2242 = vmatpush.msra.mxu0 %v708
    %2243 = vmatpush.msra.mxu0 %v704
    %2244 = vmatpush.msra.mxu0 %v700
    %2245 = vmatpush.msra.mxu0 %v696
    %2246 = vmatmul.f32.gmra.mxu0 %v2189
    %v2247 = vpop.f32.mrf.mxu0
    %v2248 = vadd.f32 %v452, %v2247
    %2249 = vdwg.mxu0
    %2250 = vmatpush.msra.mxu0 %v820
    %2251 = vmatpush.msra.mxu0 %v816
    %2252 = vmatpush.msra.mxu0 %v812
    %2253 = vmatpush.msra.mxu0 %v808
    %2254 = vmatpush.msra.mxu0 %v804
    %2255 = vmatpush.msra.mxu0 %v800
    %2256 = vmatpush.msra.mxu0 %v796
    %2257 = vmatpush.msra.mxu0 %v792
    %2258 = vmatpush.msra.mxu0 %v788
    %2259 = vmatpush.msra.mxu0 %v784
    %2260 = vmatpush.msra.mxu0 %v780
    %2261 = vmatpush.msra.mxu0 %v776
    %2262 = vmatpush.msra.mxu0 %v772
    %2263 = vmatpush.msra.mxu0 %v768
    %2264 = vmatpush.msra.mxu0 %v764
    %2265 = vmatpush.msra.mxu0 %v760
    %2266 = vmatmul.f32.gmra.mxu0 %v1045
    %v2267 = vpop.f32.mrf.mxu0
    %v2268 = vadd.f32 %v2248, %v2267
    %2269 = vdwg.mxu0
    %2270 = vmatpush.msra.mxu0 %v757
    %2271 = vmatpush.msra.mxu0 %v753
    %2272 = vmatpush.msra.mxu0 %v749
    %2273 = vmatpush.msra.mxu0 %v745
    %2274 = vmatpush.msra.mxu0 %v741
    %2275 = vmatpush.msra.mxu0 %v737
    %2276 = vmatpush.msra.mxu0 %v733
    %2277 = vmatpush.msra.mxu0 %v729
    %2278 = vmatpush.msra.mxu0 %v725
    %2279 = vmatpush.msra.mxu0 %v721
    %2280 = vmatpush.msra.mxu0 %v717
    %2281 = vmatpush.msra.mxu0 %v713
    %2282 = vmatpush.msra.mxu0 %v709
    %2283 = vmatpush.msra.mxu0 %v705
    %2284 = vmatpush.msra.mxu0 %v701
    %2285 = vmatpush.msra.mxu0 %v697
    %2286 = vmatmul.f32.gmra.mxu0 %v2189
    %v2287 = vpop.f32.mrf.mxu0
    %v2288 = vadd.f32 %v453, %v2287
    %2289 = vdwg.mxu0
    %2290 = vmatpush.msra.mxu0 %v821
    %2291 = vmatpush.msra.mxu0 %v817
    %2292 = vmatpush.msra.mxu0 %v813
    %2293 = vmatpush.msra.mxu0 %v809
    %2294 = vmatpush.msra.mxu0 %v805
    %2295 = vmatpush.msra.mxu0 %v801
    %2296 = vmatpush.msra.mxu0 %v797
    %2297 = vmatpush.msra.mxu0 %v793
    %2298 = vmatpush.msra.mxu0 %v789
    %2299 = vmatpush.msra.mxu0 %v785
    %2300 = vmatpush.msra.mxu0 %v781
    %2301 = vmatpush.msra.mxu0 %v777
    %2302 = vmatpush.msra.mxu0 %v773
    %2303 = vmatpush.msra.mxu0 %v769
    %2304 = vmatpush.msra.mxu0 %v765
    %2305 = vmatpush.msra.mxu0 %v761
    %2306 = vmatmul.f32.gmra.mxu0 %v1045
    %v2307 = vpop.f32.mrf.mxu0
    %v2308 = vadd.f32 %v2288, %v2307
    %2309 = vdwg.mxu0
    %2310 = vmatpush.msra.mxu0 %v758
    %2311 = vmatpush.msra.mxu0 %v754
    %2312 = vmatpush.msra.mxu0 %v750
    %2313 = vmatpush.msra.mxu0 %v746
    %2314 = vmatpush.msra.mxu0 %v742
    %2315 = vmatpush.msra.mxu0 %v738
    %2316 = vmatpush.msra.mxu0 %v734
    %2317 = vmatpush.msra.mxu0 %v730
    %2318 = vmatpush.msra.mxu0 %v726
    %2319 = vmatpush.msra.mxu0 %v722
    %2320 = vmatpush.msra.mxu0 %v718
    %2321 = vmatpush.msra.mxu0 %v714
    %2322 = vmatpush.msra.mxu0 %v710
    %2323 = vmatpush.msra.mxu0 %v706
    %2324 = vmatpush.msra.mxu0 %v702
    %2325 = vmatpush.msra.mxu0 %v698
    %2326 = vmatmul.f32.gmra.mxu0 %v2189
    %v2327 = vpop.f32.mrf.mxu0
    %v2328 = vadd.f32 %v454, %v2327
    %2329 = vdwg.mxu0
    %2330 = vmatpush.msra.mxu0 %v822
    %2331 = vmatpush.msra.mxu0 %v818
    %2332 = vmatpush.msra.mxu0 %v814
    %2333 = vmatpush.msra.mxu0 %v810
    %2334 = vmatpush.msra.mxu0 %v806
    %2335 = vmatpush.msra.mxu0 %v802
    %2336 = vmatpush.msra.mxu0 %v798
    %2337 = vmatpush.msra.mxu0 %v794
    %2338 = vmatpush.msra.mxu0 %v790
    %2339 = vmatpush.msra.mxu0 %v786
    %2340 = vmatpush.msra.mxu0 %v782
    %2341 = vmatpush.msra.mxu0 %v778
    %2342 = vmatpush.msra.mxu0 %v774
    %2343 = vmatpush.msra.mxu0 %v770
    %2344 = vmatpush.msra.mxu0 %v766
    %2345 = vmatpush.msra.mxu0 %v762
    %2346 = vmatmul.f32.gmra.mxu0 %v1045
    %v2347 = vpop.f32.mrf.mxu0
    %v2348 = vadd.f32 %v2328, %v2347
    %2349 = vdwg.mxu0
    %v2350 = vxor.u32 %v2228, 2147483648
    %v2351 = vmul.f32 %v2350, 1.442695
    %v2352 = vpow.pop %v2351
    %v2353 = vadd.f32 %v2352, 1.0
    %v2354 = vrcp.pop %v2353
    %v2355 = vmul.f32 %v2353, %v2354
    %v2356 = vsub.f32 1.0, %v2355
    %v2357 = vmul.f32 %v2354, %v2356
    %v2358 = vadd.f32 %v2354, %v2357
    %vm2359 = vweird.f32 %v2353
    %vm2360 = vweird.f32 %v2354
    %vm2361 = vmor %vm2359, %vm2360
    %v2362 = vsel %vm2361, %v2354, %v2358
    %v2363 = vand.u32 2147483647, %v2353
    %vm2364 = vcmp.eq.f32.partialorder %v2363, 8.507059e+37
    %v2365 = vand.u32 %v2353, 2147483648
    %v2366 = vor.u32 1.1754944e-38, %v2365
    %v2367 = vsel %vm2364, %v2366, %v2362
    %v2368 = vmul.f32 1.0, %v2367
    %v2369 = vxor.u32 %v2268, 2147483648
    %v2370 = vmul.f32 %v2369, 1.442695
    %v2371 = vpow.pop %v2370
    %v2372 = vadd.f32 %v2371, 1.0
    %v2373 = vrcp.pop %v2372
    %v2374 = vmul.f32 %v2372, %v2373
    %v2375 = vsub.f32 1.0, %v2374
    %v2376 = vmul.f32 %v2373, %v2375
    %v2377 = vadd.f32 %v2373, %v2376
    %vm2378 = vweird.f32 %v2372
    %vm2379 = vweird.f32 %v2373
    %vm2380 = vmor %vm2378, %vm2379
    %v2381 = vsel %vm2380, %v2373, %v2377
    %v2382 = vand.u32 2147483647, %v2372
    %vm2383 = vcmp.eq.f32.partialorder %v2382, 8.507059e+37
    %v2384 = vand.u32 %v2372, 2147483648
    %v2385 = vor.u32 1.1754944e-38, %v2384
    %v2386 = vsel %vm2383, %v2385, %v2381
    %v2387 = vmul.f32 1.0, %v2386
    %v2388 = vtanh.pop %v2308
    %v2389 = vxor.u32 %v2348, 2147483648
    %v2390 = vmul.f32 %v2389, 1.442695
    %v2391 = vpow.pop %v2390
    %v2392 = vadd.f32 %v2391, 1.0
    %v2393 = vrcp.pop %v2392
    %v2394 = vmul.f32 %v2392, %v2393
    %v2395 = vsub.f32 1.0, %v2394
    %v2396 = vmul.f32 %v2393, %v2395
    %v2397 = vadd.f32 %v2393, %v2396
    %vm2398 = vweird.f32 %v2392
    %vm2399 = vweird.f32 %v2393
    %vm2400 = vmor %vm2398, %vm2399
    %v2401 = vsel %vm2400, %v2393, %v2397
    %v2402 = vand.u32 2147483647, %v2392
    %vm2403 = vcmp.eq.f32.partialorder %v2402, 8.507059e+37
    %v2404 = vand.u32 %v2392, 2147483648
    %v2405 = vor.u32 1.1754944e-38, %v2404
    %v2406 = vsel %vm2403, %v2405, %v2401
    %v2407 = vmul.f32 1.0, %v2406
    %v2408 = vmul.f32 %v2387, %v1043
    %v2409 = vmul.f32 %v2368, %v2388
    %v2410 = vadd.f32 %v2408, %v2409
    %v2411 = vtanh.pop %v2410
    %v2412 = vmul.f32 %v2407, %v2411
    %2413 = vmatpush.msra.mxu0 %v1166
    %2414 = vmatpush.msra.mxu0 %v1158
    %2415 = vmatpush.msra.mxu0 %v1150
    %2416 = vmatpush.msra.mxu0 %v1142
    %2417 = vmatpush.msra.mxu0 %v1134
    %2418 = vmatpush.msra.mxu0 %v1126
    %2419 = vmatpush.msra.mxu0 %v1118
    %2420 = vmatpush.msra.mxu0 %v1110
    %2421 = vmatpush.msra.mxu0 %v1102
    %2422 = vmatpush.msra.mxu0 %v1094
    %2423 = vmatpush.msra.mxu0 %v1086
    %2424 = vmatpush.msra.mxu0 %v1078
    %2425 = vmatpush.msra.mxu0 %v1070
    %2426 = vmatpush.msra.mxu0 %v1062
    %2427 = vmatpush.msra.mxu0 %v1054
    %2428 = vmatpush.msra.mxu0 %v1046
    %2429 = vmatmul.f32.gmra.mxu0 %v2412
    %v2430 = vpop.f32.mrf.mxu0
    %v2431 = vadd.f32 %v461, %v2430
    %2432 = vdwg.mxu0
    %2433 = vmatpush.msra.mxu0 %v1294
    %2434 = vmatpush.msra.mxu0 %v1286
    %2435 = vmatpush.msra.mxu0 %v1278
    %2436 = vmatpush.msra.mxu0 %v1270
    %2437 = vmatpush.msra.mxu0 %v1262
    %2438 = vmatpush.msra.mxu0 %v1254
    %2439 = vmatpush.msra.mxu0 %v1246
    %2440 = vmatpush.msra.mxu0 %v1238
    %2441 = vmatpush.msra.mxu0 %v1230
    %2442 = vmatpush.msra.mxu0 %v1222
    %2443 = vmatpush.msra.mxu0 %v1214
    %2444 = vmatpush.msra.mxu0 %v1206
    %2445 = vmatpush.msra.mxu0 %v1198
    %2446 = vmatpush.msra.mxu0 %v1190
    %2447 = vmatpush.msra.mxu0 %v1182
    %2448 = vmatpush.msra.mxu0 %v1174
    %2449 = vmatmul.f32.gmra.mxu0 %v2034
    %v2450 = vpop.f32.mrf.mxu0
    %v2451 = vadd.f32 %v2431, %v2450
    %2452 = vdwg.mxu0
    %2453 = vmatpush.msra.mxu0 %v1422
    %2454 = vmatpush.msra.mxu0 %v1414
    %2455 = vmatpush.msra.mxu0 %v1406
    %2456 = vmatpush.msra.mxu0 %v1398
    %2457 = vmatpush.msra.mxu0 %v1390
    %2458 = vmatpush.msra.mxu0 %v1382
    %2459 = vmatpush.msra.mxu0 %v1374
    %2460 = vmatpush.msra.mxu0 %v1366
    %2461 = vmatpush.msra.mxu0 %v1358
    %2462 = vmatpush.msra.mxu0 %v1350
    %2463 = vmatpush.msra.mxu0 %v1342
    %2464 = vmatpush.msra.mxu0 %v1334
    %2465 = vmatpush.msra.mxu0 %v1326
    %2466 = vmatpush.msra.mxu0 %v1318
    %2467 = vmatpush.msra.mxu0 %v1310
    %2468 = vmatpush.msra.mxu0 %v1302
    %2469 = vmatmul.f32.gmra.mxu0 %v2035
    %v2470 = vpop.f32.mrf.mxu0
    %v2471 = vadd.f32 %v2451, %v2470
    %2472 = vdwg.mxu0
    %2473 = vmatpush.msra.mxu0 %v1167
    %2474 = vmatpush.msra.mxu0 %v1159
    %2475 = vmatpush.msra.mxu0 %v1151
    %2476 = vmatpush.msra.mxu0 %v1143
    %2477 = vmatpush.msra.mxu0 %v1135
    %2478 = vmatpush.msra.mxu0 %v1127
    %2479 = vmatpush.msra.mxu0 %v1119
    %2480 = vmatpush.msra.mxu0 %v1111
    %2481 = vmatpush.msra.mxu0 %v1103
    %2482 = vmatpush.msra.mxu0 %v1095
    %2483 = vmatpush.msra.mxu0 %v1087
    %2484 = vmatpush.msra.mxu0 %v1079
    %2485 = vmatpush.msra.mxu0 %v1071
    %2486 = vmatpush.msra.mxu0 %v1063
    %2487 = vmatpush.msra.mxu0 %v1055
    %2488 = vmatpush.msra.mxu0 %v1047
    %2489 = vmatmul.f32.gmra.mxu0 %v2412
    %v2490 = vpop.f32.mrf.mxu0
    %v2491 = vadd.f32 %v462, %v2490
    %2492 = vdwg.mxu0
    %2493 = vmatpush.msra.mxu0 %v1295
    %2494 = vmatpush.msra.mxu0 %v1287
    %2495 = vmatpush.msra.mxu0 %v1279
    %2496 = vmatpush.msra.mxu0 %v1271
    %2497 = vmatpush.msra.mxu0 %v1263
    %2498 = vmatpush.msra.mxu0 %v1255
    %2499 = vmatpush.msra.mxu0 %v1247
    %2500 = vmatpush.msra.mxu0 %v1239
    %2501 = vmatpush.msra.mxu0 %v1231
    %2502 = vmatpush.msra.mxu0 %v1223
    %2503 = vmatpush.msra.mxu0 %v1215
    %2504 = vmatpush.msra.mxu0 %v1207
    %2505 = vmatpush.msra.mxu0 %v1199
    %2506 = vmatpush.msra.mxu0 %v1191
    %2507 = vmatpush.msra.mxu0 %v1183
    %2508 = vmatpush.msra.mxu0 %v1175
    %2509 = vmatmul.f32.gmra.mxu0 %v2034
    %v2510 = vpop.f32.mrf.mxu0
    %v2511 = vadd.f32 %v2491, %v2510
    %2512 = vdwg.mxu0
    %2513 = vmatpush.msra.mxu0 %v1423
    %2514 = vmatpush.msra.mxu0 %v1415
    %2515 = vmatpush.msra.mxu0 %v1407
    %2516 = vmatpush.msra.mxu0 %v1399
    %2517 = vmatpush.msra.mxu0 %v1391
    %2518 = vmatpush.msra.mxu0 %v1383
    %2519 = vmatpush.msra.mxu0 %v1375
    %2520 = vmatpush.msra.mxu0 %v1367
    %2521 = vmatpush.msra.mxu0 %v1359
    %2522 = vmatpush.msra.mxu0 %v1351
    %2523 = vmatpush.msra.mxu0 %v1343
    %2524 = vmatpush.msra.mxu0 %v1335
    %2525 = vmatpush.msra.mxu0 %v1327
    %2526 = vmatpush.msra.mxu0 %v1319
    %2527 = vmatpush.msra.mxu0 %v1311
    %2528 = vmatpush.msra.mxu0 %v1303
    %2529 = vmatmul.f32.gmra.mxu0 %v2035
    %v2530 = vpop.f32.mrf.mxu0
    %v2531 = vadd.f32 %v2511, %v2530
    %2532 = vdwg.mxu0
    %2533 = vmatpush.msra.mxu0 %v1168
    %2534 = vmatpush.msra.mxu0 %v1160
    %2535 = vmatpush.msra.mxu0 %v1152
    %2536 = vmatpush.msra.mxu0 %v1144
    %2537 = vmatpush.msra.mxu0 %v1136
    %2538 = vmatpush.msra.mxu0 %v1128
    %2539 = vmatpush.msra.mxu0 %v1120
    %2540 = vmatpush.msra.mxu0 %v1112
    %2541 = vmatpush.msra.mxu0 %v1104
    %2542 = vmatpush.msra.mxu0 %v1096
    %2543 = vmatpush.msra.mxu0 %v1088
    %2544 = vmatpush.msra.mxu0 %v1080
    %2545 = vmatpush.msra.mxu0 %v1072
    %2546 = vmatpush.msra.mxu0 %v1064
    %2547 = vmatpush.msra.mxu0 %v1056
    %2548 = vmatpush.msra.mxu0 %v1048
    %2549 = vmatmul.f32.gmra.mxu0 %v2412
    %v2550 = vpop.f32.mrf.mxu0
    %v2551 = vadd.f32 %v463, %v2550
    %2552 = vdwg.mxu0
    %2553 = vmatpush.msra.mxu0 %v1296
    %2554 = vmatpush.msra.mxu0 %v1288
    %2555 = vmatpush.msra.mxu0 %v1280
    %2556 = vmatpush.msra.mxu0 %v1272
    %2557 = vmatpush.msra.mxu0 %v1264
    %2558 = vmatpush.msra.mxu0 %v1256
    %2559 = vmatpush.msra.mxu0 %v1248
    %2560 = vmatpush.msra.mxu0 %v1240
    %2561 = vmatpush.msra.mxu0 %v1232
    %2562 = vmatpush.msra.mxu0 %v1224
    %2563 = vmatpush.msra.mxu0 %v1216
    %2564 = vmatpush.msra.mxu0 %v1208
    %2565 = vmatpush.msra.mxu0 %v1200
    %2566 = vmatpush.msra.mxu0 %v1192
    %2567 = vmatpush.msra.mxu0 %v1184
    %2568 = vmatpush.msra.mxu0 %v1176
    %2569 = vmatmul.f32.gmra.mxu0 %v2034
    %v2570 = vpop.f32.mrf.mxu0
    %v2571 = vadd.f32 %v2551, %v2570
    %2572 = vdwg.mxu0
    %2573 = vmatpush.msra.mxu0 %v1424
    %2574 = vmatpush.msra.mxu0 %v1416
    %2575 = vmatpush.msra.mxu0 %v1408
    %2576 = vmatpush.msra.mxu0 %v1400
    %2577 = vmatpush.msra.mxu0 %v1392
    %2578 = vmatpush.msra.mxu0 %v1384
    %2579 = vmatpush.msra.mxu0 %v1376
    %2580 = vmatpush.msra.mxu0 %v1368
    %2581 = vmatpush.msra.mxu0 %v1360
    %2582 = vmatpush.msra.mxu0 %v1352
    %2583 = vmatpush.msra.mxu0 %v1344
    %2584 = vmatpush.msra.mxu0 %v1336
    %2585 = vmatpush.msra.mxu0 %v1328
    %2586 = vmatpush.msra.mxu0 %v1320
    %2587 = vmatpush.msra.mxu0 %v1312
    %2588 = vmatpush.msra.mxu0 %v1304
    %2589 = vmatmul.f32.gmra.mxu0 %v2035
    %v2590 = vpop.f32.mrf.mxu0
    %v2591 = vadd.f32 %v2571, %v2590
    %2592 = vdwg.mxu0
    %2593 = vmatpush.msra.mxu0 %v1169
    %2594 = vmatpush.msra.mxu0 %v1161
    %2595 = vmatpush.msra.mxu0 %v1153
    %2596 = vmatpush.msra.mxu0 %v1145
    %2597 = vmatpush.msra.mxu0 %v1137
    %2598 = vmatpush.msra.mxu0 %v1129
    %2599 = vmatpush.msra.mxu0 %v1121
    %2600 = vmatpush.msra.mxu0 %v1113
    %2601 = vmatpush.msra.mxu0 %v1105
    %2602 = vmatpush.msra.mxu0 %v1097
    %2603 = vmatpush.msra.mxu0 %v1089
    %2604 = vmatpush.msra.mxu0 %v1081
    %2605 = vmatpush.msra.mxu0 %v1073
    %2606 = vmatpush.msra.mxu0 %v1065
    %2607 = vmatpush.msra.mxu0 %v1057
    %2608 = vmatpush.msra.mxu0 %v1049
    %2609 = vmatmul.f32.gmra.mxu0 %v2412
    %v2610 = vpop.f32.mrf.mxu0
    %v2611 = vadd.f32 %v464, %v2610
    %2612 = vdwg.mxu0
    %2613 = vmatpush.msra.mxu0 %v1297
    %2614 = vmatpush.msra.mxu0 %v1289
    %2615 = vmatpush.msra.mxu0 %v1281
    %2616 = vmatpush.msra.mxu0 %v1273
    %2617 = vmatpush.msra.mxu0 %v1265
    %2618 = vmatpush.msra.mxu0 %v1257
    %2619 = vmatpush.msra.mxu0 %v1249
    %2620 = vmatpush.msra.mxu0 %v1241
    %2621 = vmatpush.msra.mxu0 %v1233
    %2622 = vmatpush.msra.mxu0 %v1225
    %2623 = vmatpush.msra.mxu0 %v1217
    %2624 = vmatpush.msra.mxu0 %v1209
    %2625 = vmatpush.msra.mxu0 %v1201
    %2626 = vmatpush.msra.mxu0 %v1193
    %2627 = vmatpush.msra.mxu0 %v1185
    %2628 = vmatpush.msra.mxu0 %v1177
    %2629 = vmatmul.f32.gmra.mxu0 %v2034
    %v2630 = vpop.f32.mrf.mxu0
    %v2631 = vadd.f32 %v2611, %v2630
    %2632 = vdwg.mxu0
    %2633 = vmatpush.msra.mxu0 %v1425
    %2634 = vmatpush.msra.mxu0 %v1417
    %2635 = vmatpush.msra.mxu0 %v1409
    %2636 = vmatpush.msra.mxu0 %v1401
    %2637 = vmatpush.msra.mxu0 %v1393
    %2638 = vmatpush.msra.mxu0 %v1385
    %2639 = vmatpush.msra.mxu0 %v1377
    %2640 = vmatpush.msra.mxu0 %v1369
    %2641 = vmatpush.msra.mxu0 %v1361
    %2642 = vmatpush.msra.mxu0 %v1353
    %2643 = vmatpush.msra.mxu0 %v1345
    %2644 = vmatpush.msra.mxu0 %v1337
    %2645 = vmatpush.msra.mxu0 %v1329
    %2646 = vmatpush.msra.mxu0 %v1321
    %2647 = vmatpush.msra.mxu0 %v1313
    %2648 = vmatpush.msra.mxu0 %v1305
    %2649 = vmatmul.f32.gmra.mxu0 %v2035
    %v2650 = vpop.f32.mrf.mxu0
    %v2651 = vadd.f32 %v2631, %v2650
    %2652 = vdwg.mxu0
    %2653 = vmatpush.msra.mxu0 %v1170
    %2654 = vmatpush.msra.mxu0 %v1162
    %2655 = vmatpush.msra.mxu0 %v1154
    %2656 = vmatpush.msra.mxu0 %v1146
    %2657 = vmatpush.msra.mxu0 %v1138
    %2658 = vmatpush.msra.mxu0 %v1130
    %2659 = vmatpush.msra.mxu0 %v1122
    %2660 = vmatpush.msra.mxu0 %v1114
    %2661 = vmatpush.msra.mxu0 %v1106
    %2662 = vmatpush.msra.mxu0 %v1098
    %2663 = vmatpush.msra.mxu0 %v1090
    %2664 = vmatpush.msra.mxu0 %v1082
    %2665 = vmatpush.msra.mxu0 %v1074
    %2666 = vmatpush.msra.mxu0 %v1066
    %2667 = vmatpush.msra.mxu0 %v1058
    %2668 = vmatpush.msra.mxu0 %v1050
    %2669 = vmatmul.f32.gmra.mxu0 %v2412
    %v2670 = vpop.f32.mrf.mxu0
    %v2671 = vadd.f32 %v465, %v2670
    %2672 = vdwg.mxu0
    %2673 = vmatpush.msra.mxu0 %v1298
    %2674 = vmatpush.msra.mxu0 %v1290
    %2675 = vmatpush.msra.mxu0 %v1282
    %2676 = vmatpush.msra.mxu0 %v1274
    %2677 = vmatpush.msra.mxu0 %v1266
    %2678 = vmatpush.msra.mxu0 %v1258
    %2679 = vmatpush.msra.mxu0 %v1250
    %2680 = vmatpush.msra.mxu0 %v1242
    %2681 = vmatpush.msra.mxu0 %v1234
    %2682 = vmatpush.msra.mxu0 %v1226
    %2683 = vmatpush.msra.mxu0 %v1218
    %2684 = vmatpush.msra.mxu0 %v1210
    %2685 = vmatpush.msra.mxu0 %v1202
    %2686 = vmatpush.msra.mxu0 %v1194
    %2687 = vmatpush.msra.mxu0 %v1186
    %2688 = vmatpush.msra.mxu0 %v1178
    %2689 = vmatmul.f32.gmra.mxu0 %v2034
    %v2690 = vpop.f32.mrf.mxu0
    %v2691 = vadd.f32 %v2671, %v2690
    %2692 = vdwg.mxu0
    %2693 = vmatpush.msra.mxu0 %v1426
    %2694 = vmatpush.msra.mxu0 %v1418
    %2695 = vmatpush.msra.mxu0 %v1410
    %2696 = vmatpush.msra.mxu0 %v1402
    %2697 = vmatpush.msra.mxu0 %v1394
    %2698 = vmatpush.msra.mxu0 %v1386
    %2699 = vmatpush.msra.mxu0 %v1378
    %2700 = vmatpush.msra.mxu0 %v1370
    %2701 = vmatpush.msra.mxu0 %v1362
    %2702 = vmatpush.msra.mxu0 %v1354
    %2703 = vmatpush.msra.mxu0 %v1346
    %2704 = vmatpush.msra.mxu0 %v1338
    %2705 = vmatpush.msra.mxu0 %v1330
    %2706 = vmatpush.msra.mxu0 %v1322
    %2707 = vmatpush.msra.mxu0 %v1314
    %2708 = vmatpush.msra.mxu0 %v1306
    %2709 = vmatmul.f32.gmra.mxu0 %v2035
    %v2710 = vpop.f32.mrf.mxu0
    %v2711 = vadd.f32 %v2691, %v2710
    %2712 = vdwg.mxu0
    %2713 = vmatpush.msra.mxu0 %v1171
    %2714 = vmatpush.msra.mxu0 %v1163
    %2715 = vmatpush.msra.mxu0 %v1155
    %2716 = vmatpush.msra.mxu0 %v1147
    %2717 = vmatpush.msra.mxu0 %v1139
    %2718 = vmatpush.msra.mxu0 %v1131
    %2719 = vmatpush.msra.mxu0 %v1123
    %2720 = vmatpush.msra.mxu0 %v1115
    %2721 = vmatpush.msra.mxu0 %v1107
    %2722 = vmatpush.msra.mxu0 %v1099
    %2723 = vmatpush.msra.mxu0 %v1091
    %2724 = vmatpush.msra.mxu0 %v1083
    %2725 = vmatpush.msra.mxu0 %v1075
    %2726 = vmatpush.msra.mxu0 %v1067
    %2727 = vmatpush.msra.mxu0 %v1059
    %2728 = vmatpush.msra.mxu0 %v1051
    %2729 = vmatmul.f32.gmra.mxu0 %v2412
    %v2730 = vpop.f32.mrf.mxu0
    %v2731 = vadd.f32 %v466, %v2730
    %2732 = vdwg.mxu0
    %2733 = vmatpush.msra.mxu0 %v1299
    %2734 = vmatpush.msra.mxu0 %v1291
    %2735 = vmatpush.msra.mxu0 %v1283
    %2736 = vmatpush.msra.mxu0 %v1275
    %2737 = vmatpush.msra.mxu0 %v1267
    %2738 = vmatpush.msra.mxu0 %v1259
    %2739 = vmatpush.msra.mxu0 %v1251
    %2740 = vmatpush.msra.mxu0 %v1243
    %2741 = vmatpush.msra.mxu0 %v1235
    %2742 = vmatpush.msra.mxu0 %v1227
    %2743 = vmatpush.msra.mxu0 %v1219
    %2744 = vmatpush.msra.mxu0 %v1211
    %2745 = vmatpush.msra.mxu0 %v1203
    %2746 = vmatpush.msra.mxu0 %v1195
    %2747 = vmatpush.msra.mxu0 %v1187
    %2748 = vmatpush.msra.mxu0 %v1179
    %2749 = vmatmul.f32.gmra.mxu0 %v2034
    %v2750 = vpop.f32.mrf.mxu0
    %v2751 = vadd.f32 %v2731, %v2750
    %2752 = vdwg.mxu0
    %2753 = vmatpush.msra.mxu0 %v1427
    %2754 = vmatpush.msra.mxu0 %v1419
    %2755 = vmatpush.msra.mxu0 %v1411
    %2756 = vmatpush.msra.mxu0 %v1403
    %2757 = vmatpush.msra.mxu0 %v1395
    %2758 = vmatpush.msra.mxu0 %v1387
    %2759 = vmatpush.msra.mxu0 %v1379
    %2760 = vmatpush.msra.mxu0 %v1371
    %2761 = vmatpush.msra.mxu0 %v1363
    %2762 = vmatpush.msra.mxu0 %v1355
    %2763 = vmatpush.msra.mxu0 %v1347
    %2764 = vmatpush.msra.mxu0 %v1339
    %2765 = vmatpush.msra.mxu0 %v1331
    %2766 = vmatpush.msra.mxu0 %v1323
    %2767 = vmatpush.msra.mxu0 %v1315
    %2768 = vmatpush.msra.mxu0 %v1307
    %2769 = vmatmul.f32.gmra.mxu0 %v2035
    %v2770 = vpop.f32.mrf.mxu0
    %v2771 = vadd.f32 %v2751, %v2770
    %2772 = vdwg.mxu0
    %2773 = vmatpush.msra.mxu0 %v1172
    %2774 = vmatpush.msra.mxu0 %v1164
    %2775 = vmatpush.msra.mxu0 %v1156
    %2776 = vmatpush.msra.mxu0 %v1148
    %2777 = vmatpush.msra.mxu0 %v1140
    %2778 = vmatpush.msra.mxu0 %v1132
    %2779 = vmatpush.msra.mxu0 %v1124
    %2780 = vmatpush.msra.mxu0 %v1116
    %2781 = vmatpush.msra.mxu0 %v1108
    %2782 = vmatpush.msra.mxu0 %v1100
    %2783 = vmatpush.msra.mxu0 %v1092
    %2784 = vmatpush.msra.mxu0 %v1084
    %2785 = vmatpush.msra.mxu0 %v1076
    %2786 = vmatpush.msra.mxu0 %v1068
    %2787 = vmatpush.msra.mxu0 %v1060
    %2788 = vmatpush.msra.mxu0 %v1052
    %2789 = vmatmul.f32.gmra.mxu0 %v2412
    %v2790 = vpop.f32.mrf.mxu0
    %v2791 = vadd.f32 %v467, %v2790
    %2792 = vdwg.mxu0
    %2793 = vmatpush.msra.mxu0 %v1300
    %2794 = vmatpush.msra.mxu0 %v1292
    %2795 = vmatpush.msra.mxu0 %v1284
    %2796 = vmatpush.msra.mxu0 %v1276
    %2797 = vmatpush.msra.mxu0 %v1268
    %2798 = vmatpush.msra.mxu0 %v1260
    %2799 = vmatpush.msra.mxu0 %v1252
    %2800 = vmatpush.msra.mxu0 %v1244
    %2801 = vmatpush.msra.mxu0 %v1236
    %2802 = vmatpush.msra.mxu0 %v1228
    %2803 = vmatpush.msra.mxu0 %v1220
    %2804 = vmatpush.msra.mxu0 %v1212
    %2805 = vmatpush.msra.mxu0 %v1204
    %2806 = vmatpush.msra.mxu0 %v1196
    %2807 = vmatpush.msra.mxu0 %v1188
    %2808 = vmatpush.msra.mxu0 %v1180
    %2809 = vmatmul.f32.gmra.mxu0 %v2034
    %v2810 = vpop.f32.mrf.mxu0
    %v2811 = vadd.f32 %v2791, %v2810
    %2812 = vdwg.mxu0
    %2813 = vmatpush.msra.mxu0 %v1428
    %2814 = vmatpush.msra.mxu0 %v1420
    %2815 = vmatpush.msra.mxu0 %v1412
    %2816 = vmatpush.msra.mxu0 %v1404
    %2817 = vmatpush.msra.mxu0 %v1396
    %2818 = vmatpush.msra.mxu0 %v1388
    %2819 = vmatpush.msra.mxu0 %v1380
    %2820 = vmatpush.msra.mxu0 %v1372
    %2821 = vmatpush.msra.mxu0 %v1364
    %2822 = vmatpush.msra.mxu0 %v1356
    %2823 = vmatpush.msra.mxu0 %v1348
    %2824 = vmatpush.msra.mxu0 %v1340
    %2825 = vmatpush.msra.mxu0 %v1332
    %2826 = vmatpush.msra.mxu0 %v1324
    %2827 = vmatpush.msra.mxu0 %v1316
    %2828 = vmatpush.msra.mxu0 %v1308
    %2829 = vmatmul.f32.gmra.mxu0 %v2035
    %v2830 = vpop.f32.mrf.mxu0
    %v2831 = vadd.f32 %v2811, %v2830
    %2832 = vdwg.mxu0
    %2833 = vmatpush.msra.mxu0 %v1173
    %2834 = vmatpush.msra.mxu0 %v1165
    %2835 = vmatpush.msra.mxu0 %v1157
    %2836 = vmatpush.msra.mxu0 %v1149
    %2837 = vmatpush.msra.mxu0 %v1141
    %2838 = vmatpush.msra.mxu0 %v1133
    %2839 = vmatpush.msra.mxu0 %v1125
    %2840 = vmatpush.msra.mxu0 %v1117
    %2841 = vmatpush.msra.mxu0 %v1109
    %2842 = vmatpush.msra.mxu0 %v1101
    %2843 = vmatpush.msra.mxu0 %v1093
    %2844 = vmatpush.msra.mxu0 %v1085
    %2845 = vmatpush.msra.mxu0 %v1077
    %2846 = vmatpush.msra.mxu0 %v1069
    %2847 = vmatpush.msra.mxu0 %v1061
    %2848 = vmatpush.msra.mxu0 %v1053
    %2849 = vmatmul.f32.gmra.mxu0 %v2412
    %v2850 = vpop.f32.mrf.mxu0
    %v2851 = vadd.f32 %v468, %v2850
    %2852 = vdwg.mxu0
    %2853 = vmatpush.msra.mxu0 %v1301
    %2854 = vmatpush.msra.mxu0 %v1293
    %2855 = vmatpush.msra.mxu0 %v1285
    %2856 = vmatpush.msra.mxu0 %v1277
    %2857 = vmatpush.msra.mxu0 %v1269
    %2858 = vmatpush.msra.mxu0 %v1261
    %2859 = vmatpush.msra.mxu0 %v1253
    %2860 = vmatpush.msra.mxu0 %v1245
    %2861 = vmatpush.msra.mxu0 %v1237
    %2862 = vmatpush.msra.mxu0 %v1229
    %2863 = vmatpush.msra.mxu0 %v1221
    %2864 = vmatpush.msra.mxu0 %v1213
    %2865 = vmatpush.msra.mxu0 %v1205
    %2866 = vmatpush.msra.mxu0 %v1197
    %2867 = vmatpush.msra.mxu0 %v1189
    %2868 = vmatpush.msra.mxu0 %v1181
    %2869 = vmatmul.f32.gmra.mxu0 %v2034
    %v2870 = vpop.f32.mrf.mxu0
    %v2871 = vadd.f32 %v2851, %v2870
    %2872 = vdwg.mxu0
    %2873 = vmatpush.msra.mxu0 %v1429
    %2874 = vmatpush.msra.mxu0 %v1421
    %2875 = vmatpush.msra.mxu0 %v1413
    %2876 = vmatpush.msra.mxu0 %v1405
    %2877 = vmatpush.msra.mxu0 %v1397
    %2878 = vmatpush.msra.mxu0 %v1389
    %2879 = vmatpush.msra.mxu0 %v1381
    %2880 = vmatpush.msra.mxu0 %v1373
    %2881 = vmatpush.msra.mxu0 %v1365
    %2882 = vmatpush.msra.mxu0 %v1357
    %2883 = vmatpush.msra.mxu0 %v1349
    %2884 = vmatpush.msra.mxu0 %v1341
    %2885 = vmatpush.msra.mxu0 %v1333
    %2886 = vmatpush.msra.mxu0 %v1325
    %2887 = vmatpush.msra.mxu0 %v1317
    %2888 = vmatpush.msra.mxu0 %v1309
    %2889 = vmatmul.f32.gmra.mxu0 %v2035
    %v2890 = vpop.f32.mrf.mxu0
    %v2891 = vadd.f32 %v2871, %v2890
    %2892 = vdwg.mxu0
    %v2893 = vxor.u32 %v2471, 2147483648
    %v2894 = vxor.u32 %v2531, 2147483648
    %v2895 = vmul.f32 %v2893, 1.442695
    %v2896 = vpow.pop %v2895
    %v2897 = vmul.f32 %v2894, 1.442695
    %v2898 = vpow.pop %v2897
    %v2899 = vadd.f32 %v2896, 1.0
    %v2900 = vadd.f32 %v2898, 1.0
    %v2901 = vrcp.pop %v2899
    %v2902 = vmul.f32 %v2899, %v2901
    %v2903 = vsub.f32 1.0, %v2902
    %v2904 = vmul.f32 %v2901, %v2903
    %v2905 = vadd.f32 %v2901, %v2904
    %vm2906 = vweird.f32 %v2899
    %vm2907 = vweird.f32 %v2901
    %vm2908 = vmor %vm2906, %vm2907
    %v2909 = vsel %vm2908, %v2901, %v2905
    %v2910 = vand.u32 2147483647, %v2899
    %vm2911 = vcmp.eq.f32.partialorder %v2910, 8.507059e+37
    %v2912 = vand.u32 %v2899, 2147483648
    %v2913 = vor.u32 1.1754944e-38, %v2912
    %v2914 = vsel %vm2911, %v2913, %v2909
    %v2915 = vmul.f32 1.0, %v2914
    %v2916 = vrcp.pop %v2900
    %v2917 = vmul.f32 %v2900, %v2916
    %v2918 = vsub.f32 1.0, %v2917
    %v2919 = vmul.f32 %v2916, %v2918
    %v2920 = vadd.f32 %v2916, %v2919
    %vm2921 = vweird.f32 %v2900
    %vm2922 = vweird.f32 %v2916
    %vm2923 = vmor %vm2921, %vm2922
    %v2924 = vsel %vm2923, %v2916, %v2920
    %v2925 = vand.u32 2147483647, %v2900
    %vm2926 = vcmp.eq.f32.partialorder %v2925, 8.507059e+37
    %v2927 = vand.u32 %v2900, 2147483648
    %v2928 = vor.u32 1.1754944e-38, %v2927
    %v2929 = vsel %vm2926, %v2928, %v2924
    %v2930 = vmul.f32 1.0, %v2929
    %v2931 = vxor.u32 %v2591, 2147483648
    %v2932 = vxor.u32 %v2651, 2147483648
    %v2933 = vmul.f32 %v2931, 1.442695
    %v2934 = vpow.pop %v2933
    %v2935 = vmul.f32 %v2932, 1.442695
    %v2936 = vpow.pop %v2935
    %v2937 = vadd.f32 %v2934, 1.0
    %v2938 = vadd.f32 %v2936, 1.0
    %v2939 = vrcp.pop %v2937
    %v2940 = vmul.f32 %v2937, %v2939
    %v2941 = vsub.f32 1.0, %v2940
    %v2942 = vmul.f32 %v2939, %v2941
    %v2943 = vadd.f32 %v2939, %v2942
    %vm2944 = vweird.f32 %v2937
    %vm2945 = vweird.f32 %v2939
    %vm2946 = vmor %vm2944, %vm2945
    %v2947 = vsel %vm2946, %v2939, %v2943
    %v2948 = vand.u32 2147483647, %v2937
    %vm2949 = vcmp.eq.f32.partialorder %v2948, 8.507059e+37
    %v2950 = vand.u32 %v2937, 2147483648
    %v2951 = vor.u32 1.1754944e-38, %v2950
    %v2952 = vsel %vm2949, %v2951, %v2947
    %v2953 = vmul.f32 1.0, %v2952
    %v2954 = vrcp.pop %v2938
    %v2955 = vmul.f32 %v2938, %v2954
    %v2956 = vsub.f32 1.0, %v2955
    %v2957 = vmul.f32 %v2954, %v2956
    %v2958 = vadd.f32 %v2954, %v2957
    %vm2959 = vweird.f32 %v2938
    %vm2960 = vweird.f32 %v2954
    %vm2961 = vmor %vm2959, %vm2960
    %v2962 = vsel %vm2961, %v2954, %v2958
    %v2963 = vand.u32 2147483647, %v2938
    %vm2964 = vcmp.eq.f32.partialorder %v2963, 8.507059e+37
    %v2965 = vand.u32 %v2938, 2147483648
    %v2966 = vor.u32 1.1754944e-38, %v2965
    %v2967 = vsel %vm2964, %v2966, %v2962
    %v2968 = vmul.f32 1.0, %v2967
    %v2969 = vtanh.pop %v2711
    %v2970 = vtanh.pop %v2771
    %v2971 = vxor.u32 %v2831, 2147483648
    %v2972 = vxor.u32 %v2891, 2147483648
    %v2973 = vmul.f32 %v2971, 1.442695
    %v2974 = vpow.pop %v2973
    %v2975 = vmul.f32 %v2972, 1.442695
    %v2976 = vpow.pop %v2975
    %v2977 = vadd.f32 %v2974, 1.0
    %v2978 = vadd.f32 %v2976, 1.0
    %v2979 = vrcp.pop %v2977
    %v2980 = vmul.f32 %v2977, %v2979
    %v2981 = vsub.f32 1.0, %v2980
    %v2982 = vmul.f32 %v2979, %v2981
    %v2983 = vadd.f32 %v2979, %v2982
    %vm2984 = vweird.f32 %v2977
    %vm2985 = vweird.f32 %v2979
    %vm2986 = vmor %vm2984, %vm2985
    %v2987 = vsel %vm2986, %v2979, %v2983
    %v2988 = vand.u32 2147483647, %v2977
    %vm2989 = vcmp.eq.f32.partialorder %v2988, 8.507059e+37
    %v2990 = vand.u32 %v2977, 2147483648
    %v2991 = vor.u32 1.1754944e-38, %v2990
    %v2992 = vsel %vm2989, %v2991, %v2987
    %v2993 = vmul.f32 1.0, %v2992
    %v2994 = vrcp.pop %v2978
    %v2995 = vmul.f32 %v2978, %v2994
    %v2996 = vsub.f32 1.0, %v2995
    %v2997 = vmul.f32 %v2994, %v2996
    %v2998 = vadd.f32 %v2994, %v2997
    %vm2999 = vweird.f32 %v2978
    %vm3000 = vweird.f32 %v2994
    %vm3001 = vmor %vm2999, %vm3000
    %v3002 = vsel %vm3001, %v2994, %v2998
    %v3003 = vand.u32 2147483647, %v2978
    %vm3004 = vcmp.eq.f32.partialorder %v3003, 8.507059e+37
    %v3005 = vand.u32 %v2978, 2147483648
    %v3006 = vor.u32 1.1754944e-38, %v3005
    %v3007 = vsel %vm3004, %v3006, %v3002
    %v3008 = vmul.f32 1.0, %v3007
    %v3009 = vmul.f32 %v2953, %v2030
    %v3010 = vmul.f32 %v2968, %v2031
    %v3011 = vmul.f32 %v2915, %v2969
    %v3012 = vmul.f32 %v2930, %v2970
    %v3013 = vadd.f32 %v3009, %v3011
    %v3014 = vadd.f32 %v3010, %v3012
    %v3015 = vtanh.pop %v3013
    %v3016 = vtanh.pop %v3014
    %v3017 = vmul.f32 %v2993, %v3015
    %v3018 = vmul.f32 %v3008, %v3016
    %s3019 = smul.u32 2, 4
    %s3020 = smul.addr %s3019, 8
    %s3021 = scalar_lea.vmem [#allocation2], %s3020
    %v3022 = vld [vmem:[%s3021] sm:$0xff]
    %v3023 = vld [vmem:[%s3021 + $0x8] sm:$0xff]
    %v3024 = vld [vmem:[%s3021 + $0x10] sm:$0xff]
    %v3025 = vld [vmem:[%s3021 + $0x18] sm:$0xff]
    %3026 = vmatpush.msra.mxu0 %v544
    %3027 = vmatpush.msra.mxu0 %v540
    %3028 = vmatpush.msra.mxu0 %v536
    %3029 = vmatpush.msra.mxu0 %v532
    %3030 = vmatpush.msra.mxu0 %v528
    %3031 = vmatpush.msra.mxu0 %v524
    %3032 = vmatpush.msra.mxu0 %v520
    %3033 = vmatpush.msra.mxu0 %v516
    %3034 = vmatpush.msra.mxu0 %v512
    %3035 = vmatpush.msra.mxu0 %v508
    %3036 = vmatpush.msra.mxu0 %v504
    %3037 = vmatpush.msra.mxu0 %v500
    %3038 = vmatpush.msra.mxu0 %v496
    %3039 = vmatpush.msra.mxu0 %v492
    %3040 = vmatpush.msra.mxu0 %v488
    %3041 = vmatpush.msra.mxu0 %v484
    %3042 = vmatmul.f32.gmra.mxu0 %v2189
    %v3043 = vpop.f32.mrf.mxu0
    %v3044 = vadd.f32 0.0, %v3043
    %3045 = vdwg.mxu0
    %3046 = vmatpush.msra.mxu0 %v545
    %3047 = vmatpush.msra.mxu0 %v541
    %3048 = vmatpush.msra.mxu0 %v537
    %3049 = vmatpush.msra.mxu0 %v533
    %3050 = vmatpush.msra.mxu0 %v529
    %3051 = vmatpush.msra.mxu0 %v525
    %3052 = vmatpush.msra.mxu0 %v521
    %3053 = vmatpush.msra.mxu0 %v517
    %3054 = vmatpush.msra.mxu0 %v513
    %3055 = vmatpush.msra.mxu0 %v509
    %3056 = vmatpush.msra.mxu0 %v505
    %3057 = vmatpush.msra.mxu0 %v501
    %3058 = vmatpush.msra.mxu0 %v497
    %3059 = vmatpush.msra.mxu0 %v493
    %3060 = vmatpush.msra.mxu0 %v489
    %3061 = vmatpush.msra.mxu0 %v485
    %3062 = vmatmul.f32.gmra.mxu0 %v2189
    %v3063 = vpop.f32.mrf.mxu0
    %v3064 = vadd.f32 0.0, %v3063
    %3065 = vdwg.mxu0
    %3066 = vmatpush.msra.mxu0 %v546
    %3067 = vmatpush.msra.mxu0 %v542
    %3068 = vmatpush.msra.mxu0 %v538
    %3069 = vmatpush.msra.mxu0 %v534
    %3070 = vmatpush.msra.mxu0 %v530
    %3071 = vmatpush.msra.mxu0 %v526
    %3072 = vmatpush.msra.mxu0 %v522
    %3073 = vmatpush.msra.mxu0 %v518
    %3074 = vmatpush.msra.mxu0 %v514
    %3075 = vmatpush.msra.mxu0 %v510
    %3076 = vmatpush.msra.mxu0 %v506
    %3077 = vmatpush.msra.mxu0 %v502
    %3078 = vmatpush.msra.mxu0 %v498
    %3079 = vmatpush.msra.mxu0 %v494
    %3080 = vmatpush.msra.mxu0 %v490
    %3081 = vmatpush.msra.mxu0 %v486
    %3082 = vmatmul.f32.gmra.mxu0 %v2189
    %v3083 = vpop.f32.mrf.mxu0
    %v3084 = vadd.f32 0.0, %v3083
    %3085 = vdwg.mxu0
    %3086 = vmatpush.msra.mxu0 %v547
    %3087 = vmatpush.msra.mxu0 %v543
    %3088 = vmatpush.msra.mxu0 %v539
    %3089 = vmatpush.msra.mxu0 %v535
    %3090 = vmatpush.msra.mxu0 %v531
    %3091 = vmatpush.msra.mxu0 %v527
    %3092 = vmatpush.msra.mxu0 %v523
    %3093 = vmatpush.msra.mxu0 %v519
    %3094 = vmatpush.msra.mxu0 %v515
    %3095 = vmatpush.msra.mxu0 %v511
    %3096 = vmatpush.msra.mxu0 %v507
    %3097 = vmatpush.msra.mxu0 %v503
    %3098 = vmatpush.msra.mxu0 %v499
    %3099 = vmatpush.msra.mxu0 %v495
    %3100 = vmatpush.msra.mxu0 %v491
    %3101 = vmatpush.msra.mxu0 %v487
    %3102 = vmatmul.f32.gmra.mxu0 %v2189
    %v3103 = vpop.f32.mrf.mxu0
    %v3104 = vadd.f32 0.0, %v3103
    %3105 = vdwg.mxu0
    %v3106 = vadd.f32 %v3022, %v3044
    %v3107 = vadd.f32 %v3023, %v3064
    %v3108 = vadd.f32 %v3024, %v3084
    %v3109 = vadd.f32 %v3025, %v3104
    %v3110 = vxor.u32 %v3106, 2147483648
    %v3111 = vmul.f32 %v3110, 1.442695
    %v3112 = vpow.pop %v3111
    %v3113 = vadd.f32 %v3112, 1.0
    %v3114 = vrcp.pop %v3113
    %v3115 = vmul.f32 %v3113, %v3114
    %v3116 = vsub.f32 1.0, %v3115
    %v3117 = vmul.f32 %v3114, %v3116
    %v3118 = vadd.f32 %v3114, %v3117
    %vm3119 = vweird.f32 %v3113
    %vm3120 = vweird.f32 %v3114
    %vm3121 = vmor %vm3119, %vm3120
    %v3122 = vsel %vm3121, %v3114, %v3118
    %v3123 = vand.u32 2147483647, %v3113
    %vm3124 = vcmp.eq.f32.partialorder %v3123, 8.507059e+37
    %v3125 = vand.u32 %v3113, 2147483648
    %v3126 = vor.u32 1.1754944e-38, %v3125
    %v3127 = vsel %vm3124, %v3126, %v3122
    %v3128 = vmul.f32 1.0, %v3127
    %v3129 = vxor.u32 %v3107, 2147483648
    %v3130 = vmul.f32 %v3129, 1.442695
    %v3131 = vpow.pop %v3130
    %v3132 = vadd.f32 %v3131, 1.0
    %v3133 = vrcp.pop %v3132
    %v3134 = vmul.f32 %v3132, %v3133
    %v3135 = vsub.f32 1.0, %v3134
    %v3136 = vmul.f32 %v3133, %v3135
    %v3137 = vadd.f32 %v3133, %v3136
    %vm3138 = vweird.f32 %v3132
    %vm3139 = vweird.f32 %v3133
    %vm3140 = vmor %vm3138, %vm3139
    %v3141 = vsel %vm3140, %v3133, %v3137
    %v3142 = vand.u32 2147483647, %v3132
    %vm3143 = vcmp.eq.f32.partialorder %v3142, 8.507059e+37
    %v3144 = vand.u32 %v3132, 2147483648
    %v3145 = vor.u32 1.1754944e-38, %v3144
    %v3146 = vsel %vm3143, %v3145, %v3141
    %v3147 = vmul.f32 1.0, %v3146
    %v3148 = vtanh.pop %v3108
    %v3149 = vxor.u32 %v3109, 2147483648
    %v3150 = vmul.f32 %v3149, 1.442695
    %v3151 = vpow.pop %v3150
    %v3152 = vadd.f32 %v3151, 1.0
    %v3153 = vrcp.pop %v3152
    %v3154 = vmul.f32 %v3152, %v3153
    %v3155 = vsub.f32 1.0, %v3154
    %v3156 = vmul.f32 %v3153, %v3155
    %v3157 = vadd.f32 %v3153, %v3156
    %vm3158 = vweird.f32 %v3152
    %vm3159 = vweird.f32 %v3153
    %vm3160 = vmor %vm3158, %vm3159
    %v3161 = vsel %vm3160, %v3153, %v3157
    %v3162 = vand.u32 2147483647, %v3152
    %vm3163 = vcmp.eq.f32.partialorder %v3162, 8.507059e+37
    %v3164 = vand.u32 %v3152, 2147483648
    %v3165 = vor.u32 1.1754944e-38, %v3164
    %v3166 = vsel %vm3163, %v3165, %v3161
    %v3167 = vmul.f32 1.0, %v3166
    %v3168 = vmul.f32 %v3147, %v2187
    %v3169 = vmul.f32 %v3128, %v3148
    %v3170 = vadd.f32 %v3168, %v3169
    %v3171 = vtanh.pop %v3170
    %v3172 = vmul.f32 %v3167, %v3171
    %3173 = vmatpush.msra.mxu0 %v755
    %3174 = vmatpush.msra.mxu0 %v751
    %3175 = vmatpush.msra.mxu0 %v747
    %3176 = vmatpush.msra.mxu0 %v743
    %3177 = vmatpush.msra.mxu0 %v739
    %3178 = vmatpush.msra.mxu0 %v735
    %3179 = vmatpush.msra.mxu0 %v731
    %3180 = vmatpush.msra.mxu0 %v727
    %3181 = vmatpush.msra.mxu0 %v723
    %3182 = vmatpush.msra.mxu0 %v719
    %3183 = vmatpush.msra.mxu0 %v715
    %3184 = vmatpush.msra.mxu0 %v711
    %3185 = vmatpush.msra.mxu0 %v707
    %3186 = vmatpush.msra.mxu0 %v703
    %3187 = vmatpush.msra.mxu0 %v699
    %3188 = vmatpush.msra.mxu0 %v695
    %3189 = vmatmul.f32.gmra.mxu0 %v3172
    %v3190 = vpop.f32.mrf.mxu0
    %v3191 = vadd.f32 %v451, %v3190
    %3192 = vdwg.mxu0
    %3193 = vmatpush.msra.mxu0 %v819
    %3194 = vmatpush.msra.mxu0 %v815
    %3195 = vmatpush.msra.mxu0 %v811
    %3196 = vmatpush.msra.mxu0 %v807
    %3197 = vmatpush.msra.mxu0 %v803
    %3198 = vmatpush.msra.mxu0 %v799
    %3199 = vmatpush.msra.mxu0 %v795
    %3200 = vmatpush.msra.mxu0 %v791
    %3201 = vmatpush.msra.mxu0 %v787
    %3202 = vmatpush.msra.mxu0 %v783
    %3203 = vmatpush.msra.mxu0 %v779
    %3204 = vmatpush.msra.mxu0 %v775
    %3205 = vmatpush.msra.mxu0 %v771
    %3206 = vmatpush.msra.mxu0 %v767
    %3207 = vmatpush.msra.mxu0 %v763
    %3208 = vmatpush.msra.mxu0 %v759
    %3209 = vmatmul.f32.gmra.mxu0 %v2412
    %v3210 = vpop.f32.mrf.mxu0
    %v3211 = vadd.f32 %v3191, %v3210
    %3212 = vdwg.mxu0
    %3213 = vmatpush.msra.mxu0 %v756
    %3214 = vmatpush.msra.mxu0 %v752
    %3215 = vmatpush.msra.mxu0 %v748
    %3216 = vmatpush.msra.mxu0 %v744
    %3217 = vmatpush.msra.mxu0 %v740
    %3218 = vmatpush.msra.mxu0 %v736
    %3219 = vmatpush.msra.mxu0 %v732
    %3220 = vmatpush.msra.mxu0 %v728
    %3221 = vmatpush.msra.mxu0 %v724
    %3222 = vmatpush.msra.mxu0 %v720
    %3223 = vmatpush.msra.mxu0 %v716
    %3224 = vmatpush.msra.mxu0 %v712
    %3225 = vmatpush.msra.mxu0 %v708
    %3226 = vmatpush.msra.mxu0 %v704
    %3227 = vmatpush.msra.mxu0 %v700
    %3228 = vmatpush.msra.mxu0 %v696
    %3229 = vmatmul.f32.gmra.mxu0 %v3172
    %v3230 = vpop.f32.mrf.mxu0
    %v3231 = vadd.f32 %v452, %v3230
    %3232 = vdwg.mxu0
    %3233 = vmatpush.msra.mxu0 %v820
    %3234 = vmatpush.msra.mxu0 %v816
    %3235 = vmatpush.msra.mxu0 %v812
    %3236 = vmatpush.msra.mxu0 %v808
    %3237 = vmatpush.msra.mxu0 %v804
    %3238 = vmatpush.msra.mxu0 %v800
    %3239 = vmatpush.msra.mxu0 %v796
    %3240 = vmatpush.msra.mxu0 %v792
    %3241 = vmatpush.msra.mxu0 %v788
    %3242 = vmatpush.msra.mxu0 %v784
    %3243 = vmatpush.msra.mxu0 %v780
    %3244 = vmatpush.msra.mxu0 %v776
    %3245 = vmatpush.msra.mxu0 %v772
    %3246 = vmatpush.msra.mxu0 %v768
    %3247 = vmatpush.msra.mxu0 %v764
    %3248 = vmatpush.msra.mxu0 %v760
    %3249 = vmatmul.f32.gmra.mxu0 %v2412
    %v3250 = vpop.f32.mrf.mxu0
    %v3251 = vadd.f32 %v3231, %v3250
    %3252 = vdwg.mxu0
    %3253 = vmatpush.msra.mxu0 %v757
    %3254 = vmatpush.msra.mxu0 %v753
    %3255 = vmatpush.msra.mxu0 %v749
    %3256 = vmatpush.msra.mxu0 %v745
    %3257 = vmatpush.msra.mxu0 %v741
    %3258 = vmatpush.msra.mxu0 %v737
    %3259 = vmatpush.msra.mxu0 %v733
    %3260 = vmatpush.msra.mxu0 %v729
    %3261 = vmatpush.msra.mxu0 %v725
    %3262 = vmatpush.msra.mxu0 %v721
    %3263 = vmatpush.msra.mxu0 %v717
    %3264 = vmatpush.msra.mxu0 %v713
    %3265 = vmatpush.msra.mxu0 %v709
    %3266 = vmatpush.msra.mxu0 %v705
    %3267 = vmatpush.msra.mxu0 %v701
    %3268 = vmatpush.msra.mxu0 %v697
    %3269 = vmatmul.f32.gmra.mxu0 %v3172
    %v3270 = vpop.f32.mrf.mxu0
    %v3271 = vadd.f32 %v453, %v3270
    %3272 = vdwg.mxu0
    %3273 = vmatpush.msra.mxu0 %v821
    %3274 = vmatpush.msra.mxu0 %v817
    %3275 = vmatpush.msra.mxu0 %v813
    %3276 = vmatpush.msra.mxu0 %v809
    %3277 = vmatpush.msra.mxu0 %v805
    %3278 = vmatpush.msra.mxu0 %v801
    %3279 = vmatpush.msra.mxu0 %v797
    %3280 = vmatpush.msra.mxu0 %v793
    %3281 = vmatpush.msra.mxu0 %v789
    %3282 = vmatpush.msra.mxu0 %v785
    %3283 = vmatpush.msra.mxu0 %v781
    %3284 = vmatpush.msra.mxu0 %v777
    %3285 = vmatpush.msra.mxu0 %v773
    %3286 = vmatpush.msra.mxu0 %v769
    %3287 = vmatpush.msra.mxu0 %v765
    %3288 = vmatpush.msra.mxu0 %v761
    %3289 = vmatmul.f32.gmra.mxu0 %v2412
    %v3290 = vpop.f32.mrf.mxu0
    %v3291 = vadd.f32 %v3271, %v3290
    %3292 = vdwg.mxu0
    %3293 = vmatpush.msra.mxu0 %v758
    %3294 = vmatpush.msra.mxu0 %v754
    %3295 = vmatpush.msra.mxu0 %v750
    %3296 = vmatpush.msra.mxu0 %v746
    %3297 = vmatpush.msra.mxu0 %v742
    %3298 = vmatpush.msra.mxu0 %v738
    %3299 = vmatpush.msra.mxu0 %v734
    %3300 = vmatpush.msra.mxu0 %v730
    %3301 = vmatpush.msra.mxu0 %v726
    %3302 = vmatpush.msra.mxu0 %v722
    %3303 = vmatpush.msra.mxu0 %v718
    %3304 = vmatpush.msra.mxu0 %v714
    %3305 = vmatpush.msra.mxu0 %v710
    %3306 = vmatpush.msra.mxu0 %v706
    %3307 = vmatpush.msra.mxu0 %v702
    %3308 = vmatpush.msra.mxu0 %v698
    %3309 = vmatmul.f32.gmra.mxu0 %v3172
    %v3310 = vpop.f32.mrf.mxu0
    %v3311 = vadd.f32 %v454, %v3310
    %3312 = vdwg.mxu0
    %3313 = vmatpush.msra.mxu0 %v822
    %3314 = vmatpush.msra.mxu0 %v818
    %3315 = vmatpush.msra.mxu0 %v814
    %3316 = vmatpush.msra.mxu0 %v810
    %3317 = vmatpush.msra.mxu0 %v806
    %3318 = vmatpush.msra.mxu0 %v802
    %3319 = vmatpush.msra.mxu0 %v798
    %3320 = vmatpush.msra.mxu0 %v794
    %3321 = vmatpush.msra.mxu0 %v790
    %3322 = vmatpush.msra.mxu0 %v786
    %3323 = vmatpush.msra.mxu0 %v782
    %3324 = vmatpush.msra.mxu0 %v778
    %3325 = vmatpush.msra.mxu0 %v774
    %3326 = vmatpush.msra.mxu0 %v770
    %3327 = vmatpush.msra.mxu0 %v766
    %3328 = vmatpush.msra.mxu0 %v762
    %3329 = vmatmul.f32.gmra.mxu0 %v2412
    %v3330 = vpop.f32.mrf.mxu0
    %v3331 = vadd.f32 %v3311, %v3330
    %3332 = vdwg.mxu0
    %v3333 = vxor.u32 %v3211, 2147483648
    %v3334 = vmul.f32 %v3333, 1.442695
    %v3335 = vpow.pop %v3334
    %v3336 = vadd.f32 %v3335, 1.0
    %v3337 = vrcp.pop %v3336
    %v3338 = vmul.f32 %v3336, %v3337
    %v3339 = vsub.f32 1.0, %v3338
    %v3340 = vmul.f32 %v3337, %v3339
    %v3341 = vadd.f32 %v3337, %v3340
    %vm3342 = vweird.f32 %v3336
    %vm3343 = vweird.f32 %v3337
    %vm3344 = vmor %vm3342, %vm3343
    %v3345 = vsel %vm3344, %v3337, %v3341
    %v3346 = vand.u32 2147483647, %v3336
    %vm3347 = vcmp.eq.f32.partialorder %v3346, 8.507059e+37
    %v3348 = vand.u32 %v3336, 2147483648
    %v3349 = vor.u32 1.1754944e-38, %v3348
    %v3350 = vsel %vm3347, %v3349, %v3345
    %v3351 = vmul.f32 1.0, %v3350
    %v3352 = vxor.u32 %v3251, 2147483648
    %v3353 = vmul.f32 %v3352, 1.442695
    %v3354 = vpow.pop %v3353
    %v3355 = vadd.f32 %v3354, 1.0
    %v3356 = vrcp.pop %v3355
    %v3357 = vmul.f32 %v3355, %v3356
    %v3358 = vsub.f32 1.0, %v3357
    %v3359 = vmul.f32 %v3356, %v3358
    %v3360 = vadd.f32 %v3356, %v3359
    %vm3361 = vweird.f32 %v3355
    %vm3362 = vweird.f32 %v3356
    %vm3363 = vmor %vm3361, %vm3362
    %v3364 = vsel %vm3363, %v3356, %v3360
    %v3365 = vand.u32 2147483647, %v3355
    %vm3366 = vcmp.eq.f32.partialorder %v3365, 8.507059e+37
    %v3367 = vand.u32 %v3355, 2147483648
    %v3368 = vor.u32 1.1754944e-38, %v3367
    %v3369 = vsel %vm3366, %v3368, %v3364
    %v3370 = vmul.f32 1.0, %v3369
    %v3371 = vtanh.pop %v3291
    %v3372 = vxor.u32 %v3331, 2147483648
    %v3373 = vmul.f32 %v3372, 1.442695
    %v3374 = vpow.pop %v3373
    %v3375 = vadd.f32 %v3374, 1.0
    %v3376 = vrcp.pop %v3375
    %v3377 = vmul.f32 %v3375, %v3376
    %v3378 = vsub.f32 1.0, %v3377
    %v3379 = vmul.f32 %v3376, %v3378
    %v3380 = vadd.f32 %v3376, %v3379
    %vm3381 = vweird.f32 %v3375
    %vm3382 = vweird.f32 %v3376
    %vm3383 = vmor %vm3381, %vm3382
    %v3384 = vsel %vm3383, %v3376, %v3380
    %v3385 = vand.u32 2147483647, %v3375
    %vm3386 = vcmp.eq.f32.partialorder %v3385, 8.507059e+37
    %v3387 = vand.u32 %v3375, 2147483648
    %v3388 = vor.u32 1.1754944e-38, %v3387
    %v3389 = vsel %vm3386, %v3388, %v3384
    %v3390 = vmul.f32 1.0, %v3389
    %v3391 = vmul.f32 %v3370, %v2410
    %v3392 = vmul.f32 %v3351, %v3371
    %v3393 = vadd.f32 %v3391, %v3392
    %v3394 = vtanh.pop %v3393
    %v3395 = vmul.f32 %v3390, %v3394
    %3396 = vmatpush.msra.mxu0 %v1166
    %3397 = vmatpush.msra.mxu0 %v1158
    %3398 = vmatpush.msra.mxu0 %v1150
    %3399 = vmatpush.msra.mxu0 %v1142
    %3400 = vmatpush.msra.mxu0 %v1134
    %3401 = vmatpush.msra.mxu0 %v1126
    %3402 = vmatpush.msra.mxu0 %v1118
    %3403 = vmatpush.msra.mxu0 %v1110
    %3404 = vmatpush.msra.mxu0 %v1102
    %3405 = vmatpush.msra.mxu0 %v1094
    %3406 = vmatpush.msra.mxu0 %v1086
    %3407 = vmatpush.msra.mxu0 %v1078
    %3408 = vmatpush.msra.mxu0 %v1070
    %3409 = vmatpush.msra.mxu0 %v1062
    %3410 = vmatpush.msra.mxu0 %v1054
    %3411 = vmatpush.msra.mxu0 %v1046
    %3412 = vmatmul.f32.gmra.mxu0 %v3395
    %v3413 = vpop.f32.mrf.mxu0
    %v3414 = vadd.f32 %v461, %v3413
    %3415 = vdwg.mxu0
    %3416 = vmatpush.msra.mxu0 %v1294
    %3417 = vmatpush.msra.mxu0 %v1286
    %3418 = vmatpush.msra.mxu0 %v1278
    %3419 = vmatpush.msra.mxu0 %v1270
    %3420 = vmatpush.msra.mxu0 %v1262
    %3421 = vmatpush.msra.mxu0 %v1254
    %3422 = vmatpush.msra.mxu0 %v1246
    %3423 = vmatpush.msra.mxu0 %v1238
    %3424 = vmatpush.msra.mxu0 %v1230
    %3425 = vmatpush.msra.mxu0 %v1222
    %3426 = vmatpush.msra.mxu0 %v1214
    %3427 = vmatpush.msra.mxu0 %v1206
    %3428 = vmatpush.msra.mxu0 %v1198
    %3429 = vmatpush.msra.mxu0 %v1190
    %3430 = vmatpush.msra.mxu0 %v1182
    %3431 = vmatpush.msra.mxu0 %v1174
    %3432 = vmatmul.f32.gmra.mxu0 %v3017
    %v3433 = vpop.f32.mrf.mxu0
    %v3434 = vadd.f32 %v3414, %v3433
    %3435 = vdwg.mxu0
    %3436 = vmatpush.msra.mxu0 %v1422
    %3437 = vmatpush.msra.mxu0 %v1414
    %3438 = vmatpush.msra.mxu0 %v1406
    %3439 = vmatpush.msra.mxu0 %v1398
    %3440 = vmatpush.msra.mxu0 %v1390
    %3441 = vmatpush.msra.mxu0 %v1382
    %3442 = vmatpush.msra.mxu0 %v1374
    %3443 = vmatpush.msra.mxu0 %v1366
    %3444 = vmatpush.msra.mxu0 %v1358
    %3445 = vmatpush.msra.mxu0 %v1350
    %3446 = vmatpush.msra.mxu0 %v1342
    %3447 = vmatpush.msra.mxu0 %v1334
    %3448 = vmatpush.msra.mxu0 %v1326
    %3449 = vmatpush.msra.mxu0 %v1318
    %3450 = vmatpush.msra.mxu0 %v1310
    %3451 = vmatpush.msra.mxu0 %v1302
    %3452 = vmatmul.f32.gmra.mxu0 %v3018
    %v3453 = vpop.f32.mrf.mxu0
    %v3454 = vadd.f32 %v3434, %v3453
    %3455 = vdwg.mxu0
    %3456 = vmatpush.msra.mxu0 %v1167
    %3457 = vmatpush.msra.mxu0 %v1159
    %3458 = vmatpush.msra.mxu0 %v1151
    %3459 = vmatpush.msra.mxu0 %v1143
    %3460 = vmatpush.msra.mxu0 %v1135
    %3461 = vmatpush.msra.mxu0 %v1127
    %3462 = vmatpush.msra.mxu0 %v1119
    %3463 = vmatpush.msra.mxu0 %v1111
    %3464 = vmatpush.msra.mxu0 %v1103
    %3465 = vmatpush.msra.mxu0 %v1095
    %3466 = vmatpush.msra.mxu0 %v1087
    %3467 = vmatpush.msra.mxu0 %v1079
    %3468 = vmatpush.msra.mxu0 %v1071
    %3469 = vmatpush.msra.mxu0 %v1063
    %3470 = vmatpush.msra.mxu0 %v1055
    %3471 = vmatpush.msra.mxu0 %v1047
    %3472 = vmatmul.f32.gmra.mxu0 %v3395
    %v3473 = vpop.f32.mrf.mxu0
    %v3474 = vadd.f32 %v462, %v3473
    %3475 = vdwg.mxu0
    %3476 = vmatpush.msra.mxu0 %v1295
    %3477 = vmatpush.msra.mxu0 %v1287
    %3478 = vmatpush.msra.mxu0 %v1279
    %3479 = vmatpush.msra.mxu0 %v1271
    %3480 = vmatpush.msra.mxu0 %v1263
    %3481 = vmatpush.msra.mxu0 %v1255
    %3482 = vmatpush.msra.mxu0 %v1247
    %3483 = vmatpush.msra.mxu0 %v1239
    %3484 = vmatpush.msra.mxu0 %v1231
    %3485 = vmatpush.msra.mxu0 %v1223
    %3486 = vmatpush.msra.mxu0 %v1215
    %3487 = vmatpush.msra.mxu0 %v1207
    %3488 = vmatpush.msra.mxu0 %v1199
    %3489 = vmatpush.msra.mxu0 %v1191
    %3490 = vmatpush.msra.mxu0 %v1183
    %3491 = vmatpush.msra.mxu0 %v1175
    %3492 = vmatmul.f32.gmra.mxu0 %v3017
    %v3493 = vpop.f32.mrf.mxu0
    %v3494 = vadd.f32 %v3474, %v3493
    %3495 = vdwg.mxu0
    %3496 = vmatpush.msra.mxu0 %v1423
    %3497 = vmatpush.msra.mxu0 %v1415
    %3498 = vmatpush.msra.mxu0 %v1407
    %3499 = vmatpush.msra.mxu0 %v1399
    %3500 = vmatpush.msra.mxu0 %v1391
    %3501 = vmatpush.msra.mxu0 %v1383
    %3502 = vmatpush.msra.mxu0 %v1375
    %3503 = vmatpush.msra.mxu0 %v1367
    %3504 = vmatpush.msra.mxu0 %v1359
    %3505 = vmatpush.msra.mxu0 %v1351
    %3506 = vmatpush.msra.mxu0 %v1343
    %3507 = vmatpush.msra.mxu0 %v1335
    %3508 = vmatpush.msra.mxu0 %v1327
    %3509 = vmatpush.msra.mxu0 %v1319
    %3510 = vmatpush.msra.mxu0 %v1311
    %3511 = vmatpush.msra.mxu0 %v1303
    %3512 = vmatmul.f32.gmra.mxu0 %v3018
    %v3513 = vpop.f32.mrf.mxu0
    %v3514 = vadd.f32 %v3494, %v3513
    %3515 = vdwg.mxu0
    %3516 = vmatpush.msra.mxu0 %v1168
    %3517 = vmatpush.msra.mxu0 %v1160
    %3518 = vmatpush.msra.mxu0 %v1152
    %3519 = vmatpush.msra.mxu0 %v1144
    %3520 = vmatpush.msra.mxu0 %v1136
    %3521 = vmatpush.msra.mxu0 %v1128
    %3522 = vmatpush.msra.mxu0 %v1120
    %3523 = vmatpush.msra.mxu0 %v1112
    %3524 = vmatpush.msra.mxu0 %v1104
    %3525 = vmatpush.msra.mxu0 %v1096
    %3526 = vmatpush.msra.mxu0 %v1088
    %3527 = vmatpush.msra.mxu0 %v1080
    %3528 = vmatpush.msra.mxu0 %v1072
    %3529 = vmatpush.msra.mxu0 %v1064
    %3530 = vmatpush.msra.mxu0 %v1056
    %3531 = vmatpush.msra.mxu0 %v1048
    %3532 = vmatmul.f32.gmra.mxu0 %v3395
    %v3533 = vpop.f32.mrf.mxu0
    %v3534 = vadd.f32 %v463, %v3533
    %3535 = vdwg.mxu0
    %3536 = vmatpush.msra.mxu0 %v1296
    %3537 = vmatpush.msra.mxu0 %v1288
    %3538 = vmatpush.msra.mxu0 %v1280
    %3539 = vmatpush.msra.mxu0 %v1272
    %3540 = vmatpush.msra.mxu0 %v1264
    %3541 = vmatpush.msra.mxu0 %v1256
    %3542 = vmatpush.msra.mxu0 %v1248
    %3543 = vmatpush.msra.mxu0 %v1240
    %3544 = vmatpush.msra.mxu0 %v1232
    %3545 = vmatpush.msra.mxu0 %v1224
    %3546 = vmatpush.msra.mxu0 %v1216
    %3547 = vmatpush.msra.mxu0 %v1208
    %3548 = vmatpush.msra.mxu0 %v1200
    %3549 = vmatpush.msra.mxu0 %v1192
    %3550 = vmatpush.msra.mxu0 %v1184
    %3551 = vmatpush.msra.mxu0 %v1176
    %3552 = vmatmul.f32.gmra.mxu0 %v3017
    %v3553 = vpop.f32.mrf.mxu0
    %v3554 = vadd.f32 %v3534, %v3553
    %3555 = vdwg.mxu0
    %3556 = vmatpush.msra.mxu0 %v1424
    %3557 = vmatpush.msra.mxu0 %v1416
    %3558 = vmatpush.msra.mxu0 %v1408
    %3559 = vmatpush.msra.mxu0 %v1400
    %3560 = vmatpush.msra.mxu0 %v1392
    %3561 = vmatpush.msra.mxu0 %v1384
    %3562 = vmatpush.msra.mxu0 %v1376
    %3563 = vmatpush.msra.mxu0 %v1368
    %3564 = vmatpush.msra.mxu0 %v1360
    %3565 = vmatpush.msra.mxu0 %v1352
    %3566 = vmatpush.msra.mxu0 %v1344
    %3567 = vmatpush.msra.mxu0 %v1336
    %3568 = vmatpush.msra.mxu0 %v1328
    %3569 = vmatpush.msra.mxu0 %v1320
    %3570 = vmatpush.msra.mxu0 %v1312
    %3571 = vmatpush.msra.mxu0 %v1304
    %3572 = vmatmul.f32.gmra.mxu0 %v3018
    %v3573 = vpop.f32.mrf.mxu0
    %v3574 = vadd.f32 %v3554, %v3573
    %3575 = vdwg.mxu0
    %3576 = vmatpush.msra.mxu0 %v1169
    %3577 = vmatpush.msra.mxu0 %v1161
    %3578 = vmatpush.msra.mxu0 %v1153
    %3579 = vmatpush.msra.mxu0 %v1145
    %3580 = vmatpush.msra.mxu0 %v1137
    %3581 = vmatpush.msra.mxu0 %v1129
    %3582 = vmatpush.msra.mxu0 %v1121
    %3583 = vmatpush.msra.mxu0 %v1113
    %3584 = vmatpush.msra.mxu0 %v1105
    %3585 = vmatpush.msra.mxu0 %v1097
    %3586 = vmatpush.msra.mxu0 %v1089
    %3587 = vmatpush.msra.mxu0 %v1081
    %3588 = vmatpush.msra.mxu0 %v1073
    %3589 = vmatpush.msra.mxu0 %v1065
    %3590 = vmatpush.msra.mxu0 %v1057
    %3591 = vmatpush.msra.mxu0 %v1049
    %3592 = vmatmul.f32.gmra.mxu0 %v3395
    %v3593 = vpop.f32.mrf.mxu0
    %v3594 = vadd.f32 %v464, %v3593
    %3595 = vdwg.mxu0
    %3596 = vmatpush.msra.mxu0 %v1297
    %3597 = vmatpush.msra.mxu0 %v1289
    %3598 = vmatpush.msra.mxu0 %v1281
    %3599 = vmatpush.msra.mxu0 %v1273
    %3600 = vmatpush.msra.mxu0 %v1265
    %3601 = vmatpush.msra.mxu0 %v1257
    %3602 = vmatpush.msra.mxu0 %v1249
    %3603 = vmatpush.msra.mxu0 %v1241
    %3604 = vmatpush.msra.mxu0 %v1233
    %3605 = vmatpush.msra.mxu0 %v1225
    %3606 = vmatpush.msra.mxu0 %v1217
    %3607 = vmatpush.msra.mxu0 %v1209
    %3608 = vmatpush.msra.mxu0 %v1201
    %3609 = vmatpush.msra.mxu0 %v1193
    %3610 = vmatpush.msra.mxu0 %v1185
    %3611 = vmatpush.msra.mxu0 %v1177
    %3612 = vmatmul.f32.gmra.mxu0 %v3017
    %v3613 = vpop.f32.mrf.mxu0
    %v3614 = vadd.f32 %v3594, %v3613
    %3615 = vdwg.mxu0
    %3616 = vmatpush.msra.mxu0 %v1425
    %3617 = vmatpush.msra.mxu0 %v1417
    %3618 = vmatpush.msra.mxu0 %v1409
    %3619 = vmatpush.msra.mxu0 %v1401
    %3620 = vmatpush.msra.mxu0 %v1393
    %3621 = vmatpush.msra.mxu0 %v1385
    %3622 = vmatpush.msra.mxu0 %v1377
    %3623 = vmatpush.msra.mxu0 %v1369
    %3624 = vmatpush.msra.mxu0 %v1361
    %3625 = vmatpush.msra.mxu0 %v1353
    %3626 = vmatpush.msra.mxu0 %v1345
    %3627 = vmatpush.msra.mxu0 %v1337
    %3628 = vmatpush.msra.mxu0 %v1329
    %3629 = vmatpush.msra.mxu0 %v1321
    %3630 = vmatpush.msra.mxu0 %v1313
    %3631 = vmatpush.msra.mxu0 %v1305
    %3632 = vmatmul.f32.gmra.mxu0 %v3018
    %v3633 = vpop.f32.mrf.mxu0
    %v3634 = vadd.f32 %v3614, %v3633
    %3635 = vdwg.mxu0
    %3636 = vmatpush.msra.mxu0 %v1170
    %3637 = vmatpush.msra.mxu0 %v1162
    %3638 = vmatpush.msra.mxu0 %v1154
    %3639 = vmatpush.msra.mxu0 %v1146
    %3640 = vmatpush.msra.mxu0 %v1138
    %3641 = vmatpush.msra.mxu0 %v1130
    %3642 = vmatpush.msra.mxu0 %v1122
    %3643 = vmatpush.msra.mxu0 %v1114
    %3644 = vmatpush.msra.mxu0 %v1106
    %3645 = vmatpush.msra.mxu0 %v1098
    %3646 = vmatpush.msra.mxu0 %v1090
    %3647 = vmatpush.msra.mxu0 %v1082
    %3648 = vmatpush.msra.mxu0 %v1074
    %3649 = vmatpush.msra.mxu0 %v1066
    %3650 = vmatpush.msra.mxu0 %v1058
    %3651 = vmatpush.msra.mxu0 %v1050
    %3652 = vmatmul.f32.gmra.mxu0 %v3395
    %v3653 = vpop.f32.mrf.mxu0
    %v3654 = vadd.f32 %v465, %v3653
    %3655 = vdwg.mxu0
    %3656 = vmatpush.msra.mxu0 %v1298
    %3657 = vmatpush.msra.mxu0 %v1290
    %3658 = vmatpush.msra.mxu0 %v1282
    %3659 = vmatpush.msra.mxu0 %v1274
    %3660 = vmatpush.msra.mxu0 %v1266
    %3661 = vmatpush.msra.mxu0 %v1258
    %3662 = vmatpush.msra.mxu0 %v1250
    %3663 = vmatpush.msra.mxu0 %v1242
    %3664 = vmatpush.msra.mxu0 %v1234
    %3665 = vmatpush.msra.mxu0 %v1226
    %3666 = vmatpush.msra.mxu0 %v1218
    %3667 = vmatpush.msra.mxu0 %v1210
    %3668 = vmatpush.msra.mxu0 %v1202
    %3669 = vmatpush.msra.mxu0 %v1194
    %3670 = vmatpush.msra.mxu0 %v1186
    %3671 = vmatpush.msra.mxu0 %v1178
    %3672 = vmatmul.f32.gmra.mxu0 %v3017
    %v3673 = vpop.f32.mrf.mxu0
    %v3674 = vadd.f32 %v3654, %v3673
    %3675 = vdwg.mxu0
    %3676 = vmatpush.msra.mxu0 %v1426
    %3677 = vmatpush.msra.mxu0 %v1418
    %3678 = vmatpush.msra.mxu0 %v1410
    %3679 = vmatpush.msra.mxu0 %v1402
    %3680 = vmatpush.msra.mxu0 %v1394
    %3681 = vmatpush.msra.mxu0 %v1386
    %3682 = vmatpush.msra.mxu0 %v1378
    %3683 = vmatpush.msra.mxu0 %v1370
    %3684 = vmatpush.msra.mxu0 %v1362
    %3685 = vmatpush.msra.mxu0 %v1354
    %3686 = vmatpush.msra.mxu0 %v1346
    %3687 = vmatpush.msra.mxu0 %v1338
    %3688 = vmatpush.msra.mxu0 %v1330
    %3689 = vmatpush.msra.mxu0 %v1322
    %3690 = vmatpush.msra.mxu0 %v1314
    %3691 = vmatpush.msra.mxu0 %v1306
    %3692 = vmatmul.f32.gmra.mxu0 %v3018
    %v3693 = vpop.f32.mrf.mxu0
    %v3694 = vadd.f32 %v3674, %v3693
    %3695 = vdwg.mxu0
    %3696 = vmatpush.msra.mxu0 %v1171
    %3697 = vmatpush.msra.mxu0 %v1163
    %3698 = vmatpush.msra.mxu0 %v1155
    %3699 = vmatpush.msra.mxu0 %v1147
    %3700 = vmatpush.msra.mxu0 %v1139
    %3701 = vmatpush.msra.mxu0 %v1131
    %3702 = vmatpush.msra.mxu0 %v1123
    %3703 = vmatpush.msra.mxu0 %v1115
    %3704 = vmatpush.msra.mxu0 %v1107
    %3705 = vmatpush.msra.mxu0 %v1099
    %3706 = vmatpush.msra.mxu0 %v1091
    %3707 = vmatpush.msra.mxu0 %v1083
    %3708 = vmatpush.msra.mxu0 %v1075
    %3709 = vmatpush.msra.mxu0 %v1067
    %3710 = vmatpush.msra.mxu0 %v1059
    %3711 = vmatpush.msra.mxu0 %v1051
    %3712 = vmatmul.f32.gmra.mxu0 %v3395
    %v3713 = vpop.f32.mrf.mxu0
    %v3714 = vadd.f32 %v466, %v3713
    %3715 = vdwg.mxu0
    %3716 = vmatpush.msra.mxu0 %v1299
    %3717 = vmatpush.msra.mxu0 %v1291
    %3718 = vmatpush.msra.mxu0 %v1283
    %3719 = vmatpush.msra.mxu0 %v1275
    %3720 = vmatpush.msra.mxu0 %v1267
    %3721 = vmatpush.msra.mxu0 %v1259
    %3722 = vmatpush.msra.mxu0 %v1251
    %3723 = vmatpush.msra.mxu0 %v1243
    %3724 = vmatpush.msra.mxu0 %v1235
    %3725 = vmatpush.msra.mxu0 %v1227
    %3726 = vmatpush.msra.mxu0 %v1219
    %3727 = vmatpush.msra.mxu0 %v1211
    %3728 = vmatpush.msra.mxu0 %v1203
    %3729 = vmatpush.msra.mxu0 %v1195
    %3730 = vmatpush.msra.mxu0 %v1187
    %3731 = vmatpush.msra.mxu0 %v1179
    %3732 = vmatmul.f32.gmra.mxu0 %v3017
    %v3733 = vpop.f32.mrf.mxu0
    %v3734 = vadd.f32 %v3714, %v3733
    %3735 = vdwg.mxu0
    %3736 = vmatpush.msra.mxu0 %v1427
    %3737 = vmatpush.msra.mxu0 %v1419
    %3738 = vmatpush.msra.mxu0 %v1411
    %3739 = vmatpush.msra.mxu0 %v1403
    %3740 = vmatpush.msra.mxu0 %v1395
    %3741 = vmatpush.msra.mxu0 %v1387
    %3742 = vmatpush.msra.mxu0 %v1379
    %3743 = vmatpush.msra.mxu0 %v1371
    %3744 = vmatpush.msra.mxu0 %v1363
    %3745 = vmatpush.msra.mxu0 %v1355
    %3746 = vmatpush.msra.mxu0 %v1347
    %3747 = vmatpush.msra.mxu0 %v1339
    %3748 = vmatpush.msra.mxu0 %v1331
    %3749 = vmatpush.msra.mxu0 %v1323
    %3750 = vmatpush.msra.mxu0 %v1315
    %3751 = vmatpush.msra.mxu0 %v1307
    %3752 = vmatmul.f32.gmra.mxu0 %v3018
    %v3753 = vpop.f32.mrf.mxu0
    %v3754 = vadd.f32 %v3734, %v3753
    %3755 = vdwg.mxu0
    %3756 = vmatpush.msra.mxu0 %v1172
    %3757 = vmatpush.msra.mxu0 %v1164
    %3758 = vmatpush.msra.mxu0 %v1156
    %3759 = vmatpush.msra.mxu0 %v1148
    %3760 = vmatpush.msra.mxu0 %v1140
    %3761 = vmatpush.msra.mxu0 %v1132
    %3762 = vmatpush.msra.mxu0 %v1124
    %3763 = vmatpush.msra.mxu0 %v1116
    %3764 = vmatpush.msra.mxu0 %v1108
    %3765 = vmatpush.msra.mxu0 %v1100
    %3766 = vmatpush.msra.mxu0 %v1092
    %3767 = vmatpush.msra.mxu0 %v1084
    %3768 = vmatpush.msra.mxu0 %v1076
    %3769 = vmatpush.msra.mxu0 %v1068
    %3770 = vmatpush.msra.mxu0 %v1060
    %3771 = vmatpush.msra.mxu0 %v1052
    %3772 = vmatmul.f32.gmra.mxu0 %v3395
    %v3773 = vpop.f32.mrf.mxu0
    %v3774 = vadd.f32 %v467, %v3773
    %3775 = vdwg.mxu0
    %3776 = vmatpush.msra.mxu0 %v1300
    %3777 = vmatpush.msra.mxu0 %v1292
    %3778 = vmatpush.msra.mxu0 %v1284
    %3779 = vmatpush.msra.mxu0 %v1276
    %3780 = vmatpush.msra.mxu0 %v1268
    %3781 = vmatpush.msra.mxu0 %v1260
    %3782 = vmatpush.msra.mxu0 %v1252
    %3783 = vmatpush.msra.mxu0 %v1244
    %3784 = vmatpush.msra.mxu0 %v1236
    %3785 = vmatpush.msra.mxu0 %v1228
    %3786 = vmatpush.msra.mxu0 %v1220
    %3787 = vmatpush.msra.mxu0 %v1212
    %3788 = vmatpush.msra.mxu0 %v1204
    %3789 = vmatpush.msra.mxu0 %v1196
    %3790 = vmatpush.msra.mxu0 %v1188
    %3791 = vmatpush.msra.mxu0 %v1180
    %3792 = vmatmul.f32.gmra.mxu0 %v3017
    %v3793 = vpop.f32.mrf.mxu0
    %v3794 = vadd.f32 %v3774, %v3793
    %3795 = vdwg.mxu0
    %3796 = vmatpush.msra.mxu0 %v1428
    %3797 = vmatpush.msra.mxu0 %v1420
    %3798 = vmatpush.msra.mxu0 %v1412
    %3799 = vmatpush.msra.mxu0 %v1404
    %3800 = vmatpush.msra.mxu0 %v1396
    %3801 = vmatpush.msra.mxu0 %v1388
    %3802 = vmatpush.msra.mxu0 %v1380
    %3803 = vmatpush.msra.mxu0 %v1372
    %3804 = vmatpush.msra.mxu0 %v1364
    %3805 = vmatpush.msra.mxu0 %v1356
    %3806 = vmatpush.msra.mxu0 %v1348
    %3807 = vmatpush.msra.mxu0 %v1340
    %3808 = vmatpush.msra.mxu0 %v1332
    %3809 = vmatpush.msra.mxu0 %v1324
    %3810 = vmatpush.msra.mxu0 %v1316
    %3811 = vmatpush.msra.mxu0 %v1308
    %3812 = vmatmul.f32.gmra.mxu0 %v3018
    %v3813 = vpop.f32.mrf.mxu0
    %v3814 = vadd.f32 %v3794, %v3813
    %3815 = vdwg.mxu0
    %3816 = vmatpush.msra.mxu0 %v1173
    %3817 = vmatpush.msra.mxu0 %v1165
    %3818 = vmatpush.msra.mxu0 %v1157
    %3819 = vmatpush.msra.mxu0 %v1149
    %3820 = vmatpush.msra.mxu0 %v1141
    %3821 = vmatpush.msra.mxu0 %v1133
    %3822 = vmatpush.msra.mxu0 %v1125
    %3823 = vmatpush.msra.mxu0 %v1117
    %3824 = vmatpush.msra.mxu0 %v1109
    %3825 = vmatpush.msra.mxu0 %v1101
    %3826 = vmatpush.msra.mxu0 %v1093
    %3827 = vmatpush.msra.mxu0 %v1085
    %3828 = vmatpush.msra.mxu0 %v1077
    %3829 = vmatpush.msra.mxu0 %v1069
    %3830 = vmatpush.msra.mxu0 %v1061
    %3831 = vmatpush.msra.mxu0 %v1053
    %3832 = vmatmul.f32.gmra.mxu0 %v3395
    %v3833 = vpop.f32.mrf.mxu0
    %v3834 = vadd.f32 %v468, %v3833
    %3835 = vdwg.mxu0
    %3836 = vmatpush.msra.mxu0 %v1301
    %3837 = vmatpush.msra.mxu0 %v1293
    %3838 = vmatpush.msra.mxu0 %v1285
    %3839 = vmatpush.msra.mxu0 %v1277
    %3840 = vmatpush.msra.mxu0 %v1269
    %3841 = vmatpush.msra.mxu0 %v1261
    %3842 = vmatpush.msra.mxu0 %v1253
    %3843 = vmatpush.msra.mxu0 %v1245
    %3844 = vmatpush.msra.mxu0 %v1237
    %3845 = vmatpush.msra.mxu0 %v1229
    %3846 = vmatpush.msra.mxu0 %v1221
    %3847 = vmatpush.msra.mxu0 %v1213
    %3848 = vmatpush.msra.mxu0 %v1205
    %3849 = vmatpush.msra.mxu0 %v1197
    %3850 = vmatpush.msra.mxu0 %v1189
    %3851 = vmatpush.msra.mxu0 %v1181
    %3852 = vmatmul.f32.gmra.mxu0 %v3017
    %v3853 = vpop.f32.mrf.mxu0
    %v3854 = vadd.f32 %v3834, %v3853
    %3855 = vdwg.mxu0
    %3856 = vmatpush.msra.mxu0 %v1429
    %3857 = vmatpush.msra.mxu0 %v1421
    %3858 = vmatpush.msra.mxu0 %v1413
    %3859 = vmatpush.msra.mxu0 %v1405
    %3860 = vmatpush.msra.mxu0 %v1397
    %3861 = vmatpush.msra.mxu0 %v1389
    %3862 = vmatpush.msra.mxu0 %v1381
    %3863 = vmatpush.msra.mxu0 %v1373
    %3864 = vmatpush.msra.mxu0 %v1365
    %3865 = vmatpush.msra.mxu0 %v1357
    %3866 = vmatpush.msra.mxu0 %v1349
    %3867 = vmatpush.msra.mxu0 %v1341
    %3868 = vmatpush.msra.mxu0 %v1333
    %3869 = vmatpush.msra.mxu0 %v1325
    %3870 = vmatpush.msra.mxu0 %v1317
    %3871 = vmatpush.msra.mxu0 %v1309
    %3872 = vmatmul.f32.gmra.mxu0 %v3018
    %v3873 = vpop.f32.mrf.mxu0
    %v3874 = vadd.f32 %v3854, %v3873
    %3875 = vdwg.mxu0
    %v3876 = vxor.u32 %v3454, 2147483648
    %v3877 = vxor.u32 %v3514, 2147483648
    %v3878 = vmul.f32 %v3876, 1.442695
    %v3879 = vpow.pop %v3878
    %v3880 = vmul.f32 %v3877, 1.442695
    %v3881 = vpow.pop %v3880
    %v3882 = vadd.f32 %v3879, 1.0
    %v3883 = vadd.f32 %v3881, 1.0
    %v3884 = vrcp.pop %v3882
    %v3885 = vmul.f32 %v3882, %v3884
    %v3886 = vsub.f32 1.0, %v3885
    %v3887 = vmul.f32 %v3884, %v3886
    %v3888 = vadd.f32 %v3884, %v3887
    %vm3889 = vweird.f32 %v3882
    %vm3890 = vweird.f32 %v3884
    %vm3891 = vmor %vm3889, %vm3890
    %v3892 = vsel %vm3891, %v3884, %v3888
    %v3893 = vand.u32 2147483647, %v3882
    %vm3894 = vcmp.eq.f32.partialorder %v3893, 8.507059e+37
    %v3895 = vand.u32 %v3882, 2147483648
    %v3896 = vor.u32 1.1754944e-38, %v3895
    %v3897 = vsel %vm3894, %v3896, %v3892
    %v3898 = vmul.f32 1.0, %v3897
    %v3899 = vrcp.pop %v3883
    %v3900 = vmul.f32 %v3883, %v3899
    %v3901 = vsub.f32 1.0, %v3900
    %v3902 = vmul.f32 %v3899, %v3901
    %v3903 = vadd.f32 %v3899, %v3902
    %vm3904 = vweird.f32 %v3883
    %vm3905 = vweird.f32 %v3899
    %vm3906 = vmor %vm3904, %vm3905
    %v3907 = vsel %vm3906, %v3899, %v3903
    %v3908 = vand.u32 2147483647, %v3883
    %vm3909 = vcmp.eq.f32.partialorder %v3908, 8.507059e+37
    %v3910 = vand.u32 %v3883, 2147483648
    %v3911 = vor.u32 1.1754944e-38, %v3910
    %v3912 = vsel %vm3909, %v3911, %v3907
    %v3913 = vmul.f32 1.0, %v3912
    %v3914 = vxor.u32 %v3574, 2147483648
    %v3915 = vxor.u32 %v3634, 2147483648
    %v3916 = vmul.f32 %v3914, 1.442695
    %v3917 = vpow.pop %v3916
    %v3918 = vmul.f32 %v3915, 1.442695
    %v3919 = vpow.pop %v3918
    %v3920 = vadd.f32 %v3917, 1.0
    %v3921 = vadd.f32 %v3919, 1.0
    %v3922 = vrcp.pop %v3920
    %v3923 = vmul.f32 %v3920, %v3922
    %v3924 = vsub.f32 1.0, %v3923
    %v3925 = vmul.f32 %v3922, %v3924
    %v3926 = vadd.f32 %v3922, %v3925
    %vm3927 = vweird.f32 %v3920
    %vm3928 = vweird.f32 %v3922
    %vm3929 = vmor %vm3927, %vm3928
    %v3930 = vsel %vm3929, %v3922, %v3926
    %v3931 = vand.u32 2147483647, %v3920
    %vm3932 = vcmp.eq.f32.partialorder %v3931, 8.507059e+37
    %v3933 = vand.u32 %v3920, 2147483648
    %v3934 = vor.u32 1.1754944e-38, %v3933
    %v3935 = vsel %vm3932, %v3934, %v3930
    %v3936 = vmul.f32 1.0, %v3935
    %v3937 = vrcp.pop %v3921
    %v3938 = vmul.f32 %v3921, %v3937
    %v3939 = vsub.f32 1.0, %v3938
    %v3940 = vmul.f32 %v3937, %v3939
    %v3941 = vadd.f32 %v3937, %v3940
    %vm3942 = vweird.f32 %v3921
    %vm3943 = vweird.f32 %v3937
    %vm3944 = vmor %vm3942, %vm3943
    %v3945 = vsel %vm3944, %v3937, %v3941
    %v3946 = vand.u32 2147483647, %v3921
    %vm3947 = vcmp.eq.f32.partialorder %v3946, 8.507059e+37
    %v3948 = vand.u32 %v3921, 2147483648
    %v3949 = vor.u32 1.1754944e-38, %v3948
    %v3950 = vsel %vm3947, %v3949, %v3945
    %v3951 = vmul.f32 1.0, %v3950
    %v3952 = vtanh.pop %v3694
    %v3953 = vtanh.pop %v3754
    %v3954 = vxor.u32 %v3814, 2147483648
    %v3955 = vxor.u32 %v3874, 2147483648
    %v3956 = vmul.f32 %v3954, 1.442695
    %v3957 = vpow.pop %v3956
    %v3958 = vmul.f32 %v3955, 1.442695
    %v3959 = vpow.pop %v3958
    %v3960 = vadd.f32 %v3957, 1.0
    %v3961 = vadd.f32 %v3959, 1.0
    %v3962 = vrcp.pop %v3960
    %v3963 = vmul.f32 %v3960, %v3962
    %v3964 = vsub.f32 1.0, %v3963
    %v3965 = vmul.f32 %v3962, %v3964
    %v3966 = vadd.f32 %v3962, %v3965
    %vm3967 = vweird.f32 %v3960
    %vm3968 = vweird.f32 %v3962
    %vm3969 = vmor %vm3967, %vm3968
    %v3970 = vsel %vm3969, %v3962, %v3966
    %v3971 = vand.u32 2147483647, %v3960
    %vm3972 = vcmp.eq.f32.partialorder %v3971, 8.507059e+37
    %v3973 = vand.u32 %v3960, 2147483648
    %v3974 = vor.u32 1.1754944e-38, %v3973
    %v3975 = vsel %vm3972, %v3974, %v3970
    %v3976 = vmul.f32 1.0, %v3975
    %v3977 = vrcp.pop %v3961
    %v3978 = vmul.f32 %v3961, %v3977
    %v3979 = vsub.f32 1.0, %v3978
    %v3980 = vmul.f32 %v3977, %v3979
    %v3981 = vadd.f32 %v3977, %v3980
    %vm3982 = vweird.f32 %v3961
    %vm3983 = vweird.f32 %v3977
    %vm3984 = vmor %vm3982, %vm3983
    %v3985 = vsel %vm3984, %v3977, %v3981
    %v3986 = vand.u32 2147483647, %v3961
    %vm3987 = vcmp.eq.f32.partialorder %v3986, 8.507059e+37
    %v3988 = vand.u32 %v3961, 2147483648
    %v3989 = vor.u32 1.1754944e-38, %v3988
    %v3990 = vsel %vm3987, %v3989, %v3985
    %v3991 = vmul.f32 1.0, %v3990
    %v3992 = vmul.f32 %v3936, %v3013
    %v3993 = vmul.f32 %v3951, %v3014
    %v3994 = vmul.f32 %v3898, %v3952
    %v3995 = vmul.f32 %v3913, %v3953
    %v3996 = vadd.f32 %v3992, %v3994
    %v3997 = vadd.f32 %v3993, %v3995
    %v3998 = vtanh.pop %v3996
    %v3999 = vtanh.pop %v3997
    %v4000 = vmul.f32 %v3976, %v3998
    %v4001 = vmul.f32 %v3991, %v3999
    %s4002 = smul.u32 3, 4
    %s4003 = smul.addr %s4002, 8
    %s4004 = scalar_lea.vmem [#allocation2], %s4003
    %v4005 = vld [vmem:[%s4004] sm:$0xff]
    %v4006 = vld [vmem:[%s4004 + $0x8] sm:$0xff]
    %v4007 = vld [vmem:[%s4004 + $0x10] sm:$0xff]
    %v4008 = vld [vmem:[%s4004 + $0x18] sm:$0xff]
    %4009 = vmatpush.msra.mxu0 %v544
    %4010 = vmatpush.msra.mxu0 %v540
    %4011 = vmatpush.msra.mxu0 %v536
    %4012 = vmatpush.msra.mxu0 %v532
    %4013 = vmatpush.msra.mxu0 %v528
    %4014 = vmatpush.msra.mxu0 %v524
    %4015 = vmatpush.msra.mxu0 %v520
    %4016 = vmatpush.msra.mxu0 %v516
    %4017 = vmatpush.msra.mxu0 %v512
    %4018 = vmatpush.msra.mxu0 %v508
    %4019 = vmatpush.msra.mxu0 %v504
    %4020 = vmatpush.msra.mxu0 %v500
    %4021 = vmatpush.msra.mxu0 %v496
    %4022 = vmatpush.msra.mxu0 %v492
    %4023 = vmatpush.msra.mxu0 %v488
    %4024 = vmatpush.msra.mxu0 %v484
    %4025 = vmatmul.f32.gmra.mxu0 %v3172
    %v4026 = vpop.f32.mrf.mxu0
    %v4027 = vadd.f32 0.0, %v4026
    %4028 = vdwg.mxu0
    %4029 = vmatpush.msra.mxu0 %v545
    %4030 = vmatpush.msra.mxu0 %v541
    %4031 = vmatpush.msra.mxu0 %v537
    %4032 = vmatpush.msra.mxu0 %v533
    %4033 = vmatpush.msra.mxu0 %v529
    %4034 = vmatpush.msra.mxu0 %v525
    %4035 = vmatpush.msra.mxu0 %v521
    %4036 = vmatpush.msra.mxu0 %v517
    %4037 = vmatpush.msra.mxu0 %v513
    %4038 = vmatpush.msra.mxu0 %v509
    %4039 = vmatpush.msra.mxu0 %v505
    %4040 = vmatpush.msra.mxu0 %v501
    %4041 = vmatpush.msra.mxu0 %v497
    %4042 = vmatpush.msra.mxu0 %v493
    %4043 = vmatpush.msra.mxu0 %v489
    %4044 = vmatpush.msra.mxu0 %v485
    %4045 = vmatmul.f32.gmra.mxu0 %v3172
    %v4046 = vpop.f32.mrf.mxu0
    %v4047 = vadd.f32 0.0, %v4046
    %4048 = vdwg.mxu0
    %4049 = vmatpush.msra.mxu0 %v546
    %4050 = vmatpush.msra.mxu0 %v542
    %4051 = vmatpush.msra.mxu0 %v538
    %4052 = vmatpush.msra.mxu0 %v534
    %4053 = vmatpush.msra.mxu0 %v530
    %4054 = vmatpush.msra.mxu0 %v526
    %4055 = vmatpush.msra.mxu0 %v522
    %4056 = vmatpush.msra.mxu0 %v518
    %4057 = vmatpush.msra.mxu0 %v514
    %4058 = vmatpush.msra.mxu0 %v510
    %4059 = vmatpush.msra.mxu0 %v506
    %4060 = vmatpush.msra.mxu0 %v502
    %4061 = vmatpush.msra.mxu0 %v498
    %4062 = vmatpush.msra.mxu0 %v494
    %4063 = vmatpush.msra.mxu0 %v490
    %4064 = vmatpush.msra.mxu0 %v486
    %4065 = vmatmul.f32.gmra.mxu0 %v3172
    %v4066 = vpop.f32.mrf.mxu0
    %v4067 = vadd.f32 0.0, %v4066
    %4068 = vdwg.mxu0
    %4069 = vmatpush.msra.mxu0 %v547
    %4070 = vmatpush.msra.mxu0 %v543
    %4071 = vmatpush.msra.mxu0 %v539
    %4072 = vmatpush.msra.mxu0 %v535
    %4073 = vmatpush.msra.mxu0 %v531
    %4074 = vmatpush.msra.mxu0 %v527
    %4075 = vmatpush.msra.mxu0 %v523
    %4076 = vmatpush.msra.mxu0 %v519
    %4077 = vmatpush.msra.mxu0 %v515
    %4078 = vmatpush.msra.mxu0 %v511
    %4079 = vmatpush.msra.mxu0 %v507
    %4080 = vmatpush.msra.mxu0 %v503
    %4081 = vmatpush.msra.mxu0 %v499
    %4082 = vmatpush.msra.mxu0 %v495
    %4083 = vmatpush.msra.mxu0 %v491
    %4084 = vmatpush.msra.mxu0 %v487
    %4085 = vmatmul.f32.gmra.mxu0 %v3172
    %v4086 = vpop.f32.mrf.mxu0
    %v4087 = vadd.f32 0.0, %v4086
    %4088 = vdwg.mxu0
    %v4089 = vadd.f32 %v4005, %v4027
    %v4090 = vadd.f32 %v4006, %v4047
    %v4091 = vadd.f32 %v4007, %v4067
    %v4092 = vadd.f32 %v4008, %v4087
    %v4093 = vxor.u32 %v4089, 2147483648
    %v4094 = vmul.f32 %v4093, 1.442695
    %v4095 = vpow.pop %v4094
    %v4096 = vadd.f32 %v4095, 1.0
    %v4097 = vrcp.pop %v4096
    %v4098 = vmul.f32 %v4096, %v4097
    %v4099 = vsub.f32 1.0, %v4098
    %v4100 = vmul.f32 %v4097, %v4099
    %v4101 = vadd.f32 %v4097, %v4100
    %vm4102 = vweird.f32 %v4096
    %vm4103 = vweird.f32 %v4097
    %vm4104 = vmor %vm4102, %vm4103
    %v4105 = vsel %vm4104, %v4097, %v4101
    %v4106 = vand.u32 2147483647, %v4096
    %vm4107 = vcmp.eq.f32.partialorder %v4106, 8.507059e+37
    %v4108 = vand.u32 %v4096, 2147483648
    %v4109 = vor.u32 1.1754944e-38, %v4108
    %v4110 = vsel %vm4107, %v4109, %v4105
    %v4111 = vmul.f32 1.0, %v4110
    %v4112 = vxor.u32 %v4090, 2147483648
    %v4113 = vmul.f32 %v4112, 1.442695
    %v4114 = vpow.pop %v4113
    %v4115 = vadd.f32 %v4114, 1.0
    %v4116 = vrcp.pop %v4115
    %v4117 = vmul.f32 %v4115, %v4116
    %v4118 = vsub.f32 1.0, %v4117
    %v4119 = vmul.f32 %v4116, %v4118
    %v4120 = vadd.f32 %v4116, %v4119
    %vm4121 = vweird.f32 %v4115
    %vm4122 = vweird.f32 %v4116
    %vm4123 = vmor %vm4121, %vm4122
    %v4124 = vsel %vm4123, %v4116, %v4120
    %v4125 = vand.u32 2147483647, %v4115
    %vm4126 = vcmp.eq.f32.partialorder %v4125, 8.507059e+37
    %v4127 = vand.u32 %v4115, 2147483648
    %v4128 = vor.u32 1.1754944e-38, %v4127
    %v4129 = vsel %vm4126, %v4128, %v4124
    %v4130 = vmul.f32 1.0, %v4129
    %v4131 = vtanh.pop %v4091
    %v4132 = vxor.u32 %v4092, 2147483648
    %v4133 = vmul.f32 %v4132, 1.442695
    %v4134 = vpow.pop %v4133
    %v4135 = vadd.f32 %v4134, 1.0
    %v4136 = vrcp.pop %v4135
    %v4137 = vmul.f32 %v4135, %v4136
    %v4138 = vsub.f32 1.0, %v4137
    %v4139 = vmul.f32 %v4136, %v4138
    %v4140 = vadd.f32 %v4136, %v4139
    %vm4141 = vweird.f32 %v4135
    %vm4142 = vweird.f32 %v4136
    %vm4143 = vmor %vm4141, %vm4142
    %v4144 = vsel %vm4143, %v4136, %v4140
    %v4145 = vand.u32 2147483647, %v4135
    %vm4146 = vcmp.eq.f32.partialorder %v4145, 8.507059e+37
    %v4147 = vand.u32 %v4135, 2147483648
    %v4148 = vor.u32 1.1754944e-38, %v4147
    %v4149 = vsel %vm4146, %v4148, %v4144
    %v4150 = vmul.f32 1.0, %v4149
    %v4151 = vmul.f32 %v4130, %v3170
    %v4152 = vmul.f32 %v4111, %v4131
    %v4153 = vadd.f32 %v4151, %v4152
    %v4154 = vtanh.pop %v4153
    %v4155 = vmul.f32 %v4150, %v4154
    %4156 = vmatpush.msra.mxu0 %v755
    %4157 = vmatpush.msra.mxu0 %v751
    %4158 = vmatpush.msra.mxu0 %v747
    %4159 = vmatpush.msra.mxu0 %v743
    %4160 = vmatpush.msra.mxu0 %v739
    %4161 = vmatpush.msra.mxu0 %v735
    %4162 = vmatpush.msra.mxu0 %v731
    %4163 = vmatpush.msra.mxu0 %v727
    %4164 = vmatpush.msra.mxu0 %v723
    %4165 = vmatpush.msra.mxu0 %v719
    %4166 = vmatpush.msra.mxu0 %v715
    %4167 = vmatpush.msra.mxu0 %v711
    %4168 = vmatpush.msra.mxu0 %v707
    %4169 = vmatpush.msra.mxu0 %v703
    %4170 = vmatpush.msra.mxu0 %v699
    %4171 = vmatpush.msra.mxu0 %v695
    %4172 = vmatmul.f32.gmra.mxu0 %v4155
    %v4173 = vpop.f32.mrf.mxu0
    %v4174 = vadd.f32 %v451, %v4173
    %4175 = vdwg.mxu0
    %4176 = vmatpush.msra.mxu0 %v819
    %4177 = vmatpush.msra.mxu0 %v815
    %4178 = vmatpush.msra.mxu0 %v811
    %4179 = vmatpush.msra.mxu0 %v807
    %4180 = vmatpush.msra.mxu0 %v803
    %4181 = vmatpush.msra.mxu0 %v799
    %4182 = vmatpush.msra.mxu0 %v795
    %4183 = vmatpush.msra.mxu0 %v791
    %4184 = vmatpush.msra.mxu0 %v787
    %4185 = vmatpush.msra.mxu0 %v783
    %4186 = vmatpush.msra.mxu0 %v779
    %4187 = vmatpush.msra.mxu0 %v775
    %4188 = vmatpush.msra.mxu0 %v771
    %4189 = vmatpush.msra.mxu0 %v767
    %4190 = vmatpush.msra.mxu0 %v763
    %4191 = vmatpush.msra.mxu0 %v759
    %4192 = vmatmul.f32.gmra.mxu0 %v3395
    %v4193 = vpop.f32.mrf.mxu0
    %v4194 = vadd.f32 %v4174, %v4193
    %4195 = vdwg.mxu0
    %4196 = vmatpush.msra.mxu0 %v756
    %4197 = vmatpush.msra.mxu0 %v752
    %4198 = vmatpush.msra.mxu0 %v748
    %4199 = vmatpush.msra.mxu0 %v744
    %4200 = vmatpush.msra.mxu0 %v740
    %4201 = vmatpush.msra.mxu0 %v736
    %4202 = vmatpush.msra.mxu0 %v732
    %4203 = vmatpush.msra.mxu0 %v728
    %4204 = vmatpush.msra.mxu0 %v724
    %4205 = vmatpush.msra.mxu0 %v720
    %4206 = vmatpush.msra.mxu0 %v716
    %4207 = vmatpush.msra.mxu0 %v712
    %4208 = vmatpush.msra.mxu0 %v708
    %4209 = vmatpush.msra.mxu0 %v704
    %4210 = vmatpush.msra.mxu0 %v700
    %4211 = vmatpush.msra.mxu0 %v696
    %4212 = vmatmul.f32.gmra.mxu0 %v4155
    %v4213 = vpop.f32.mrf.mxu0
    %v4214 = vadd.f32 %v452, %v4213
    %4215 = vdwg.mxu0
    %4216 = vmatpush.msra.mxu0 %v820
    %4217 = vmatpush.msra.mxu0 %v816
    %4218 = vmatpush.msra.mxu0 %v812
    %4219 = vmatpush.msra.mxu0 %v808
    %4220 = vmatpush.msra.mxu0 %v804
    %4221 = vmatpush.msra.mxu0 %v800
    %4222 = vmatpush.msra.mxu0 %v796
    %4223 = vmatpush.msra.mxu0 %v792
    %4224 = vmatpush.msra.mxu0 %v788
    %4225 = vmatpush.msra.mxu0 %v784
    %4226 = vmatpush.msra.mxu0 %v780
    %4227 = vmatpush.msra.mxu0 %v776
    %4228 = vmatpush.msra.mxu0 %v772
    %4229 = vmatpush.msra.mxu0 %v768
    %4230 = vmatpush.msra.mxu0 %v764
    %4231 = vmatpush.msra.mxu0 %v760
    %4232 = vmatmul.f32.gmra.mxu0 %v3395
    %v4233 = vpop.f32.mrf.mxu0
    %v4234 = vadd.f32 %v4214, %v4233
    %4235 = vdwg.mxu0
    %4236 = vmatpush.msra.mxu0 %v757
    %4237 = vmatpush.msra.mxu0 %v753
    %4238 = vmatpush.msra.mxu0 %v749
    %4239 = vmatpush.msra.mxu0 %v745
    %4240 = vmatpush.msra.mxu0 %v741
    %4241 = vmatpush.msra.mxu0 %v737
    %4242 = vmatpush.msra.mxu0 %v733
    %4243 = vmatpush.msra.mxu0 %v729
    %4244 = vmatpush.msra.mxu0 %v725
    %4245 = vmatpush.msra.mxu0 %v721
    %4246 = vmatpush.msra.mxu0 %v717
    %4247 = vmatpush.msra.mxu0 %v713
    %4248 = vmatpush.msra.mxu0 %v709
    %4249 = vmatpush.msra.mxu0 %v705
    %4250 = vmatpush.msra.mxu0 %v701
    %4251 = vmatpush.msra.mxu0 %v697
    %4252 = vmatmul.f32.gmra.mxu0 %v4155
    %v4253 = vpop.f32.mrf.mxu0
    %v4254 = vadd.f32 %v453, %v4253
    %4255 = vdwg.mxu0
    %4256 = vmatpush.msra.mxu0 %v821
    %4257 = vmatpush.msra.mxu0 %v817
    %4258 = vmatpush.msra.mxu0 %v813
    %4259 = vmatpush.msra.mxu0 %v809
    %4260 = vmatpush.msra.mxu0 %v805
    %4261 = vmatpush.msra.mxu0 %v801
    %4262 = vmatpush.msra.mxu0 %v797
    %4263 = vmatpush.msra.mxu0 %v793
    %4264 = vmatpush.msra.mxu0 %v789
    %4265 = vmatpush.msra.mxu0 %v785
    %4266 = vmatpush.msra.mxu0 %v781
    %4267 = vmatpush.msra.mxu0 %v777
    %4268 = vmatpush.msra.mxu0 %v773
    %4269 = vmatpush.msra.mxu0 %v769
    %4270 = vmatpush.msra.mxu0 %v765
    %4271 = vmatpush.msra.mxu0 %v761
    %4272 = vmatmul.f32.gmra.mxu0 %v3395
    %v4273 = vpop.f32.mrf.mxu0
    %v4274 = vadd.f32 %v4254, %v4273
    %4275 = vdwg.mxu0
    %4276 = vmatpush.msra.mxu0 %v758
    %4277 = vmatpush.msra.mxu0 %v754
    %4278 = vmatpush.msra.mxu0 %v750
    %4279 = vmatpush.msra.mxu0 %v746
    %4280 = vmatpush.msra.mxu0 %v742
    %4281 = vmatpush.msra.mxu0 %v738
    %4282 = vmatpush.msra.mxu0 %v734
    %4283 = vmatpush.msra.mxu0 %v730
    %4284 = vmatpush.msra.mxu0 %v726
    %4285 = vmatpush.msra.mxu0 %v722
    %4286 = vmatpush.msra.mxu0 %v718
    %4287 = vmatpush.msra.mxu0 %v714
    %4288 = vmatpush.msra.mxu0 %v710
    %4289 = vmatpush.msra.mxu0 %v706
    %4290 = vmatpush.msra.mxu0 %v702
    %4291 = vmatpush.msra.mxu0 %v698
    %4292 = vmatmul.f32.gmra.mxu0 %v4155
    %v4293 = vpop.f32.mrf.mxu0
    %v4294 = vadd.f32 %v454, %v4293
    %4295 = vdwg.mxu0
    %4296 = vmatpush.msra.mxu0 %v822
    %4297 = vmatpush.msra.mxu0 %v818
    %4298 = vmatpush.msra.mxu0 %v814
    %4299 = vmatpush.msra.mxu0 %v810
    %4300 = vmatpush.msra.mxu0 %v806
    %4301 = vmatpush.msra.mxu0 %v802
    %4302 = vmatpush.msra.mxu0 %v798
    %4303 = vmatpush.msra.mxu0 %v794
    %4304 = vmatpush.msra.mxu0 %v790
    %4305 = vmatpush.msra.mxu0 %v786
    %4306 = vmatpush.msra.mxu0 %v782
    %4307 = vmatpush.msra.mxu0 %v778
    %4308 = vmatpush.msra.mxu0 %v774
    %4309 = vmatpush.msra.mxu0 %v770
    %4310 = vmatpush.msra.mxu0 %v766
    %4311 = vmatpush.msra.mxu0 %v762
    %4312 = vmatmul.f32.gmra.mxu0 %v3395
    %v4313 = vpop.f32.mrf.mxu0
    %v4314 = vadd.f32 %v4294, %v4313
    %4315 = vdwg.mxu0
    %v4316 = vxor.u32 %v4194, 2147483648
    %v4317 = vmul.f32 %v4316, 1.442695
    %v4318 = vpow.pop %v4317
    %v4319 = vadd.f32 %v4318, 1.0
    %v4320 = vrcp.pop %v4319
    %v4321 = vmul.f32 %v4319, %v4320
    %v4322 = vsub.f32 1.0, %v4321
    %v4323 = vmul.f32 %v4320, %v4322
    %v4324 = vadd.f32 %v4320, %v4323
    %vm4325 = vweird.f32 %v4319
    %vm4326 = vweird.f32 %v4320
    %vm4327 = vmor %vm4325, %vm4326
    %v4328 = vsel %vm4327, %v4320, %v4324
    %v4329 = vand.u32 2147483647, %v4319
    %vm4330 = vcmp.eq.f32.partialorder %v4329, 8.507059e+37
    %v4331 = vand.u32 %v4319, 2147483648
    %v4332 = vor.u32 1.1754944e-38, %v4331
    %v4333 = vsel %vm4330, %v4332, %v4328
    %v4334 = vmul.f32 1.0, %v4333
    %v4335 = vxor.u32 %v4234, 2147483648
    %v4336 = vmul.f32 %v4335, 1.442695
    %v4337 = vpow.pop %v4336
    %v4338 = vadd.f32 %v4337, 1.0
    %v4339 = vrcp.pop %v4338
    %v4340 = vmul.f32 %v4338, %v4339
    %v4341 = vsub.f32 1.0, %v4340
    %v4342 = vmul.f32 %v4339, %v4341
    %v4343 = vadd.f32 %v4339, %v4342
    %vm4344 = vweird.f32 %v4338
    %vm4345 = vweird.f32 %v4339
    %vm4346 = vmor %vm4344, %vm4345
    %v4347 = vsel %vm4346, %v4339, %v4343
    %v4348 = vand.u32 2147483647, %v4338
    %vm4349 = vcmp.eq.f32.partialorder %v4348, 8.507059e+37
    %v4350 = vand.u32 %v4338, 2147483648
    %v4351 = vor.u32 1.1754944e-38, %v4350
    %v4352 = vsel %vm4349, %v4351, %v4347
    %v4353 = vmul.f32 1.0, %v4352
    %v4354 = vtanh.pop %v4274
    %v4355 = vxor.u32 %v4314, 2147483648
    %v4356 = vmul.f32 %v4355, 1.442695
    %v4357 = vpow.pop %v4356
    %v4358 = vadd.f32 %v4357, 1.0
    %v4359 = vrcp.pop %v4358
    %v4360 = vmul.f32 %v4358, %v4359
    %v4361 = vsub.f32 1.0, %v4360
    %v4362 = vmul.f32 %v4359, %v4361
    %v4363 = vadd.f32 %v4359, %v4362
    %vm4364 = vweird.f32 %v4358
    %vm4365 = vweird.f32 %v4359
    %vm4366 = vmor %vm4364, %vm4365
    %v4367 = vsel %vm4366, %v4359, %v4363
    %v4368 = vand.u32 2147483647, %v4358
    %vm4369 = vcmp.eq.f32.partialorder %v4368, 8.507059e+37
    %v4370 = vand.u32 %v4358, 2147483648
    %v4371 = vor.u32 1.1754944e-38, %v4370
    %v4372 = vsel %vm4369, %v4371, %v4367
    %v4373 = vmul.f32 1.0, %v4372
    %v4374 = vmul.f32 %v4353, %v3393
    %v4375 = vmul.f32 %v4334, %v4354
    %v4376 = vadd.f32 %v4374, %v4375
    %v4377 = vtanh.pop %v4376
    %v4378 = vmul.f32 %v4373, %v4377
    %4379 = vmatpush.msra.mxu0 %v1166
    %4380 = vmatpush.msra.mxu0 %v1158
    %4381 = vmatpush.msra.mxu0 %v1150
    %4382 = vmatpush.msra.mxu0 %v1142
    %4383 = vmatpush.msra.mxu0 %v1134
    %4384 = vmatpush.msra.mxu0 %v1126
    %4385 = vmatpush.msra.mxu0 %v1118
    %4386 = vmatpush.msra.mxu0 %v1110
    %4387 = vmatpush.msra.mxu0 %v1102
    %4388 = vmatpush.msra.mxu0 %v1094
    %4389 = vmatpush.msra.mxu0 %v1086
    %4390 = vmatpush.msra.mxu0 %v1078
    %4391 = vmatpush.msra.mxu0 %v1070
    %4392 = vmatpush.msra.mxu0 %v1062
    %4393 = vmatpush.msra.mxu0 %v1054
    %4394 = vmatpush.msra.mxu0 %v1046
    %4395 = vmatmul.f32.gmra.mxu0 %v4378
    %v4396 = vpop.f32.mrf.mxu0
    %v4397 = vadd.f32 %v461, %v4396
    %4398 = vdwg.mxu0
    %4399 = vmatpush.msra.mxu0 %v1294
    %4400 = vmatpush.msra.mxu0 %v1286
    %4401 = vmatpush.msra.mxu0 %v1278
    %4402 = vmatpush.msra.mxu0 %v1270
    %4403 = vmatpush.msra.mxu0 %v1262
    %4404 = vmatpush.msra.mxu0 %v1254
    %4405 = vmatpush.msra.mxu0 %v1246
    %4406 = vmatpush.msra.mxu0 %v1238
    %4407 = vmatpush.msra.mxu0 %v1230
    %4408 = vmatpush.msra.mxu0 %v1222
    %4409 = vmatpush.msra.mxu0 %v1214
    %4410 = vmatpush.msra.mxu0 %v1206
    %4411 = vmatpush.msra.mxu0 %v1198
    %4412 = vmatpush.msra.mxu0 %v1190
    %4413 = vmatpush.msra.mxu0 %v1182
    %4414 = vmatpush.msra.mxu0 %v1174
    %4415 = vmatmul.f32.gmra.mxu0 %v4000
    %v4416 = vpop.f32.mrf.mxu0
    %v4417 = vadd.f32 %v4397, %v4416
    %4418 = vdwg.mxu0
    %4419 = vmatpush.msra.mxu0 %v1422
    %4420 = vmatpush.msra.mxu0 %v1414
    %4421 = vmatpush.msra.mxu0 %v1406
    %4422 = vmatpush.msra.mxu0 %v1398
    %4423 = vmatpush.msra.mxu0 %v1390
    %4424 = vmatpush.msra.mxu0 %v1382
    %4425 = vmatpush.msra.mxu0 %v1374
    %4426 = vmatpush.msra.mxu0 %v1366
    %4427 = vmatpush.msra.mxu0 %v1358
    %4428 = vmatpush.msra.mxu0 %v1350
    %4429 = vmatpush.msra.mxu0 %v1342
    %4430 = vmatpush.msra.mxu0 %v1334
    %4431 = vmatpush.msra.mxu0 %v1326
    %4432 = vmatpush.msra.mxu0 %v1318
    %4433 = vmatpush.msra.mxu0 %v1310
    %4434 = vmatpush.msra.mxu0 %v1302
    %4435 = vmatmul.f32.gmra.mxu0 %v4001
    %v4436 = vpop.f32.mrf.mxu0
    %v4437 = vadd.f32 %v4417, %v4436
    %4438 = vdwg.mxu0
    %4439 = vmatpush.msra.mxu0 %v1167
    %4440 = vmatpush.msra.mxu0 %v1159
    %4441 = vmatpush.msra.mxu0 %v1151
    %4442 = vmatpush.msra.mxu0 %v1143
    %4443 = vmatpush.msra.mxu0 %v1135
    %4444 = vmatpush.msra.mxu0 %v1127
    %4445 = vmatpush.msra.mxu0 %v1119
    %4446 = vmatpush.msra.mxu0 %v1111
    %4447 = vmatpush.msra.mxu0 %v1103
    %4448 = vmatpush.msra.mxu0 %v1095
    %4449 = vmatpush.msra.mxu0 %v1087
    %4450 = vmatpush.msra.mxu0 %v1079
    %4451 = vmatpush.msra.mxu0 %v1071
    %4452 = vmatpush.msra.mxu0 %v1063
    %4453 = vmatpush.msra.mxu0 %v1055
    %4454 = vmatpush.msra.mxu0 %v1047
    %4455 = vmatmul.f32.gmra.mxu0 %v4378
    %v4456 = vpop.f32.mrf.mxu0
    %v4457 = vadd.f32 %v462, %v4456
    %4458 = vdwg.mxu0
    %4459 = vmatpush.msra.mxu0 %v1295
    %4460 = vmatpush.msra.mxu0 %v1287
    %4461 = vmatpush.msra.mxu0 %v1279
    %4462 = vmatpush.msra.mxu0 %v1271
    %4463 = vmatpush.msra.mxu0 %v1263
    %4464 = vmatpush.msra.mxu0 %v1255
    %4465 = vmatpush.msra.mxu0 %v1247
    %4466 = vmatpush.msra.mxu0 %v1239
    %4467 = vmatpush.msra.mxu0 %v1231
    %4468 = vmatpush.msra.mxu0 %v1223
    %4469 = vmatpush.msra.mxu0 %v1215
    %4470 = vmatpush.msra.mxu0 %v1207
    %4471 = vmatpush.msra.mxu0 %v1199
    %4472 = vmatpush.msra.mxu0 %v1191
    %4473 = vmatpush.msra.mxu0 %v1183
    %4474 = vmatpush.msra.mxu0 %v1175
    %4475 = vmatmul.f32.gmra.mxu0 %v4000
    %v4476 = vpop.f32.mrf.mxu0
    %v4477 = vadd.f32 %v4457, %v4476
    %4478 = vdwg.mxu0
    %4479 = vmatpush.msra.mxu0 %v1423
    %4480 = vmatpush.msra.mxu0 %v1415
    %4481 = vmatpush.msra.mxu0 %v1407
    %4482 = vmatpush.msra.mxu0 %v1399
    %4483 = vmatpush.msra.mxu0 %v1391
    %4484 = vmatpush.msra.mxu0 %v1383
    %4485 = vmatpush.msra.mxu0 %v1375
    %4486 = vmatpush.msra.mxu0 %v1367
    %4487 = vmatpush.msra.mxu0 %v1359
    %4488 = vmatpush.msra.mxu0 %v1351
    %4489 = vmatpush.msra.mxu0 %v1343
    %4490 = vmatpush.msra.mxu0 %v1335
    %4491 = vmatpush.msra.mxu0 %v1327
    %4492 = vmatpush.msra.mxu0 %v1319
    %4493 = vmatpush.msra.mxu0 %v1311
    %4494 = vmatpush.msra.mxu0 %v1303
    %4495 = vmatmul.f32.gmra.mxu0 %v4001
    %v4496 = vpop.f32.mrf.mxu0
    %v4497 = vadd.f32 %v4477, %v4496
    %4498 = vdwg.mxu0
    %4499 = vmatpush.msra.mxu0 %v1168
    %4500 = vmatpush.msra.mxu0 %v1160
    %4501 = vmatpush.msra.mxu0 %v1152
    %4502 = vmatpush.msra.mxu0 %v1144
    %4503 = vmatpush.msra.mxu0 %v1136
    %4504 = vmatpush.msra.mxu0 %v1128
    %4505 = vmatpush.msra.mxu0 %v1120
    %4506 = vmatpush.msra.mxu0 %v1112
    %4507 = vmatpush.msra.mxu0 %v1104
    %4508 = vmatpush.msra.mxu0 %v1096
    %4509 = vmatpush.msra.mxu0 %v1088
    %4510 = vmatpush.msra.mxu0 %v1080
    %4511 = vmatpush.msra.mxu0 %v1072
    %4512 = vmatpush.msra.mxu0 %v1064
    %4513 = vmatpush.msra.mxu0 %v1056
    %4514 = vmatpush.msra.mxu0 %v1048
    %4515 = vmatmul.f32.gmra.mxu0 %v4378
    %v4516 = vpop.f32.mrf.mxu0
    %v4517 = vadd.f32 %v463, %v4516
    %4518 = vdwg.mxu0
    %4519 = vmatpush.msra.mxu0 %v1296
    %4520 = vmatpush.msra.mxu0 %v1288
    %4521 = vmatpush.msra.mxu0 %v1280
    %4522 = vmatpush.msra.mxu0 %v1272
    %4523 = vmatpush.msra.mxu0 %v1264
    %4524 = vmatpush.msra.mxu0 %v1256
    %4525 = vmatpush.msra.mxu0 %v1248
    %4526 = vmatpush.msra.mxu0 %v1240
    %4527 = vmatpush.msra.mxu0 %v1232
    %4528 = vmatpush.msra.mxu0 %v1224
    %4529 = vmatpush.msra.mxu0 %v1216
    %4530 = vmatpush.msra.mxu0 %v1208
    %4531 = vmatpush.msra.mxu0 %v1200
    %4532 = vmatpush.msra.mxu0 %v1192
    %4533 = vmatpush.msra.mxu0 %v1184
    %4534 = vmatpush.msra.mxu0 %v1176
    %4535 = vmatmul.f32.gmra.mxu0 %v4000
    %v4536 = vpop.f32.mrf.mxu0
    %v4537 = vadd.f32 %v4517, %v4536
    %4538 = vdwg.mxu0
    %4539 = vmatpush.msra.mxu0 %v1424
    %4540 = vmatpush.msra.mxu0 %v1416
    %4541 = vmatpush.msra.mxu0 %v1408
    %4542 = vmatpush.msra.mxu0 %v1400
    %4543 = vmatpush.msra.mxu0 %v1392
    %4544 = vmatpush.msra.mxu0 %v1384
    %4545 = vmatpush.msra.mxu0 %v1376
    %4546 = vmatpush.msra.mxu0 %v1368
    %4547 = vmatpush.msra.mxu0 %v1360
    %4548 = vmatpush.msra.mxu0 %v1352
    %4549 = vmatpush.msra.mxu0 %v1344
    %4550 = vmatpush.msra.mxu0 %v1336
    %4551 = vmatpush.msra.mxu0 %v1328
    %4552 = vmatpush.msra.mxu0 %v1320
    %4553 = vmatpush.msra.mxu0 %v1312
    %4554 = vmatpush.msra.mxu0 %v1304
    %4555 = vmatmul.f32.gmra.mxu0 %v4001
    %v4556 = vpop.f32.mrf.mxu0
    %v4557 = vadd.f32 %v4537, %v4556
    %4558 = vdwg.mxu0
    %4559 = vmatpush.msra.mxu0 %v1169
    %4560 = vmatpush.msra.mxu0 %v1161
    %4561 = vmatpush.msra.mxu0 %v1153
    %4562 = vmatpush.msra.mxu0 %v1145
    %4563 = vmatpush.msra.mxu0 %v1137
    %4564 = vmatpush.msra.mxu0 %v1129
    %4565 = vmatpush.msra.mxu0 %v1121
    %4566 = vmatpush.msra.mxu0 %v1113
    %4567 = vmatpush.msra.mxu0 %v1105
    %4568 = vmatpush.msra.mxu0 %v1097
    %4569 = vmatpush.msra.mxu0 %v1089
    %4570 = vmatpush.msra.mxu0 %v1081
    %4571 = vmatpush.msra.mxu0 %v1073
    %4572 = vmatpush.msra.mxu0 %v1065
    %4573 = vmatpush.msra.mxu0 %v1057
    %4574 = vmatpush.msra.mxu0 %v1049
    %4575 = vmatmul.f32.gmra.mxu0 %v4378
    %v4576 = vpop.f32.mrf.mxu0
    %v4577 = vadd.f32 %v464, %v4576
    %4578 = vdwg.mxu0
    %4579 = vmatpush.msra.mxu0 %v1297
    %4580 = vmatpush.msra.mxu0 %v1289
    %4581 = vmatpush.msra.mxu0 %v1281
    %4582 = vmatpush.msra.mxu0 %v1273
    %4583 = vmatpush.msra.mxu0 %v1265
    %4584 = vmatpush.msra.mxu0 %v1257
    %4585 = vmatpush.msra.mxu0 %v1249
    %4586 = vmatpush.msra.mxu0 %v1241
    %4587 = vmatpush.msra.mxu0 %v1233
    %4588 = vmatpush.msra.mxu0 %v1225
    %4589 = vmatpush.msra.mxu0 %v1217
    %4590 = vmatpush.msra.mxu0 %v1209
    %4591 = vmatpush.msra.mxu0 %v1201
    %4592 = vmatpush.msra.mxu0 %v1193
    %4593 = vmatpush.msra.mxu0 %v1185
    %4594 = vmatpush.msra.mxu0 %v1177
    %4595 = vmatmul.f32.gmra.mxu0 %v4000
    %v4596 = vpop.f32.mrf.mxu0
    %v4597 = vadd.f32 %v4577, %v4596
    %4598 = vdwg.mxu0
    %4599 = vmatpush.msra.mxu0 %v1425
    %4600 = vmatpush.msra.mxu0 %v1417
    %4601 = vmatpush.msra.mxu0 %v1409
    %4602 = vmatpush.msra.mxu0 %v1401
    %4603 = vmatpush.msra.mxu0 %v1393
    %4604 = vmatpush.msra.mxu0 %v1385
    %4605 = vmatpush.msra.mxu0 %v1377
    %4606 = vmatpush.msra.mxu0 %v1369
    %4607 = vmatpush.msra.mxu0 %v1361
    %4608 = vmatpush.msra.mxu0 %v1353
    %4609 = vmatpush.msra.mxu0 %v1345
    %4610 = vmatpush.msra.mxu0 %v1337
    %4611 = vmatpush.msra.mxu0 %v1329
    %4612 = vmatpush.msra.mxu0 %v1321
    %4613 = vmatpush.msra.mxu0 %v1313
    %4614 = vmatpush.msra.mxu0 %v1305
    %4615 = vmatmul.f32.gmra.mxu0 %v4001
    %v4616 = vpop.f32.mrf.mxu0
    %v4617 = vadd.f32 %v4597, %v4616
    %4618 = vdwg.mxu0
    %4619 = vmatpush.msra.mxu0 %v1170
    %4620 = vmatpush.msra.mxu0 %v1162
    %4621 = vmatpush.msra.mxu0 %v1154
    %4622 = vmatpush.msra.mxu0 %v1146
    %4623 = vmatpush.msra.mxu0 %v1138
    %4624 = vmatpush.msra.mxu0 %v1130
    %4625 = vmatpush.msra.mxu0 %v1122
    %4626 = vmatpush.msra.mxu0 %v1114
    %4627 = vmatpush.msra.mxu0 %v1106
    %4628 = vmatpush.msra.mxu0 %v1098
    %4629 = vmatpush.msra.mxu0 %v1090
    %4630 = vmatpush.msra.mxu0 %v1082
    %4631 = vmatpush.msra.mxu0 %v1074
    %4632 = vmatpush.msra.mxu0 %v1066
    %4633 = vmatpush.msra.mxu0 %v1058
    %4634 = vmatpush.msra.mxu0 %v1050
    %4635 = vmatmul.f32.gmra.mxu0 %v4378
    %v4636 = vpop.f32.mrf.mxu0
    %v4637 = vadd.f32 %v465, %v4636
    %4638 = vdwg.mxu0
    %4639 = vmatpush.msra.mxu0 %v1298
    %4640 = vmatpush.msra.mxu0 %v1290
    %4641 = vmatpush.msra.mxu0 %v1282
    %4642 = vmatpush.msra.mxu0 %v1274
    %4643 = vmatpush.msra.mxu0 %v1266
    %4644 = vmatpush.msra.mxu0 %v1258
    %4645 = vmatpush.msra.mxu0 %v1250
    %4646 = vmatpush.msra.mxu0 %v1242
    %4647 = vmatpush.msra.mxu0 %v1234
    %4648 = vmatpush.msra.mxu0 %v1226
    %4649 = vmatpush.msra.mxu0 %v1218
    %4650 = vmatpush.msra.mxu0 %v1210
    %4651 = vmatpush.msra.mxu0 %v1202
    %4652 = vmatpush.msra.mxu0 %v1194
    %4653 = vmatpush.msra.mxu0 %v1186
    %4654 = vmatpush.msra.mxu0 %v1178
    %4655 = vmatmul.f32.gmra.mxu0 %v4000
    %v4656 = vpop.f32.mrf.mxu0
    %v4657 = vadd.f32 %v4637, %v4656
    %4658 = vdwg.mxu0
    %4659 = vmatpush.msra.mxu0 %v1426
    %4660 = vmatpush.msra.mxu0 %v1418
    %4661 = vmatpush.msra.mxu0 %v1410
    %4662 = vmatpush.msra.mxu0 %v1402
    %4663 = vmatpush.msra.mxu0 %v1394
    %4664 = vmatpush.msra.mxu0 %v1386
    %4665 = vmatpush.msra.mxu0 %v1378
    %4666 = vmatpush.msra.mxu0 %v1370
    %4667 = vmatpush.msra.mxu0 %v1362
    %4668 = vmatpush.msra.mxu0 %v1354
    %4669 = vmatpush.msra.mxu0 %v1346
    %4670 = vmatpush.msra.mxu0 %v1338
    %4671 = vmatpush.msra.mxu0 %v1330
    %4672 = vmatpush.msra.mxu0 %v1322
    %4673 = vmatpush.msra.mxu0 %v1314
    %4674 = vmatpush.msra.mxu0 %v1306
    %4675 = vmatmul.f32.gmra.mxu0 %v4001
    %v4676 = vpop.f32.mrf.mxu0
    %v4677 = vadd.f32 %v4657, %v4676
    %4678 = vdwg.mxu0
    %4679 = vmatpush.msra.mxu0 %v1171
    %4680 = vmatpush.msra.mxu0 %v1163
    %4681 = vmatpush.msra.mxu0 %v1155
    %4682 = vmatpush.msra.mxu0 %v1147
    %4683 = vmatpush.msra.mxu0 %v1139
    %4684 = vmatpush.msra.mxu0 %v1131
    %4685 = vmatpush.msra.mxu0 %v1123
    %4686 = vmatpush.msra.mxu0 %v1115
    %4687 = vmatpush.msra.mxu0 %v1107
    %4688 = vmatpush.msra.mxu0 %v1099
    %4689 = vmatpush.msra.mxu0 %v1091
    %4690 = vmatpush.msra.mxu0 %v1083
    %4691 = vmatpush.msra.mxu0 %v1075
    %4692 = vmatpush.msra.mxu0 %v1067
    %4693 = vmatpush.msra.mxu0 %v1059
    %4694 = vmatpush.msra.mxu0 %v1051
    %4695 = vmatmul.f32.gmra.mxu0 %v4378
    %v4696 = vpop.f32.mrf.mxu0
    %v4697 = vadd.f32 %v466, %v4696
    %4698 = vdwg.mxu0
    %4699 = vmatpush.msra.mxu0 %v1299
    %4700 = vmatpush.msra.mxu0 %v1291
    %4701 = vmatpush.msra.mxu0 %v1283
    %4702 = vmatpush.msra.mxu0 %v1275
    %4703 = vmatpush.msra.mxu0 %v1267
    %4704 = vmatpush.msra.mxu0 %v1259
    %4705 = vmatpush.msra.mxu0 %v1251
    %4706 = vmatpush.msra.mxu0 %v1243
    %4707 = vmatpush.msra.mxu0 %v1235
    %4708 = vmatpush.msra.mxu0 %v1227
    %4709 = vmatpush.msra.mxu0 %v1219
    %4710 = vmatpush.msra.mxu0 %v1211
    %4711 = vmatpush.msra.mxu0 %v1203
    %4712 = vmatpush.msra.mxu0 %v1195
    %4713 = vmatpush.msra.mxu0 %v1187
    %4714 = vmatpush.msra.mxu0 %v1179
    %4715 = vmatmul.f32.gmra.mxu0 %v4000
    %v4716 = vpop.f32.mrf.mxu0
    %v4717 = vadd.f32 %v4697, %v4716
    %4718 = vdwg.mxu0
    %4719 = vmatpush.msra.mxu0 %v1427
    %4720 = vmatpush.msra.mxu0 %v1419
    %4721 = vmatpush.msra.mxu0 %v1411
    %4722 = vmatpush.msra.mxu0 %v1403
    %4723 = vmatpush.msra.mxu0 %v1395
    %4724 = vmatpush.msra.mxu0 %v1387
    %4725 = vmatpush.msra.mxu0 %v1379
    %4726 = vmatpush.msra.mxu0 %v1371
    %4727 = vmatpush.msra.mxu0 %v1363
    %4728 = vmatpush.msra.mxu0 %v1355
    %4729 = vmatpush.msra.mxu0 %v1347
    %4730 = vmatpush.msra.mxu0 %v1339
    %4731 = vmatpush.msra.mxu0 %v1331
    %4732 = vmatpush.msra.mxu0 %v1323
    %4733 = vmatpush.msra.mxu0 %v1315
    %4734 = vmatpush.msra.mxu0 %v1307
    %4735 = vmatmul.f32.gmra.mxu0 %v4001
    %v4736 = vpop.f32.mrf.mxu0
    %v4737 = vadd.f32 %v4717, %v4736
    %4738 = vdwg.mxu0
    %4739 = vmatpush.msra.mxu0 %v1172
    %4740 = vmatpush.msra.mxu0 %v1164
    %4741 = vmatpush.msra.mxu0 %v1156
    %4742 = vmatpush.msra.mxu0 %v1148
    %4743 = vmatpush.msra.mxu0 %v1140
    %4744 = vmatpush.msra.mxu0 %v1132
    %4745 = vmatpush.msra.mxu0 %v1124
    %4746 = vmatpush.msra.mxu0 %v1116
    %4747 = vmatpush.msra.mxu0 %v1108
    %4748 = vmatpush.msra.mxu0 %v1100
    %4749 = vmatpush.msra.mxu0 %v1092
    %4750 = vmatpush.msra.mxu0 %v1084
    %4751 = vmatpush.msra.mxu0 %v1076
    %4752 = vmatpush.msra.mxu0 %v1068
    %4753 = vmatpush.msra.mxu0 %v1060
    %4754 = vmatpush.msra.mxu0 %v1052
    %4755 = vmatmul.f32.gmra.mxu0 %v4378
    %v4756 = vpop.f32.mrf.mxu0
    %v4757 = vadd.f32 %v467, %v4756
    %4758 = vdwg.mxu0
    %4759 = vmatpush.msra.mxu0 %v1300
    %4760 = vmatpush.msra.mxu0 %v1292
    %4761 = vmatpush.msra.mxu0 %v1284
    %4762 = vmatpush.msra.mxu0 %v1276
    %4763 = vmatpush.msra.mxu0 %v1268
    %4764 = vmatpush.msra.mxu0 %v1260
    %4765 = vmatpush.msra.mxu0 %v1252
    %4766 = vmatpush.msra.mxu0 %v1244
    %4767 = vmatpush.msra.mxu0 %v1236
    %4768 = vmatpush.msra.mxu0 %v1228
    %4769 = vmatpush.msra.mxu0 %v1220
    %4770 = vmatpush.msra.mxu0 %v1212
    %4771 = vmatpush.msra.mxu0 %v1204
    %4772 = vmatpush.msra.mxu0 %v1196
    %4773 = vmatpush.msra.mxu0 %v1188
    %4774 = vmatpush.msra.mxu0 %v1180
    %4775 = vmatmul.f32.gmra.mxu0 %v4000
    %v4776 = vpop.f32.mrf.mxu0
    %v4777 = vadd.f32 %v4757, %v4776
    %4778 = vdwg.mxu0
    %4779 = vmatpush.msra.mxu0 %v1428
    %4780 = vmatpush.msra.mxu0 %v1420
    %4781 = vmatpush.msra.mxu0 %v1412
    %4782 = vmatpush.msra.mxu0 %v1404
    %4783 = vmatpush.msra.mxu0 %v1396
    %4784 = vmatpush.msra.mxu0 %v1388
    %4785 = vmatpush.msra.mxu0 %v1380
    %4786 = vmatpush.msra.mxu0 %v1372
    %4787 = vmatpush.msra.mxu0 %v1364
    %4788 = vmatpush.msra.mxu0 %v1356
    %4789 = vmatpush.msra.mxu0 %v1348
    %4790 = vmatpush.msra.mxu0 %v1340
    %4791 = vmatpush.msra.mxu0 %v1332
    %4792 = vmatpush.msra.mxu0 %v1324
    %4793 = vmatpush.msra.mxu0 %v1316
    %4794 = vmatpush.msra.mxu0 %v1308
    %4795 = vmatmul.f32.gmra.mxu0 %v4001
    %v4796 = vpop.f32.mrf.mxu0
    %v4797 = vadd.f32 %v4777, %v4796
    %4798 = vdwg.mxu0
    %4799 = vmatpush.msra.mxu0 %v1173
    %4800 = vmatpush.msra.mxu0 %v1165
    %4801 = vmatpush.msra.mxu0 %v1157
    %4802 = vmatpush.msra.mxu0 %v1149
    %4803 = vmatpush.msra.mxu0 %v1141
    %4804 = vmatpush.msra.mxu0 %v1133
    %4805 = vmatpush.msra.mxu0 %v1125
    %4806 = vmatpush.msra.mxu0 %v1117
    %4807 = vmatpush.msra.mxu0 %v1109
    %4808 = vmatpush.msra.mxu0 %v1101
    %4809 = vmatpush.msra.mxu0 %v1093
    %4810 = vmatpush.msra.mxu0 %v1085
    %4811 = vmatpush.msra.mxu0 %v1077
    %4812 = vmatpush.msra.mxu0 %v1069
    %4813 = vmatpush.msra.mxu0 %v1061
    %4814 = vmatpush.msra.mxu0 %v1053
    %4815 = vmatmul.f32.gmra.mxu0 %v4378
    %v4816 = vpop.f32.mrf.mxu0
    %v4817 = vadd.f32 %v468, %v4816
    %4818 = vdwg.mxu0
    %4819 = vmatpush.msra.mxu0 %v1301
    %4820 = vmatpush.msra.mxu0 %v1293
    %4821 = vmatpush.msra.mxu0 %v1285
    %4822 = vmatpush.msra.mxu0 %v1277
    %4823 = vmatpush.msra.mxu0 %v1269
    %4824 = vmatpush.msra.mxu0 %v1261
    %4825 = vmatpush.msra.mxu0 %v1253
    %4826 = vmatpush.msra.mxu0 %v1245
    %4827 = vmatpush.msra.mxu0 %v1237
    %4828 = vmatpush.msra.mxu0 %v1229
    %4829 = vmatpush.msra.mxu0 %v1221
    %4830 = vmatpush.msra.mxu0 %v1213
    %4831 = vmatpush.msra.mxu0 %v1205
    %4832 = vmatpush.msra.mxu0 %v1197
    %4833 = vmatpush.msra.mxu0 %v1189
    %4834 = vmatpush.msra.mxu0 %v1181
    %4835 = vmatmul.f32.gmra.mxu0 %v4000
    %v4836 = vpop.f32.mrf.mxu0
    %v4837 = vadd.f32 %v4817, %v4836
    %4838 = vdwg.mxu0
    %4839 = vmatpush.msra.mxu0 %v1429
    %4840 = vmatpush.msra.mxu0 %v1421
    %4841 = vmatpush.msra.mxu0 %v1413
    %4842 = vmatpush.msra.mxu0 %v1405
    %4843 = vmatpush.msra.mxu0 %v1397
    %4844 = vmatpush.msra.mxu0 %v1389
    %4845 = vmatpush.msra.mxu0 %v1381
    %4846 = vmatpush.msra.mxu0 %v1373
    %4847 = vmatpush.msra.mxu0 %v1365
    %4848 = vmatpush.msra.mxu0 %v1357
    %4849 = vmatpush.msra.mxu0 %v1349
    %4850 = vmatpush.msra.mxu0 %v1341
    %4851 = vmatpush.msra.mxu0 %v1333
    %4852 = vmatpush.msra.mxu0 %v1325
    %4853 = vmatpush.msra.mxu0 %v1317
    %4854 = vmatpush.msra.mxu0 %v1309
    %4855 = vmatmul.f32.gmra.mxu0 %v4001
    %v4856 = vpop.f32.mrf.mxu0
    %v4857 = vadd.f32 %v4837, %v4856
    %4858 = vdwg.mxu0
    %v4859 = vxor.u32 %v4437, 2147483648
    %v4860 = vxor.u32 %v4497, 2147483648
    %v4861 = vmul.f32 %v4859, 1.442695
    %v4862 = vpow.pop %v4861
    %v4863 = vmul.f32 %v4860, 1.442695
    %v4864 = vpow.pop %v4863
    %v4865 = vadd.f32 %v4862, 1.0
    %v4866 = vadd.f32 %v4864, 1.0
    %v4867 = vrcp.pop %v4865
    %v4868 = vmul.f32 %v4865, %v4867
    %v4869 = vsub.f32 1.0, %v4868
    %v4870 = vmul.f32 %v4867, %v4869
    %v4871 = vadd.f32 %v4867, %v4870
    %vm4872 = vweird.f32 %v4865
    %vm4873 = vweird.f32 %v4867
    %vm4874 = vmor %vm4872, %vm4873
    %v4875 = vsel %vm4874, %v4867, %v4871
    %v4876 = vand.u32 2147483647, %v4865
    %vm4877 = vcmp.eq.f32.partialorder %v4876, 8.507059e+37
    %v4878 = vand.u32 %v4865, 2147483648
    %v4879 = vor.u32 1.1754944e-38, %v4878
    %v4880 = vsel %vm4877, %v4879, %v4875
    %v4881 = vmul.f32 1.0, %v4880
    %v4882 = vrcp.pop %v4866
    %v4883 = vmul.f32 %v4866, %v4882
    %v4884 = vsub.f32 1.0, %v4883
    %v4885 = vmul.f32 %v4882, %v4884
    %v4886 = vadd.f32 %v4882, %v4885
    %vm4887 = vweird.f32 %v4866
    %vm4888 = vweird.f32 %v4882
    %vm4889 = vmor %vm4887, %vm4888
    %v4890 = vsel %vm4889, %v4882, %v4886
    %v4891 = vand.u32 2147483647, %v4866
    %vm4892 = vcmp.eq.f32.partialorder %v4891, 8.507059e+37
    %v4893 = vand.u32 %v4866, 2147483648
    %v4894 = vor.u32 1.1754944e-38, %v4893
    %v4895 = vsel %vm4892, %v4894, %v4890
    %v4896 = vmul.f32 1.0, %v4895
    %v4897 = vxor.u32 %v4557, 2147483648
    %v4898 = vxor.u32 %v4617, 2147483648
    %v4899 = vmul.f32 %v4897, 1.442695
    %v4900 = vpow.pop %v4899
    %v4901 = vmul.f32 %v4898, 1.442695
    %v4902 = vpow.pop %v4901
    %v4903 = vadd.f32 %v4900, 1.0
    %v4904 = vadd.f32 %v4902, 1.0
    %v4905 = vrcp.pop %v4903
    %v4906 = vmul.f32 %v4903, %v4905
    %v4907 = vsub.f32 1.0, %v4906
    %v4908 = vmul.f32 %v4905, %v4907
    %v4909 = vadd.f32 %v4905, %v4908
    %vm4910 = vweird.f32 %v4903
    %vm4911 = vweird.f32 %v4905
    %vm4912 = vmor %vm4910, %vm4911
    %v4913 = vsel %vm4912, %v4905, %v4909
    %v4914 = vand.u32 2147483647, %v4903
    %vm4915 = vcmp.eq.f32.partialorder %v4914, 8.507059e+37
    %v4916 = vand.u32 %v4903, 2147483648
    %v4917 = vor.u32 1.1754944e-38, %v4916
    %v4918 = vsel %vm4915, %v4917, %v4913
    %v4919 = vmul.f32 1.0, %v4918
    %v4920 = vrcp.pop %v4904
    %v4921 = vmul.f32 %v4904, %v4920
    %v4922 = vsub.f32 1.0, %v4921
    %v4923 = vmul.f32 %v4920, %v4922
    %v4924 = vadd.f32 %v4920, %v4923
    %vm4925 = vweird.f32 %v4904
    %vm4926 = vweird.f32 %v4920
    %vm4927 = vmor %vm4925, %vm4926
    %v4928 = vsel %vm4927, %v4920, %v4924
    %v4929 = vand.u32 2147483647, %v4904
    %vm4930 = vcmp.eq.f32.partialorder %v4929, 8.507059e+37
    %v4931 = vand.u32 %v4904, 2147483648
    %v4932 = vor.u32 1.1754944e-38, %v4931
    %v4933 = vsel %vm4930, %v4932, %v4928
    %v4934 = vmul.f32 1.0, %v4933
    %v4935 = vtanh.pop %v4677
    %v4936 = vtanh.pop %v4737
    %v4937 = vxor.u32 %v4797, 2147483648
    %v4938 = vxor.u32 %v4857, 2147483648
    %v4939 = vmul.f32 %v4937, 1.442695
    %v4940 = vpow.pop %v4939
    %v4941 = vmul.f32 %v4938, 1.442695
    %v4942 = vpow.pop %v4941
    %v4943 = vadd.f32 %v4940, 1.0
    %v4944 = vadd.f32 %v4942, 1.0
    %v4945 = vrcp.pop %v4943
    %v4946 = vmul.f32 %v4943, %v4945
    %v4947 = vsub.f32 1.0, %v4946
    %v4948 = vmul.f32 %v4945, %v4947
    %v4949 = vadd.f32 %v4945, %v4948
    %vm4950 = vweird.f32 %v4943
    %vm4951 = vweird.f32 %v4945
    %vm4952 = vmor %vm4950, %vm4951
    %v4953 = vsel %vm4952, %v4945, %v4949
    %v4954 = vand.u32 2147483647, %v4943
    %vm4955 = vcmp.eq.f32.partialorder %v4954, 8.507059e+37
    %v4956 = vand.u32 %v4943, 2147483648
    %v4957 = vor.u32 1.1754944e-38, %v4956
    %v4958 = vsel %vm4955, %v4957, %v4953
    %v4959 = vmul.f32 1.0, %v4958
    %v4960 = vrcp.pop %v4944
    %v4961 = vmul.f32 %v4944, %v4960
    %v4962 = vsub.f32 1.0, %v4961
    %v4963 = vmul.f32 %v4960, %v4962
    %v4964 = vadd.f32 %v4960, %v4963
    %vm4965 = vweird.f32 %v4944
    %vm4966 = vweird.f32 %v4960
    %vm4967 = vmor %vm4965, %vm4966
    %v4968 = vsel %vm4967, %v4960, %v4964
    %v4969 = vand.u32 2147483647, %v4944
    %vm4970 = vcmp.eq.f32.partialorder %v4969, 8.507059e+37
    %v4971 = vand.u32 %v4944, 2147483648
    %v4972 = vor.u32 1.1754944e-38, %v4971
    %v4973 = vsel %vm4970, %v4972, %v4968
    %v4974 = vmul.f32 1.0, %v4973
    %v4975 = vmul.f32 %v4919, %v3996
    %v4976 = vmul.f32 %v4934, %v3997
    %v4977 = vmul.f32 %v4881, %v4935
    %v4978 = vmul.f32 %v4896, %v4936
    %v4979 = vadd.f32 %v4975, %v4977
    %v4980 = vadd.f32 %v4976, %v4978
    %v4981 = vtanh.pop %v4979
    %v4982 = vtanh.pop %v4980
    %v4983 = vmul.f32 %v4959, %v4981
    %v4984 = vmul.f32 %v4974, %v4982
    %s4985 = smul.u32 4, 4
    %s4986 = smul.addr %s4985, 8
    %s4987 = scalar_lea.vmem [#allocation2], %s4986
    %v4988 = vld [vmem:[%s4987] sm:$0xff]
    %v4989 = vld [vmem:[%s4987 + $0x8] sm:$0xff]
    %v4990 = vld [vmem:[%s4987 + $0x10] sm:$0xff]
    %v4991 = vld [vmem:[%s4987 + $0x18] sm:$0xff]
    %4992 = vmatpush.msra.mxu0 %v544
    %4993 = vmatpush.msra.mxu0 %v540
    %4994 = vmatpush.msra.mxu0 %v536
    %4995 = vmatpush.msra.mxu0 %v532
    %4996 = vmatpush.msra.mxu0 %v528
    %4997 = vmatpush.msra.mxu0 %v524
    %4998 = vmatpush.msra.mxu0 %v520
    %4999 = vmatpush.msra.mxu0 %v516
    %5000 = vmatpush.msra.mxu0 %v512
    %5001 = vmatpush.msra.mxu0 %v508
    %5002 = vmatpush.msra.mxu0 %v504
    %5003 = vmatpush.msra.mxu0 %v500
    %5004 = vmatpush.msra.mxu0 %v496
    %5005 = vmatpush.msra.mxu0 %v492
    %5006 = vmatpush.msra.mxu0 %v488
    %5007 = vmatpush.msra.mxu0 %v484
    %5008 = vmatmul.f32.gmra.mxu0 %v4155
    %v5009 = vpop.f32.mrf.mxu0
    %v5010 = vadd.f32 0.0, %v5009
    %5011 = vdwg.mxu0
    %5012 = vmatpush.msra.mxu0 %v545
    %5013 = vmatpush.msra.mxu0 %v541
    %5014 = vmatpush.msra.mxu0 %v537
    %5015 = vmatpush.msra.mxu0 %v533
    %5016 = vmatpush.msra.mxu0 %v529
    %5017 = vmatpush.msra.mxu0 %v525
    %5018 = vmatpush.msra.mxu0 %v521
    %5019 = vmatpush.msra.mxu0 %v517
    %5020 = vmatpush.msra.mxu0 %v513
    %5021 = vmatpush.msra.mxu0 %v509
    %5022 = vmatpush.msra.mxu0 %v505
    %5023 = vmatpush.msra.mxu0 %v501
    %5024 = vmatpush.msra.mxu0 %v497
    %5025 = vmatpush.msra.mxu0 %v493
    %5026 = vmatpush.msra.mxu0 %v489
    %5027 = vmatpush.msra.mxu0 %v485
    %5028 = vmatmul.f32.gmra.mxu0 %v4155
    %v5029 = vpop.f32.mrf.mxu0
    %v5030 = vadd.f32 0.0, %v5029
    %5031 = vdwg.mxu0
    %5032 = vmatpush.msra.mxu0 %v546
    %5033 = vmatpush.msra.mxu0 %v542
    %5034 = vmatpush.msra.mxu0 %v538
    %5035 = vmatpush.msra.mxu0 %v534
    %5036 = vmatpush.msra.mxu0 %v530
    %5037 = vmatpush.msra.mxu0 %v526
    %5038 = vmatpush.msra.mxu0 %v522
    %5039 = vmatpush.msra.mxu0 %v518
    %5040 = vmatpush.msra.mxu0 %v514
    %5041 = vmatpush.msra.mxu0 %v510
    %5042 = vmatpush.msra.mxu0 %v506
    %5043 = vmatpush.msra.mxu0 %v502
    %5044 = vmatpush.msra.mxu0 %v498
    %5045 = vmatpush.msra.mxu0 %v494
    %5046 = vmatpush.msra.mxu0 %v490
    %5047 = vmatpush.msra.mxu0 %v486
    %5048 = vmatmul.f32.gmra.mxu0 %v4155
    %v5049 = vpop.f32.mrf.mxu0
    %v5050 = vadd.f32 0.0, %v5049
    %5051 = vdwg.mxu0
    %5052 = vmatpush.msra.mxu0 %v547
    %5053 = vmatpush.msra.mxu0 %v543
    %5054 = vmatpush.msra.mxu0 %v539
    %5055 = vmatpush.msra.mxu0 %v535
    %5056 = vmatpush.msra.mxu0 %v531
    %5057 = vmatpush.msra.mxu0 %v527
    %5058 = vmatpush.msra.mxu0 %v523
    %5059 = vmatpush.msra.mxu0 %v519
    %5060 = vmatpush.msra.mxu0 %v515
    %5061 = vmatpush.msra.mxu0 %v511
    %5062 = vmatpush.msra.mxu0 %v507
    %5063 = vmatpush.msra.mxu0 %v503
    %5064 = vmatpush.msra.mxu0 %v499
    %5065 = vmatpush.msra.mxu0 %v495
    %5066 = vmatpush.msra.mxu0 %v491
    %5067 = vmatpush.msra.mxu0 %v487
    %5068 = vmatmul.f32.gmra.mxu0 %v4155
    %v5069 = vpop.f32.mrf.mxu0
    %v5070 = vadd.f32 0.0, %v5069
    %5071 = vdwg.mxu0
    %v5072 = vadd.f32 %v4988, %v5010
    %v5073 = vadd.f32 %v4989, %v5030
    %v5074 = vadd.f32 %v4990, %v5050
    %v5075 = vadd.f32 %v4991, %v5070
    %v5076 = vxor.u32 %v5072, 2147483648
    %v5077 = vmul.f32 %v5076, 1.442695
    %v5078 = vpow.pop %v5077
    %v5079 = vadd.f32 %v5078, 1.0
    %v5080 = vrcp.pop %v5079
    %v5081 = vmul.f32 %v5079, %v5080
    %v5082 = vsub.f32 1.0, %v5081
    %v5083 = vmul.f32 %v5080, %v5082
    %v5084 = vadd.f32 %v5080, %v5083
    %vm5085 = vweird.f32 %v5079
    %vm5086 = vweird.f32 %v5080
    %vm5087 = vmor %vm5085, %vm5086
    %v5088 = vsel %vm5087, %v5080, %v5084
    %v5089 = vand.u32 2147483647, %v5079
    %vm5090 = vcmp.eq.f32.partialorder %v5089, 8.507059e+37
    %v5091 = vand.u32 %v5079, 2147483648
    %v5092 = vor.u32 1.1754944e-38, %v5091
    %v5093 = vsel %vm5090, %v5092, %v5088
    %v5094 = vmul.f32 1.0, %v5093
    %v5095 = vxor.u32 %v5073, 2147483648
    %v5096 = vmul.f32 %v5095, 1.442695
    %v5097 = vpow.pop %v5096
    %v5098 = vadd.f32 %v5097, 1.0
    %v5099 = vrcp.pop %v5098
    %v5100 = vmul.f32 %v5098, %v5099
    %v5101 = vsub.f32 1.0, %v5100
    %v5102 = vmul.f32 %v5099, %v5101
    %v5103 = vadd.f32 %v5099, %v5102
    %vm5104 = vweird.f32 %v5098
    %vm5105 = vweird.f32 %v5099
    %vm5106 = vmor %vm5104, %vm5105
    %v5107 = vsel %vm5106, %v5099, %v5103
    %v5108 = vand.u32 2147483647, %v5098
    %vm5109 = vcmp.eq.f32.partialorder %v5108, 8.507059e+37
    %v5110 = vand.u32 %v5098, 2147483648
    %v5111 = vor.u32 1.1754944e-38, %v5110
    %v5112 = vsel %vm5109, %v5111, %v5107
    %v5113 = vmul.f32 1.0, %v5112
    %v5114 = vtanh.pop %v5074
    %v5115 = vxor.u32 %v5075, 2147483648
    %v5116 = vmul.f32 %v5115, 1.442695
    %v5117 = vpow.pop %v5116
    %v5118 = vadd.f32 %v5117, 1.0
    %v5119 = vrcp.pop %v5118
    %v5120 = vmul.f32 %v5118, %v5119
    %v5121 = vsub.f32 1.0, %v5120
    %v5122 = vmul.f32 %v5119, %v5121
    %v5123 = vadd.f32 %v5119, %v5122
    %vm5124 = vweird.f32 %v5118
    %vm5125 = vweird.f32 %v5119
    %vm5126 = vmor %vm5124, %vm5125
    %v5127 = vsel %vm5126, %v5119, %v5123
    %v5128 = vand.u32 2147483647, %v5118
    %vm5129 = vcmp.eq.f32.partialorder %v5128, 8.507059e+37
    %v5130 = vand.u32 %v5118, 2147483648
    %v5131 = vor.u32 1.1754944e-38, %v5130
    %v5132 = vsel %vm5129, %v5131, %v5127
    %v5133 = vmul.f32 1.0, %v5132
    %v5134 = vmul.f32 %v5113, %v4153
    %v5135 = vmul.f32 %v5094, %v5114
    %v5136 = vadd.f32 %v5134, %v5135
    %v5137 = vtanh.pop %v5136
    %v5138 = vmul.f32 %v5133, %v5137
    %5139 = vmatpush.msra.mxu0 %v755
    %5140 = vmatpush.msra.mxu0 %v751
    %5141 = vmatpush.msra.mxu0 %v747
    %5142 = vmatpush.msra.mxu0 %v743
    %5143 = vmatpush.msra.mxu0 %v739
    %5144 = vmatpush.msra.mxu0 %v735
    %5145 = vmatpush.msra.mxu0 %v731
    %5146 = vmatpush.msra.mxu0 %v727
    %5147 = vmatpush.msra.mxu0 %v723
    %5148 = vmatpush.msra.mxu0 %v719
    %5149 = vmatpush.msra.mxu0 %v715
    %5150 = vmatpush.msra.mxu0 %v711
    %5151 = vmatpush.msra.mxu0 %v707
    %5152 = vmatpush.msra.mxu0 %v703
    %5153 = vmatpush.msra.mxu0 %v699
    %5154 = vmatpush.msra.mxu0 %v695
    %5155 = vmatmul.f32.gmra.mxu0 %v5138
    %v5156 = vpop.f32.mrf.mxu0
    %v5157 = vadd.f32 %v451, %v5156
    %5158 = vdwg.mxu0
    %5159 = vmatpush.msra.mxu0 %v819
    %5160 = vmatpush.msra.mxu0 %v815
    %5161 = vmatpush.msra.mxu0 %v811
    %5162 = vmatpush.msra.mxu0 %v807
    %5163 = vmatpush.msra.mxu0 %v803
    %5164 = vmatpush.msra.mxu0 %v799
    %5165 = vmatpush.msra.mxu0 %v795
    %5166 = vmatpush.msra.mxu0 %v791
    %5167 = vmatpush.msra.mxu0 %v787
    %5168 = vmatpush.msra.mxu0 %v783
    %5169 = vmatpush.msra.mxu0 %v779
    %5170 = vmatpush.msra.mxu0 %v775
    %5171 = vmatpush.msra.mxu0 %v771
    %5172 = vmatpush.msra.mxu0 %v767
    %5173 = vmatpush.msra.mxu0 %v763
    %5174 = vmatpush.msra.mxu0 %v759
    %5175 = vmatmul.f32.gmra.mxu0 %v4378
    %v5176 = vpop.f32.mrf.mxu0
    %v5177 = vadd.f32 %v5157, %v5176
    %5178 = vdwg.mxu0
    %5179 = vmatpush.msra.mxu0 %v756
    %5180 = vmatpush.msra.mxu0 %v752
    %5181 = vmatpush.msra.mxu0 %v748
    %5182 = vmatpush.msra.mxu0 %v744
    %5183 = vmatpush.msra.mxu0 %v740
    %5184 = vmatpush.msra.mxu0 %v736
    %5185 = vmatpush.msra.mxu0 %v732
    %5186 = vmatpush.msra.mxu0 %v728
    %5187 = vmatpush.msra.mxu0 %v724
    %5188 = vmatpush.msra.mxu0 %v720
    %5189 = vmatpush.msra.mxu0 %v716
    %5190 = vmatpush.msra.mxu0 %v712
    %5191 = vmatpush.msra.mxu0 %v708
    %5192 = vmatpush.msra.mxu0 %v704
    %5193 = vmatpush.msra.mxu0 %v700
    %5194 = vmatpush.msra.mxu0 %v696
    %5195 = vmatmul.f32.gmra.mxu0 %v5138
    %v5196 = vpop.f32.mrf.mxu0
    %v5197 = vadd.f32 %v452, %v5196
    %5198 = vdwg.mxu0
    %5199 = vmatpush.msra.mxu0 %v820
    %5200 = vmatpush.msra.mxu0 %v816
    %5201 = vmatpush.msra.mxu0 %v812
    %5202 = vmatpush.msra.mxu0 %v808
    %5203 = vmatpush.msra.mxu0 %v804
    %5204 = vmatpush.msra.mxu0 %v800
    %5205 = vmatpush.msra.mxu0 %v796
    %5206 = vmatpush.msra.mxu0 %v792
    %5207 = vmatpush.msra.mxu0 %v788
    %5208 = vmatpush.msra.mxu0 %v784
    %5209 = vmatpush.msra.mxu0 %v780
    %5210 = vmatpush.msra.mxu0 %v776
    %5211 = vmatpush.msra.mxu0 %v772
    %5212 = vmatpush.msra.mxu0 %v768
    %5213 = vmatpush.msra.mxu0 %v764
    %5214 = vmatpush.msra.mxu0 %v760
    %5215 = vmatmul.f32.gmra.mxu0 %v4378
    %v5216 = vpop.f32.mrf.mxu0
    %v5217 = vadd.f32 %v5197, %v5216
    %5218 = vdwg.mxu0
    %5219 = vmatpush.msra.mxu0 %v757
    %5220 = vmatpush.msra.mxu0 %v753
    %5221 = vmatpush.msra.mxu0 %v749
    %5222 = vmatpush.msra.mxu0 %v745
    %5223 = vmatpush.msra.mxu0 %v741
    %5224 = vmatpush.msra.mxu0 %v737
    %5225 = vmatpush.msra.mxu0 %v733
    %5226 = vmatpush.msra.mxu0 %v729
    %5227 = vmatpush.msra.mxu0 %v725
    %5228 = vmatpush.msra.mxu0 %v721
    %5229 = vmatpush.msra.mxu0 %v717
    %5230 = vmatpush.msra.mxu0 %v713
    %5231 = vmatpush.msra.mxu0 %v709
    %5232 = vmatpush.msra.mxu0 %v705
    %5233 = vmatpush.msra.mxu0 %v701
    %5234 = vmatpush.msra.mxu0 %v697
    %5235 = vmatmul.f32.gmra.mxu0 %v5138
    %v5236 = vpop.f32.mrf.mxu0
    %v5237 = vadd.f32 %v453, %v5236
    %5238 = vdwg.mxu0
    %5239 = vmatpush.msra.mxu0 %v821
    %5240 = vmatpush.msra.mxu0 %v817
    %5241 = vmatpush.msra.mxu0 %v813
    %5242 = vmatpush.msra.mxu0 %v809
    %5243 = vmatpush.msra.mxu0 %v805
    %5244 = vmatpush.msra.mxu0 %v801
    %5245 = vmatpush.msra.mxu0 %v797
    %5246 = vmatpush.msra.mxu0 %v793
    %5247 = vmatpush.msra.mxu0 %v789
    %5248 = vmatpush.msra.mxu0 %v785
    %5249 = vmatpush.msra.mxu0 %v781
    %5250 = vmatpush.msra.mxu0 %v777
    %5251 = vmatpush.msra.mxu0 %v773
    %5252 = vmatpush.msra.mxu0 %v769
    %5253 = vmatpush.msra.mxu0 %v765
    %5254 = vmatpush.msra.mxu0 %v761
    %5255 = vmatmul.f32.gmra.mxu0 %v4378
    %v5256 = vpop.f32.mrf.mxu0
    %v5257 = vadd.f32 %v5237, %v5256
    %5258 = vdwg.mxu0
    %5259 = vmatpush.msra.mxu0 %v758
    %5260 = vmatpush.msra.mxu0 %v754
    %5261 = vmatpush.msra.mxu0 %v750
    %5262 = vmatpush.msra.mxu0 %v746
    %5263 = vmatpush.msra.mxu0 %v742
    %5264 = vmatpush.msra.mxu0 %v738
    %5265 = vmatpush.msra.mxu0 %v734
    %5266 = vmatpush.msra.mxu0 %v730
    %5267 = vmatpush.msra.mxu0 %v726
    %5268 = vmatpush.msra.mxu0 %v722
    %5269 = vmatpush.msra.mxu0 %v718
    %5270 = vmatpush.msra.mxu0 %v714
    %5271 = vmatpush.msra.mxu0 %v710
    %5272 = vmatpush.msra.mxu0 %v706
    %5273 = vmatpush.msra.mxu0 %v702
    %5274 = vmatpush.msra.mxu0 %v698
    %5275 = vmatmul.f32.gmra.mxu0 %v5138
    %v5276 = vpop.f32.mrf.mxu0
    %v5277 = vadd.f32 %v454, %v5276
    %5278 = vdwg.mxu0
    %5279 = vmatpush.msra.mxu0 %v822
    %5280 = vmatpush.msra.mxu0 %v818
    %5281 = vmatpush.msra.mxu0 %v814
    %5282 = vmatpush.msra.mxu0 %v810
    %5283 = vmatpush.msra.mxu0 %v806
    %5284 = vmatpush.msra.mxu0 %v802
    %5285 = vmatpush.msra.mxu0 %v798
    %5286 = vmatpush.msra.mxu0 %v794
    %5287 = vmatpush.msra.mxu0 %v790
    %5288 = vmatpush.msra.mxu0 %v786
    %5289 = vmatpush.msra.mxu0 %v782
    %5290 = vmatpush.msra.mxu0 %v778
    %5291 = vmatpush.msra.mxu0 %v774
    %5292 = vmatpush.msra.mxu0 %v770
    %5293 = vmatpush.msra.mxu0 %v766
    %5294 = vmatpush.msra.mxu0 %v762
    %5295 = vmatmul.f32.gmra.mxu0 %v4378
    %v5296 = vpop.f32.mrf.mxu0
    %v5297 = vadd.f32 %v5277, %v5296
    %5298 = vdwg.mxu0
    %v5299 = vxor.u32 %v5177, 2147483648
    %v5300 = vmul.f32 %v5299, 1.442695
    %v5301 = vpow.pop %v5300
    %v5302 = vadd.f32 %v5301, 1.0
    %v5303 = vrcp.pop %v5302
    %v5304 = vmul.f32 %v5302, %v5303
    %v5305 = vsub.f32 1.0, %v5304
    %v5306 = vmul.f32 %v5303, %v5305
    %v5307 = vadd.f32 %v5303, %v5306
    %vm5308 = vweird.f32 %v5302
    %vm5309 = vweird.f32 %v5303
    %vm5310 = vmor %vm5308, %vm5309
    %v5311 = vsel %vm5310, %v5303, %v5307
    %v5312 = vand.u32 2147483647, %v5302
    %vm5313 = vcmp.eq.f32.partialorder %v5312, 8.507059e+37
    %v5314 = vand.u32 %v5302, 2147483648
    %v5315 = vor.u32 1.1754944e-38, %v5314
    %v5316 = vsel %vm5313, %v5315, %v5311
    %v5317 = vmul.f32 1.0, %v5316
    %v5318 = vxor.u32 %v5217, 2147483648
    %v5319 = vmul.f32 %v5318, 1.442695
    %v5320 = vpow.pop %v5319
    %v5321 = vadd.f32 %v5320, 1.0
    %v5322 = vrcp.pop %v5321
    %v5323 = vmul.f32 %v5321, %v5322
    %v5324 = vsub.f32 1.0, %v5323
    %v5325 = vmul.f32 %v5322, %v5324
    %v5326 = vadd.f32 %v5322, %v5325
    %vm5327 = vweird.f32 %v5321
    %vm5328 = vweird.f32 %v5322
    %vm5329 = vmor %vm5327, %vm5328
    %v5330 = vsel %vm5329, %v5322, %v5326
    %v5331 = vand.u32 2147483647, %v5321
    %vm5332 = vcmp.eq.f32.partialorder %v5331, 8.507059e+37
    %v5333 = vand.u32 %v5321, 2147483648
    %v5334 = vor.u32 1.1754944e-38, %v5333
    %v5335 = vsel %vm5332, %v5334, %v5330
    %v5336 = vmul.f32 1.0, %v5335
    %v5337 = vtanh.pop %v5257
    %v5338 = vxor.u32 %v5297, 2147483648
    %v5339 = vmul.f32 %v5338, 1.442695
    %v5340 = vpow.pop %v5339
    %v5341 = vadd.f32 %v5340, 1.0
    %v5342 = vrcp.pop %v5341
    %v5343 = vmul.f32 %v5341, %v5342
    %v5344 = vsub.f32 1.0, %v5343
    %v5345 = vmul.f32 %v5342, %v5344
    %v5346 = vadd.f32 %v5342, %v5345
    %vm5347 = vweird.f32 %v5341
    %vm5348 = vweird.f32 %v5342
    %vm5349 = vmor %vm5347, %vm5348
    %v5350 = vsel %vm5349, %v5342, %v5346
    %v5351 = vand.u32 2147483647, %v5341
    %vm5352 = vcmp.eq.f32.partialorder %v5351, 8.507059e+37
    %v5353 = vand.u32 %v5341, 2147483648
    %v5354 = vor.u32 1.1754944e-38, %v5353
    %v5355 = vsel %vm5352, %v5354, %v5350
    %v5356 = vmul.f32 1.0, %v5355
    %v5357 = vmul.f32 %v5336, %v4376
    %v5358 = vmul.f32 %v5317, %v5337
    %v5359 = vadd.f32 %v5357, %v5358
    %v5360 = vtanh.pop %v5359
    %v5361 = vmul.f32 %v5356, %v5360
    %5362 = vmatpush.msra.mxu0 %v1166
    %5363 = vmatpush.msra.mxu0 %v1158
    %5364 = vmatpush.msra.mxu0 %v1150
    %5365 = vmatpush.msra.mxu0 %v1142
    %5366 = vmatpush.msra.mxu0 %v1134
    %5367 = vmatpush.msra.mxu0 %v1126
    %5368 = vmatpush.msra.mxu0 %v1118
    %5369 = vmatpush.msra.mxu0 %v1110
    %5370 = vmatpush.msra.mxu0 %v1102
    %5371 = vmatpush.msra.mxu0 %v1094
    %5372 = vmatpush.msra.mxu0 %v1086
    %5373 = vmatpush.msra.mxu0 %v1078
    %5374 = vmatpush.msra.mxu0 %v1070
    %5375 = vmatpush.msra.mxu0 %v1062
    %5376 = vmatpush.msra.mxu0 %v1054
    %5377 = vmatpush.msra.mxu0 %v1046
    %5378 = vmatmul.f32.gmra.mxu0 %v5361
    %v5379 = vpop.f32.mrf.mxu0
    %v5380 = vadd.f32 %v461, %v5379
    %5381 = vdwg.mxu0
    %5382 = vmatpush.msra.mxu0 %v1294
    %5383 = vmatpush.msra.mxu0 %v1286
    %5384 = vmatpush.msra.mxu0 %v1278
    %5385 = vmatpush.msra.mxu0 %v1270
    %5386 = vmatpush.msra.mxu0 %v1262
    %5387 = vmatpush.msra.mxu0 %v1254
    %5388 = vmatpush.msra.mxu0 %v1246
    %5389 = vmatpush.msra.mxu0 %v1238
    %5390 = vmatpush.msra.mxu0 %v1230
    %5391 = vmatpush.msra.mxu0 %v1222
    %5392 = vmatpush.msra.mxu0 %v1214
    %5393 = vmatpush.msra.mxu0 %v1206
    %5394 = vmatpush.msra.mxu0 %v1198
    %5395 = vmatpush.msra.mxu0 %v1190
    %5396 = vmatpush.msra.mxu0 %v1182
    %5397 = vmatpush.msra.mxu0 %v1174
    %5398 = vmatmul.f32.gmra.mxu0 %v4983
    %v5399 = vpop.f32.mrf.mxu0
    %v5400 = vadd.f32 %v5380, %v5399
    %5401 = vdwg.mxu0
    %5402 = vmatpush.msra.mxu0 %v1422
    %5403 = vmatpush.msra.mxu0 %v1414
    %5404 = vmatpush.msra.mxu0 %v1406
    %5405 = vmatpush.msra.mxu0 %v1398
    %5406 = vmatpush.msra.mxu0 %v1390
    %5407 = vmatpush.msra.mxu0 %v1382
    %5408 = vmatpush.msra.mxu0 %v1374
    %5409 = vmatpush.msra.mxu0 %v1366
    %5410 = vmatpush.msra.mxu0 %v1358
    %5411 = vmatpush.msra.mxu0 %v1350
    %5412 = vmatpush.msra.mxu0 %v1342
    %5413 = vmatpush.msra.mxu0 %v1334
    %5414 = vmatpush.msra.mxu0 %v1326
    %5415 = vmatpush.msra.mxu0 %v1318
    %5416 = vmatpush.msra.mxu0 %v1310
    %5417 = vmatpush.msra.mxu0 %v1302
    %5418 = vmatmul.f32.gmra.mxu0 %v4984
    %v5419 = vpop.f32.mrf.mxu0
    %v5420 = vadd.f32 %v5400, %v5419
    %5421 = vdwg.mxu0
    %5422 = vmatpush.msra.mxu0 %v1167
    %5423 = vmatpush.msra.mxu0 %v1159
    %5424 = vmatpush.msra.mxu0 %v1151
    %5425 = vmatpush.msra.mxu0 %v1143
    %5426 = vmatpush.msra.mxu0 %v1135
    %5427 = vmatpush.msra.mxu0 %v1127
    %5428 = vmatpush.msra.mxu0 %v1119
    %5429 = vmatpush.msra.mxu0 %v1111
    %5430 = vmatpush.msra.mxu0 %v1103
    %5431 = vmatpush.msra.mxu0 %v1095
    %5432 = vmatpush.msra.mxu0 %v1087
    %5433 = vmatpush.msra.mxu0 %v1079
    %5434 = vmatpush.msra.mxu0 %v1071
    %5435 = vmatpush.msra.mxu0 %v1063
    %5436 = vmatpush.msra.mxu0 %v1055
    %5437 = vmatpush.msra.mxu0 %v1047
    %5438 = vmatmul.f32.gmra.mxu0 %v5361
    %v5439 = vpop.f32.mrf.mxu0
    %v5440 = vadd.f32 %v462, %v5439
    %5441 = vdwg.mxu0
    %5442 = vmatpush.msra.mxu0 %v1295
    %5443 = vmatpush.msra.mxu0 %v1287
    %5444 = vmatpush.msra.mxu0 %v1279
    %5445 = vmatpush.msra.mxu0 %v1271
    %5446 = vmatpush.msra.mxu0 %v1263
    %5447 = vmatpush.msra.mxu0 %v1255
    %5448 = vmatpush.msra.mxu0 %v1247
    %5449 = vmatpush.msra.mxu0 %v1239
    %5450 = vmatpush.msra.mxu0 %v1231
    %5451 = vmatpush.msra.mxu0 %v1223
    %5452 = vmatpush.msra.mxu0 %v1215
    %5453 = vmatpush.msra.mxu0 %v1207
    %5454 = vmatpush.msra.mxu0 %v1199
    %5455 = vmatpush.msra.mxu0 %v1191
    %5456 = vmatpush.msra.mxu0 %v1183
    %5457 = vmatpush.msra.mxu0 %v1175
    %5458 = vmatmul.f32.gmra.mxu0 %v4983
    %v5459 = vpop.f32.mrf.mxu0
    %v5460 = vadd.f32 %v5440, %v5459
    %5461 = vdwg.mxu0
    %5462 = vmatpush.msra.mxu0 %v1423
    %5463 = vmatpush.msra.mxu0 %v1415
    %5464 = vmatpush.msra.mxu0 %v1407
    %5465 = vmatpush.msra.mxu0 %v1399
    %5466 = vmatpush.msra.mxu0 %v1391
    %5467 = vmatpush.msra.mxu0 %v1383
    %5468 = vmatpush.msra.mxu0 %v1375
    %5469 = vmatpush.msra.mxu0 %v1367
    %5470 = vmatpush.msra.mxu0 %v1359
    %5471 = vmatpush.msra.mxu0 %v1351
    %5472 = vmatpush.msra.mxu0 %v1343
    %5473 = vmatpush.msra.mxu0 %v1335
    %5474 = vmatpush.msra.mxu0 %v1327
    %5475 = vmatpush.msra.mxu0 %v1319
    %5476 = vmatpush.msra.mxu0 %v1311
    %5477 = vmatpush.msra.mxu0 %v1303
    %5478 = vmatmul.f32.gmra.mxu0 %v4984
    %v5479 = vpop.f32.mrf.mxu0
    %v5480 = vadd.f32 %v5460, %v5479
    %5481 = vdwg.mxu0
    %5482 = vmatpush.msra.mxu0 %v1168
    %5483 = vmatpush.msra.mxu0 %v1160
    %5484 = vmatpush.msra.mxu0 %v1152
    %5485 = vmatpush.msra.mxu0 %v1144
    %5486 = vmatpush.msra.mxu0 %v1136
    %5487 = vmatpush.msra.mxu0 %v1128
    %5488 = vmatpush.msra.mxu0 %v1120
    %5489 = vmatpush.msra.mxu0 %v1112
    %5490 = vmatpush.msra.mxu0 %v1104
    %5491 = vmatpush.msra.mxu0 %v1096
    %5492 = vmatpush.msra.mxu0 %v1088
    %5493 = vmatpush.msra.mxu0 %v1080
    %5494 = vmatpush.msra.mxu0 %v1072
    %5495 = vmatpush.msra.mxu0 %v1064
    %5496 = vmatpush.msra.mxu0 %v1056
    %5497 = vmatpush.msra.mxu0 %v1048
    %5498 = vmatmul.f32.gmra.mxu0 %v5361
    %v5499 = vpop.f32.mrf.mxu0
    %v5500 = vadd.f32 %v463, %v5499
    %5501 = vdwg.mxu0
    %5502 = vmatpush.msra.mxu0 %v1296
    %5503 = vmatpush.msra.mxu0 %v1288
    %5504 = vmatpush.msra.mxu0 %v1280
    %5505 = vmatpush.msra.mxu0 %v1272
    %5506 = vmatpush.msra.mxu0 %v1264
    %5507 = vmatpush.msra.mxu0 %v1256
    %5508 = vmatpush.msra.mxu0 %v1248
    %5509 = vmatpush.msra.mxu0 %v1240
    %5510 = vmatpush.msra.mxu0 %v1232
    %5511 = vmatpush.msra.mxu0 %v1224
    %5512 = vmatpush.msra.mxu0 %v1216
    %5513 = vmatpush.msra.mxu0 %v1208
    %5514 = vmatpush.msra.mxu0 %v1200
    %5515 = vmatpush.msra.mxu0 %v1192
    %5516 = vmatpush.msra.mxu0 %v1184
    %5517 = vmatpush.msra.mxu0 %v1176
    %5518 = vmatmul.f32.gmra.mxu0 %v4983
    %v5519 = vpop.f32.mrf.mxu0
    %v5520 = vadd.f32 %v5500, %v5519
    %5521 = vdwg.mxu0
    %5522 = vmatpush.msra.mxu0 %v1424
    %5523 = vmatpush.msra.mxu0 %v1416
    %5524 = vmatpush.msra.mxu0 %v1408
    %5525 = vmatpush.msra.mxu0 %v1400
    %5526 = vmatpush.msra.mxu0 %v1392
    %5527 = vmatpush.msra.mxu0 %v1384
    %5528 = vmatpush.msra.mxu0 %v1376
    %5529 = vmatpush.msra.mxu0 %v1368
    %5530 = vmatpush.msra.mxu0 %v1360
    %5531 = vmatpush.msra.mxu0 %v1352
    %5532 = vmatpush.msra.mxu0 %v1344
    %5533 = vmatpush.msra.mxu0 %v1336
    %5534 = vmatpush.msra.mxu0 %v1328
    %5535 = vmatpush.msra.mxu0 %v1320
    %5536 = vmatpush.msra.mxu0 %v1312
    %5537 = vmatpush.msra.mxu0 %v1304
    %5538 = vmatmul.f32.gmra.mxu0 %v4984
    %v5539 = vpop.f32.mrf.mxu0
    %v5540 = vadd.f32 %v5520, %v5539
    %5541 = vdwg.mxu0
    %5542 = vmatpush.msra.mxu0 %v1169
    %5543 = vmatpush.msra.mxu0 %v1161
    %5544 = vmatpush.msra.mxu0 %v1153
    %5545 = vmatpush.msra.mxu0 %v1145
    %5546 = vmatpush.msra.mxu0 %v1137
    %5547 = vmatpush.msra.mxu0 %v1129
    %5548 = vmatpush.msra.mxu0 %v1121
    %5549 = vmatpush.msra.mxu0 %v1113
    %5550 = vmatpush.msra.mxu0 %v1105
    %5551 = vmatpush.msra.mxu0 %v1097
    %5552 = vmatpush.msra.mxu0 %v1089
    %5553 = vmatpush.msra.mxu0 %v1081
    %5554 = vmatpush.msra.mxu0 %v1073
    %5555 = vmatpush.msra.mxu0 %v1065
    %5556 = vmatpush.msra.mxu0 %v1057
    %5557 = vmatpush.msra.mxu0 %v1049
    %5558 = vmatmul.f32.gmra.mxu0 %v5361
    %v5559 = vpop.f32.mrf.mxu0
    %v5560 = vadd.f32 %v464, %v5559
    %5561 = vdwg.mxu0
    %5562 = vmatpush.msra.mxu0 %v1297
    %5563 = vmatpush.msra.mxu0 %v1289
    %5564 = vmatpush.msra.mxu0 %v1281
    %5565 = vmatpush.msra.mxu0 %v1273
    %5566 = vmatpush.msra.mxu0 %v1265
    %5567 = vmatpush.msra.mxu0 %v1257
    %5568 = vmatpush.msra.mxu0 %v1249
    %5569 = vmatpush.msra.mxu0 %v1241
    %5570 = vmatpush.msra.mxu0 %v1233
    %5571 = vmatpush.msra.mxu0 %v1225
    %5572 = vmatpush.msra.mxu0 %v1217
    %5573 = vmatpush.msra.mxu0 %v1209
    %5574 = vmatpush.msra.mxu0 %v1201
    %5575 = vmatpush.msra.mxu0 %v1193
    %5576 = vmatpush.msra.mxu0 %v1185
    %5577 = vmatpush.msra.mxu0 %v1177
    %5578 = vmatmul.f32.gmra.mxu0 %v4983
    %v5579 = vpop.f32.mrf.mxu0
    %v5580 = vadd.f32 %v5560, %v5579
    %5581 = vdwg.mxu0
    %5582 = vmatpush.msra.mxu0 %v1425
    %5583 = vmatpush.msra.mxu0 %v1417
    %5584 = vmatpush.msra.mxu0 %v1409
    %5585 = vmatpush.msra.mxu0 %v1401
    %5586 = vmatpush.msra.mxu0 %v1393
    %5587 = vmatpush.msra.mxu0 %v1385
    %5588 = vmatpush.msra.mxu0 %v1377
    %5589 = vmatpush.msra.mxu0 %v1369
    %5590 = vmatpush.msra.mxu0 %v1361
    %5591 = vmatpush.msra.mxu0 %v1353
    %5592 = vmatpush.msra.mxu0 %v1345
    %5593 = vmatpush.msra.mxu0 %v1337
    %5594 = vmatpush.msra.mxu0 %v1329
    %5595 = vmatpush.msra.mxu0 %v1321
    %5596 = vmatpush.msra.mxu0 %v1313
    %5597 = vmatpush.msra.mxu0 %v1305
    %5598 = vmatmul.f32.gmra.mxu0 %v4984
    %v5599 = vpop.f32.mrf.mxu0
    %v5600 = vadd.f32 %v5580, %v5599
    %5601 = vdwg.mxu0
    %5602 = vmatpush.msra.mxu0 %v1170
    %5603 = vmatpush.msra.mxu0 %v1162
    %5604 = vmatpush.msra.mxu0 %v1154
    %5605 = vmatpush.msra.mxu0 %v1146
    %5606 = vmatpush.msra.mxu0 %v1138
    %5607 = vmatpush.msra.mxu0 %v1130
    %5608 = vmatpush.msra.mxu0 %v1122
    %5609 = vmatpush.msra.mxu0 %v1114
    %5610 = vmatpush.msra.mxu0 %v1106
    %5611 = vmatpush.msra.mxu0 %v1098
    %5612 = vmatpush.msra.mxu0 %v1090
    %5613 = vmatpush.msra.mxu0 %v1082
    %5614 = vmatpush.msra.mxu0 %v1074
    %5615 = vmatpush.msra.mxu0 %v1066
    %5616 = vmatpush.msra.mxu0 %v1058
    %5617 = vmatpush.msra.mxu0 %v1050
    %5618 = vmatmul.f32.gmra.mxu0 %v5361
    %v5619 = vpop.f32.mrf.mxu0
    %v5620 = vadd.f32 %v465, %v5619
    %5621 = vdwg.mxu0
    %5622 = vmatpush.msra.mxu0 %v1298
    %5623 = vmatpush.msra.mxu0 %v1290
    %5624 = vmatpush.msra.mxu0 %v1282
    %5625 = vmatpush.msra.mxu0 %v1274
    %5626 = vmatpush.msra.mxu0 %v1266
    %5627 = vmatpush.msra.mxu0 %v1258
    %5628 = vmatpush.msra.mxu0 %v1250
    %5629 = vmatpush.msra.mxu0 %v1242
    %5630 = vmatpush.msra.mxu0 %v1234
    %5631 = vmatpush.msra.mxu0 %v1226
    %5632 = vmatpush.msra.mxu0 %v1218
    %5633 = vmatpush.msra.mxu0 %v1210
    %5634 = vmatpush.msra.mxu0 %v1202
    %5635 = vmatpush.msra.mxu0 %v1194
    %5636 = vmatpush.msra.mxu0 %v1186
    %5637 = vmatpush.msra.mxu0 %v1178
    %5638 = vmatmul.f32.gmra.mxu0 %v4983
    %v5639 = vpop.f32.mrf.mxu0
    %v5640 = vadd.f32 %v5620, %v5639
    %5641 = vdwg.mxu0
    %5642 = vmatpush.msra.mxu0 %v1426
    %5643 = vmatpush.msra.mxu0 %v1418
    %5644 = vmatpush.msra.mxu0 %v1410
    %5645 = vmatpush.msra.mxu0 %v1402
    %5646 = vmatpush.msra.mxu0 %v1394
    %5647 = vmatpush.msra.mxu0 %v1386
    %5648 = vmatpush.msra.mxu0 %v1378
    %5649 = vmatpush.msra.mxu0 %v1370
    %5650 = vmatpush.msra.mxu0 %v1362
    %5651 = vmatpush.msra.mxu0 %v1354
    %5652 = vmatpush.msra.mxu0 %v1346
    %5653 = vmatpush.msra.mxu0 %v1338
    %5654 = vmatpush.msra.mxu0 %v1330
    %5655 = vmatpush.msra.mxu0 %v1322
    %5656 = vmatpush.msra.mxu0 %v1314
    %5657 = vmatpush.msra.mxu0 %v1306
    %5658 = vmatmul.f32.gmra.mxu0 %v4984
    %v5659 = vpop.f32.mrf.mxu0
    %v5660 = vadd.f32 %v5640, %v5659
    %5661 = vdwg.mxu0
    %5662 = vmatpush.msra.mxu0 %v1171
    %5663 = vmatpush.msra.mxu0 %v1163
    %5664 = vmatpush.msra.mxu0 %v1155
    %5665 = vmatpush.msra.mxu0 %v1147
    %5666 = vmatpush.msra.mxu0 %v1139
    %5667 = vmatpush.msra.mxu0 %v1131
    %5668 = vmatpush.msra.mxu0 %v1123
    %5669 = vmatpush.msra.mxu0 %v1115
    %5670 = vmatpush.msra.mxu0 %v1107
    %5671 = vmatpush.msra.mxu0 %v1099
    %5672 = vmatpush.msra.mxu0 %v1091
    %5673 = vmatpush.msra.mxu0 %v1083
    %5674 = vmatpush.msra.mxu0 %v1075
    %5675 = vmatpush.msra.mxu0 %v1067
    %5676 = vmatpush.msra.mxu0 %v1059
    %5677 = vmatpush.msra.mxu0 %v1051
    %5678 = vmatmul.f32.gmra.mxu0 %v5361
    %v5679 = vpop.f32.mrf.mxu0
    %v5680 = vadd.f32 %v466, %v5679
    %5681 = vdwg.mxu0
    %5682 = vmatpush.msra.mxu0 %v1299
    %5683 = vmatpush.msra.mxu0 %v1291
    %5684 = vmatpush.msra.mxu0 %v1283
    %5685 = vmatpush.msra.mxu0 %v1275
    %5686 = vmatpush.msra.mxu0 %v1267
    %5687 = vmatpush.msra.mxu0 %v1259
    %5688 = vmatpush.msra.mxu0 %v1251
    %5689 = vmatpush.msra.mxu0 %v1243
    %5690 = vmatpush.msra.mxu0 %v1235
    %5691 = vmatpush.msra.mxu0 %v1227
    %5692 = vmatpush.msra.mxu0 %v1219
    %5693 = vmatpush.msra.mxu0 %v1211
    %5694 = vmatpush.msra.mxu0 %v1203
    %5695 = vmatpush.msra.mxu0 %v1195
    %5696 = vmatpush.msra.mxu0 %v1187
    %5697 = vmatpush.msra.mxu0 %v1179
    %5698 = vmatmul.f32.gmra.mxu0 %v4983
    %v5699 = vpop.f32.mrf.mxu0
    %v5700 = vadd.f32 %v5680, %v5699
    %5701 = vdwg.mxu0
    %5702 = vmatpush.msra.mxu0 %v1427
    %5703 = vmatpush.msra.mxu0 %v1419
    %5704 = vmatpush.msra.mxu0 %v1411
    %5705 = vmatpush.msra.mxu0 %v1403
    %5706 = vmatpush.msra.mxu0 %v1395
    %5707 = vmatpush.msra.mxu0 %v1387
    %5708 = vmatpush.msra.mxu0 %v1379
    %5709 = vmatpush.msra.mxu0 %v1371
    %5710 = vmatpush.msra.mxu0 %v1363
    %5711 = vmatpush.msra.mxu0 %v1355
    %5712 = vmatpush.msra.mxu0 %v1347
    %5713 = vmatpush.msra.mxu0 %v1339
    %5714 = vmatpush.msra.mxu0 %v1331
    %5715 = vmatpush.msra.mxu0 %v1323
    %5716 = vmatpush.msra.mxu0 %v1315
    %5717 = vmatpush.msra.mxu0 %v1307
    %5718 = vmatmul.f32.gmra.mxu0 %v4984
    %v5719 = vpop.f32.mrf.mxu0
    %v5720 = vadd.f32 %v5700, %v5719
    %5721 = vdwg.mxu0
    %5722 = vmatpush.msra.mxu0 %v1172
    %5723 = vmatpush.msra.mxu0 %v1164
    %5724 = vmatpush.msra.mxu0 %v1156
    %5725 = vmatpush.msra.mxu0 %v1148
    %5726 = vmatpush.msra.mxu0 %v1140
    %5727 = vmatpush.msra.mxu0 %v1132
    %5728 = vmatpush.msra.mxu0 %v1124
    %5729 = vmatpush.msra.mxu0 %v1116
    %5730 = vmatpush.msra.mxu0 %v1108
    %5731 = vmatpush.msra.mxu0 %v1100
    %5732 = vmatpush.msra.mxu0 %v1092
    %5733 = vmatpush.msra.mxu0 %v1084
    %5734 = vmatpush.msra.mxu0 %v1076
    %5735 = vmatpush.msra.mxu0 %v1068
    %5736 = vmatpush.msra.mxu0 %v1060
    %5737 = vmatpush.msra.mxu0 %v1052
    %5738 = vmatmul.f32.gmra.mxu0 %v5361
    %v5739 = vpop.f32.mrf.mxu0
    %v5740 = vadd.f32 %v467, %v5739
    %5741 = vdwg.mxu0
    %5742 = vmatpush.msra.mxu0 %v1300
    %5743 = vmatpush.msra.mxu0 %v1292
    %5744 = vmatpush.msra.mxu0 %v1284
    %5745 = vmatpush.msra.mxu0 %v1276
    %5746 = vmatpush.msra.mxu0 %v1268
    %5747 = vmatpush.msra.mxu0 %v1260
    %5748 = vmatpush.msra.mxu0 %v1252
    %5749 = vmatpush.msra.mxu0 %v1244
    %5750 = vmatpush.msra.mxu0 %v1236
    %5751 = vmatpush.msra.mxu0 %v1228
    %5752 = vmatpush.msra.mxu0 %v1220
    %5753 = vmatpush.msra.mxu0 %v1212
    %5754 = vmatpush.msra.mxu0 %v1204
    %5755 = vmatpush.msra.mxu0 %v1196
    %5756 = vmatpush.msra.mxu0 %v1188
    %5757 = vmatpush.msra.mxu0 %v1180
    %5758 = vmatmul.f32.gmra.mxu0 %v4983
    %v5759 = vpop.f32.mrf.mxu0
    %v5760 = vadd.f32 %v5740, %v5759
    %5761 = vdwg.mxu0
    %5762 = vmatpush.msra.mxu0 %v1428
    %5763 = vmatpush.msra.mxu0 %v1420
    %5764 = vmatpush.msra.mxu0 %v1412
    %5765 = vmatpush.msra.mxu0 %v1404
    %5766 = vmatpush.msra.mxu0 %v1396
    %5767 = vmatpush.msra.mxu0 %v1388
    %5768 = vmatpush.msra.mxu0 %v1380
    %5769 = vmatpush.msra.mxu0 %v1372
    %5770 = vmatpush.msra.mxu0 %v1364
    %5771 = vmatpush.msra.mxu0 %v1356
    %5772 = vmatpush.msra.mxu0 %v1348
    %5773 = vmatpush.msra.mxu0 %v1340
    %5774 = vmatpush.msra.mxu0 %v1332
    %5775 = vmatpush.msra.mxu0 %v1324
    %5776 = vmatpush.msra.mxu0 %v1316
    %5777 = vmatpush.msra.mxu0 %v1308
    %5778 = vmatmul.f32.gmra.mxu0 %v4984
    %v5779 = vpop.f32.mrf.mxu0
    %v5780 = vadd.f32 %v5760, %v5779
    %5781 = vdwg.mxu0
    %5782 = vmatpush.msra.mxu0 %v1173
    %5783 = vmatpush.msra.mxu0 %v1165
    %5784 = vmatpush.msra.mxu0 %v1157
    %5785 = vmatpush.msra.mxu0 %v1149
    %5786 = vmatpush.msra.mxu0 %v1141
    %5787 = vmatpush.msra.mxu0 %v1133
    %5788 = vmatpush.msra.mxu0 %v1125
    %5789 = vmatpush.msra.mxu0 %v1117
    %5790 = vmatpush.msra.mxu0 %v1109
    %5791 = vmatpush.msra.mxu0 %v1101
    %5792 = vmatpush.msra.mxu0 %v1093
    %5793 = vmatpush.msra.mxu0 %v1085
    %5794 = vmatpush.msra.mxu0 %v1077
    %5795 = vmatpush.msra.mxu0 %v1069
    %5796 = vmatpush.msra.mxu0 %v1061
    %5797 = vmatpush.msra.mxu0 %v1053
    %5798 = vmatmul.f32.gmra.mxu0 %v5361
    %v5799 = vpop.f32.mrf.mxu0
    %v5800 = vadd.f32 %v468, %v5799
    %5801 = vdwg.mxu0
    %5802 = vmatpush.msra.mxu0 %v1301
    %5803 = vmatpush.msra.mxu0 %v1293
    %5804 = vmatpush.msra.mxu0 %v1285
    %5805 = vmatpush.msra.mxu0 %v1277
    %5806 = vmatpush.msra.mxu0 %v1269
    %5807 = vmatpush.msra.mxu0 %v1261
    %5808 = vmatpush.msra.mxu0 %v1253
    %5809 = vmatpush.msra.mxu0 %v1245
    %5810 = vmatpush.msra.mxu0 %v1237
    %5811 = vmatpush.msra.mxu0 %v1229
    %5812 = vmatpush.msra.mxu0 %v1221
    %5813 = vmatpush.msra.mxu0 %v1213
    %5814 = vmatpush.msra.mxu0 %v1205
    %5815 = vmatpush.msra.mxu0 %v1197
    %5816 = vmatpush.msra.mxu0 %v1189
    %5817 = vmatpush.msra.mxu0 %v1181
    %5818 = vmatmul.f32.gmra.mxu0 %v4983
    %v5819 = vpop.f32.mrf.mxu0
    %v5820 = vadd.f32 %v5800, %v5819
    %5821 = vdwg.mxu0
    %5822 = vmatpush.msra.mxu0 %v1429
    %5823 = vmatpush.msra.mxu0 %v1421
    %5824 = vmatpush.msra.mxu0 %v1413
    %5825 = vmatpush.msra.mxu0 %v1405
    %5826 = vmatpush.msra.mxu0 %v1397
    %5827 = vmatpush.msra.mxu0 %v1389
    %5828 = vmatpush.msra.mxu0 %v1381
    %5829 = vmatpush.msra.mxu0 %v1373
    %5830 = vmatpush.msra.mxu0 %v1365
    %5831 = vmatpush.msra.mxu0 %v1357
    %5832 = vmatpush.msra.mxu0 %v1349
    %5833 = vmatpush.msra.mxu0 %v1341
    %5834 = vmatpush.msra.mxu0 %v1333
    %5835 = vmatpush.msra.mxu0 %v1325
    %5836 = vmatpush.msra.mxu0 %v1317
    %5837 = vmatpush.msra.mxu0 %v1309
    %5838 = vmatmul.f32.gmra.mxu0 %v4984
    %v5839 = vpop.f32.mrf.mxu0
    %v5840 = vadd.f32 %v5820, %v5839
    %5841 = vdwg.mxu0
    %v5842 = vxor.u32 %v5420, 2147483648
    %v5843 = vxor.u32 %v5480, 2147483648
    %v5844 = vmul.f32 %v5842, 1.442695
    %v5845 = vpow.pop %v5844
    %v5846 = vmul.f32 %v5843, 1.442695
    %v5847 = vpow.pop %v5846
    %v5848 = vadd.f32 %v5845, 1.0
    %v5849 = vadd.f32 %v5847, 1.0
    %v5850 = vrcp.pop %v5848
    %v5851 = vmul.f32 %v5848, %v5850
    %v5852 = vsub.f32 1.0, %v5851
    %v5853 = vmul.f32 %v5850, %v5852
    %v5854 = vadd.f32 %v5850, %v5853
    %vm5855 = vweird.f32 %v5848
    %vm5856 = vweird.f32 %v5850
    %vm5857 = vmor %vm5855, %vm5856
    %v5858 = vsel %vm5857, %v5850, %v5854
    %v5859 = vand.u32 2147483647, %v5848
    %vm5860 = vcmp.eq.f32.partialorder %v5859, 8.507059e+37
    %v5861 = vand.u32 %v5848, 2147483648
    %v5862 = vor.u32 1.1754944e-38, %v5861
    %v5863 = vsel %vm5860, %v5862, %v5858
    %v5864 = vmul.f32 1.0, %v5863
    %v5865 = vrcp.pop %v5849
    %v5866 = vmul.f32 %v5849, %v5865
    %v5867 = vsub.f32 1.0, %v5866
    %v5868 = vmul.f32 %v5865, %v5867
    %v5869 = vadd.f32 %v5865, %v5868
    %vm5870 = vweird.f32 %v5849
    %vm5871 = vweird.f32 %v5865
    %vm5872 = vmor %vm5870, %vm5871
    %v5873 = vsel %vm5872, %v5865, %v5869
    %v5874 = vand.u32 2147483647, %v5849
    %vm5875 = vcmp.eq.f32.partialorder %v5874, 8.507059e+37
    %v5876 = vand.u32 %v5849, 2147483648
    %v5877 = vor.u32 1.1754944e-38, %v5876
    %v5878 = vsel %vm5875, %v5877, %v5873
    %v5879 = vmul.f32 1.0, %v5878
    %v5880 = vxor.u32 %v5540, 2147483648
    %v5881 = vxor.u32 %v5600, 2147483648
    %v5882 = vmul.f32 %v5880, 1.442695
    %v5883 = vpow.pop %v5882
    %v5884 = vmul.f32 %v5881, 1.442695
    %v5885 = vpow.pop %v5884
    %v5886 = vadd.f32 %v5883, 1.0
    %v5887 = vadd.f32 %v5885, 1.0
    %v5888 = vrcp.pop %v5886
    %v5889 = vmul.f32 %v5886, %v5888
    %v5890 = vsub.f32 1.0, %v5889
    %v5891 = vmul.f32 %v5888, %v5890
    %v5892 = vadd.f32 %v5888, %v5891
    %vm5893 = vweird.f32 %v5886
    %vm5894 = vweird.f32 %v5888
    %vm5895 = vmor %vm5893, %vm5894
    %v5896 = vsel %vm5895, %v5888, %v5892
    %v5897 = vand.u32 2147483647, %v5886
    %vm5898 = vcmp.eq.f32.partialorder %v5897, 8.507059e+37
    %v5899 = vand.u32 %v5886, 2147483648
    %v5900 = vor.u32 1.1754944e-38, %v5899
    %v5901 = vsel %vm5898, %v5900, %v5896
    %v5902 = vmul.f32 1.0, %v5901
    %v5903 = vrcp.pop %v5887
    %v5904 = vmul.f32 %v5887, %v5903
    %v5905 = vsub.f32 1.0, %v5904
    %v5906 = vmul.f32 %v5903, %v5905
    %v5907 = vadd.f32 %v5903, %v5906
    %vm5908 = vweird.f32 %v5887
    %vm5909 = vweird.f32 %v5903
    %vm5910 = vmor %vm5908, %vm5909
    %v5911 = vsel %vm5910, %v5903, %v5907
    %v5912 = vand.u32 2147483647, %v5887
    %vm5913 = vcmp.eq.f32.partialorder %v5912, 8.507059e+37
    %v5914 = vand.u32 %v5887, 2147483648
    %v5915 = vor.u32 1.1754944e-38, %v5914
    %v5916 = vsel %vm5913, %v5915, %v5911
    %v5917 = vmul.f32 1.0, %v5916
    %v5918 = vtanh.pop %v5660
    %v5919 = vtanh.pop %v5720
    %v5920 = vxor.u32 %v5780, 2147483648
    %v5921 = vxor.u32 %v5840, 2147483648
    %v5922 = vmul.f32 %v5920, 1.442695
    %v5923 = vpow.pop %v5922
    %v5924 = vmul.f32 %v5921, 1.442695
    %v5925 = vpow.pop %v5924
    %v5926 = vadd.f32 %v5923, 1.0
    %v5927 = vadd.f32 %v5925, 1.0
    %v5928 = vrcp.pop %v5926
    %v5929 = vmul.f32 %v5926, %v5928
    %v5930 = vsub.f32 1.0, %v5929
    %v5931 = vmul.f32 %v5928, %v5930
    %v5932 = vadd.f32 %v5928, %v5931
    %vm5933 = vweird.f32 %v5926
    %vm5934 = vweird.f32 %v5928
    %vm5935 = vmor %vm5933, %vm5934
    %v5936 = vsel %vm5935, %v5928, %v5932
    %v5937 = vand.u32 2147483647, %v5926
    %vm5938 = vcmp.eq.f32.partialorder %v5937, 8.507059e+37
    %v5939 = vand.u32 %v5926, 2147483648
    %v5940 = vor.u32 1.1754944e-38, %v5939
    %v5941 = vsel %vm5938, %v5940, %v5936
    %v5942 = vmul.f32 1.0, %v5941
    %v5943 = vrcp.pop %v5927
    %v5944 = vmul.f32 %v5927, %v5943
    %v5945 = vsub.f32 1.0, %v5944
    %v5946 = vmul.f32 %v5943, %v5945
    %v5947 = vadd.f32 %v5943, %v5946
    %vm5948 = vweird.f32 %v5927
    %vm5949 = vweird.f32 %v5943
    %vm5950 = vmor %vm5948, %vm5949
    %v5951 = vsel %vm5950, %v5943, %v5947
    %v5952 = vand.u32 2147483647, %v5927
    %vm5953 = vcmp.eq.f32.partialorder %v5952, 8.507059e+37
    %v5954 = vand.u32 %v5927, 2147483648
    %v5955 = vor.u32 1.1754944e-38, %v5954
    %v5956 = vsel %vm5953, %v5955, %v5951
    %v5957 = vmul.f32 1.0, %v5956
    %v5958 = vmul.f32 %v5902, %v4979
    %v5959 = vmul.f32 %v5917, %v4980
    %v5960 = vmul.f32 %v5864, %v5918
    %v5961 = vmul.f32 %v5879, %v5919
    %v5962 = vadd.f32 %v5958, %v5960
    %v5963 = vadd.f32 %v5959, %v5961
    %v5964 = vtanh.pop %v5962
    %v5965 = vtanh.pop %v5963
    %v5966 = vmul.f32 %v5942, %v5964
    %v5967 = vmul.f32 %v5957, %v5965
    %s5968 = smul.u32 5, 4
    %s5969 = smul.addr %s5968, 8
    %s5970 = scalar_lea.vmem [#allocation2], %s5969
    %v5971 = vld [vmem:[%s5970] sm:$0xff]
    %v5972 = vld [vmem:[%s5970 + $0x8] sm:$0xff]
    %v5973 = vld [vmem:[%s5970 + $0x10] sm:$0xff]
    %v5974 = vld [vmem:[%s5970 + $0x18] sm:$0xff]
    %5975 = vmatpush.msra.mxu0 %v544
    %5976 = vmatpush.msra.mxu0 %v540
    %5977 = vmatpush.msra.mxu0 %v536
    %5978 = vmatpush.msra.mxu0 %v532
    %5979 = vmatpush.msra.mxu0 %v528
    %5980 = vmatpush.msra.mxu0 %v524
    %5981 = vmatpush.msra.mxu0 %v520
    %5982 = vmatpush.msra.mxu0 %v516
    %5983 = vmatpush.msra.mxu0 %v512
    %5984 = vmatpush.msra.mxu0 %v508
    %5985 = vmatpush.msra.mxu0 %v504
    %5986 = vmatpush.msra.mxu0 %v500
    %5987 = vmatpush.msra.mxu0 %v496
    %5988 = vmatpush.msra.mxu0 %v492
    %5989 = vmatpush.msra.mxu0 %v488
    %5990 = vmatpush.msra.mxu0 %v484
    %5991 = vmatmul.f32.gmra.mxu0 %v5138
    %v5992 = vpop.f32.mrf.mxu0
    %v5993 = vadd.f32 0.0, %v5992
    %5994 = vdwg.mxu0
    %5995 = vmatpush.msra.mxu0 %v545
    %5996 = vmatpush.msra.mxu0 %v541
    %5997 = vmatpush.msra.mxu0 %v537
    %5998 = vmatpush.msra.mxu0 %v533
    %5999 = vmatpush.msra.mxu0 %v529
    %6000 = vmatpush.msra.mxu0 %v525
    %6001 = vmatpush.msra.mxu0 %v521
    %6002 = vmatpush.msra.mxu0 %v517
    %6003 = vmatpush.msra.mxu0 %v513
    %6004 = vmatpush.msra.mxu0 %v509
    %6005 = vmatpush.msra.mxu0 %v505
    %6006 = vmatpush.msra.mxu0 %v501
    %6007 = vmatpush.msra.mxu0 %v497
    %6008 = vmatpush.msra.mxu0 %v493
    %6009 = vmatpush.msra.mxu0 %v489
    %6010 = vmatpush.msra.mxu0 %v485
    %6011 = vmatmul.f32.gmra.mxu0 %v5138
    %v6012 = vpop.f32.mrf.mxu0
    %v6013 = vadd.f32 0.0, %v6012
    %6014 = vdwg.mxu0
    %6015 = vmatpush.msra.mxu0 %v546
    %6016 = vmatpush.msra.mxu0 %v542
    %6017 = vmatpush.msra.mxu0 %v538
    %6018 = vmatpush.msra.mxu0 %v534
    %6019 = vmatpush.msra.mxu0 %v530
    %6020 = vmatpush.msra.mxu0 %v526
    %6021 = vmatpush.msra.mxu0 %v522
    %6022 = vmatpush.msra.mxu0 %v518
    %6023 = vmatpush.msra.mxu0 %v514
    %6024 = vmatpush.msra.mxu0 %v510
    %6025 = vmatpush.msra.mxu0 %v506
    %6026 = vmatpush.msra.mxu0 %v502
    %6027 = vmatpush.msra.mxu0 %v498
    %6028 = vmatpush.msra.mxu0 %v494
    %6029 = vmatpush.msra.mxu0 %v490
    %6030 = vmatpush.msra.mxu0 %v486
    %6031 = vmatmul.f32.gmra.mxu0 %v5138
    %v6032 = vpop.f32.mrf.mxu0
    %v6033 = vadd.f32 0.0, %v6032
    %6034 = vdwg.mxu0
    %6035 = vmatpush.msra.mxu0 %v547
    %6036 = vmatpush.msra.mxu0 %v543
    %6037 = vmatpush.msra.mxu0 %v539
    %6038 = vmatpush.msra.mxu0 %v535
    %6039 = vmatpush.msra.mxu0 %v531
    %6040 = vmatpush.msra.mxu0 %v527
    %6041 = vmatpush.msra.mxu0 %v523
    %6042 = vmatpush.msra.mxu0 %v519
    %6043 = vmatpush.msra.mxu0 %v515
    %6044 = vmatpush.msra.mxu0 %v511
    %6045 = vmatpush.msra.mxu0 %v507
    %6046 = vmatpush.msra.mxu0 %v503
    %6047 = vmatpush.msra.mxu0 %v499
    %6048 = vmatpush.msra.mxu0 %v495
    %6049 = vmatpush.msra.mxu0 %v491
    %6050 = vmatpush.msra.mxu0 %v487
    %6051 = vmatmul.f32.gmra.mxu0 %v5138
    %v6052 = vpop.f32.mrf.mxu0
    %v6053 = vadd.f32 0.0, %v6052
    %6054 = vdwg.mxu0
    %v6055 = vadd.f32 %v5971, %v5993
    %v6056 = vadd.f32 %v5972, %v6013
    %v6057 = vadd.f32 %v5973, %v6033
    %v6058 = vadd.f32 %v5974, %v6053
    %v6059 = vxor.u32 %v6055, 2147483648
    %v6060 = vmul.f32 %v6059, 1.442695
    %v6061 = vpow.pop %v6060
    %v6062 = vadd.f32 %v6061, 1.0
    %v6063 = vrcp.pop %v6062
    %v6064 = vmul.f32 %v6062, %v6063
    %v6065 = vsub.f32 1.0, %v6064
    %v6066 = vmul.f32 %v6063, %v6065
    %v6067 = vadd.f32 %v6063, %v6066
    %vm6068 = vweird.f32 %v6062
    %vm6069 = vweird.f32 %v6063
    %vm6070 = vmor %vm6068, %vm6069
    %v6071 = vsel %vm6070, %v6063, %v6067
    %v6072 = vand.u32 2147483647, %v6062
    %vm6073 = vcmp.eq.f32.partialorder %v6072, 8.507059e+37
    %v6074 = vand.u32 %v6062, 2147483648
    %v6075 = vor.u32 1.1754944e-38, %v6074
    %v6076 = vsel %vm6073, %v6075, %v6071
    %v6077 = vmul.f32 1.0, %v6076
    %v6078 = vxor.u32 %v6056, 2147483648
    %v6079 = vmul.f32 %v6078, 1.442695
    %v6080 = vpow.pop %v6079
    %v6081 = vadd.f32 %v6080, 1.0
    %v6082 = vrcp.pop %v6081
    %v6083 = vmul.f32 %v6081, %v6082
    %v6084 = vsub.f32 1.0, %v6083
    %v6085 = vmul.f32 %v6082, %v6084
    %v6086 = vadd.f32 %v6082, %v6085
    %vm6087 = vweird.f32 %v6081
    %vm6088 = vweird.f32 %v6082
    %vm6089 = vmor %vm6087, %vm6088
    %v6090 = vsel %vm6089, %v6082, %v6086
    %v6091 = vand.u32 2147483647, %v6081
    %vm6092 = vcmp.eq.f32.partialorder %v6091, 8.507059e+37
    %v6093 = vand.u32 %v6081, 2147483648
    %v6094 = vor.u32 1.1754944e-38, %v6093
    %v6095 = vsel %vm6092, %v6094, %v6090
    %v6096 = vmul.f32 1.0, %v6095
    %v6097 = vtanh.pop %v6057
    %v6098 = vxor.u32 %v6058, 2147483648
    %v6099 = vmul.f32 %v6098, 1.442695
    %v6100 = vpow.pop %v6099
    %v6101 = vadd.f32 %v6100, 1.0
    %v6102 = vrcp.pop %v6101
    %v6103 = vmul.f32 %v6101, %v6102
    %v6104 = vsub.f32 1.0, %v6103
    %v6105 = vmul.f32 %v6102, %v6104
    %v6106 = vadd.f32 %v6102, %v6105
    %vm6107 = vweird.f32 %v6101
    %vm6108 = vweird.f32 %v6102
    %vm6109 = vmor %vm6107, %vm6108
    %v6110 = vsel %vm6109, %v6102, %v6106
    %v6111 = vand.u32 2147483647, %v6101
    %vm6112 = vcmp.eq.f32.partialorder %v6111, 8.507059e+37
    %v6113 = vand.u32 %v6101, 2147483648
    %v6114 = vor.u32 1.1754944e-38, %v6113
    %v6115 = vsel %vm6112, %v6114, %v6110
    %v6116 = vmul.f32 1.0, %v6115
    %v6117 = vmul.f32 %v6096, %v5136
    %v6118 = vmul.f32 %v6077, %v6097
    %v6119 = vadd.f32 %v6117, %v6118
    %v6120 = vtanh.pop %v6119
    %v6121 = vmul.f32 %v6116, %v6120
    %6122 = vmatpush.msra.mxu0 %v755
    %6123 = vmatpush.msra.mxu0 %v751
    %6124 = vmatpush.msra.mxu0 %v747
    %6125 = vmatpush.msra.mxu0 %v743
    %6126 = vmatpush.msra.mxu0 %v739
    %6127 = vmatpush.msra.mxu0 %v735
    %6128 = vmatpush.msra.mxu0 %v731
    %6129 = vmatpush.msra.mxu0 %v727
    %6130 = vmatpush.msra.mxu0 %v723
    %6131 = vmatpush.msra.mxu0 %v719
    %6132 = vmatpush.msra.mxu0 %v715
    %6133 = vmatpush.msra.mxu0 %v711
    %6134 = vmatpush.msra.mxu0 %v707
    %6135 = vmatpush.msra.mxu0 %v703
    %6136 = vmatpush.msra.mxu0 %v699
    %6137 = vmatpush.msra.mxu0 %v695
    %6138 = vmatmul.f32.gmra.mxu0 %v6121
    %v6139 = vpop.f32.mrf.mxu0
    %v6140 = vadd.f32 %v451, %v6139
    %6141 = vdwg.mxu0
    %6142 = vmatpush.msra.mxu0 %v819
    %6143 = vmatpush.msra.mxu0 %v815
    %6144 = vmatpush.msra.mxu0 %v811
    %6145 = vmatpush.msra.mxu0 %v807
    %6146 = vmatpush.msra.mxu0 %v803
    %6147 = vmatpush.msra.mxu0 %v799
    %6148 = vmatpush.msra.mxu0 %v795
    %6149 = vmatpush.msra.mxu0 %v791
    %6150 = vmatpush.msra.mxu0 %v787
    %6151 = vmatpush.msra.mxu0 %v783
    %6152 = vmatpush.msra.mxu0 %v779
    %6153 = vmatpush.msra.mxu0 %v775
    %6154 = vmatpush.msra.mxu0 %v771
    %6155 = vmatpush.msra.mxu0 %v767
    %6156 = vmatpush.msra.mxu0 %v763
    %6157 = vmatpush.msra.mxu0 %v759
    %6158 = vmatmul.f32.gmra.mxu0 %v5361
    %v6159 = vpop.f32.mrf.mxu0
    %v6160 = vadd.f32 %v6140, %v6159
    %6161 = vdwg.mxu0
    %6162 = vmatpush.msra.mxu0 %v756
    %6163 = vmatpush.msra.mxu0 %v752
    %6164 = vmatpush.msra.mxu0 %v748
    %6165 = vmatpush.msra.mxu0 %v744
    %6166 = vmatpush.msra.mxu0 %v740
    %6167 = vmatpush.msra.mxu0 %v736
    %6168 = vmatpush.msra.mxu0 %v732
    %6169 = vmatpush.msra.mxu0 %v728
    %6170 = vmatpush.msra.mxu0 %v724
    %6171 = vmatpush.msra.mxu0 %v720
    %6172 = vmatpush.msra.mxu0 %v716
    %6173 = vmatpush.msra.mxu0 %v712
    %6174 = vmatpush.msra.mxu0 %v708
    %6175 = vmatpush.msra.mxu0 %v704
    %6176 = vmatpush.msra.mxu0 %v700
    %6177 = vmatpush.msra.mxu0 %v696
    %6178 = vmatmul.f32.gmra.mxu0 %v6121
    %v6179 = vpop.f32.mrf.mxu0
    %v6180 = vadd.f32 %v452, %v6179
    %6181 = vdwg.mxu0
    %6182 = vmatpush.msra.mxu0 %v820
    %6183 = vmatpush.msra.mxu0 %v816
    %6184 = vmatpush.msra.mxu0 %v812
    %6185 = vmatpush.msra.mxu0 %v808
    %6186 = vmatpush.msra.mxu0 %v804
    %6187 = vmatpush.msra.mxu0 %v800
    %6188 = vmatpush.msra.mxu0 %v796
    %6189 = vmatpush.msra.mxu0 %v792
    %6190 = vmatpush.msra.mxu0 %v788
    %6191 = vmatpush.msra.mxu0 %v784
    %6192 = vmatpush.msra.mxu0 %v780
    %6193 = vmatpush.msra.mxu0 %v776
    %6194 = vmatpush.msra.mxu0 %v772
    %6195 = vmatpush.msra.mxu0 %v768
    %6196 = vmatpush.msra.mxu0 %v764
    %6197 = vmatpush.msra.mxu0 %v760
    %6198 = vmatmul.f32.gmra.mxu0 %v5361
    %v6199 = vpop.f32.mrf.mxu0
    %v6200 = vadd.f32 %v6180, %v6199
    %6201 = vdwg.mxu0
    %6202 = vmatpush.msra.mxu0 %v757
    %6203 = vmatpush.msra.mxu0 %v753
    %6204 = vmatpush.msra.mxu0 %v749
    %6205 = vmatpush.msra.mxu0 %v745
    %6206 = vmatpush.msra.mxu0 %v741
    %6207 = vmatpush.msra.mxu0 %v737
    %6208 = vmatpush.msra.mxu0 %v733
    %6209 = vmatpush.msra.mxu0 %v729
    %6210 = vmatpush.msra.mxu0 %v725
    %6211 = vmatpush.msra.mxu0 %v721
    %6212 = vmatpush.msra.mxu0 %v717
    %6213 = vmatpush.msra.mxu0 %v713
    %6214 = vmatpush.msra.mxu0 %v709
    %6215 = vmatpush.msra.mxu0 %v705
    %6216 = vmatpush.msra.mxu0 %v701
    %6217 = vmatpush.msra.mxu0 %v697
    %6218 = vmatmul.f32.gmra.mxu0 %v6121
    %v6219 = vpop.f32.mrf.mxu0
    %v6220 = vadd.f32 %v453, %v6219
    %6221 = vdwg.mxu0
    %6222 = vmatpush.msra.mxu0 %v821
    %6223 = vmatpush.msra.mxu0 %v817
    %6224 = vmatpush.msra.mxu0 %v813
    %6225 = vmatpush.msra.mxu0 %v809
    %6226 = vmatpush.msra.mxu0 %v805
    %6227 = vmatpush.msra.mxu0 %v801
    %6228 = vmatpush.msra.mxu0 %v797
    %6229 = vmatpush.msra.mxu0 %v793
    %6230 = vmatpush.msra.mxu0 %v789
    %6231 = vmatpush.msra.mxu0 %v785
    %6232 = vmatpush.msra.mxu0 %v781
    %6233 = vmatpush.msra.mxu0 %v777
    %6234 = vmatpush.msra.mxu0 %v773
    %6235 = vmatpush.msra.mxu0 %v769
    %6236 = vmatpush.msra.mxu0 %v765
    %6237 = vmatpush.msra.mxu0 %v761
    %6238 = vmatmul.f32.gmra.mxu0 %v5361
    %v6239 = vpop.f32.mrf.mxu0
    %v6240 = vadd.f32 %v6220, %v6239
    %6241 = vdwg.mxu0
    %6242 = vmatpush.msra.mxu0 %v758
    %6243 = vmatpush.msra.mxu0 %v754
    %6244 = vmatpush.msra.mxu0 %v750
    %6245 = vmatpush.msra.mxu0 %v746
    %6246 = vmatpush.msra.mxu0 %v742
    %6247 = vmatpush.msra.mxu0 %v738
    %6248 = vmatpush.msra.mxu0 %v734
    %6249 = vmatpush.msra.mxu0 %v730
    %6250 = vmatpush.msra.mxu0 %v726
    %6251 = vmatpush.msra.mxu0 %v722
    %6252 = vmatpush.msra.mxu0 %v718
    %6253 = vmatpush.msra.mxu0 %v714
    %6254 = vmatpush.msra.mxu0 %v710
    %6255 = vmatpush.msra.mxu0 %v706
    %6256 = vmatpush.msra.mxu0 %v702
    %6257 = vmatpush.msra.mxu0 %v698
    %6258 = vmatmul.f32.gmra.mxu0 %v6121
    %v6259 = vpop.f32.mrf.mxu0
    %v6260 = vadd.f32 %v454, %v6259
    %6261 = vdwg.mxu0
    %6262 = vmatpush.msra.mxu0 %v822
    %6263 = vmatpush.msra.mxu0 %v818
    %6264 = vmatpush.msra.mxu0 %v814
    %6265 = vmatpush.msra.mxu0 %v810
    %6266 = vmatpush.msra.mxu0 %v806
    %6267 = vmatpush.msra.mxu0 %v802
    %6268 = vmatpush.msra.mxu0 %v798
    %6269 = vmatpush.msra.mxu0 %v794
    %6270 = vmatpush.msra.mxu0 %v790
    %6271 = vmatpush.msra.mxu0 %v786
    %6272 = vmatpush.msra.mxu0 %v782
    %6273 = vmatpush.msra.mxu0 %v778
    %6274 = vmatpush.msra.mxu0 %v774
    %6275 = vmatpush.msra.mxu0 %v770
    %6276 = vmatpush.msra.mxu0 %v766
    %6277 = vmatpush.msra.mxu0 %v762
    %6278 = vmatmul.f32.gmra.mxu0 %v5361
    %v6279 = vpop.f32.mrf.mxu0
    %v6280 = vadd.f32 %v6260, %v6279
    %6281 = vdwg.mxu0
    %v6282 = vxor.u32 %v6160, 2147483648
    %v6283 = vmul.f32 %v6282, 1.442695
    %v6284 = vpow.pop %v6283
    %v6285 = vadd.f32 %v6284, 1.0
    %v6286 = vrcp.pop %v6285
    %v6287 = vmul.f32 %v6285, %v6286
    %v6288 = vsub.f32 1.0, %v6287
    %v6289 = vmul.f32 %v6286, %v6288
    %v6290 = vadd.f32 %v6286, %v6289
    %vm6291 = vweird.f32 %v6285
    %vm6292 = vweird.f32 %v6286
    %vm6293 = vmor %vm6291, %vm6292
    %v6294 = vsel %vm6293, %v6286, %v6290
    %v6295 = vand.u32 2147483647, %v6285
    %vm6296 = vcmp.eq.f32.partialorder %v6295, 8.507059e+37
    %v6297 = vand.u32 %v6285, 2147483648
    %v6298 = vor.u32 1.1754944e-38, %v6297
    %v6299 = vsel %vm6296, %v6298, %v6294
    %v6300 = vmul.f32 1.0, %v6299
    %v6301 = vxor.u32 %v6200, 2147483648
    %v6302 = vmul.f32 %v6301, 1.442695
    %v6303 = vpow.pop %v6302
    %v6304 = vadd.f32 %v6303, 1.0
    %v6305 = vrcp.pop %v6304
    %v6306 = vmul.f32 %v6304, %v6305
    %v6307 = vsub.f32 1.0, %v6306
    %v6308 = vmul.f32 %v6305, %v6307
    %v6309 = vadd.f32 %v6305, %v6308
    %vm6310 = vweird.f32 %v6304
    %vm6311 = vweird.f32 %v6305
    %vm6312 = vmor %vm6310, %vm6311
    %v6313 = vsel %vm6312, %v6305, %v6309
    %v6314 = vand.u32 2147483647, %v6304
    %vm6315 = vcmp.eq.f32.partialorder %v6314, 8.507059e+37
    %v6316 = vand.u32 %v6304, 2147483648
    %v6317 = vor.u32 1.1754944e-38, %v6316
    %v6318 = vsel %vm6315, %v6317, %v6313
    %v6319 = vmul.f32 1.0, %v6318
    %v6320 = vtanh.pop %v6240
    %v6321 = vxor.u32 %v6280, 2147483648
    %v6322 = vmul.f32 %v6321, 1.442695
    %v6323 = vpow.pop %v6322
    %v6324 = vadd.f32 %v6323, 1.0
    %v6325 = vrcp.pop %v6324
    %v6326 = vmul.f32 %v6324, %v6325
    %v6327 = vsub.f32 1.0, %v6326
    %v6328 = vmul.f32 %v6325, %v6327
    %v6329 = vadd.f32 %v6325, %v6328
    %vm6330 = vweird.f32 %v6324
    %vm6331 = vweird.f32 %v6325
    %vm6332 = vmor %vm6330, %vm6331
    %v6333 = vsel %vm6332, %v6325, %v6329
    %v6334 = vand.u32 2147483647, %v6324
    %vm6335 = vcmp.eq.f32.partialorder %v6334, 8.507059e+37
    %v6336 = vand.u32 %v6324, 2147483648
    %v6337 = vor.u32 1.1754944e-38, %v6336
    %v6338 = vsel %vm6335, %v6337, %v6333
    %v6339 = vmul.f32 1.0, %v6338
    %v6340 = vmul.f32 %v6319, %v5359
    %v6341 = vmul.f32 %v6300, %v6320
    %v6342 = vadd.f32 %v6340, %v6341
    %v6343 = vtanh.pop %v6342
    %v6344 = vmul.f32 %v6339, %v6343
    %6345 = vmatpush.msra.mxu0 %v1166
    %6346 = vmatpush.msra.mxu0 %v1158
    %6347 = vmatpush.msra.mxu0 %v1150
    %6348 = vmatpush.msra.mxu0 %v1142
    %6349 = vmatpush.msra.mxu0 %v1134
    %6350 = vmatpush.msra.mxu0 %v1126
    %6351 = vmatpush.msra.mxu0 %v1118
    %6352 = vmatpush.msra.mxu0 %v1110
    %6353 = vmatpush.msra.mxu0 %v1102
    %6354 = vmatpush.msra.mxu0 %v1094
    %6355 = vmatpush.msra.mxu0 %v1086
    %6356 = vmatpush.msra.mxu0 %v1078
    %6357 = vmatpush.msra.mxu0 %v1070
    %6358 = vmatpush.msra.mxu0 %v1062
    %6359 = vmatpush.msra.mxu0 %v1054
    %6360 = vmatpush.msra.mxu0 %v1046
    %6361 = vmatmul.f32.gmra.mxu0 %v6344
    %v6362 = vpop.f32.mrf.mxu0
    %v6363 = vadd.f32 %v461, %v6362
    %6364 = vdwg.mxu0
    %6365 = vmatpush.msra.mxu0 %v1294
    %6366 = vmatpush.msra.mxu0 %v1286
    %6367 = vmatpush.msra.mxu0 %v1278
    %6368 = vmatpush.msra.mxu0 %v1270
    %6369 = vmatpush.msra.mxu0 %v1262
    %6370 = vmatpush.msra.mxu0 %v1254
    %6371 = vmatpush.msra.mxu0 %v1246
    %6372 = vmatpush.msra.mxu0 %v1238
    %6373 = vmatpush.msra.mxu0 %v1230
    %6374 = vmatpush.msra.mxu0 %v1222
    %6375 = vmatpush.msra.mxu0 %v1214
    %6376 = vmatpush.msra.mxu0 %v1206
    %6377 = vmatpush.msra.mxu0 %v1198
    %6378 = vmatpush.msra.mxu0 %v1190
    %6379 = vmatpush.msra.mxu0 %v1182
    %6380 = vmatpush.msra.mxu0 %v1174
    %6381 = vmatmul.f32.gmra.mxu0 %v5966
    %v6382 = vpop.f32.mrf.mxu0
    %v6383 = vadd.f32 %v6363, %v6382
    %6384 = vdwg.mxu0
    %6385 = vmatpush.msra.mxu0 %v1422
    %6386 = vmatpush.msra.mxu0 %v1414
    %6387 = vmatpush.msra.mxu0 %v1406
    %6388 = vmatpush.msra.mxu0 %v1398
    %6389 = vmatpush.msra.mxu0 %v1390
    %6390 = vmatpush.msra.mxu0 %v1382
    %6391 = vmatpush.msra.mxu0 %v1374
    %6392 = vmatpush.msra.mxu0 %v1366
    %6393 = vmatpush.msra.mxu0 %v1358
    %6394 = vmatpush.msra.mxu0 %v1350
    %6395 = vmatpush.msra.mxu0 %v1342
    %6396 = vmatpush.msra.mxu0 %v1334
    %6397 = vmatpush.msra.mxu0 %v1326
    %6398 = vmatpush.msra.mxu0 %v1318
    %6399 = vmatpush.msra.mxu0 %v1310
    %6400 = vmatpush.msra.mxu0 %v1302
    %6401 = vmatmul.f32.gmra.mxu0 %v5967
    %v6402 = vpop.f32.mrf.mxu0
    %v6403 = vadd.f32 %v6383, %v6402
    %6404 = vdwg.mxu0
    %6405 = vmatpush.msra.mxu0 %v1167
    %6406 = vmatpush.msra.mxu0 %v1159
    %6407 = vmatpush.msra.mxu0 %v1151
    %6408 = vmatpush.msra.mxu0 %v1143
    %6409 = vmatpush.msra.mxu0 %v1135
    %6410 = vmatpush.msra.mxu0 %v1127
    %6411 = vmatpush.msra.mxu0 %v1119
    %6412 = vmatpush.msra.mxu0 %v1111
    %6413 = vmatpush.msra.mxu0 %v1103
    %6414 = vmatpush.msra.mxu0 %v1095
    %6415 = vmatpush.msra.mxu0 %v1087
    %6416 = vmatpush.msra.mxu0 %v1079
    %6417 = vmatpush.msra.mxu0 %v1071
    %6418 = vmatpush.msra.mxu0 %v1063
    %6419 = vmatpush.msra.mxu0 %v1055
    %6420 = vmatpush.msra.mxu0 %v1047
    %6421 = vmatmul.f32.gmra.mxu0 %v6344
    %v6422 = vpop.f32.mrf.mxu0
    %v6423 = vadd.f32 %v462, %v6422
    %6424 = vdwg.mxu0
    %6425 = vmatpush.msra.mxu0 %v1295
    %6426 = vmatpush.msra.mxu0 %v1287
    %6427 = vmatpush.msra.mxu0 %v1279
    %6428 = vmatpush.msra.mxu0 %v1271
    %6429 = vmatpush.msra.mxu0 %v1263
    %6430 = vmatpush.msra.mxu0 %v1255
    %6431 = vmatpush.msra.mxu0 %v1247
    %6432 = vmatpush.msra.mxu0 %v1239
    %6433 = vmatpush.msra.mxu0 %v1231
    %6434 = vmatpush.msra.mxu0 %v1223
    %6435 = vmatpush.msra.mxu0 %v1215
    %6436 = vmatpush.msra.mxu0 %v1207
    %6437 = vmatpush.msra.mxu0 %v1199
    %6438 = vmatpush.msra.mxu0 %v1191
    %6439 = vmatpush.msra.mxu0 %v1183
    %6440 = vmatpush.msra.mxu0 %v1175
    %6441 = vmatmul.f32.gmra.mxu0 %v5966
    %v6442 = vpop.f32.mrf.mxu0
    %v6443 = vadd.f32 %v6423, %v6442
    %6444 = vdwg.mxu0
    %6445 = vmatpush.msra.mxu0 %v1423
    %6446 = vmatpush.msra.mxu0 %v1415
    %6447 = vmatpush.msra.mxu0 %v1407
    %6448 = vmatpush.msra.mxu0 %v1399
    %6449 = vmatpush.msra.mxu0 %v1391
    %6450 = vmatpush.msra.mxu0 %v1383
    %6451 = vmatpush.msra.mxu0 %v1375
    %6452 = vmatpush.msra.mxu0 %v1367
    %6453 = vmatpush.msra.mxu0 %v1359
    %6454 = vmatpush.msra.mxu0 %v1351
    %6455 = vmatpush.msra.mxu0 %v1343
    %6456 = vmatpush.msra.mxu0 %v1335
    %6457 = vmatpush.msra.mxu0 %v1327
    %6458 = vmatpush.msra.mxu0 %v1319
    %6459 = vmatpush.msra.mxu0 %v1311
    %6460 = vmatpush.msra.mxu0 %v1303
    %6461 = vmatmul.f32.gmra.mxu0 %v5967
    %v6462 = vpop.f32.mrf.mxu0
    %v6463 = vadd.f32 %v6443, %v6462
    %6464 = vdwg.mxu0
    %6465 = vmatpush.msra.mxu0 %v1168
    %6466 = vmatpush.msra.mxu0 %v1160
    %6467 = vmatpush.msra.mxu0 %v1152
    %6468 = vmatpush.msra.mxu0 %v1144
    %6469 = vmatpush.msra.mxu0 %v1136
    %6470 = vmatpush.msra.mxu0 %v1128
    %6471 = vmatpush.msra.mxu0 %v1120
    %6472 = vmatpush.msra.mxu0 %v1112
    %6473 = vmatpush.msra.mxu0 %v1104
    %6474 = vmatpush.msra.mxu0 %v1096
    %6475 = vmatpush.msra.mxu0 %v1088
    %6476 = vmatpush.msra.mxu0 %v1080
    %6477 = vmatpush.msra.mxu0 %v1072
    %6478 = vmatpush.msra.mxu0 %v1064
    %6479 = vmatpush.msra.mxu0 %v1056
    %6480 = vmatpush.msra.mxu0 %v1048
    %6481 = vmatmul.f32.gmra.mxu0 %v6344
    %v6482 = vpop.f32.mrf.mxu0
    %v6483 = vadd.f32 %v463, %v6482
    %6484 = vdwg.mxu0
    %6485 = vmatpush.msra.mxu0 %v1296
    %6486 = vmatpush.msra.mxu0 %v1288
    %6487 = vmatpush.msra.mxu0 %v1280
    %6488 = vmatpush.msra.mxu0 %v1272
    %6489 = vmatpush.msra.mxu0 %v1264
    %6490 = vmatpush.msra.mxu0 %v1256
    %6491 = vmatpush.msra.mxu0 %v1248
    %6492 = vmatpush.msra.mxu0 %v1240
    %6493 = vmatpush.msra.mxu0 %v1232
    %6494 = vmatpush.msra.mxu0 %v1224
    %6495 = vmatpush.msra.mxu0 %v1216
    %6496 = vmatpush.msra.mxu0 %v1208
    %6497 = vmatpush.msra.mxu0 %v1200
    %6498 = vmatpush.msra.mxu0 %v1192
    %6499 = vmatpush.msra.mxu0 %v1184
    %6500 = vmatpush.msra.mxu0 %v1176
    %6501 = vmatmul.f32.gmra.mxu0 %v5966
    %v6502 = vpop.f32.mrf.mxu0
    %v6503 = vadd.f32 %v6483, %v6502
    %6504 = vdwg.mxu0
    %6505 = vmatpush.msra.mxu0 %v1424
    %6506 = vmatpush.msra.mxu0 %v1416
    %6507 = vmatpush.msra.mxu0 %v1408
    %6508 = vmatpush.msra.mxu0 %v1400
    %6509 = vmatpush.msra.mxu0 %v1392
    %6510 = vmatpush.msra.mxu0 %v1384
    %6511 = vmatpush.msra.mxu0 %v1376
    %6512 = vmatpush.msra.mxu0 %v1368
    %6513 = vmatpush.msra.mxu0 %v1360
    %6514 = vmatpush.msra.mxu0 %v1352
    %6515 = vmatpush.msra.mxu0 %v1344
    %6516 = vmatpush.msra.mxu0 %v1336
    %6517 = vmatpush.msra.mxu0 %v1328
    %6518 = vmatpush.msra.mxu0 %v1320
    %6519 = vmatpush.msra.mxu0 %v1312
    %6520 = vmatpush.msra.mxu0 %v1304
    %6521 = vmatmul.f32.gmra.mxu0 %v5967
    %v6522 = vpop.f32.mrf.mxu0
    %v6523 = vadd.f32 %v6503, %v6522
    %6524 = vdwg.mxu0
    %6525 = vmatpush.msra.mxu0 %v1169
    %6526 = vmatpush.msra.mxu0 %v1161
    %6527 = vmatpush.msra.mxu0 %v1153
    %6528 = vmatpush.msra.mxu0 %v1145
    %6529 = vmatpush.msra.mxu0 %v1137
    %6530 = vmatpush.msra.mxu0 %v1129
    %6531 = vmatpush.msra.mxu0 %v1121
    %6532 = vmatpush.msra.mxu0 %v1113
    %6533 = vmatpush.msra.mxu0 %v1105
    %6534 = vmatpush.msra.mxu0 %v1097
    %6535 = vmatpush.msra.mxu0 %v1089
    %6536 = vmatpush.msra.mxu0 %v1081
    %6537 = vmatpush.msra.mxu0 %v1073
    %6538 = vmatpush.msra.mxu0 %v1065
    %6539 = vmatpush.msra.mxu0 %v1057
    %6540 = vmatpush.msra.mxu0 %v1049
    %6541 = vmatmul.f32.gmra.mxu0 %v6344
    %v6542 = vpop.f32.mrf.mxu0
    %v6543 = vadd.f32 %v464, %v6542
    %6544 = vdwg.mxu0
    %6545 = vmatpush.msra.mxu0 %v1297
    %6546 = vmatpush.msra.mxu0 %v1289
    %6547 = vmatpush.msra.mxu0 %v1281
    %6548 = vmatpush.msra.mxu0 %v1273
    %6549 = vmatpush.msra.mxu0 %v1265
    %6550 = vmatpush.msra.mxu0 %v1257
    %6551 = vmatpush.msra.mxu0 %v1249
    %6552 = vmatpush.msra.mxu0 %v1241
    %6553 = vmatpush.msra.mxu0 %v1233
    %6554 = vmatpush.msra.mxu0 %v1225
    %6555 = vmatpush.msra.mxu0 %v1217
    %6556 = vmatpush.msra.mxu0 %v1209
    %6557 = vmatpush.msra.mxu0 %v1201
    %6558 = vmatpush.msra.mxu0 %v1193
    %6559 = vmatpush.msra.mxu0 %v1185
    %6560 = vmatpush.msra.mxu0 %v1177
    %6561 = vmatmul.f32.gmra.mxu0 %v5966
    %v6562 = vpop.f32.mrf.mxu0
    %v6563 = vadd.f32 %v6543, %v6562
    %6564 = vdwg.mxu0
    %6565 = vmatpush.msra.mxu0 %v1425
    %6566 = vmatpush.msra.mxu0 %v1417
    %6567 = vmatpush.msra.mxu0 %v1409
    %6568 = vmatpush.msra.mxu0 %v1401
    %6569 = vmatpush.msra.mxu0 %v1393
    %6570 = vmatpush.msra.mxu0 %v1385
    %6571 = vmatpush.msra.mxu0 %v1377
    %6572 = vmatpush.msra.mxu0 %v1369
    %6573 = vmatpush.msra.mxu0 %v1361
    %6574 = vmatpush.msra.mxu0 %v1353
    %6575 = vmatpush.msra.mxu0 %v1345
    %6576 = vmatpush.msra.mxu0 %v1337
    %6577 = vmatpush.msra.mxu0 %v1329
    %6578 = vmatpush.msra.mxu0 %v1321
    %6579 = vmatpush.msra.mxu0 %v1313
    %6580 = vmatpush.msra.mxu0 %v1305
    %6581 = vmatmul.f32.gmra.mxu0 %v5967
    %v6582 = vpop.f32.mrf.mxu0
    %v6583 = vadd.f32 %v6563, %v6582
    %6584 = vdwg.mxu0
    %6585 = vmatpush.msra.mxu0 %v1170
    %6586 = vmatpush.msra.mxu0 %v1162
    %6587 = vmatpush.msra.mxu0 %v1154
    %6588 = vmatpush.msra.mxu0 %v1146
    %6589 = vmatpush.msra.mxu0 %v1138
    %6590 = vmatpush.msra.mxu0 %v1130
    %6591 = vmatpush.msra.mxu0 %v1122
    %6592 = vmatpush.msra.mxu0 %v1114
    %6593 = vmatpush.msra.mxu0 %v1106
    %6594 = vmatpush.msra.mxu0 %v1098
    %6595 = vmatpush.msra.mxu0 %v1090
    %6596 = vmatpush.msra.mxu0 %v1082
    %6597 = vmatpush.msra.mxu0 %v1074
    %6598 = vmatpush.msra.mxu0 %v1066
    %6599 = vmatpush.msra.mxu0 %v1058
    %6600 = vmatpush.msra.mxu0 %v1050
    %6601 = vmatmul.f32.gmra.mxu0 %v6344
    %v6602 = vpop.f32.mrf.mxu0
    %v6603 = vadd.f32 %v465, %v6602
    %6604 = vdwg.mxu0
    %6605 = vmatpush.msra.mxu0 %v1298
    %6606 = vmatpush.msra.mxu0 %v1290
    %6607 = vmatpush.msra.mxu0 %v1282
    %6608 = vmatpush.msra.mxu0 %v1274
    %6609 = vmatpush.msra.mxu0 %v1266
    %6610 = vmatpush.msra.mxu0 %v1258
    %6611 = vmatpush.msra.mxu0 %v1250
    %6612 = vmatpush.msra.mxu0 %v1242
    %6613 = vmatpush.msra.mxu0 %v1234
    %6614 = vmatpush.msra.mxu0 %v1226
    %6615 = vmatpush.msra.mxu0 %v1218
    %6616 = vmatpush.msra.mxu0 %v1210
    %6617 = vmatpush.msra.mxu0 %v1202
    %6618 = vmatpush.msra.mxu0 %v1194
    %6619 = vmatpush.msra.mxu0 %v1186
    %6620 = vmatpush.msra.mxu0 %v1178
    %6621 = vmatmul.f32.gmra.mxu0 %v5966
    %v6622 = vpop.f32.mrf.mxu0
    %v6623 = vadd.f32 %v6603, %v6622
    %6624 = vdwg.mxu0
    %6625 = vmatpush.msra.mxu0 %v1426
    %6626 = vmatpush.msra.mxu0 %v1418
    %6627 = vmatpush.msra.mxu0 %v1410
    %6628 = vmatpush.msra.mxu0 %v1402
    %6629 = vmatpush.msra.mxu0 %v1394
    %6630 = vmatpush.msra.mxu0 %v1386
    %6631 = vmatpush.msra.mxu0 %v1378
    %6632 = vmatpush.msra.mxu0 %v1370
    %6633 = vmatpush.msra.mxu0 %v1362
    %6634 = vmatpush.msra.mxu0 %v1354
    %6635 = vmatpush.msra.mxu0 %v1346
    %6636 = vmatpush.msra.mxu0 %v1338
    %6637 = vmatpush.msra.mxu0 %v1330
    %6638 = vmatpush.msra.mxu0 %v1322
    %6639 = vmatpush.msra.mxu0 %v1314
    %6640 = vmatpush.msra.mxu0 %v1306
    %6641 = vmatmul.f32.gmra.mxu0 %v5967
    %v6642 = vpop.f32.mrf.mxu0
    %v6643 = vadd.f32 %v6623, %v6642
    %6644 = vdwg.mxu0
    %6645 = vmatpush.msra.mxu0 %v1171
    %6646 = vmatpush.msra.mxu0 %v1163
    %6647 = vmatpush.msra.mxu0 %v1155
    %6648 = vmatpush.msra.mxu0 %v1147
    %6649 = vmatpush.msra.mxu0 %v1139
    %6650 = vmatpush.msra.mxu0 %v1131
    %6651 = vmatpush.msra.mxu0 %v1123
    %6652 = vmatpush.msra.mxu0 %v1115
    %6653 = vmatpush.msra.mxu0 %v1107
    %6654 = vmatpush.msra.mxu0 %v1099
    %6655 = vmatpush.msra.mxu0 %v1091
    %6656 = vmatpush.msra.mxu0 %v1083
    %6657 = vmatpush.msra.mxu0 %v1075
    %6658 = vmatpush.msra.mxu0 %v1067
    %6659 = vmatpush.msra.mxu0 %v1059
    %6660 = vmatpush.msra.mxu0 %v1051
    %6661 = vmatmul.f32.gmra.mxu0 %v6344
    %v6662 = vpop.f32.mrf.mxu0
    %v6663 = vadd.f32 %v466, %v6662
    %6664 = vdwg.mxu0
    %6665 = vmatpush.msra.mxu0 %v1299
    %6666 = vmatpush.msra.mxu0 %v1291
    %6667 = vmatpush.msra.mxu0 %v1283
    %6668 = vmatpush.msra.mxu0 %v1275
    %6669 = vmatpush.msra.mxu0 %v1267
    %6670 = vmatpush.msra.mxu0 %v1259
    %6671 = vmatpush.msra.mxu0 %v1251
    %6672 = vmatpush.msra.mxu0 %v1243
    %6673 = vmatpush.msra.mxu0 %v1235
    %6674 = vmatpush.msra.mxu0 %v1227
    %6675 = vmatpush.msra.mxu0 %v1219
    %6676 = vmatpush.msra.mxu0 %v1211
    %6677 = vmatpush.msra.mxu0 %v1203
    %6678 = vmatpush.msra.mxu0 %v1195
    %6679 = vmatpush.msra.mxu0 %v1187
    %6680 = vmatpush.msra.mxu0 %v1179
    %6681 = vmatmul.f32.gmra.mxu0 %v5966
    %v6682 = vpop.f32.mrf.mxu0
    %v6683 = vadd.f32 %v6663, %v6682
    %6684 = vdwg.mxu0
    %6685 = vmatpush.msra.mxu0 %v1427
    %6686 = vmatpush.msra.mxu0 %v1419
    %6687 = vmatpush.msra.mxu0 %v1411
    %6688 = vmatpush.msra.mxu0 %v1403
    %6689 = vmatpush.msra.mxu0 %v1395
    %6690 = vmatpush.msra.mxu0 %v1387
    %6691 = vmatpush.msra.mxu0 %v1379
    %6692 = vmatpush.msra.mxu0 %v1371
    %6693 = vmatpush.msra.mxu0 %v1363
    %6694 = vmatpush.msra.mxu0 %v1355
    %6695 = vmatpush.msra.mxu0 %v1347
    %6696 = vmatpush.msra.mxu0 %v1339
    %6697 = vmatpush.msra.mxu0 %v1331
    %6698 = vmatpush.msra.mxu0 %v1323
    %6699 = vmatpush.msra.mxu0 %v1315
    %6700 = vmatpush.msra.mxu0 %v1307
    %6701 = vmatmul.f32.gmra.mxu0 %v5967
    %v6702 = vpop.f32.mrf.mxu0
    %v6703 = vadd.f32 %v6683, %v6702
    %6704 = vdwg.mxu0
    %6705 = vmatpush.msra.mxu0 %v1172
    %6706 = vmatpush.msra.mxu0 %v1164
    %6707 = vmatpush.msra.mxu0 %v1156
    %6708 = vmatpush.msra.mxu0 %v1148
    %6709 = vmatpush.msra.mxu0 %v1140
    %6710 = vmatpush.msra.mxu0 %v1132
    %6711 = vmatpush.msra.mxu0 %v1124
    %6712 = vmatpush.msra.mxu0 %v1116
    %6713 = vmatpush.msra.mxu0 %v1108
    %6714 = vmatpush.msra.mxu0 %v1100
    %6715 = vmatpush.msra.mxu0 %v1092
    %6716 = vmatpush.msra.mxu0 %v1084
    %6717 = vmatpush.msra.mxu0 %v1076
    %6718 = vmatpush.msra.mxu0 %v1068
    %6719 = vmatpush.msra.mxu0 %v1060
    %6720 = vmatpush.msra.mxu0 %v1052
    %6721 = vmatmul.f32.gmra.mxu0 %v6344
    %v6722 = vpop.f32.mrf.mxu0
    %v6723 = vadd.f32 %v467, %v6722
    %6724 = vdwg.mxu0
    %6725 = vmatpush.msra.mxu0 %v1300
    %6726 = vmatpush.msra.mxu0 %v1292
    %6727 = vmatpush.msra.mxu0 %v1284
    %6728 = vmatpush.msra.mxu0 %v1276
    %6729 = vmatpush.msra.mxu0 %v1268
    %6730 = vmatpush.msra.mxu0 %v1260
    %6731 = vmatpush.msra.mxu0 %v1252
    %6732 = vmatpush.msra.mxu0 %v1244
    %6733 = vmatpush.msra.mxu0 %v1236
    %6734 = vmatpush.msra.mxu0 %v1228
    %6735 = vmatpush.msra.mxu0 %v1220
    %6736 = vmatpush.msra.mxu0 %v1212
    %6737 = vmatpush.msra.mxu0 %v1204
    %6738 = vmatpush.msra.mxu0 %v1196
    %6739 = vmatpush.msra.mxu0 %v1188
    %6740 = vmatpush.msra.mxu0 %v1180
    %6741 = vmatmul.f32.gmra.mxu0 %v5966
    %v6742 = vpop.f32.mrf.mxu0
    %v6743 = vadd.f32 %v6723, %v6742
    %6744 = vdwg.mxu0
    %6745 = vmatpush.msra.mxu0 %v1428
    %6746 = vmatpush.msra.mxu0 %v1420
    %6747 = vmatpush.msra.mxu0 %v1412
    %6748 = vmatpush.msra.mxu0 %v1404
    %6749 = vmatpush.msra.mxu0 %v1396
    %6750 = vmatpush.msra.mxu0 %v1388
    %6751 = vmatpush.msra.mxu0 %v1380
    %6752 = vmatpush.msra.mxu0 %v1372
    %6753 = vmatpush.msra.mxu0 %v1364
    %6754 = vmatpush.msra.mxu0 %v1356
    %6755 = vmatpush.msra.mxu0 %v1348
    %6756 = vmatpush.msra.mxu0 %v1340
    %6757 = vmatpush.msra.mxu0 %v1332
    %6758 = vmatpush.msra.mxu0 %v1324
    %6759 = vmatpush.msra.mxu0 %v1316
    %6760 = vmatpush.msra.mxu0 %v1308
    %6761 = vmatmul.f32.gmra.mxu0 %v5967
    %v6762 = vpop.f32.mrf.mxu0
    %v6763 = vadd.f32 %v6743, %v6762
    %6764 = vdwg.mxu0
    %6765 = vmatpush.msra.mxu0 %v1173
    %6766 = vmatpush.msra.mxu0 %v1165
    %6767 = vmatpush.msra.mxu0 %v1157
    %6768 = vmatpush.msra.mxu0 %v1149
    %6769 = vmatpush.msra.mxu0 %v1141
    %6770 = vmatpush.msra.mxu0 %v1133
    %6771 = vmatpush.msra.mxu0 %v1125
    %6772 = vmatpush.msra.mxu0 %v1117
    %6773 = vmatpush.msra.mxu0 %v1109
    %6774 = vmatpush.msra.mxu0 %v1101
    %6775 = vmatpush.msra.mxu0 %v1093
    %6776 = vmatpush.msra.mxu0 %v1085
    %6777 = vmatpush.msra.mxu0 %v1077
    %6778 = vmatpush.msra.mxu0 %v1069
    %6779 = vmatpush.msra.mxu0 %v1061
    %6780 = vmatpush.msra.mxu0 %v1053
    %6781 = vmatmul.f32.gmra.mxu0 %v6344
    %v6782 = vpop.f32.mrf.mxu0
    %v6783 = vadd.f32 %v468, %v6782
    %6784 = vdwg.mxu0
    %6785 = vmatpush.msra.mxu0 %v1301
    %6786 = vmatpush.msra.mxu0 %v1293
    %6787 = vmatpush.msra.mxu0 %v1285
    %6788 = vmatpush.msra.mxu0 %v1277
    %6789 = vmatpush.msra.mxu0 %v1269
    %6790 = vmatpush.msra.mxu0 %v1261
    %6791 = vmatpush.msra.mxu0 %v1253
    %6792 = vmatpush.msra.mxu0 %v1245
    %6793 = vmatpush.msra.mxu0 %v1237
    %6794 = vmatpush.msra.mxu0 %v1229
    %6795 = vmatpush.msra.mxu0 %v1221
    %6796 = vmatpush.msra.mxu0 %v1213
    %6797 = vmatpush.msra.mxu0 %v1205
    %6798 = vmatpush.msra.mxu0 %v1197
    %6799 = vmatpush.msra.mxu0 %v1189
    %6800 = vmatpush.msra.mxu0 %v1181
    %6801 = vmatmul.f32.gmra.mxu0 %v5966
    %v6802 = vpop.f32.mrf.mxu0
    %v6803 = vadd.f32 %v6783, %v6802
    %6804 = vdwg.mxu0
    %6805 = vmatpush.msra.mxu0 %v1429
    %6806 = vmatpush.msra.mxu0 %v1421
    %6807 = vmatpush.msra.mxu0 %v1413
    %6808 = vmatpush.msra.mxu0 %v1405
    %6809 = vmatpush.msra.mxu0 %v1397
    %6810 = vmatpush.msra.mxu0 %v1389
    %6811 = vmatpush.msra.mxu0 %v1381
    %6812 = vmatpush.msra.mxu0 %v1373
    %6813 = vmatpush.msra.mxu0 %v1365
    %6814 = vmatpush.msra.mxu0 %v1357
    %6815 = vmatpush.msra.mxu0 %v1349
    %6816 = vmatpush.msra.mxu0 %v1341
    %6817 = vmatpush.msra.mxu0 %v1333
    %6818 = vmatpush.msra.mxu0 %v1325
    %6819 = vmatpush.msra.mxu0 %v1317
    %6820 = vmatpush.msra.mxu0 %v1309
    %6821 = vmatmul.f32.gmra.mxu0 %v5967
    %v6822 = vpop.f32.mrf.mxu0
    %v6823 = vadd.f32 %v6803, %v6822
    %6824 = vdwg.mxu0
    %v6825 = vxor.u32 %v6403, 2147483648
    %v6826 = vxor.u32 %v6463, 2147483648
    %v6827 = vmul.f32 %v6825, 1.442695
    %v6828 = vpow.pop %v6827
    %v6829 = vmul.f32 %v6826, 1.442695
    %v6830 = vpow.pop %v6829
    %v6831 = vadd.f32 %v6828, 1.0
    %v6832 = vadd.f32 %v6830, 1.0
    %v6833 = vrcp.pop %v6831
    %v6834 = vmul.f32 %v6831, %v6833
    %v6835 = vsub.f32 1.0, %v6834
    %v6836 = vmul.f32 %v6833, %v6835
    %v6837 = vadd.f32 %v6833, %v6836
    %vm6838 = vweird.f32 %v6831
    %vm6839 = vweird.f32 %v6833
    %vm6840 = vmor %vm6838, %vm6839
    %v6841 = vsel %vm6840, %v6833, %v6837
    %v6842 = vand.u32 2147483647, %v6831
    %vm6843 = vcmp.eq.f32.partialorder %v6842, 8.507059e+37
    %v6844 = vand.u32 %v6831, 2147483648
    %v6845 = vor.u32 1.1754944e-38, %v6844
    %v6846 = vsel %vm6843, %v6845, %v6841
    %v6847 = vmul.f32 1.0, %v6846
    %v6848 = vrcp.pop %v6832
    %v6849 = vmul.f32 %v6832, %v6848
    %v6850 = vsub.f32 1.0, %v6849
    %v6851 = vmul.f32 %v6848, %v6850
    %v6852 = vadd.f32 %v6848, %v6851
    %vm6853 = vweird.f32 %v6832
    %vm6854 = vweird.f32 %v6848
    %vm6855 = vmor %vm6853, %vm6854
    %v6856 = vsel %vm6855, %v6848, %v6852
    %v6857 = vand.u32 2147483647, %v6832
    %vm6858 = vcmp.eq.f32.partialorder %v6857, 8.507059e+37
    %v6859 = vand.u32 %v6832, 2147483648
    %v6860 = vor.u32 1.1754944e-38, %v6859
    %v6861 = vsel %vm6858, %v6860, %v6856
    %v6862 = vmul.f32 1.0, %v6861
    %v6863 = vxor.u32 %v6523, 2147483648
    %v6864 = vxor.u32 %v6583, 2147483648
    %v6865 = vmul.f32 %v6863, 1.442695
    %v6866 = vpow.pop %v6865
    %v6867 = vmul.f32 %v6864, 1.442695
    %v6868 = vpow.pop %v6867
    %v6869 = vadd.f32 %v6866, 1.0
    %v6870 = vadd.f32 %v6868, 1.0
    %v6871 = vrcp.pop %v6869
    %v6872 = vmul.f32 %v6869, %v6871
    %v6873 = vsub.f32 1.0, %v6872
    %v6874 = vmul.f32 %v6871, %v6873
    %v6875 = vadd.f32 %v6871, %v6874
    %vm6876 = vweird.f32 %v6869
    %vm6877 = vweird.f32 %v6871
    %vm6878 = vmor %vm6876, %vm6877
    %v6879 = vsel %vm6878, %v6871, %v6875
    %v6880 = vand.u32 2147483647, %v6869
    %vm6881 = vcmp.eq.f32.partialorder %v6880, 8.507059e+37
    %v6882 = vand.u32 %v6869, 2147483648
    %v6883 = vor.u32 1.1754944e-38, %v6882
    %v6884 = vsel %vm6881, %v6883, %v6879
    %v6885 = vmul.f32 1.0, %v6884
    %v6886 = vrcp.pop %v6870
    %v6887 = vmul.f32 %v6870, %v6886
    %v6888 = vsub.f32 1.0, %v6887
    %v6889 = vmul.f32 %v6886, %v6888
    %v6890 = vadd.f32 %v6886, %v6889
    %vm6891 = vweird.f32 %v6870
    %vm6892 = vweird.f32 %v6886
    %vm6893 = vmor %vm6891, %vm6892
    %v6894 = vsel %vm6893, %v6886, %v6890
    %v6895 = vand.u32 2147483647, %v6870
    %vm6896 = vcmp.eq.f32.partialorder %v6895, 8.507059e+37
    %v6897 = vand.u32 %v6870, 2147483648
    %v6898 = vor.u32 1.1754944e-38, %v6897
    %v6899 = vsel %vm6896, %v6898, %v6894
    %v6900 = vmul.f32 1.0, %v6899
    %v6901 = vtanh.pop %v6643
    %v6902 = vtanh.pop %v6703
    %v6903 = vxor.u32 %v6763, 2147483648
    %v6904 = vxor.u32 %v6823, 2147483648
    %v6905 = vmul.f32 %v6903, 1.442695
    %v6906 = vpow.pop %v6905
    %v6907 = vmul.f32 %v6904, 1.442695
    %v6908 = vpow.pop %v6907
    %v6909 = vadd.f32 %v6906, 1.0
    %v6910 = vadd.f32 %v6908, 1.0
    %v6911 = vrcp.pop %v6909
    %v6912 = vmul.f32 %v6909, %v6911
    %v6913 = vsub.f32 1.0, %v6912
    %v6914 = vmul.f32 %v6911, %v6913
    %v6915 = vadd.f32 %v6911, %v6914
    %vm6916 = vweird.f32 %v6909
    %vm6917 = vweird.f32 %v6911
    %vm6918 = vmor %vm6916, %vm6917
    %v6919 = vsel %vm6918, %v6911, %v6915
    %v6920 = vand.u32 2147483647, %v6909
    %vm6921 = vcmp.eq.f32.partialorder %v6920, 8.507059e+37
    %v6922 = vand.u32 %v6909, 2147483648
    %v6923 = vor.u32 1.1754944e-38, %v6922
    %v6924 = vsel %vm6921, %v6923, %v6919
    %v6925 = vmul.f32 1.0, %v6924
    %v6926 = vrcp.pop %v6910
    %v6927 = vmul.f32 %v6910, %v6926
    %v6928 = vsub.f32 1.0, %v6927
    %v6929 = vmul.f32 %v6926, %v6928
    %v6930 = vadd.f32 %v6926, %v6929
    %vm6931 = vweird.f32 %v6910
    %vm6932 = vweird.f32 %v6926
    %vm6933 = vmor %vm6931, %vm6932
    %v6934 = vsel %vm6933, %v6926, %v6930
    %v6935 = vand.u32 2147483647, %v6910
    %vm6936 = vcmp.eq.f32.partialorder %v6935, 8.507059e+37
    %v6937 = vand.u32 %v6910, 2147483648
    %v6938 = vor.u32 1.1754944e-38, %v6937
    %v6939 = vsel %vm6936, %v6938, %v6934
    %v6940 = vmul.f32 1.0, %v6939
    %v6941 = vmul.f32 %v6885, %v5962
    %v6942 = vmul.f32 %v6900, %v5963
    %v6943 = vmul.f32 %v6847, %v6901
    %v6944 = vmul.f32 %v6862, %v6902
    %v6945 = vadd.f32 %v6941, %v6943
    %v6946 = vadd.f32 %v6942, %v6944
    %v6947 = vtanh.pop %v6945
    %v6948 = vtanh.pop %v6946
    %v6949 = vmul.f32 %v6925, %v6947
    %v6950 = vmul.f32 %v6940, %v6948
    %s6951 = smul.u32 6, 4
    %s6952 = smul.addr %s6951, 8
    %s6953 = scalar_lea.vmem [#allocation2], %s6952
    %v6954 = vld [vmem:[%s6953] sm:$0xff]
    %v6955 = vld [vmem:[%s6953 + $0x8] sm:$0xff]
    %v6956 = vld [vmem:[%s6953 + $0x10] sm:$0xff]
    %v6957 = vld [vmem:[%s6953 + $0x18] sm:$0xff]
    %6958 = vmatpush.msra.mxu0 %v544
    %6959 = vmatpush.msra.mxu0 %v540
    %6960 = vmatpush.msra.mxu0 %v536
    %6961 = vmatpush.msra.mxu0 %v532
    %6962 = vmatpush.msra.mxu0 %v528
    %6963 = vmatpush.msra.mxu0 %v524
    %6964 = vmatpush.msra.mxu0 %v520
    %6965 = vmatpush.msra.mxu0 %v516
    %6966 = vmatpush.msra.mxu0 %v512
    %6967 = vmatpush.msra.mxu0 %v508
    %6968 = vmatpush.msra.mxu0 %v504
    %6969 = vmatpush.msra.mxu0 %v500
    %6970 = vmatpush.msra.mxu0 %v496
    %6971 = vmatpush.msra.mxu0 %v492
    %6972 = vmatpush.msra.mxu0 %v488
    %6973 = vmatpush.msra.mxu0 %v484
    %6974 = vmatmul.f32.gmra.mxu0 %v6121
    %v6975 = vpop.f32.mrf.mxu0
    %v6976 = vadd.f32 0.0, %v6975
    %6977 = vdwg.mxu0
    %6978 = vmatpush.msra.mxu0 %v545
    %6979 = vmatpush.msra.mxu0 %v541
    %6980 = vmatpush.msra.mxu0 %v537
    %6981 = vmatpush.msra.mxu0 %v533
    %6982 = vmatpush.msra.mxu0 %v529
    %6983 = vmatpush.msra.mxu0 %v525
    %6984 = vmatpush.msra.mxu0 %v521
    %6985 = vmatpush.msra.mxu0 %v517
    %6986 = vmatpush.msra.mxu0 %v513
    %6987 = vmatpush.msra.mxu0 %v509
    %6988 = vmatpush.msra.mxu0 %v505
    %6989 = vmatpush.msra.mxu0 %v501
    %6990 = vmatpush.msra.mxu0 %v497
    %6991 = vmatpush.msra.mxu0 %v493
    %6992 = vmatpush.msra.mxu0 %v489
    %6993 = vmatpush.msra.mxu0 %v485
    %6994 = vmatmul.f32.gmra.mxu0 %v6121
    %v6995 = vpop.f32.mrf.mxu0
    %v6996 = vadd.f32 0.0, %v6995
    %6997 = vdwg.mxu0
    %6998 = vmatpush.msra.mxu0 %v546
    %6999 = vmatpush.msra.mxu0 %v542
    %7000 = vmatpush.msra.mxu0 %v538
    %7001 = vmatpush.msra.mxu0 %v534
    %7002 = vmatpush.msra.mxu0 %v530
    %7003 = vmatpush.msra.mxu0 %v526
    %7004 = vmatpush.msra.mxu0 %v522
    %7005 = vmatpush.msra.mxu0 %v518
    %7006 = vmatpush.msra.mxu0 %v514
    %7007 = vmatpush.msra.mxu0 %v510
    %7008 = vmatpush.msra.mxu0 %v506
    %7009 = vmatpush.msra.mxu0 %v502
    %7010 = vmatpush.msra.mxu0 %v498
    %7011 = vmatpush.msra.mxu0 %v494
    %7012 = vmatpush.msra.mxu0 %v490
    %7013 = vmatpush.msra.mxu0 %v486
    %7014 = vmatmul.f32.gmra.mxu0 %v6121
    %v7015 = vpop.f32.mrf.mxu0
    %v7016 = vadd.f32 0.0, %v7015
    %7017 = vdwg.mxu0
    %7018 = vmatpush.msra.mxu0 %v547
    %7019 = vmatpush.msra.mxu0 %v543
    %7020 = vmatpush.msra.mxu0 %v539
    %7021 = vmatpush.msra.mxu0 %v535
    %7022 = vmatpush.msra.mxu0 %v531
    %7023 = vmatpush.msra.mxu0 %v527
    %7024 = vmatpush.msra.mxu0 %v523
    %7025 = vmatpush.msra.mxu0 %v519
    %7026 = vmatpush.msra.mxu0 %v515
    %7027 = vmatpush.msra.mxu0 %v511
    %7028 = vmatpush.msra.mxu0 %v507
    %7029 = vmatpush.msra.mxu0 %v503
    %7030 = vmatpush.msra.mxu0 %v499
    %7031 = vmatpush.msra.mxu0 %v495
    %7032 = vmatpush.msra.mxu0 %v491
    %7033 = vmatpush.msra.mxu0 %v487
    %7034 = vmatmul.f32.gmra.mxu0 %v6121
    %v7035 = vpop.f32.mrf.mxu0
    %v7036 = vadd.f32 0.0, %v7035
    %7037 = vdwg.mxu0
    %v7038 = vadd.f32 %v6954, %v6976
    %v7039 = vadd.f32 %v6955, %v6996
    %v7040 = vadd.f32 %v6956, %v7016
    %v7041 = vadd.f32 %v6957, %v7036
    %v7042 = vxor.u32 %v7038, 2147483648
    %v7043 = vmul.f32 %v7042, 1.442695
    %v7044 = vpow.pop %v7043
    %v7045 = vadd.f32 %v7044, 1.0
    %v7046 = vrcp.pop %v7045
    %v7047 = vmul.f32 %v7045, %v7046
    %v7048 = vsub.f32 1.0, %v7047
    %v7049 = vmul.f32 %v7046, %v7048
    %v7050 = vadd.f32 %v7046, %v7049
    %vm7051 = vweird.f32 %v7045
    %vm7052 = vweird.f32 %v7046
    %vm7053 = vmor %vm7051, %vm7052
    %v7054 = vsel %vm7053, %v7046, %v7050
    %v7055 = vand.u32 2147483647, %v7045
    %vm7056 = vcmp.eq.f32.partialorder %v7055, 8.507059e+37
    %v7057 = vand.u32 %v7045, 2147483648
    %v7058 = vor.u32 1.1754944e-38, %v7057
    %v7059 = vsel %vm7056, %v7058, %v7054
    %v7060 = vmul.f32 1.0, %v7059
    %v7061 = vxor.u32 %v7039, 2147483648
    %v7062 = vmul.f32 %v7061, 1.442695
    %v7063 = vpow.pop %v7062
    %v7064 = vadd.f32 %v7063, 1.0
    %v7065 = vrcp.pop %v7064
    %v7066 = vmul.f32 %v7064, %v7065
    %v7067 = vsub.f32 1.0, %v7066
    %v7068 = vmul.f32 %v7065, %v7067
    %v7069 = vadd.f32 %v7065, %v7068
    %vm7070 = vweird.f32 %v7064
    %vm7071 = vweird.f32 %v7065
    %vm7072 = vmor %vm7070, %vm7071
    %v7073 = vsel %vm7072, %v7065, %v7069
    %v7074 = vand.u32 2147483647, %v7064
    %vm7075 = vcmp.eq.f32.partialorder %v7074, 8.507059e+37
    %v7076 = vand.u32 %v7064, 2147483648
    %v7077 = vor.u32 1.1754944e-38, %v7076
    %v7078 = vsel %vm7075, %v7077, %v7073
    %v7079 = vmul.f32 1.0, %v7078
    %v7080 = vtanh.pop %v7040
    %v7081 = vxor.u32 %v7041, 2147483648
    %v7082 = vmul.f32 %v7081, 1.442695
    %v7083 = vpow.pop %v7082
    %v7084 = vadd.f32 %v7083, 1.0
    %v7085 = vrcp.pop %v7084
    %v7086 = vmul.f32 %v7084, %v7085
    %v7087 = vsub.f32 1.0, %v7086
    %v7088 = vmul.f32 %v7085, %v7087
    %v7089 = vadd.f32 %v7085, %v7088
    %vm7090 = vweird.f32 %v7084
    %vm7091 = vweird.f32 %v7085
    %vm7092 = vmor %vm7090, %vm7091
    %v7093 = vsel %vm7092, %v7085, %v7089
    %v7094 = vand.u32 2147483647, %v7084
    %vm7095 = vcmp.eq.f32.partialorder %v7094, 8.507059e+37
    %v7096 = vand.u32 %v7084, 2147483648
    %v7097 = vor.u32 1.1754944e-38, %v7096
    %v7098 = vsel %vm7095, %v7097, %v7093
    %v7099 = vmul.f32 1.0, %v7098
    %v7100 = vmul.f32 %v7079, %v6119
    %v7101 = vmul.f32 %v7060, %v7080
    %v7102 = vadd.f32 %v7100, %v7101
    %v7103 = vtanh.pop %v7102
    %v7104 = vmul.f32 %v7099, %v7103
    %7105 = vmatpush.msra.mxu0 %v755
    %7106 = vmatpush.msra.mxu0 %v751
    %7107 = vmatpush.msra.mxu0 %v747
    %7108 = vmatpush.msra.mxu0 %v743
    %7109 = vmatpush.msra.mxu0 %v739
    %7110 = vmatpush.msra.mxu0 %v735
    %7111 = vmatpush.msra.mxu0 %v731
    %7112 = vmatpush.msra.mxu0 %v727
    %7113 = vmatpush.msra.mxu0 %v723
    %7114 = vmatpush.msra.mxu0 %v719
    %7115 = vmatpush.msra.mxu0 %v715
    %7116 = vmatpush.msra.mxu0 %v711
    %7117 = vmatpush.msra.mxu0 %v707
    %7118 = vmatpush.msra.mxu0 %v703
    %7119 = vmatpush.msra.mxu0 %v699
    %7120 = vmatpush.msra.mxu0 %v695
    %7121 = vmatmul.f32.gmra.mxu0 %v7104
    %v7122 = vpop.f32.mrf.mxu0
    %v7123 = vadd.f32 %v451, %v7122
    %7124 = vdwg.mxu0
    %7125 = vmatpush.msra.mxu0 %v819
    %7126 = vmatpush.msra.mxu0 %v815
    %7127 = vmatpush.msra.mxu0 %v811
    %7128 = vmatpush.msra.mxu0 %v807
    %7129 = vmatpush.msra.mxu0 %v803
    %7130 = vmatpush.msra.mxu0 %v799
    %7131 = vmatpush.msra.mxu0 %v795
    %7132 = vmatpush.msra.mxu0 %v791
    %7133 = vmatpush.msra.mxu0 %v787
    %7134 = vmatpush.msra.mxu0 %v783
    %7135 = vmatpush.msra.mxu0 %v779
    %7136 = vmatpush.msra.mxu0 %v775
    %7137 = vmatpush.msra.mxu0 %v771
    %7138 = vmatpush.msra.mxu0 %v767
    %7139 = vmatpush.msra.mxu0 %v763
    %7140 = vmatpush.msra.mxu0 %v759
    %7141 = vmatmul.f32.gmra.mxu0 %v6344
    %v7142 = vpop.f32.mrf.mxu0
    %v7143 = vadd.f32 %v7123, %v7142
    %7144 = vdwg.mxu0
    %7145 = vmatpush.msra.mxu0 %v756
    %7146 = vmatpush.msra.mxu0 %v752
    %7147 = vmatpush.msra.mxu0 %v748
    %7148 = vmatpush.msra.mxu0 %v744
    %7149 = vmatpush.msra.mxu0 %v740
    %7150 = vmatpush.msra.mxu0 %v736
    %7151 = vmatpush.msra.mxu0 %v732
    %7152 = vmatpush.msra.mxu0 %v728
    %7153 = vmatpush.msra.mxu0 %v724
    %7154 = vmatpush.msra.mxu0 %v720
    %7155 = vmatpush.msra.mxu0 %v716
    %7156 = vmatpush.msra.mxu0 %v712
    %7157 = vmatpush.msra.mxu0 %v708
    %7158 = vmatpush.msra.mxu0 %v704
    %7159 = vmatpush.msra.mxu0 %v700
    %7160 = vmatpush.msra.mxu0 %v696
    %7161 = vmatmul.f32.gmra.mxu0 %v7104
    %v7162 = vpop.f32.mrf.mxu0
    %v7163 = vadd.f32 %v452, %v7162
    %7164 = vdwg.mxu0
    %7165 = vmatpush.msra.mxu0 %v820
    %7166 = vmatpush.msra.mxu0 %v816
    %7167 = vmatpush.msra.mxu0 %v812
    %7168 = vmatpush.msra.mxu0 %v808
    %7169 = vmatpush.msra.mxu0 %v804
    %7170 = vmatpush.msra.mxu0 %v800
    %7171 = vmatpush.msra.mxu0 %v796
    %7172 = vmatpush.msra.mxu0 %v792
    %7173 = vmatpush.msra.mxu0 %v788
    %7174 = vmatpush.msra.mxu0 %v784
    %7175 = vmatpush.msra.mxu0 %v780
    %7176 = vmatpush.msra.mxu0 %v776
    %7177 = vmatpush.msra.mxu0 %v772
    %7178 = vmatpush.msra.mxu0 %v768
    %7179 = vmatpush.msra.mxu0 %v764
    %7180 = vmatpush.msra.mxu0 %v760
    %7181 = vmatmul.f32.gmra.mxu0 %v6344
    %v7182 = vpop.f32.mrf.mxu0
    %v7183 = vadd.f32 %v7163, %v7182
    %7184 = vdwg.mxu0
    %7185 = vmatpush.msra.mxu0 %v757
    %7186 = vmatpush.msra.mxu0 %v753
    %7187 = vmatpush.msra.mxu0 %v749
    %7188 = vmatpush.msra.mxu0 %v745
    %7189 = vmatpush.msra.mxu0 %v741
    %7190 = vmatpush.msra.mxu0 %v737
    %7191 = vmatpush.msra.mxu0 %v733
    %7192 = vmatpush.msra.mxu0 %v729
    %7193 = vmatpush.msra.mxu0 %v725
    %7194 = vmatpush.msra.mxu0 %v721
    %7195 = vmatpush.msra.mxu0 %v717
    %7196 = vmatpush.msra.mxu0 %v713
    %7197 = vmatpush.msra.mxu0 %v709
    %7198 = vmatpush.msra.mxu0 %v705
    %7199 = vmatpush.msra.mxu0 %v701
    %7200 = vmatpush.msra.mxu0 %v697
    %7201 = vmatmul.f32.gmra.mxu0 %v7104
    %v7202 = vpop.f32.mrf.mxu0
    %v7203 = vadd.f32 %v453, %v7202
    %7204 = vdwg.mxu0
    %7205 = vmatpush.msra.mxu0 %v821
    %7206 = vmatpush.msra.mxu0 %v817
    %7207 = vmatpush.msra.mxu0 %v813
    %7208 = vmatpush.msra.mxu0 %v809
    %7209 = vmatpush.msra.mxu0 %v805
    %7210 = vmatpush.msra.mxu0 %v801
    %7211 = vmatpush.msra.mxu0 %v797
    %7212 = vmatpush.msra.mxu0 %v793
    %7213 = vmatpush.msra.mxu0 %v789
    %7214 = vmatpush.msra.mxu0 %v785
    %7215 = vmatpush.msra.mxu0 %v781
    %7216 = vmatpush.msra.mxu0 %v777
    %7217 = vmatpush.msra.mxu0 %v773
    %7218 = vmatpush.msra.mxu0 %v769
    %7219 = vmatpush.msra.mxu0 %v765
    %7220 = vmatpush.msra.mxu0 %v761
    %7221 = vmatmul.f32.gmra.mxu0 %v6344
    %v7222 = vpop.f32.mrf.mxu0
    %v7223 = vadd.f32 %v7203, %v7222
    %7224 = vdwg.mxu0
    %7225 = vmatpush.msra.mxu0 %v758
    %7226 = vmatpush.msra.mxu0 %v754
    %7227 = vmatpush.msra.mxu0 %v750
    %7228 = vmatpush.msra.mxu0 %v746
    %7229 = vmatpush.msra.mxu0 %v742
    %7230 = vmatpush.msra.mxu0 %v738
    %7231 = vmatpush.msra.mxu0 %v734
    %7232 = vmatpush.msra.mxu0 %v730
    %7233 = vmatpush.msra.mxu0 %v726
    %7234 = vmatpush.msra.mxu0 %v722
    %7235 = vmatpush.msra.mxu0 %v718
    %7236 = vmatpush.msra.mxu0 %v714
    %7237 = vmatpush.msra.mxu0 %v710
    %7238 = vmatpush.msra.mxu0 %v706
    %7239 = vmatpush.msra.mxu0 %v702
    %7240 = vmatpush.msra.mxu0 %v698
    %7241 = vmatmul.f32.gmra.mxu0 %v7104
    %v7242 = vpop.f32.mrf.mxu0
    %v7243 = vadd.f32 %v454, %v7242
    %7244 = vdwg.mxu0
    %7245 = vmatpush.msra.mxu0 %v822
    %7246 = vmatpush.msra.mxu0 %v818
    %7247 = vmatpush.msra.mxu0 %v814
    %7248 = vmatpush.msra.mxu0 %v810
    %7249 = vmatpush.msra.mxu0 %v806
    %7250 = vmatpush.msra.mxu0 %v802
    %7251 = vmatpush.msra.mxu0 %v798
    %7252 = vmatpush.msra.mxu0 %v794
    %7253 = vmatpush.msra.mxu0 %v790
    %7254 = vmatpush.msra.mxu0 %v786
    %7255 = vmatpush.msra.mxu0 %v782
    %7256 = vmatpush.msra.mxu0 %v778
    %7257 = vmatpush.msra.mxu0 %v774
    %7258 = vmatpush.msra.mxu0 %v770
    %7259 = vmatpush.msra.mxu0 %v766
    %7260 = vmatpush.msra.mxu0 %v762
    %7261 = vmatmul.f32.gmra.mxu0 %v6344
    %v7262 = vpop.f32.mrf.mxu0
    %v7263 = vadd.f32 %v7243, %v7262
    %7264 = vdwg.mxu0
    %v7265 = vxor.u32 %v7143, 2147483648
    %v7266 = vmul.f32 %v7265, 1.442695
    %v7267 = vpow.pop %v7266
    %v7268 = vadd.f32 %v7267, 1.0
    %v7269 = vrcp.pop %v7268
    %v7270 = vmul.f32 %v7268, %v7269
    %v7271 = vsub.f32 1.0, %v7270
    %v7272 = vmul.f32 %v7269, %v7271
    %v7273 = vadd.f32 %v7269, %v7272
    %vm7274 = vweird.f32 %v7268
    %vm7275 = vweird.f32 %v7269
    %vm7276 = vmor %vm7274, %vm7275
    %v7277 = vsel %vm7276, %v7269, %v7273
    %v7278 = vand.u32 2147483647, %v7268
    %vm7279 = vcmp.eq.f32.partialorder %v7278, 8.507059e+37
    %v7280 = vand.u32 %v7268, 2147483648
    %v7281 = vor.u32 1.1754944e-38, %v7280
    %v7282 = vsel %vm7279, %v7281, %v7277
    %v7283 = vmul.f32 1.0, %v7282
    %v7284 = vxor.u32 %v7183, 2147483648
    %v7285 = vmul.f32 %v7284, 1.442695
    %v7286 = vpow.pop %v7285
    %v7287 = vadd.f32 %v7286, 1.0
    %v7288 = vrcp.pop %v7287
    %v7289 = vmul.f32 %v7287, %v7288
    %v7290 = vsub.f32 1.0, %v7289
    %v7291 = vmul.f32 %v7288, %v7290
    %v7292 = vadd.f32 %v7288, %v7291
    %vm7293 = vweird.f32 %v7287
    %vm7294 = vweird.f32 %v7288
    %vm7295 = vmor %vm7293, %vm7294
    %v7296 = vsel %vm7295, %v7288, %v7292
    %v7297 = vand.u32 2147483647, %v7287
    %vm7298 = vcmp.eq.f32.partialorder %v7297, 8.507059e+37
    %v7299 = vand.u32 %v7287, 2147483648
    %v7300 = vor.u32 1.1754944e-38, %v7299
    %v7301 = vsel %vm7298, %v7300, %v7296
    %v7302 = vmul.f32 1.0, %v7301
    %v7303 = vtanh.pop %v7223
    %v7304 = vxor.u32 %v7263, 2147483648
    %v7305 = vmul.f32 %v7304, 1.442695
    %v7306 = vpow.pop %v7305
    %v7307 = vadd.f32 %v7306, 1.0
    %v7308 = vrcp.pop %v7307
    %v7309 = vmul.f32 %v7307, %v7308
    %v7310 = vsub.f32 1.0, %v7309
    %v7311 = vmul.f32 %v7308, %v7310
    %v7312 = vadd.f32 %v7308, %v7311
    %vm7313 = vweird.f32 %v7307
    %vm7314 = vweird.f32 %v7308
    %vm7315 = vmor %vm7313, %vm7314
    %v7316 = vsel %vm7315, %v7308, %v7312
    %v7317 = vand.u32 2147483647, %v7307
    %vm7318 = vcmp.eq.f32.partialorder %v7317, 8.507059e+37
    %v7319 = vand.u32 %v7307, 2147483648
    %v7320 = vor.u32 1.1754944e-38, %v7319
    %v7321 = vsel %vm7318, %v7320, %v7316
    %v7322 = vmul.f32 1.0, %v7321
    %v7323 = vmul.f32 %v7302, %v6342
    %v7324 = vmul.f32 %v7283, %v7303
    %v7325 = vadd.f32 %v7323, %v7324
    %v7326 = vtanh.pop %v7325
    %v7327 = vmul.f32 %v7322, %v7326
    %7328 = vmatpush.msra.mxu0 %v1166
    %7329 = vmatpush.msra.mxu0 %v1158
    %7330 = vmatpush.msra.mxu0 %v1150
    %7331 = vmatpush.msra.mxu0 %v1142
    %7332 = vmatpush.msra.mxu0 %v1134
    %7333 = vmatpush.msra.mxu0 %v1126
    %7334 = vmatpush.msra.mxu0 %v1118
    %7335 = vmatpush.msra.mxu0 %v1110
    %7336 = vmatpush.msra.mxu0 %v1102
    %7337 = vmatpush.msra.mxu0 %v1094
    %7338 = vmatpush.msra.mxu0 %v1086
    %7339 = vmatpush.msra.mxu0 %v1078
    %7340 = vmatpush.msra.mxu0 %v1070
    %7341 = vmatpush.msra.mxu0 %v1062
    %7342 = vmatpush.msra.mxu0 %v1054
    %7343 = vmatpush.msra.mxu0 %v1046
    %7344 = vmatmul.f32.gmra.mxu0 %v7327
    %v7345 = vpop.f32.mrf.mxu0
    %v7346 = vadd.f32 %v461, %v7345
    %7347 = vdwg.mxu0
    %7348 = vmatpush.msra.mxu0 %v1294
    %7349 = vmatpush.msra.mxu0 %v1286
    %7350 = vmatpush.msra.mxu0 %v1278
    %7351 = vmatpush.msra.mxu0 %v1270
    %7352 = vmatpush.msra.mxu0 %v1262
    %7353 = vmatpush.msra.mxu0 %v1254
    %7354 = vmatpush.msra.mxu0 %v1246
    %7355 = vmatpush.msra.mxu0 %v1238
    %7356 = vmatpush.msra.mxu0 %v1230
    %7357 = vmatpush.msra.mxu0 %v1222
    %7358 = vmatpush.msra.mxu0 %v1214
    %7359 = vmatpush.msra.mxu0 %v1206
    %7360 = vmatpush.msra.mxu0 %v1198
    %7361 = vmatpush.msra.mxu0 %v1190
    %7362 = vmatpush.msra.mxu0 %v1182
    %7363 = vmatpush.msra.mxu0 %v1174
    %7364 = vmatmul.f32.gmra.mxu0 %v6949
    %v7365 = vpop.f32.mrf.mxu0
    %v7366 = vadd.f32 %v7346, %v7365
    %7367 = vdwg.mxu0
    %7368 = vmatpush.msra.mxu0 %v1422
    %7369 = vmatpush.msra.mxu0 %v1414
    %7370 = vmatpush.msra.mxu0 %v1406
    %7371 = vmatpush.msra.mxu0 %v1398
    %7372 = vmatpush.msra.mxu0 %v1390
    %7373 = vmatpush.msra.mxu0 %v1382
    %7374 = vmatpush.msra.mxu0 %v1374
    %7375 = vmatpush.msra.mxu0 %v1366
    %7376 = vmatpush.msra.mxu0 %v1358
    %7377 = vmatpush.msra.mxu0 %v1350
    %7378 = vmatpush.msra.mxu0 %v1342
    %7379 = vmatpush.msra.mxu0 %v1334
    %7380 = vmatpush.msra.mxu0 %v1326
    %7381 = vmatpush.msra.mxu0 %v1318
    %7382 = vmatpush.msra.mxu0 %v1310
    %7383 = vmatpush.msra.mxu0 %v1302
    %7384 = vmatmul.f32.gmra.mxu0 %v6950
    %v7385 = vpop.f32.mrf.mxu0
    %v7386 = vadd.f32 %v7366, %v7385
    %7387 = vdwg.mxu0
    %7388 = vmatpush.msra.mxu0 %v1167
    %7389 = vmatpush.msra.mxu0 %v1159
    %7390 = vmatpush.msra.mxu0 %v1151
    %7391 = vmatpush.msra.mxu0 %v1143
    %7392 = vmatpush.msra.mxu0 %v1135
    %7393 = vmatpush.msra.mxu0 %v1127
    %7394 = vmatpush.msra.mxu0 %v1119
    %7395 = vmatpush.msra.mxu0 %v1111
    %7396 = vmatpush.msra.mxu0 %v1103
    %7397 = vmatpush.msra.mxu0 %v1095
    %7398 = vmatpush.msra.mxu0 %v1087
    %7399 = vmatpush.msra.mxu0 %v1079
    %7400 = vmatpush.msra.mxu0 %v1071
    %7401 = vmatpush.msra.mxu0 %v1063
    %7402 = vmatpush.msra.mxu0 %v1055
    %7403 = vmatpush.msra.mxu0 %v1047
    %7404 = vmatmul.f32.gmra.mxu0 %v7327
    %v7405 = vpop.f32.mrf.mxu0
    %v7406 = vadd.f32 %v462, %v7405
    %7407 = vdwg.mxu0
    %7408 = vmatpush.msra.mxu0 %v1295
    %7409 = vmatpush.msra.mxu0 %v1287
    %7410 = vmatpush.msra.mxu0 %v1279
    %7411 = vmatpush.msra.mxu0 %v1271
    %7412 = vmatpush.msra.mxu0 %v1263
    %7413 = vmatpush.msra.mxu0 %v1255
    %7414 = vmatpush.msra.mxu0 %v1247
    %7415 = vmatpush.msra.mxu0 %v1239
    %7416 = vmatpush.msra.mxu0 %v1231
    %7417 = vmatpush.msra.mxu0 %v1223
    %7418 = vmatpush.msra.mxu0 %v1215
    %7419 = vmatpush.msra.mxu0 %v1207
    %7420 = vmatpush.msra.mxu0 %v1199
    %7421 = vmatpush.msra.mxu0 %v1191
    %7422 = vmatpush.msra.mxu0 %v1183
    %7423 = vmatpush.msra.mxu0 %v1175
    %7424 = vmatmul.f32.gmra.mxu0 %v6949
    %v7425 = vpop.f32.mrf.mxu0
    %v7426 = vadd.f32 %v7406, %v7425
    %7427 = vdwg.mxu0
    %7428 = vmatpush.msra.mxu0 %v1423
    %7429 = vmatpush.msra.mxu0 %v1415
    %7430 = vmatpush.msra.mxu0 %v1407
    %7431 = vmatpush.msra.mxu0 %v1399
    %7432 = vmatpush.msra.mxu0 %v1391
    %7433 = vmatpush.msra.mxu0 %v1383
    %7434 = vmatpush.msra.mxu0 %v1375
    %7435 = vmatpush.msra.mxu0 %v1367
    %7436 = vmatpush.msra.mxu0 %v1359
    %7437 = vmatpush.msra.mxu0 %v1351
    %7438 = vmatpush.msra.mxu0 %v1343
    %7439 = vmatpush.msra.mxu0 %v1335
    %7440 = vmatpush.msra.mxu0 %v1327
    %7441 = vmatpush.msra.mxu0 %v1319
    %7442 = vmatpush.msra.mxu0 %v1311
    %7443 = vmatpush.msra.mxu0 %v1303
    %7444 = vmatmul.f32.gmra.mxu0 %v6950
    %v7445 = vpop.f32.mrf.mxu0
    %v7446 = vadd.f32 %v7426, %v7445
    %7447 = vdwg.mxu0
    %7448 = vmatpush.msra.mxu0 %v1168
    %7449 = vmatpush.msra.mxu0 %v1160
    %7450 = vmatpush.msra.mxu0 %v1152
    %7451 = vmatpush.msra.mxu0 %v1144
    %7452 = vmatpush.msra.mxu0 %v1136
    %7453 = vmatpush.msra.mxu0 %v1128
    %7454 = vmatpush.msra.mxu0 %v1120
    %7455 = vmatpush.msra.mxu0 %v1112
    %7456 = vmatpush.msra.mxu0 %v1104
    %7457 = vmatpush.msra.mxu0 %v1096
    %7458 = vmatpush.msra.mxu0 %v1088
    %7459 = vmatpush.msra.mxu0 %v1080
    %7460 = vmatpush.msra.mxu0 %v1072
    %7461 = vmatpush.msra.mxu0 %v1064
    %7462 = vmatpush.msra.mxu0 %v1056
    %7463 = vmatpush.msra.mxu0 %v1048
    %7464 = vmatmul.f32.gmra.mxu0 %v7327
    %v7465 = vpop.f32.mrf.mxu0
    %v7466 = vadd.f32 %v463, %v7465
    %7467 = vdwg.mxu0
    %7468 = vmatpush.msra.mxu0 %v1296
    %7469 = vmatpush.msra.mxu0 %v1288
    %7470 = vmatpush.msra.mxu0 %v1280
    %7471 = vmatpush.msra.mxu0 %v1272
    %7472 = vmatpush.msra.mxu0 %v1264
    %7473 = vmatpush.msra.mxu0 %v1256
    %7474 = vmatpush.msra.mxu0 %v1248
    %7475 = vmatpush.msra.mxu0 %v1240
    %7476 = vmatpush.msra.mxu0 %v1232
    %7477 = vmatpush.msra.mxu0 %v1224
    %7478 = vmatpush.msra.mxu0 %v1216
    %7479 = vmatpush.msra.mxu0 %v1208
    %7480 = vmatpush.msra.mxu0 %v1200
    %7481 = vmatpush.msra.mxu0 %v1192
    %7482 = vmatpush.msra.mxu0 %v1184
    %7483 = vmatpush.msra.mxu0 %v1176
    %7484 = vmatmul.f32.gmra.mxu0 %v6949
    %v7485 = vpop.f32.mrf.mxu0
    %v7486 = vadd.f32 %v7466, %v7485
    %7487 = vdwg.mxu0
    %7488 = vmatpush.msra.mxu0 %v1424
    %7489 = vmatpush.msra.mxu0 %v1416
    %7490 = vmatpush.msra.mxu0 %v1408
    %7491 = vmatpush.msra.mxu0 %v1400
    %7492 = vmatpush.msra.mxu0 %v1392
    %7493 = vmatpush.msra.mxu0 %v1384
    %7494 = vmatpush.msra.mxu0 %v1376
    %7495 = vmatpush.msra.mxu0 %v1368
    %7496 = vmatpush.msra.mxu0 %v1360
    %7497 = vmatpush.msra.mxu0 %v1352
    %7498 = vmatpush.msra.mxu0 %v1344
    %7499 = vmatpush.msra.mxu0 %v1336
    %7500 = vmatpush.msra.mxu0 %v1328
    %7501 = vmatpush.msra.mxu0 %v1320
    %7502 = vmatpush.msra.mxu0 %v1312
    %7503 = vmatpush.msra.mxu0 %v1304
    %7504 = vmatmul.f32.gmra.mxu0 %v6950
    %v7505 = vpop.f32.mrf.mxu0
    %v7506 = vadd.f32 %v7486, %v7505
    %7507 = vdwg.mxu0
    %7508 = vmatpush.msra.mxu0 %v1169
    %7509 = vmatpush.msra.mxu0 %v1161
    %7510 = vmatpush.msra.mxu0 %v1153
    %7511 = vmatpush.msra.mxu0 %v1145
    %7512 = vmatpush.msra.mxu0 %v1137
    %7513 = vmatpush.msra.mxu0 %v1129
    %7514 = vmatpush.msra.mxu0 %v1121
    %7515 = vmatpush.msra.mxu0 %v1113
    %7516 = vmatpush.msra.mxu0 %v1105
    %7517 = vmatpush.msra.mxu0 %v1097
    %7518 = vmatpush.msra.mxu0 %v1089
    %7519 = vmatpush.msra.mxu0 %v1081
    %7520 = vmatpush.msra.mxu0 %v1073
    %7521 = vmatpush.msra.mxu0 %v1065
    %7522 = vmatpush.msra.mxu0 %v1057
    %7523 = vmatpush.msra.mxu0 %v1049
    %7524 = vmatmul.f32.gmra.mxu0 %v7327
    %v7525 = vpop.f32.mrf.mxu0
    %v7526 = vadd.f32 %v464, %v7525
    %7527 = vdwg.mxu0
    %7528 = vmatpush.msra.mxu0 %v1297
    %7529 = vmatpush.msra.mxu0 %v1289
    %7530 = vmatpush.msra.mxu0 %v1281
    %7531 = vmatpush.msra.mxu0 %v1273
    %7532 = vmatpush.msra.mxu0 %v1265
    %7533 = vmatpush.msra.mxu0 %v1257
    %7534 = vmatpush.msra.mxu0 %v1249
    %7535 = vmatpush.msra.mxu0 %v1241
    %7536 = vmatpush.msra.mxu0 %v1233
    %7537 = vmatpush.msra.mxu0 %v1225
    %7538 = vmatpush.msra.mxu0 %v1217
    %7539 = vmatpush.msra.mxu0 %v1209
    %7540 = vmatpush.msra.mxu0 %v1201
    %7541 = vmatpush.msra.mxu0 %v1193
    %7542 = vmatpush.msra.mxu0 %v1185
    %7543 = vmatpush.msra.mxu0 %v1177
    %7544 = vmatmul.f32.gmra.mxu0 %v6949
    %v7545 = vpop.f32.mrf.mxu0
    %v7546 = vadd.f32 %v7526, %v7545
    %7547 = vdwg.mxu0
    %7548 = vmatpush.msra.mxu0 %v1425
    %7549 = vmatpush.msra.mxu0 %v1417
    %7550 = vmatpush.msra.mxu0 %v1409
    %7551 = vmatpush.msra.mxu0 %v1401
    %7552 = vmatpush.msra.mxu0 %v1393
    %7553 = vmatpush.msra.mxu0 %v1385
    %7554 = vmatpush.msra.mxu0 %v1377
    %7555 = vmatpush.msra.mxu0 %v1369
    %7556 = vmatpush.msra.mxu0 %v1361
    %7557 = vmatpush.msra.mxu0 %v1353
    %7558 = vmatpush.msra.mxu0 %v1345
    %7559 = vmatpush.msra.mxu0 %v1337
    %7560 = vmatpush.msra.mxu0 %v1329
    %7561 = vmatpush.msra.mxu0 %v1321
    %7562 = vmatpush.msra.mxu0 %v1313
    %7563 = vmatpush.msra.mxu0 %v1305
    %7564 = vmatmul.f32.gmra.mxu0 %v6950
    %v7565 = vpop.f32.mrf.mxu0
    %v7566 = vadd.f32 %v7546, %v7565
    %7567 = vdwg.mxu0
    %7568 = vmatpush.msra.mxu0 %v1170
    %7569 = vmatpush.msra.mxu0 %v1162
    %7570 = vmatpush.msra.mxu0 %v1154
    %7571 = vmatpush.msra.mxu0 %v1146
    %7572 = vmatpush.msra.mxu0 %v1138
    %7573 = vmatpush.msra.mxu0 %v1130
    %7574 = vmatpush.msra.mxu0 %v1122
    %7575 = vmatpush.msra.mxu0 %v1114
    %7576 = vmatpush.msra.mxu0 %v1106
    %7577 = vmatpush.msra.mxu0 %v1098
    %7578 = vmatpush.msra.mxu0 %v1090
    %7579 = vmatpush.msra.mxu0 %v1082
    %7580 = vmatpush.msra.mxu0 %v1074
    %7581 = vmatpush.msra.mxu0 %v1066
    %7582 = vmatpush.msra.mxu0 %v1058
    %7583 = vmatpush.msra.mxu0 %v1050
    %7584 = vmatmul.f32.gmra.mxu0 %v7327
    %v7585 = vpop.f32.mrf.mxu0
    %v7586 = vadd.f32 %v465, %v7585
    %7587 = vdwg.mxu0
    %7588 = vmatpush.msra.mxu0 %v1298
    %7589 = vmatpush.msra.mxu0 %v1290
    %7590 = vmatpush.msra.mxu0 %v1282
    %7591 = vmatpush.msra.mxu0 %v1274
    %7592 = vmatpush.msra.mxu0 %v1266
    %7593 = vmatpush.msra.mxu0 %v1258
    %7594 = vmatpush.msra.mxu0 %v1250
    %7595 = vmatpush.msra.mxu0 %v1242
    %7596 = vmatpush.msra.mxu0 %v1234
    %7597 = vmatpush.msra.mxu0 %v1226
    %7598 = vmatpush.msra.mxu0 %v1218
    %7599 = vmatpush.msra.mxu0 %v1210
    %7600 = vmatpush.msra.mxu0 %v1202
    %7601 = vmatpush.msra.mxu0 %v1194
    %7602 = vmatpush.msra.mxu0 %v1186
    %7603 = vmatpush.msra.mxu0 %v1178
    %7604 = vmatmul.f32.gmra.mxu0 %v6949
    %v7605 = vpop.f32.mrf.mxu0
    %v7606 = vadd.f32 %v7586, %v7605
    %7607 = vdwg.mxu0
    %7608 = vmatpush.msra.mxu0 %v1426
    %7609 = vmatpush.msra.mxu0 %v1418
    %7610 = vmatpush.msra.mxu0 %v1410
    %7611 = vmatpush.msra.mxu0 %v1402
    %7612 = vmatpush.msra.mxu0 %v1394
    %7613 = vmatpush.msra.mxu0 %v1386
    %7614 = vmatpush.msra.mxu0 %v1378
    %7615 = vmatpush.msra.mxu0 %v1370
    %7616 = vmatpush.msra.mxu0 %v1362
    %7617 = vmatpush.msra.mxu0 %v1354
    %7618 = vmatpush.msra.mxu0 %v1346
    %7619 = vmatpush.msra.mxu0 %v1338
    %7620 = vmatpush.msra.mxu0 %v1330
    %7621 = vmatpush.msra.mxu0 %v1322
    %7622 = vmatpush.msra.mxu0 %v1314
    %7623 = vmatpush.msra.mxu0 %v1306
    %7624 = vmatmul.f32.gmra.mxu0 %v6950
    %v7625 = vpop.f32.mrf.mxu0
    %v7626 = vadd.f32 %v7606, %v7625
    %7627 = vdwg.mxu0
    %7628 = vmatpush.msra.mxu0 %v1171
    %7629 = vmatpush.msra.mxu0 %v1163
    %7630 = vmatpush.msra.mxu0 %v1155
    %7631 = vmatpush.msra.mxu0 %v1147
    %7632 = vmatpush.msra.mxu0 %v1139
    %7633 = vmatpush.msra.mxu0 %v1131
    %7634 = vmatpush.msra.mxu0 %v1123
    %7635 = vmatpush.msra.mxu0 %v1115
    %7636 = vmatpush.msra.mxu0 %v1107
    %7637 = vmatpush.msra.mxu0 %v1099
    %7638 = vmatpush.msra.mxu0 %v1091
    %7639 = vmatpush.msra.mxu0 %v1083
    %7640 = vmatpush.msra.mxu0 %v1075
    %7641 = vmatpush.msra.mxu0 %v1067
    %7642 = vmatpush.msra.mxu0 %v1059
    %7643 = vmatpush.msra.mxu0 %v1051
    %7644 = vmatmul.f32.gmra.mxu0 %v7327
    %v7645 = vpop.f32.mrf.mxu0
    %v7646 = vadd.f32 %v466, %v7645
    %7647 = vdwg.mxu0
    %7648 = vmatpush.msra.mxu0 %v1299
    %7649 = vmatpush.msra.mxu0 %v1291
    %7650 = vmatpush.msra.mxu0 %v1283
    %7651 = vmatpush.msra.mxu0 %v1275
    %7652 = vmatpush.msra.mxu0 %v1267
    %7653 = vmatpush.msra.mxu0 %v1259
    %7654 = vmatpush.msra.mxu0 %v1251
    %7655 = vmatpush.msra.mxu0 %v1243
    %7656 = vmatpush.msra.mxu0 %v1235
    %7657 = vmatpush.msra.mxu0 %v1227
    %7658 = vmatpush.msra.mxu0 %v1219
    %7659 = vmatpush.msra.mxu0 %v1211
    %7660 = vmatpush.msra.mxu0 %v1203
    %7661 = vmatpush.msra.mxu0 %v1195
    %7662 = vmatpush.msra.mxu0 %v1187
    %7663 = vmatpush.msra.mxu0 %v1179
    %7664 = vmatmul.f32.gmra.mxu0 %v6949
    %v7665 = vpop.f32.mrf.mxu0
    %v7666 = vadd.f32 %v7646, %v7665
    %7667 = vdwg.mxu0
    %7668 = vmatpush.msra.mxu0 %v1427
    %7669 = vmatpush.msra.mxu0 %v1419
    %7670 = vmatpush.msra.mxu0 %v1411
    %7671 = vmatpush.msra.mxu0 %v1403
    %7672 = vmatpush.msra.mxu0 %v1395
    %7673 = vmatpush.msra.mxu0 %v1387
    %7674 = vmatpush.msra.mxu0 %v1379
    %7675 = vmatpush.msra.mxu0 %v1371
    %7676 = vmatpush.msra.mxu0 %v1363
    %7677 = vmatpush.msra.mxu0 %v1355
    %7678 = vmatpush.msra.mxu0 %v1347
    %7679 = vmatpush.msra.mxu0 %v1339
    %7680 = vmatpush.msra.mxu0 %v1331
    %7681 = vmatpush.msra.mxu0 %v1323
    %7682 = vmatpush.msra.mxu0 %v1315
    %7683 = vmatpush.msra.mxu0 %v1307
    %7684 = vmatmul.f32.gmra.mxu0 %v6950
    %v7685 = vpop.f32.mrf.mxu0
    %v7686 = vadd.f32 %v7666, %v7685
    %7687 = vdwg.mxu0
    %7688 = vmatpush.msra.mxu0 %v1172
    %7689 = vmatpush.msra.mxu0 %v1164
    %7690 = vmatpush.msra.mxu0 %v1156
    %7691 = vmatpush.msra.mxu0 %v1148
    %7692 = vmatpush.msra.mxu0 %v1140
    %7693 = vmatpush.msra.mxu0 %v1132
    %7694 = vmatpush.msra.mxu0 %v1124
    %7695 = vmatpush.msra.mxu0 %v1116
    %7696 = vmatpush.msra.mxu0 %v1108
    %7697 = vmatpush.msra.mxu0 %v1100
    %7698 = vmatpush.msra.mxu0 %v1092
    %7699 = vmatpush.msra.mxu0 %v1084
    %7700 = vmatpush.msra.mxu0 %v1076
    %7701 = vmatpush.msra.mxu0 %v1068
    %7702 = vmatpush.msra.mxu0 %v1060
    %7703 = vmatpush.msra.mxu0 %v1052
    %7704 = vmatmul.f32.gmra.mxu0 %v7327
    %v7705 = vpop.f32.mrf.mxu0
    %v7706 = vadd.f32 %v467, %v7705
    %7707 = vdwg.mxu0
    %7708 = vmatpush.msra.mxu0 %v1300
    %7709 = vmatpush.msra.mxu0 %v1292
    %7710 = vmatpush.msra.mxu0 %v1284
    %7711 = vmatpush.msra.mxu0 %v1276
    %7712 = vmatpush.msra.mxu0 %v1268
    %7713 = vmatpush.msra.mxu0 %v1260
    %7714 = vmatpush.msra.mxu0 %v1252
    %7715 = vmatpush.msra.mxu0 %v1244
    %7716 = vmatpush.msra.mxu0 %v1236
    %7717 = vmatpush.msra.mxu0 %v1228
    %7718 = vmatpush.msra.mxu0 %v1220
    %7719 = vmatpush.msra.mxu0 %v1212
    %7720 = vmatpush.msra.mxu0 %v1204
    %7721 = vmatpush.msra.mxu0 %v1196
    %7722 = vmatpush.msra.mxu0 %v1188
    %7723 = vmatpush.msra.mxu0 %v1180
    %7724 = vmatmul.f32.gmra.mxu0 %v6949
    %v7725 = vpop.f32.mrf.mxu0
    %v7726 = vadd.f32 %v7706, %v7725
    %7727 = vdwg.mxu0
    %7728 = vmatpush.msra.mxu0 %v1428
    %7729 = vmatpush.msra.mxu0 %v1420
    %7730 = vmatpush.msra.mxu0 %v1412
    %7731 = vmatpush.msra.mxu0 %v1404
    %7732 = vmatpush.msra.mxu0 %v1396
    %7733 = vmatpush.msra.mxu0 %v1388
    %7734 = vmatpush.msra.mxu0 %v1380
    %7735 = vmatpush.msra.mxu0 %v1372
    %7736 = vmatpush.msra.mxu0 %v1364
    %7737 = vmatpush.msra.mxu0 %v1356
    %7738 = vmatpush.msra.mxu0 %v1348
    %7739 = vmatpush.msra.mxu0 %v1340
    %7740 = vmatpush.msra.mxu0 %v1332
    %7741 = vmatpush.msra.mxu0 %v1324
    %7742 = vmatpush.msra.mxu0 %v1316
    %7743 = vmatpush.msra.mxu0 %v1308
    %7744 = vmatmul.f32.gmra.mxu0 %v6950
    %v7745 = vpop.f32.mrf.mxu0
    %v7746 = vadd.f32 %v7726, %v7745
    %7747 = vdwg.mxu0
    %7748 = vmatpush.msra.mxu0 %v1173
    %7749 = vmatpush.msra.mxu0 %v1165
    %7750 = vmatpush.msra.mxu0 %v1157
    %7751 = vmatpush.msra.mxu0 %v1149
    %7752 = vmatpush.msra.mxu0 %v1141
    %7753 = vmatpush.msra.mxu0 %v1133
    %7754 = vmatpush.msra.mxu0 %v1125
    %7755 = vmatpush.msra.mxu0 %v1117
    %7756 = vmatpush.msra.mxu0 %v1109
    %7757 = vmatpush.msra.mxu0 %v1101
    %7758 = vmatpush.msra.mxu0 %v1093
    %7759 = vmatpush.msra.mxu0 %v1085
    %7760 = vmatpush.msra.mxu0 %v1077
    %7761 = vmatpush.msra.mxu0 %v1069
    %7762 = vmatpush.msra.mxu0 %v1061
    %7763 = vmatpush.msra.mxu0 %v1053
    %7764 = vmatmul.f32.gmra.mxu0 %v7327
    %v7765 = vpop.f32.mrf.mxu0
    %v7766 = vadd.f32 %v468, %v7765
    %7767 = vdwg.mxu0
    %7768 = vmatpush.msra.mxu0 %v1301
    %7769 = vmatpush.msra.mxu0 %v1293
    %7770 = vmatpush.msra.mxu0 %v1285
    %7771 = vmatpush.msra.mxu0 %v1277
    %7772 = vmatpush.msra.mxu0 %v1269
    %7773 = vmatpush.msra.mxu0 %v1261
    %7774 = vmatpush.msra.mxu0 %v1253
    %7775 = vmatpush.msra.mxu0 %v1245
    %7776 = vmatpush.msra.mxu0 %v1237
    %7777 = vmatpush.msra.mxu0 %v1229
    %7778 = vmatpush.msra.mxu0 %v1221
    %7779 = vmatpush.msra.mxu0 %v1213
    %7780 = vmatpush.msra.mxu0 %v1205
    %7781 = vmatpush.msra.mxu0 %v1197
    %7782 = vmatpush.msra.mxu0 %v1189
    %7783 = vmatpush.msra.mxu0 %v1181
    %7784 = vmatmul.f32.gmra.mxu0 %v6949
    %v7785 = vpop.f32.mrf.mxu0
    %v7786 = vadd.f32 %v7766, %v7785
    %7787 = vdwg.mxu0
    %7788 = vmatpush.msra.mxu0 %v1429
    %7789 = vmatpush.msra.mxu0 %v1421
    %7790 = vmatpush.msra.mxu0 %v1413
    %7791 = vmatpush.msra.mxu0 %v1405
    %7792 = vmatpush.msra.mxu0 %v1397
    %7793 = vmatpush.msra.mxu0 %v1389
    %7794 = vmatpush.msra.mxu0 %v1381
    %7795 = vmatpush.msra.mxu0 %v1373
    %7796 = vmatpush.msra.mxu0 %v1365
    %7797 = vmatpush.msra.mxu0 %v1357
    %7798 = vmatpush.msra.mxu0 %v1349
    %7799 = vmatpush.msra.mxu0 %v1341
    %7800 = vmatpush.msra.mxu0 %v1333
    %7801 = vmatpush.msra.mxu0 %v1325
    %7802 = vmatpush.msra.mxu0 %v1317
    %7803 = vmatpush.msra.mxu0 %v1309
    %7804 = vmatmul.f32.gmra.mxu0 %v6950
    %v7805 = vpop.f32.mrf.mxu0
    %v7806 = vadd.f32 %v7786, %v7805
    %7807 = vdwg.mxu0
    %v7808 = vxor.u32 %v7386, 2147483648
    %v7809 = vxor.u32 %v7446, 2147483648
    %v7810 = vmul.f32 %v7808, 1.442695
    %v7811 = vpow.pop %v7810
    %v7812 = vmul.f32 %v7809, 1.442695
    %v7813 = vpow.pop %v7812
    %v7814 = vadd.f32 %v7811, 1.0
    %v7815 = vadd.f32 %v7813, 1.0
    %v7816 = vrcp.pop %v7814
    %v7817 = vmul.f32 %v7814, %v7816
    %v7818 = vsub.f32 1.0, %v7817
    %v7819 = vmul.f32 %v7816, %v7818
    %v7820 = vadd.f32 %v7816, %v7819
    %vm7821 = vweird.f32 %v7814
    %vm7822 = vweird.f32 %v7816
    %vm7823 = vmor %vm7821, %vm7822
    %v7824 = vsel %vm7823, %v7816, %v7820
    %v7825 = vand.u32 2147483647, %v7814
    %vm7826 = vcmp.eq.f32.partialorder %v7825, 8.507059e+37
    %v7827 = vand.u32 %v7814, 2147483648
    %v7828 = vor.u32 1.1754944e-38, %v7827
    %v7829 = vsel %vm7826, %v7828, %v7824
    %v7830 = vmul.f32 1.0, %v7829
    %v7831 = vrcp.pop %v7815
    %v7832 = vmul.f32 %v7815, %v7831
    %v7833 = vsub.f32 1.0, %v7832
    %v7834 = vmul.f32 %v7831, %v7833
    %v7835 = vadd.f32 %v7831, %v7834
    %vm7836 = vweird.f32 %v7815
    %vm7837 = vweird.f32 %v7831
    %vm7838 = vmor %vm7836, %vm7837
    %v7839 = vsel %vm7838, %v7831, %v7835
    %v7840 = vand.u32 2147483647, %v7815
    %vm7841 = vcmp.eq.f32.partialorder %v7840, 8.507059e+37
    %v7842 = vand.u32 %v7815, 2147483648
    %v7843 = vor.u32 1.1754944e-38, %v7842
    %v7844 = vsel %vm7841, %v7843, %v7839
    %v7845 = vmul.f32 1.0, %v7844
    %v7846 = vxor.u32 %v7506, 2147483648
    %v7847 = vxor.u32 %v7566, 2147483648
    %v7848 = vmul.f32 %v7846, 1.442695
    %v7849 = vpow.pop %v7848
    %v7850 = vmul.f32 %v7847, 1.442695
    %v7851 = vpow.pop %v7850
    %v7852 = vadd.f32 %v7849, 1.0
    %v7853 = vadd.f32 %v7851, 1.0
    %v7854 = vrcp.pop %v7852
    %v7855 = vmul.f32 %v7852, %v7854
    %v7856 = vsub.f32 1.0, %v7855
    %v7857 = vmul.f32 %v7854, %v7856
    %v7858 = vadd.f32 %v7854, %v7857
    %vm7859 = vweird.f32 %v7852
    %vm7860 = vweird.f32 %v7854
    %vm7861 = vmor %vm7859, %vm7860
    %v7862 = vsel %vm7861, %v7854, %v7858
    %v7863 = vand.u32 2147483647, %v7852
    %vm7864 = vcmp.eq.f32.partialorder %v7863, 8.507059e+37
    %v7865 = vand.u32 %v7852, 2147483648
    %v7866 = vor.u32 1.1754944e-38, %v7865
    %v7867 = vsel %vm7864, %v7866, %v7862
    %v7868 = vmul.f32 1.0, %v7867
    %v7869 = vrcp.pop %v7853
    %v7870 = vmul.f32 %v7853, %v7869
    %v7871 = vsub.f32 1.0, %v7870
    %v7872 = vmul.f32 %v7869, %v7871
    %v7873 = vadd.f32 %v7869, %v7872
    %vm7874 = vweird.f32 %v7853
    %vm7875 = vweird.f32 %v7869
    %vm7876 = vmor %vm7874, %vm7875
    %v7877 = vsel %vm7876, %v7869, %v7873
    %v7878 = vand.u32 2147483647, %v7853
    %vm7879 = vcmp.eq.f32.partialorder %v7878, 8.507059e+37
    %v7880 = vand.u32 %v7853, 2147483648
    %v7881 = vor.u32 1.1754944e-38, %v7880
    %v7882 = vsel %vm7879, %v7881, %v7877
    %v7883 = vmul.f32 1.0, %v7882
    %v7884 = vtanh.pop %v7626
    %v7885 = vtanh.pop %v7686
    %v7886 = vxor.u32 %v7746, 2147483648
    %v7887 = vxor.u32 %v7806, 2147483648
    %v7888 = vmul.f32 %v7886, 1.442695
    %v7889 = vpow.pop %v7888
    %v7890 = vmul.f32 %v7887, 1.442695
    %v7891 = vpow.pop %v7890
    %v7892 = vadd.f32 %v7889, 1.0
    %v7893 = vadd.f32 %v7891, 1.0
    %v7894 = vrcp.pop %v7892
    %v7895 = vmul.f32 %v7892, %v7894
    %v7896 = vsub.f32 1.0, %v7895
    %v7897 = vmul.f32 %v7894, %v7896
    %v7898 = vadd.f32 %v7894, %v7897
    %vm7899 = vweird.f32 %v7892
    %vm7900 = vweird.f32 %v7894
    %vm7901 = vmor %vm7899, %vm7900
    %v7902 = vsel %vm7901, %v7894, %v7898
    %v7903 = vand.u32 2147483647, %v7892
    %vm7904 = vcmp.eq.f32.partialorder %v7903, 8.507059e+37
    %v7905 = vand.u32 %v7892, 2147483648
    %v7906 = vor.u32 1.1754944e-38, %v7905
    %v7907 = vsel %vm7904, %v7906, %v7902
    %v7908 = vmul.f32 1.0, %v7907
    %v7909 = vrcp.pop %v7893
    %v7910 = vmul.f32 %v7893, %v7909
    %v7911 = vsub.f32 1.0, %v7910
    %v7912 = vmul.f32 %v7909, %v7911
    %v7913 = vadd.f32 %v7909, %v7912
    %vm7914 = vweird.f32 %v7893
    %vm7915 = vweird.f32 %v7909
    %vm7916 = vmor %vm7914, %vm7915
    %v7917 = vsel %vm7916, %v7909, %v7913
    %v7918 = vand.u32 2147483647, %v7893
    %vm7919 = vcmp.eq.f32.partialorder %v7918, 8.507059e+37
    %v7920 = vand.u32 %v7893, 2147483648
    %v7921 = vor.u32 1.1754944e-38, %v7920
    %v7922 = vsel %vm7919, %v7921, %v7917
    %v7923 = vmul.f32 1.0, %v7922
    %v7924 = vmul.f32 %v7868, %v6945
    %v7925 = vmul.f32 %v7883, %v6946
    %v7926 = vmul.f32 %v7830, %v7884
    %v7927 = vmul.f32 %v7845, %v7885
    %v7928 = vadd.f32 %v7924, %v7926
    %v7929 = vadd.f32 %v7925, %v7927
    %v7930 = vtanh.pop %v7928
    %v7931 = vtanh.pop %v7929
    %v7932 = vmul.f32 %v7908, %v7930
    %v7933 = vmul.f32 %v7923, %v7931
    %s7934 = smul.u32 7, 4
    %s7935 = smul.addr %s7934, 8
    %s7936 = scalar_lea.vmem [#allocation2], %s7935
    %v7937 = vld [vmem:[%s7936] sm:$0xff]
    %v7938 = vld [vmem:[%s7936 + $0x8] sm:$0xff]
    %v7939 = vld [vmem:[%s7936 + $0x10] sm:$0xff]
    %v7940 = vld [vmem:[%s7936 + $0x18] sm:$0xff]
    %7941 = vmatpush.msra.mxu0 %v544
    %7942 = vmatpush.msra.mxu0 %v540
    %7943 = vmatpush.msra.mxu0 %v536
    %7944 = vmatpush.msra.mxu0 %v532
    %7945 = vmatpush.msra.mxu0 %v528
    %7946 = vmatpush.msra.mxu0 %v524
    %7947 = vmatpush.msra.mxu0 %v520
    %7948 = vmatpush.msra.mxu0 %v516
    %7949 = vmatpush.msra.mxu0 %v512
    %7950 = vmatpush.msra.mxu0 %v508
    %7951 = vmatpush.msra.mxu0 %v504
    %7952 = vmatpush.msra.mxu0 %v500
    %7953 = vmatpush.msra.mxu0 %v496
    %7954 = vmatpush.msra.mxu0 %v492
    %7955 = vmatpush.msra.mxu0 %v488
    %7956 = vmatpush.msra.mxu0 %v484
    %7957 = vmatmul.f32.gmra.mxu0 %v7104
    %v7958 = vpop.f32.mrf.mxu0
    %v7959 = vadd.f32 0.0, %v7958
    %7960 = vdwg.mxu0
    %7961 = vmatpush.msra.mxu0 %v545
    %7962 = vmatpush.msra.mxu0 %v541
    %7963 = vmatpush.msra.mxu0 %v537
    %7964 = vmatpush.msra.mxu0 %v533
    %7965 = vmatpush.msra.mxu0 %v529
    %7966 = vmatpush.msra.mxu0 %v525
    %7967 = vmatpush.msra.mxu0 %v521
    %7968 = vmatpush.msra.mxu0 %v517
    %7969 = vmatpush.msra.mxu0 %v513
    %7970 = vmatpush.msra.mxu0 %v509
    %7971 = vmatpush.msra.mxu0 %v505
    %7972 = vmatpush.msra.mxu0 %v501
    %7973 = vmatpush.msra.mxu0 %v497
    %7974 = vmatpush.msra.mxu0 %v493
    %7975 = vmatpush.msra.mxu0 %v489
    %7976 = vmatpush.msra.mxu0 %v485
    %7977 = vmatmul.f32.gmra.mxu0 %v7104
    %v7978 = vpop.f32.mrf.mxu0
    %v7979 = vadd.f32 0.0, %v7978
    %7980 = vdwg.mxu0
    %7981 = vmatpush.msra.mxu0 %v546
    %7982 = vmatpush.msra.mxu0 %v542
    %7983 = vmatpush.msra.mxu0 %v538
    %7984 = vmatpush.msra.mxu0 %v534
    %7985 = vmatpush.msra.mxu0 %v530
    %7986 = vmatpush.msra.mxu0 %v526
    %7987 = vmatpush.msra.mxu0 %v522
    %7988 = vmatpush.msra.mxu0 %v518
    %7989 = vmatpush.msra.mxu0 %v514
    %7990 = vmatpush.msra.mxu0 %v510
    %7991 = vmatpush.msra.mxu0 %v506
    %7992 = vmatpush.msra.mxu0 %v502
    %7993 = vmatpush.msra.mxu0 %v498
    %7994 = vmatpush.msra.mxu0 %v494
    %7995 = vmatpush.msra.mxu0 %v490
    %7996 = vmatpush.msra.mxu0 %v486
    %7997 = vmatmul.f32.gmra.mxu0 %v7104
    %v7998 = vpop.f32.mrf.mxu0
    %v7999 = vadd.f32 0.0, %v7998
    %8000 = vdwg.mxu0
    %8001 = vmatpush.msra.mxu0 %v547
    %8002 = vmatpush.msra.mxu0 %v543
    %8003 = vmatpush.msra.mxu0 %v539
    %8004 = vmatpush.msra.mxu0 %v535
    %8005 = vmatpush.msra.mxu0 %v531
    %8006 = vmatpush.msra.mxu0 %v527
    %8007 = vmatpush.msra.mxu0 %v523
    %8008 = vmatpush.msra.mxu0 %v519
    %8009 = vmatpush.msra.mxu0 %v515
    %8010 = vmatpush.msra.mxu0 %v511
    %8011 = vmatpush.msra.mxu0 %v507
    %8012 = vmatpush.msra.mxu0 %v503
    %8013 = vmatpush.msra.mxu0 %v499
    %8014 = vmatpush.msra.mxu0 %v495
    %8015 = vmatpush.msra.mxu0 %v491
    %8016 = vmatpush.msra.mxu0 %v487
    %8017 = vmatmul.f32.gmra.mxu0 %v7104
    %v8018 = vpop.f32.mrf.mxu0
    %v8019 = vadd.f32 0.0, %v8018
    %8020 = vdwg.mxu0
    %v8021 = vadd.f32 %v7937, %v7959
    %v8022 = vadd.f32 %v7938, %v7979
    %v8023 = vadd.f32 %v7939, %v7999
    %v8024 = vadd.f32 %v7940, %v8019
    %v8025 = vxor.u32 %v8021, 2147483648
    %v8026 = vmul.f32 %v8025, 1.442695
    %v8027 = vpow.pop %v8026
    %v8028 = vadd.f32 %v8027, 1.0
    %v8029 = vrcp.pop %v8028
    %v8030 = vmul.f32 %v8028, %v8029
    %v8031 = vsub.f32 1.0, %v8030
    %v8032 = vmul.f32 %v8029, %v8031
    %v8033 = vadd.f32 %v8029, %v8032
    %vm8034 = vweird.f32 %v8028
    %vm8035 = vweird.f32 %v8029
    %vm8036 = vmor %vm8034, %vm8035
    %v8037 = vsel %vm8036, %v8029, %v8033
    %v8038 = vand.u32 2147483647, %v8028
    %vm8039 = vcmp.eq.f32.partialorder %v8038, 8.507059e+37
    %v8040 = vand.u32 %v8028, 2147483648
    %v8041 = vor.u32 1.1754944e-38, %v8040
    %v8042 = vsel %vm8039, %v8041, %v8037
    %v8043 = vmul.f32 1.0, %v8042
    %v8044 = vxor.u32 %v8022, 2147483648
    %v8045 = vmul.f32 %v8044, 1.442695
    %v8046 = vpow.pop %v8045
    %v8047 = vadd.f32 %v8046, 1.0
    %v8048 = vrcp.pop %v8047
    %v8049 = vmul.f32 %v8047, %v8048
    %v8050 = vsub.f32 1.0, %v8049
    %v8051 = vmul.f32 %v8048, %v8050
    %v8052 = vadd.f32 %v8048, %v8051
    %vm8053 = vweird.f32 %v8047
    %vm8054 = vweird.f32 %v8048
    %vm8055 = vmor %vm8053, %vm8054
    %v8056 = vsel %vm8055, %v8048, %v8052
    %v8057 = vand.u32 2147483647, %v8047
    %vm8058 = vcmp.eq.f32.partialorder %v8057, 8.507059e+37
    %v8059 = vand.u32 %v8047, 2147483648
    %v8060 = vor.u32 1.1754944e-38, %v8059
    %v8061 = vsel %vm8058, %v8060, %v8056
    %v8062 = vmul.f32 1.0, %v8061
    %v8063 = vtanh.pop %v8023
    %v8064 = vxor.u32 %v8024, 2147483648
    %v8065 = vmul.f32 %v8064, 1.442695
    %v8066 = vpow.pop %v8065
    %v8067 = vadd.f32 %v8066, 1.0
    %v8068 = vrcp.pop %v8067
    %v8069 = vmul.f32 %v8067, %v8068
    %v8070 = vsub.f32 1.0, %v8069
    %v8071 = vmul.f32 %v8068, %v8070
    %v8072 = vadd.f32 %v8068, %v8071
    %vm8073 = vweird.f32 %v8067
    %vm8074 = vweird.f32 %v8068
    %vm8075 = vmor %vm8073, %vm8074
    %v8076 = vsel %vm8075, %v8068, %v8072
    %v8077 = vand.u32 2147483647, %v8067
    %vm8078 = vcmp.eq.f32.partialorder %v8077, 8.507059e+37
    %v8079 = vand.u32 %v8067, 2147483648
    %v8080 = vor.u32 1.1754944e-38, %v8079
    %v8081 = vsel %vm8078, %v8080, %v8076
    %v8082 = vmul.f32 1.0, %v8081
    %v8083 = vmul.f32 %v8062, %v7102
    %v8084 = vmul.f32 %v8043, %v8063
    %v8085 = vadd.f32 %v8083, %v8084
    %v8086 = vtanh.pop %v8085
    %v8087 = vmul.f32 %v8082, %v8086
    %8088 = vmatpush.msra.mxu0 %v755
    %8089 = vmatpush.msra.mxu0 %v751
    %8090 = vmatpush.msra.mxu0 %v747
    %8091 = vmatpush.msra.mxu0 %v743
    %8092 = vmatpush.msra.mxu0 %v739
    %8093 = vmatpush.msra.mxu0 %v735
    %8094 = vmatpush.msra.mxu0 %v731
    %8095 = vmatpush.msra.mxu0 %v727
    %8096 = vmatpush.msra.mxu0 %v723
    %8097 = vmatpush.msra.mxu0 %v719
    %8098 = vmatpush.msra.mxu0 %v715
    %8099 = vmatpush.msra.mxu0 %v711
    %8100 = vmatpush.msra.mxu0 %v707
    %8101 = vmatpush.msra.mxu0 %v703
    %8102 = vmatpush.msra.mxu0 %v699
    %8103 = vmatpush.msra.mxu0 %v695
    %8104 = vmatmul.f32.gmra.mxu0 %v8087
    %v8105 = vpop.f32.mrf.mxu0
    %v8106 = vadd.f32 %v451, %v8105
    %8107 = vdwg.mxu0
    %8108 = vmatpush.msra.mxu0 %v819
    %8109 = vmatpush.msra.mxu0 %v815
    %8110 = vmatpush.msra.mxu0 %v811
    %8111 = vmatpush.msra.mxu0 %v807
    %8112 = vmatpush.msra.mxu0 %v803
    %8113 = vmatpush.msra.mxu0 %v799
    %8114 = vmatpush.msra.mxu0 %v795
    %8115 = vmatpush.msra.mxu0 %v791
    %8116 = vmatpush.msra.mxu0 %v787
    %8117 = vmatpush.msra.mxu0 %v783
    %8118 = vmatpush.msra.mxu0 %v779
    %8119 = vmatpush.msra.mxu0 %v775
    %8120 = vmatpush.msra.mxu0 %v771
    %8121 = vmatpush.msra.mxu0 %v767
    %8122 = vmatpush.msra.mxu0 %v763
    %8123 = vmatpush.msra.mxu0 %v759
    %8124 = vmatmul.f32.gmra.mxu0 %v7327
    %v8125 = vpop.f32.mrf.mxu0
    %v8126 = vadd.f32 %v8106, %v8125
    %8127 = vdwg.mxu0
    %8128 = vmatpush.msra.mxu0 %v756
    %8129 = vmatpush.msra.mxu0 %v752
    %8130 = vmatpush.msra.mxu0 %v748
    %8131 = vmatpush.msra.mxu0 %v744
    %8132 = vmatpush.msra.mxu0 %v740
    %8133 = vmatpush.msra.mxu0 %v736
    %8134 = vmatpush.msra.mxu0 %v732
    %8135 = vmatpush.msra.mxu0 %v728
    %8136 = vmatpush.msra.mxu0 %v724
    %8137 = vmatpush.msra.mxu0 %v720
    %8138 = vmatpush.msra.mxu0 %v716
    %8139 = vmatpush.msra.mxu0 %v712
    %8140 = vmatpush.msra.mxu0 %v708
    %8141 = vmatpush.msra.mxu0 %v704
    %8142 = vmatpush.msra.mxu0 %v700
    %8143 = vmatpush.msra.mxu0 %v696
    %8144 = vmatmul.f32.gmra.mxu0 %v8087
    %v8145 = vpop.f32.mrf.mxu0
    %v8146 = vadd.f32 %v452, %v8145
    %8147 = vdwg.mxu0
    %8148 = vmatpush.msra.mxu0 %v820
    %8149 = vmatpush.msra.mxu0 %v816
    %8150 = vmatpush.msra.mxu0 %v812
    %8151 = vmatpush.msra.mxu0 %v808
    %8152 = vmatpush.msra.mxu0 %v804
    %8153 = vmatpush.msra.mxu0 %v800
    %8154 = vmatpush.msra.mxu0 %v796
    %8155 = vmatpush.msra.mxu0 %v792
    %8156 = vmatpush.msra.mxu0 %v788
    %8157 = vmatpush.msra.mxu0 %v784
    %8158 = vmatpush.msra.mxu0 %v780
    %8159 = vmatpush.msra.mxu0 %v776
    %8160 = vmatpush.msra.mxu0 %v772
    %8161 = vmatpush.msra.mxu0 %v768
    %8162 = vmatpush.msra.mxu0 %v764
    %8163 = vmatpush.msra.mxu0 %v760
    %8164 = vmatmul.f32.gmra.mxu0 %v7327
    %v8165 = vpop.f32.mrf.mxu0
    %v8166 = vadd.f32 %v8146, %v8165
    %8167 = vdwg.mxu0
    %8168 = vmatpush.msra.mxu0 %v757
    %8169 = vmatpush.msra.mxu0 %v753
    %8170 = vmatpush.msra.mxu0 %v749
    %8171 = vmatpush.msra.mxu0 %v745
    %8172 = vmatpush.msra.mxu0 %v741
    %8173 = vmatpush.msra.mxu0 %v737
    %8174 = vmatpush.msra.mxu0 %v733
    %8175 = vmatpush.msra.mxu0 %v729
    %8176 = vmatpush.msra.mxu0 %v725
    %8177 = vmatpush.msra.mxu0 %v721
    %8178 = vmatpush.msra.mxu0 %v717
    %8179 = vmatpush.msra.mxu0 %v713
    %8180 = vmatpush.msra.mxu0 %v709
    %8181 = vmatpush.msra.mxu0 %v705
    %8182 = vmatpush.msra.mxu0 %v701
    %8183 = vmatpush.msra.mxu0 %v697
    %8184 = vmatmul.f32.gmra.mxu0 %v8087
    %v8185 = vpop.f32.mrf.mxu0
    %v8186 = vadd.f32 %v453, %v8185
    %8187 = vdwg.mxu0
    %8188 = vmatpush.msra.mxu0 %v821
    %8189 = vmatpush.msra.mxu0 %v817
    %8190 = vmatpush.msra.mxu0 %v813
    %8191 = vmatpush.msra.mxu0 %v809
    %8192 = vmatpush.msra.mxu0 %v805
    %8193 = vmatpush.msra.mxu0 %v801
    %8194 = vmatpush.msra.mxu0 %v797
    %8195 = vmatpush.msra.mxu0 %v793
    %8196 = vmatpush.msra.mxu0 %v789
    %8197 = vmatpush.msra.mxu0 %v785
    %8198 = vmatpush.msra.mxu0 %v781
    %8199 = vmatpush.msra.mxu0 %v777
    %8200 = vmatpush.msra.mxu0 %v773
    %8201 = vmatpush.msra.mxu0 %v769
    %8202 = vmatpush.msra.mxu0 %v765
    %8203 = vmatpush.msra.mxu0 %v761
    %8204 = vmatmul.f32.gmra.mxu0 %v7327
    %v8205 = vpop.f32.mrf.mxu0
    %v8206 = vadd.f32 %v8186, %v8205
    %8207 = vdwg.mxu0
    %8208 = vmatpush.msra.mxu0 %v758
    %8209 = vmatpush.msra.mxu0 %v754
    %8210 = vmatpush.msra.mxu0 %v750
    %8211 = vmatpush.msra.mxu0 %v746
    %8212 = vmatpush.msra.mxu0 %v742
    %8213 = vmatpush.msra.mxu0 %v738
    %8214 = vmatpush.msra.mxu0 %v734
    %8215 = vmatpush.msra.mxu0 %v730
    %8216 = vmatpush.msra.mxu0 %v726
    %8217 = vmatpush.msra.mxu0 %v722
    %8218 = vmatpush.msra.mxu0 %v718
    %8219 = vmatpush.msra.mxu0 %v714
    %8220 = vmatpush.msra.mxu0 %v710
    %8221 = vmatpush.msra.mxu0 %v706
    %8222 = vmatpush.msra.mxu0 %v702
    %8223 = vmatpush.msra.mxu0 %v698
    %8224 = vmatmul.f32.gmra.mxu0 %v8087
    %v8225 = vpop.f32.mrf.mxu0
    %v8226 = vadd.f32 %v454, %v8225
    %8227 = vdwg.mxu0
    %8228 = vmatpush.msra.mxu0 %v822
    %8229 = vmatpush.msra.mxu0 %v818
    %8230 = vmatpush.msra.mxu0 %v814
    %8231 = vmatpush.msra.mxu0 %v810
    %8232 = vmatpush.msra.mxu0 %v806
    %8233 = vmatpush.msra.mxu0 %v802
    %8234 = vmatpush.msra.mxu0 %v798
    %8235 = vmatpush.msra.mxu0 %v794
    %8236 = vmatpush.msra.mxu0 %v790
    %8237 = vmatpush.msra.mxu0 %v786
    %8238 = vmatpush.msra.mxu0 %v782
    %8239 = vmatpush.msra.mxu0 %v778
    %8240 = vmatpush.msra.mxu0 %v774
    %8241 = vmatpush.msra.mxu0 %v770
    %8242 = vmatpush.msra.mxu0 %v766
    %8243 = vmatpush.msra.mxu0 %v762
    %8244 = vmatmul.f32.gmra.mxu0 %v7327
    %v8245 = vpop.f32.mrf.mxu0
    %v8246 = vadd.f32 %v8226, %v8245
    %8247 = vdwg.mxu0
    %v8248 = vxor.u32 %v8126, 2147483648
    %v8249 = vmul.f32 %v8248, 1.442695
    %v8250 = vpow.pop %v8249
    %v8251 = vadd.f32 %v8250, 1.0
    %v8252 = vrcp.pop %v8251
    %v8253 = vmul.f32 %v8251, %v8252
    %v8254 = vsub.f32 1.0, %v8253
    %v8255 = vmul.f32 %v8252, %v8254
    %v8256 = vadd.f32 %v8252, %v8255
    %vm8257 = vweird.f32 %v8251
    %vm8258 = vweird.f32 %v8252
    %vm8259 = vmor %vm8257, %vm8258
    %v8260 = vsel %vm8259, %v8252, %v8256
    %v8261 = vand.u32 2147483647, %v8251
    %vm8262 = vcmp.eq.f32.partialorder %v8261, 8.507059e+37
    %v8263 = vand.u32 %v8251, 2147483648
    %v8264 = vor.u32 1.1754944e-38, %v8263
    %v8265 = vsel %vm8262, %v8264, %v8260
    %v8266 = vmul.f32 1.0, %v8265
    %v8267 = vxor.u32 %v8166, 2147483648
    %v8268 = vmul.f32 %v8267, 1.442695
    %v8269 = vpow.pop %v8268
    %v8270 = vadd.f32 %v8269, 1.0
    %v8271 = vrcp.pop %v8270
    %v8272 = vmul.f32 %v8270, %v8271
    %v8273 = vsub.f32 1.0, %v8272
    %v8274 = vmul.f32 %v8271, %v8273
    %v8275 = vadd.f32 %v8271, %v8274
    %vm8276 = vweird.f32 %v8270
    %vm8277 = vweird.f32 %v8271
    %vm8278 = vmor %vm8276, %vm8277
    %v8279 = vsel %vm8278, %v8271, %v8275
    %v8280 = vand.u32 2147483647, %v8270
    %vm8281 = vcmp.eq.f32.partialorder %v8280, 8.507059e+37
    %v8282 = vand.u32 %v8270, 2147483648
    %v8283 = vor.u32 1.1754944e-38, %v8282
    %v8284 = vsel %vm8281, %v8283, %v8279
    %v8285 = vmul.f32 1.0, %v8284
    %v8286 = vtanh.pop %v8206
    %v8287 = vxor.u32 %v8246, 2147483648
    %v8288 = vmul.f32 %v8287, 1.442695
    %v8289 = vpow.pop %v8288
    %v8290 = vadd.f32 %v8289, 1.0
    %v8291 = vrcp.pop %v8290
    %v8292 = vmul.f32 %v8290, %v8291
    %v8293 = vsub.f32 1.0, %v8292
    %v8294 = vmul.f32 %v8291, %v8293
    %v8295 = vadd.f32 %v8291, %v8294
    %vm8296 = vweird.f32 %v8290
    %vm8297 = vweird.f32 %v8291
    %vm8298 = vmor %vm8296, %vm8297
    %v8299 = vsel %vm8298, %v8291, %v8295
    %v8300 = vand.u32 2147483647, %v8290
    %vm8301 = vcmp.eq.f32.partialorder %v8300, 8.507059e+37
    %v8302 = vand.u32 %v8290, 2147483648
    %v8303 = vor.u32 1.1754944e-38, %v8302
    %v8304 = vsel %vm8301, %v8303, %v8299
    %v8305 = vmul.f32 1.0, %v8304
    %v8306 = vmul.f32 %v8285, %v7325
    %v8307 = vmul.f32 %v8266, %v8286
    %v8308 = vadd.f32 %v8306, %v8307
    %v8309 = vtanh.pop %v8308
    %v8310 = vmul.f32 %v8305, %v8309
    %8311 = vmatpush.msra.mxu0 %v1166
    %8312 = vmatpush.msra.mxu0 %v1158
    %8313 = vmatpush.msra.mxu0 %v1150
    %8314 = vmatpush.msra.mxu0 %v1142
    %8315 = vmatpush.msra.mxu0 %v1134
    %8316 = vmatpush.msra.mxu0 %v1126
    %8317 = vmatpush.msra.mxu0 %v1118
    %8318 = vmatpush.msra.mxu0 %v1110
    %8319 = vmatpush.msra.mxu0 %v1102
    %8320 = vmatpush.msra.mxu0 %v1094
    %8321 = vmatpush.msra.mxu0 %v1086
    %8322 = vmatpush.msra.mxu0 %v1078
    %8323 = vmatpush.msra.mxu0 %v1070
    %8324 = vmatpush.msra.mxu0 %v1062
    %8325 = vmatpush.msra.mxu0 %v1054
    %8326 = vmatpush.msra.mxu0 %v1046
    %8327 = vmatmul.f32.gmra.mxu0 %v8310
    %v8328 = vpop.f32.mrf.mxu0
    %v8329 = vadd.f32 %v461, %v8328
    %8330 = vdwg.mxu0
    %8331 = vmatpush.msra.mxu0 %v1294
    %8332 = vmatpush.msra.mxu0 %v1286
    %8333 = vmatpush.msra.mxu0 %v1278
    %8334 = vmatpush.msra.mxu0 %v1270
    %8335 = vmatpush.msra.mxu0 %v1262
    %8336 = vmatpush.msra.mxu0 %v1254
    %8337 = vmatpush.msra.mxu0 %v1246
    %8338 = vmatpush.msra.mxu0 %v1238
    %8339 = vmatpush.msra.mxu0 %v1230
    %8340 = vmatpush.msra.mxu0 %v1222
    %8341 = vmatpush.msra.mxu0 %v1214
    %8342 = vmatpush.msra.mxu0 %v1206
    %8343 = vmatpush.msra.mxu0 %v1198
    %8344 = vmatpush.msra.mxu0 %v1190
    %8345 = vmatpush.msra.mxu0 %v1182
    %8346 = vmatpush.msra.mxu0 %v1174
    %8347 = vmatmul.f32.gmra.mxu0 %v7932
    %v8348 = vpop.f32.mrf.mxu0
    %v8349 = vadd.f32 %v8329, %v8348
    %8350 = vdwg.mxu0
    %8351 = vmatpush.msra.mxu0 %v1422
    %8352 = vmatpush.msra.mxu0 %v1414
    %8353 = vmatpush.msra.mxu0 %v1406
    %8354 = vmatpush.msra.mxu0 %v1398
    %8355 = vmatpush.msra.mxu0 %v1390
    %8356 = vmatpush.msra.mxu0 %v1382
    %8357 = vmatpush.msra.mxu0 %v1374
    %8358 = vmatpush.msra.mxu0 %v1366
    %8359 = vmatpush.msra.mxu0 %v1358
    %8360 = vmatpush.msra.mxu0 %v1350
    %8361 = vmatpush.msra.mxu0 %v1342
    %8362 = vmatpush.msra.mxu0 %v1334
    %8363 = vmatpush.msra.mxu0 %v1326
    %8364 = vmatpush.msra.mxu0 %v1318
    %8365 = vmatpush.msra.mxu0 %v1310
    %8366 = vmatpush.msra.mxu0 %v1302
    %8367 = vmatmul.f32.gmra.mxu0 %v7933
    %v8368 = vpop.f32.mrf.mxu0
    %v8369 = vadd.f32 %v8349, %v8368
    %8370 = vdwg.mxu0
    %8371 = vmatpush.msra.mxu0 %v1167
    %8372 = vmatpush.msra.mxu0 %v1159
    %8373 = vmatpush.msra.mxu0 %v1151
    %8374 = vmatpush.msra.mxu0 %v1143
    %8375 = vmatpush.msra.mxu0 %v1135
    %8376 = vmatpush.msra.mxu0 %v1127
    %8377 = vmatpush.msra.mxu0 %v1119
    %8378 = vmatpush.msra.mxu0 %v1111
    %8379 = vmatpush.msra.mxu0 %v1103
    %8380 = vmatpush.msra.mxu0 %v1095
    %8381 = vmatpush.msra.mxu0 %v1087
    %8382 = vmatpush.msra.mxu0 %v1079
    %8383 = vmatpush.msra.mxu0 %v1071
    %8384 = vmatpush.msra.mxu0 %v1063
    %8385 = vmatpush.msra.mxu0 %v1055
    %8386 = vmatpush.msra.mxu0 %v1047
    %8387 = vmatmul.f32.gmra.mxu0 %v8310
    %v8388 = vpop.f32.mrf.mxu0
    %v8389 = vadd.f32 %v462, %v8388
    %8390 = vdwg.mxu0
    %8391 = vmatpush.msra.mxu0 %v1295
    %8392 = vmatpush.msra.mxu0 %v1287
    %8393 = vmatpush.msra.mxu0 %v1279
    %8394 = vmatpush.msra.mxu0 %v1271
    %8395 = vmatpush.msra.mxu0 %v1263
    %8396 = vmatpush.msra.mxu0 %v1255
    %8397 = vmatpush.msra.mxu0 %v1247
    %8398 = vmatpush.msra.mxu0 %v1239
    %8399 = vmatpush.msra.mxu0 %v1231
    %8400 = vmatpush.msra.mxu0 %v1223
    %8401 = vmatpush.msra.mxu0 %v1215
    %8402 = vmatpush.msra.mxu0 %v1207
    %8403 = vmatpush.msra.mxu0 %v1199
    %8404 = vmatpush.msra.mxu0 %v1191
    %8405 = vmatpush.msra.mxu0 %v1183
    %8406 = vmatpush.msra.mxu0 %v1175
    %8407 = vmatmul.f32.gmra.mxu0 %v7932
    %v8408 = vpop.f32.mrf.mxu0
    %v8409 = vadd.f32 %v8389, %v8408
    %8410 = vdwg.mxu0
    %8411 = vmatpush.msra.mxu0 %v1423
    %8412 = vmatpush.msra.mxu0 %v1415
    %8413 = vmatpush.msra.mxu0 %v1407
    %8414 = vmatpush.msra.mxu0 %v1399
    %8415 = vmatpush.msra.mxu0 %v1391
    %8416 = vmatpush.msra.mxu0 %v1383
    %8417 = vmatpush.msra.mxu0 %v1375
    %8418 = vmatpush.msra.mxu0 %v1367
    %8419 = vmatpush.msra.mxu0 %v1359
    %8420 = vmatpush.msra.mxu0 %v1351
    %8421 = vmatpush.msra.mxu0 %v1343
    %8422 = vmatpush.msra.mxu0 %v1335
    %8423 = vmatpush.msra.mxu0 %v1327
    %8424 = vmatpush.msra.mxu0 %v1319
    %8425 = vmatpush.msra.mxu0 %v1311
    %8426 = vmatpush.msra.mxu0 %v1303
    %8427 = vmatmul.f32.gmra.mxu0 %v7933
    %v8428 = vpop.f32.mrf.mxu0
    %v8429 = vadd.f32 %v8409, %v8428
    %8430 = vdwg.mxu0
    %8431 = vmatpush.msra.mxu0 %v1168
    %8432 = vmatpush.msra.mxu0 %v1160
    %8433 = vmatpush.msra.mxu0 %v1152
    %8434 = vmatpush.msra.mxu0 %v1144
    %8435 = vmatpush.msra.mxu0 %v1136
    %8436 = vmatpush.msra.mxu0 %v1128
    %8437 = vmatpush.msra.mxu0 %v1120
    %8438 = vmatpush.msra.mxu0 %v1112
    %8439 = vmatpush.msra.mxu0 %v1104
    %8440 = vmatpush.msra.mxu0 %v1096
    %8441 = vmatpush.msra.mxu0 %v1088
    %8442 = vmatpush.msra.mxu0 %v1080
    %8443 = vmatpush.msra.mxu0 %v1072
    %8444 = vmatpush.msra.mxu0 %v1064
    %8445 = vmatpush.msra.mxu0 %v1056
    %8446 = vmatpush.msra.mxu0 %v1048
    %8447 = vmatmul.f32.gmra.mxu0 %v8310
    %v8448 = vpop.f32.mrf.mxu0
    %v8449 = vadd.f32 %v463, %v8448
    %8450 = vdwg.mxu0
    %8451 = vmatpush.msra.mxu0 %v1296
    %8452 = vmatpush.msra.mxu0 %v1288
    %8453 = vmatpush.msra.mxu0 %v1280
    %8454 = vmatpush.msra.mxu0 %v1272
    %8455 = vmatpush.msra.mxu0 %v1264
    %8456 = vmatpush.msra.mxu0 %v1256
    %8457 = vmatpush.msra.mxu0 %v1248
    %8458 = vmatpush.msra.mxu0 %v1240
    %8459 = vmatpush.msra.mxu0 %v1232
    %8460 = vmatpush.msra.mxu0 %v1224
    %8461 = vmatpush.msra.mxu0 %v1216
    %8462 = vmatpush.msra.mxu0 %v1208
    %8463 = vmatpush.msra.mxu0 %v1200
    %8464 = vmatpush.msra.mxu0 %v1192
    %8465 = vmatpush.msra.mxu0 %v1184
    %8466 = vmatpush.msra.mxu0 %v1176
    %8467 = vmatmul.f32.gmra.mxu0 %v7932
    %v8468 = vpop.f32.mrf.mxu0
    %v8469 = vadd.f32 %v8449, %v8468
    %8470 = vdwg.mxu0
    %8471 = vmatpush.msra.mxu0 %v1424
    %8472 = vmatpush.msra.mxu0 %v1416
    %8473 = vmatpush.msra.mxu0 %v1408
    %8474 = vmatpush.msra.mxu0 %v1400
    %8475 = vmatpush.msra.mxu0 %v1392
    %8476 = vmatpush.msra.mxu0 %v1384
    %8477 = vmatpush.msra.mxu0 %v1376
    %8478 = vmatpush.msra.mxu0 %v1368
    %8479 = vmatpush.msra.mxu0 %v1360
    %8480 = vmatpush.msra.mxu0 %v1352
    %8481 = vmatpush.msra.mxu0 %v1344
    %8482 = vmatpush.msra.mxu0 %v1336
    %8483 = vmatpush.msra.mxu0 %v1328
    %8484 = vmatpush.msra.mxu0 %v1320
    %8485 = vmatpush.msra.mxu0 %v1312
    %8486 = vmatpush.msra.mxu0 %v1304
    %8487 = vmatmul.f32.gmra.mxu0 %v7933
    %v8488 = vpop.f32.mrf.mxu0
    %v8489 = vadd.f32 %v8469, %v8488
    %8490 = vdwg.mxu0
    %8491 = vmatpush.msra.mxu0 %v1169
    %8492 = vmatpush.msra.mxu0 %v1161
    %8493 = vmatpush.msra.mxu0 %v1153
    %8494 = vmatpush.msra.mxu0 %v1145
    %8495 = vmatpush.msra.mxu0 %v1137
    %8496 = vmatpush.msra.mxu0 %v1129
    %8497 = vmatpush.msra.mxu0 %v1121
    %8498 = vmatpush.msra.mxu0 %v1113
    %8499 = vmatpush.msra.mxu0 %v1105
    %8500 = vmatpush.msra.mxu0 %v1097
    %8501 = vmatpush.msra.mxu0 %v1089
    %8502 = vmatpush.msra.mxu0 %v1081
    %8503 = vmatpush.msra.mxu0 %v1073
    %8504 = vmatpush.msra.mxu0 %v1065
    %8505 = vmatpush.msra.mxu0 %v1057
    %8506 = vmatpush.msra.mxu0 %v1049
    %8507 = vmatmul.f32.gmra.mxu0 %v8310
    %v8508 = vpop.f32.mrf.mxu0
    %v8509 = vadd.f32 %v464, %v8508
    %8510 = vdwg.mxu0
    %8511 = vmatpush.msra.mxu0 %v1297
    %8512 = vmatpush.msra.mxu0 %v1289
    %8513 = vmatpush.msra.mxu0 %v1281
    %8514 = vmatpush.msra.mxu0 %v1273
    %8515 = vmatpush.msra.mxu0 %v1265
    %8516 = vmatpush.msra.mxu0 %v1257
    %8517 = vmatpush.msra.mxu0 %v1249
    %8518 = vmatpush.msra.mxu0 %v1241
    %8519 = vmatpush.msra.mxu0 %v1233
    %8520 = vmatpush.msra.mxu0 %v1225
    %8521 = vmatpush.msra.mxu0 %v1217
    %8522 = vmatpush.msra.mxu0 %v1209
    %8523 = vmatpush.msra.mxu0 %v1201
    %8524 = vmatpush.msra.mxu0 %v1193
    %8525 = vmatpush.msra.mxu0 %v1185
    %8526 = vmatpush.msra.mxu0 %v1177
    %8527 = vmatmul.f32.gmra.mxu0 %v7932
    %v8528 = vpop.f32.mrf.mxu0
    %v8529 = vadd.f32 %v8509, %v8528
    %8530 = vdwg.mxu0
    %8531 = vmatpush.msra.mxu0 %v1425
    %8532 = vmatpush.msra.mxu0 %v1417
    %8533 = vmatpush.msra.mxu0 %v1409
    %8534 = vmatpush.msra.mxu0 %v1401
    %8535 = vmatpush.msra.mxu0 %v1393
    %8536 = vmatpush.msra.mxu0 %v1385
    %8537 = vmatpush.msra.mxu0 %v1377
    %8538 = vmatpush.msra.mxu0 %v1369
    %8539 = vmatpush.msra.mxu0 %v1361
    %8540 = vmatpush.msra.mxu0 %v1353
    %8541 = vmatpush.msra.mxu0 %v1345
    %8542 = vmatpush.msra.mxu0 %v1337
    %8543 = vmatpush.msra.mxu0 %v1329
    %8544 = vmatpush.msra.mxu0 %v1321
    %8545 = vmatpush.msra.mxu0 %v1313
    %8546 = vmatpush.msra.mxu0 %v1305
    %8547 = vmatmul.f32.gmra.mxu0 %v7933
    %v8548 = vpop.f32.mrf.mxu0
    %v8549 = vadd.f32 %v8529, %v8548
    %8550 = vdwg.mxu0
    %8551 = vmatpush.msra.mxu0 %v1170
    %8552 = vmatpush.msra.mxu0 %v1162
    %8553 = vmatpush.msra.mxu0 %v1154
    %8554 = vmatpush.msra.mxu0 %v1146
    %8555 = vmatpush.msra.mxu0 %v1138
    %8556 = vmatpush.msra.mxu0 %v1130
    %8557 = vmatpush.msra.mxu0 %v1122
    %8558 = vmatpush.msra.mxu0 %v1114
    %8559 = vmatpush.msra.mxu0 %v1106
    %8560 = vmatpush.msra.mxu0 %v1098
    %8561 = vmatpush.msra.mxu0 %v1090
    %8562 = vmatpush.msra.mxu0 %v1082
    %8563 = vmatpush.msra.mxu0 %v1074
    %8564 = vmatpush.msra.mxu0 %v1066
    %8565 = vmatpush.msra.mxu0 %v1058
    %8566 = vmatpush.msra.mxu0 %v1050
    %8567 = vmatmul.f32.gmra.mxu0 %v8310
    %v8568 = vpop.f32.mrf.mxu0
    %v8569 = vadd.f32 %v465, %v8568
    %8570 = vdwg.mxu0
    %8571 = vmatpush.msra.mxu0 %v1298
    %8572 = vmatpush.msra.mxu0 %v1290
    %8573 = vmatpush.msra.mxu0 %v1282
    %8574 = vmatpush.msra.mxu0 %v1274
    %8575 = vmatpush.msra.mxu0 %v1266
    %8576 = vmatpush.msra.mxu0 %v1258
    %8577 = vmatpush.msra.mxu0 %v1250
    %8578 = vmatpush.msra.mxu0 %v1242
    %8579 = vmatpush.msra.mxu0 %v1234
    %8580 = vmatpush.msra.mxu0 %v1226
    %8581 = vmatpush.msra.mxu0 %v1218
    %8582 = vmatpush.msra.mxu0 %v1210
    %8583 = vmatpush.msra.mxu0 %v1202
    %8584 = vmatpush.msra.mxu0 %v1194
    %8585 = vmatpush.msra.mxu0 %v1186
    %8586 = vmatpush.msra.mxu0 %v1178
    %8587 = vmatmul.f32.gmra.mxu0 %v7932
    %v8588 = vpop.f32.mrf.mxu0
    %v8589 = vadd.f32 %v8569, %v8588
    %8590 = vdwg.mxu0
    %8591 = vmatpush.msra.mxu0 %v1426
    %8592 = vmatpush.msra.mxu0 %v1418
    %8593 = vmatpush.msra.mxu0 %v1410
    %8594 = vmatpush.msra.mxu0 %v1402
    %8595 = vmatpush.msra.mxu0 %v1394
    %8596 = vmatpush.msra.mxu0 %v1386
    %8597 = vmatpush.msra.mxu0 %v1378
    %8598 = vmatpush.msra.mxu0 %v1370
    %8599 = vmatpush.msra.mxu0 %v1362
    %8600 = vmatpush.msra.mxu0 %v1354
    %8601 = vmatpush.msra.mxu0 %v1346
    %8602 = vmatpush.msra.mxu0 %v1338
    %8603 = vmatpush.msra.mxu0 %v1330
    %8604 = vmatpush.msra.mxu0 %v1322
    %8605 = vmatpush.msra.mxu0 %v1314
    %8606 = vmatpush.msra.mxu0 %v1306
    %8607 = vmatmul.f32.gmra.mxu0 %v7933
    %v8608 = vpop.f32.mrf.mxu0
    %v8609 = vadd.f32 %v8589, %v8608
    %8610 = vdwg.mxu0
    %8611 = vmatpush.msra.mxu0 %v1171
    %8612 = vmatpush.msra.mxu0 %v1163
    %8613 = vmatpush.msra.mxu0 %v1155
    %8614 = vmatpush.msra.mxu0 %v1147
    %8615 = vmatpush.msra.mxu0 %v1139
    %8616 = vmatpush.msra.mxu0 %v1131
    %8617 = vmatpush.msra.mxu0 %v1123
    %8618 = vmatpush.msra.mxu0 %v1115
    %8619 = vmatpush.msra.mxu0 %v1107
    %8620 = vmatpush.msra.mxu0 %v1099
    %8621 = vmatpush.msra.mxu0 %v1091
    %8622 = vmatpush.msra.mxu0 %v1083
    %8623 = vmatpush.msra.mxu0 %v1075
    %8624 = vmatpush.msra.mxu0 %v1067
    %8625 = vmatpush.msra.mxu0 %v1059
    %8626 = vmatpush.msra.mxu0 %v1051
    %8627 = vmatmul.f32.gmra.mxu0 %v8310
    %v8628 = vpop.f32.mrf.mxu0
    %v8629 = vadd.f32 %v466, %v8628
    %8630 = vdwg.mxu0
    %8631 = vmatpush.msra.mxu0 %v1299
    %8632 = vmatpush.msra.mxu0 %v1291
    %8633 = vmatpush.msra.mxu0 %v1283
    %8634 = vmatpush.msra.mxu0 %v1275
    %8635 = vmatpush.msra.mxu0 %v1267
    %8636 = vmatpush.msra.mxu0 %v1259
    %8637 = vmatpush.msra.mxu0 %v1251
    %8638 = vmatpush.msra.mxu0 %v1243
    %8639 = vmatpush.msra.mxu0 %v1235
    %8640 = vmatpush.msra.mxu0 %v1227
    %8641 = vmatpush.msra.mxu0 %v1219
    %8642 = vmatpush.msra.mxu0 %v1211
    %8643 = vmatpush.msra.mxu0 %v1203
    %8644 = vmatpush.msra.mxu0 %v1195
    %8645 = vmatpush.msra.mxu0 %v1187
    %8646 = vmatpush.msra.mxu0 %v1179
    %8647 = vmatmul.f32.gmra.mxu0 %v7932
    %v8648 = vpop.f32.mrf.mxu0
    %v8649 = vadd.f32 %v8629, %v8648
    %8650 = vdwg.mxu0
    %8651 = vmatpush.msra.mxu0 %v1427
    %8652 = vmatpush.msra.mxu0 %v1419
    %8653 = vmatpush.msra.mxu0 %v1411
    %8654 = vmatpush.msra.mxu0 %v1403
    %8655 = vmatpush.msra.mxu0 %v1395
    %8656 = vmatpush.msra.mxu0 %v1387
    %8657 = vmatpush.msra.mxu0 %v1379
    %8658 = vmatpush.msra.mxu0 %v1371
    %8659 = vmatpush.msra.mxu0 %v1363
    %8660 = vmatpush.msra.mxu0 %v1355
    %8661 = vmatpush.msra.mxu0 %v1347
    %8662 = vmatpush.msra.mxu0 %v1339
    %8663 = vmatpush.msra.mxu0 %v1331
    %8664 = vmatpush.msra.mxu0 %v1323
    %8665 = vmatpush.msra.mxu0 %v1315
    %8666 = vmatpush.msra.mxu0 %v1307
    %8667 = vmatmul.f32.gmra.mxu0 %v7933
    %v8668 = vpop.f32.mrf.mxu0
    %v8669 = vadd.f32 %v8649, %v8668
    %8670 = vdwg.mxu0
    %8671 = vmatpush.msra.mxu0 %v1172
    %8672 = vmatpush.msra.mxu0 %v1164
    %8673 = vmatpush.msra.mxu0 %v1156
    %8674 = vmatpush.msra.mxu0 %v1148
    %8675 = vmatpush.msra.mxu0 %v1140
    %8676 = vmatpush.msra.mxu0 %v1132
    %8677 = vmatpush.msra.mxu0 %v1124
    %8678 = vmatpush.msra.mxu0 %v1116
    %8679 = vmatpush.msra.mxu0 %v1108
    %8680 = vmatpush.msra.mxu0 %v1100
    %8681 = vmatpush.msra.mxu0 %v1092
    %8682 = vmatpush.msra.mxu0 %v1084
    %8683 = vmatpush.msra.mxu0 %v1076
    %8684 = vmatpush.msra.mxu0 %v1068
    %8685 = vmatpush.msra.mxu0 %v1060
    %8686 = vmatpush.msra.mxu0 %v1052
    %8687 = vmatmul.f32.gmra.mxu0 %v8310
    %v8688 = vpop.f32.mrf.mxu0
    %v8689 = vadd.f32 %v467, %v8688
    %8690 = vdwg.mxu0
    %8691 = vmatpush.msra.mxu0 %v1300
    %8692 = vmatpush.msra.mxu0 %v1292
    %8693 = vmatpush.msra.mxu0 %v1284
    %8694 = vmatpush.msra.mxu0 %v1276
    %8695 = vmatpush.msra.mxu0 %v1268
    %8696 = vmatpush.msra.mxu0 %v1260
    %8697 = vmatpush.msra.mxu0 %v1252
    %8698 = vmatpush.msra.mxu0 %v1244
    %8699 = vmatpush.msra.mxu0 %v1236
    %8700 = vmatpush.msra.mxu0 %v1228
    %8701 = vmatpush.msra.mxu0 %v1220
    %8702 = vmatpush.msra.mxu0 %v1212
    %8703 = vmatpush.msra.mxu0 %v1204
    %8704 = vmatpush.msra.mxu0 %v1196
    %8705 = vmatpush.msra.mxu0 %v1188
    %8706 = vmatpush.msra.mxu0 %v1180
    %8707 = vmatmul.f32.gmra.mxu0 %v7932
    %v8708 = vpop.f32.mrf.mxu0
    %v8709 = vadd.f32 %v8689, %v8708
    %8710 = vdwg.mxu0
    %8711 = vmatpush.msra.mxu0 %v1428
    %8712 = vmatpush.msra.mxu0 %v1420
    %8713 = vmatpush.msra.mxu0 %v1412
    %8714 = vmatpush.msra.mxu0 %v1404
    %8715 = vmatpush.msra.mxu0 %v1396
    %8716 = vmatpush.msra.mxu0 %v1388
    %8717 = vmatpush.msra.mxu0 %v1380
    %8718 = vmatpush.msra.mxu0 %v1372
    %8719 = vmatpush.msra.mxu0 %v1364
    %8720 = vmatpush.msra.mxu0 %v1356
    %8721 = vmatpush.msra.mxu0 %v1348
    %8722 = vmatpush.msra.mxu0 %v1340
    %8723 = vmatpush.msra.mxu0 %v1332
    %8724 = vmatpush.msra.mxu0 %v1324
    %8725 = vmatpush.msra.mxu0 %v1316
    %8726 = vmatpush.msra.mxu0 %v1308
    %8727 = vmatmul.f32.gmra.mxu0 %v7933
    %v8728 = vpop.f32.mrf.mxu0
    %v8729 = vadd.f32 %v8709, %v8728
    %8730 = vdwg.mxu0
    %8731 = vmatpush.msra.mxu0 %v1173
    %8732 = vmatpush.msra.mxu0 %v1165
    %8733 = vmatpush.msra.mxu0 %v1157
    %8734 = vmatpush.msra.mxu0 %v1149
    %8735 = vmatpush.msra.mxu0 %v1141
    %8736 = vmatpush.msra.mxu0 %v1133
    %8737 = vmatpush.msra.mxu0 %v1125
    %8738 = vmatpush.msra.mxu0 %v1117
    %8739 = vmatpush.msra.mxu0 %v1109
    %8740 = vmatpush.msra.mxu0 %v1101
    %8741 = vmatpush.msra.mxu0 %v1093
    %8742 = vmatpush.msra.mxu0 %v1085
    %8743 = vmatpush.msra.mxu0 %v1077
    %8744 = vmatpush.msra.mxu0 %v1069
    %8745 = vmatpush.msra.mxu0 %v1061
    %8746 = vmatpush.msra.mxu0 %v1053
    %8747 = vmatmul.f32.gmra.mxu0 %v8310
    %v8748 = vpop.f32.mrf.mxu0
    %v8749 = vadd.f32 %v468, %v8748
    %8750 = vdwg.mxu0
    %8751 = vmatpush.msra.mxu0 %v1301
    %8752 = vmatpush.msra.mxu0 %v1293
    %8753 = vmatpush.msra.mxu0 %v1285
    %8754 = vmatpush.msra.mxu0 %v1277
    %8755 = vmatpush.msra.mxu0 %v1269
    %8756 = vmatpush.msra.mxu0 %v1261
    %8757 = vmatpush.msra.mxu0 %v1253
    %8758 = vmatpush.msra.mxu0 %v1245
    %8759 = vmatpush.msra.mxu0 %v1237
    %8760 = vmatpush.msra.mxu0 %v1229
    %8761 = vmatpush.msra.mxu0 %v1221
    %8762 = vmatpush.msra.mxu0 %v1213
    %8763 = vmatpush.msra.mxu0 %v1205
    %8764 = vmatpush.msra.mxu0 %v1197
    %8765 = vmatpush.msra.mxu0 %v1189
    %8766 = vmatpush.msra.mxu0 %v1181
    %8767 = vmatmul.f32.gmra.mxu0 %v7932
    %v8768 = vpop.f32.mrf.mxu0
    %v8769 = vadd.f32 %v8749, %v8768
    %8770 = vdwg.mxu0
    %8771 = vmatpush.msra.mxu0 %v1429
    %8772 = vmatpush.msra.mxu0 %v1421
    %8773 = vmatpush.msra.mxu0 %v1413
    %8774 = vmatpush.msra.mxu0 %v1405
    %8775 = vmatpush.msra.mxu0 %v1397
    %8776 = vmatpush.msra.mxu0 %v1389
    %8777 = vmatpush.msra.mxu0 %v1381
    %8778 = vmatpush.msra.mxu0 %v1373
    %8779 = vmatpush.msra.mxu0 %v1365
    %8780 = vmatpush.msra.mxu0 %v1357
    %8781 = vmatpush.msra.mxu0 %v1349
    %8782 = vmatpush.msra.mxu0 %v1341
    %8783 = vmatpush.msra.mxu0 %v1333
    %8784 = vmatpush.msra.mxu0 %v1325
    %8785 = vmatpush.msra.mxu0 %v1317
    %8786 = vmatpush.msra.mxu0 %v1309
    %8787 = vmatmul.f32.gmra.mxu0 %v7933
    %v8788 = vpop.f32.mrf.mxu0
    %v8789 = vadd.f32 %v8769, %v8788
    %8790 = vdwg.mxu0
    %v8791 = vxor.u32 %v8369, 2147483648
    %v8792 = vxor.u32 %v8429, 2147483648
    %v8793 = vmul.f32 %v8791, 1.442695
    %v8794 = vpow.pop %v8793
    %v8795 = vmul.f32 %v8792, 1.442695
    %v8796 = vpow.pop %v8795
    %v8797 = vadd.f32 %v8794, 1.0
    %v8798 = vadd.f32 %v8796, 1.0
    %v8799 = vrcp.pop %v8797
    %v8800 = vmul.f32 %v8797, %v8799
    %v8801 = vsub.f32 1.0, %v8800
    %v8802 = vmul.f32 %v8799, %v8801
    %v8803 = vadd.f32 %v8799, %v8802
    %vm8804 = vweird.f32 %v8797
    %vm8805 = vweird.f32 %v8799
    %vm8806 = vmor %vm8804, %vm8805
    %v8807 = vsel %vm8806, %v8799, %v8803
    %v8808 = vand.u32 2147483647, %v8797
    %vm8809 = vcmp.eq.f32.partialorder %v8808, 8.507059e+37
    %v8810 = vand.u32 %v8797, 2147483648
    %v8811 = vor.u32 1.1754944e-38, %v8810
    %v8812 = vsel %vm8809, %v8811, %v8807
    %v8813 = vmul.f32 1.0, %v8812
    %v8814 = vrcp.pop %v8798
    %v8815 = vmul.f32 %v8798, %v8814
    %v8816 = vsub.f32 1.0, %v8815
    %v8817 = vmul.f32 %v8814, %v8816
    %v8818 = vadd.f32 %v8814, %v8817
    %vm8819 = vweird.f32 %v8798
    %vm8820 = vweird.f32 %v8814
    %vm8821 = vmor %vm8819, %vm8820
    %v8822 = vsel %vm8821, %v8814, %v8818
    %v8823 = vand.u32 2147483647, %v8798
    %vm8824 = vcmp.eq.f32.partialorder %v8823, 8.507059e+37
    %v8825 = vand.u32 %v8798, 2147483648
    %v8826 = vor.u32 1.1754944e-38, %v8825
    %v8827 = vsel %vm8824, %v8826, %v8822
    %v8828 = vmul.f32 1.0, %v8827
    %v8829 = vxor.u32 %v8489, 2147483648
    %v8830 = vxor.u32 %v8549, 2147483648
    %v8831 = vmul.f32 %v8829, 1.442695
    %v8832 = vpow.pop %v8831
    %v8833 = vmul.f32 %v8830, 1.442695
    %v8834 = vpow.pop %v8833
    %v8835 = vadd.f32 %v8832, 1.0
    %v8836 = vadd.f32 %v8834, 1.0
    %v8837 = vrcp.pop %v8835
    %v8838 = vmul.f32 %v8835, %v8837
    %v8839 = vsub.f32 1.0, %v8838
    %v8840 = vmul.f32 %v8837, %v8839
    %v8841 = vadd.f32 %v8837, %v8840
    %vm8842 = vweird.f32 %v8835
    %vm8843 = vweird.f32 %v8837
    %vm8844 = vmor %vm8842, %vm8843
    %v8845 = vsel %vm8844, %v8837, %v8841
    %v8846 = vand.u32 2147483647, %v8835
    %vm8847 = vcmp.eq.f32.partialorder %v8846, 8.507059e+37
    %v8848 = vand.u32 %v8835, 2147483648
    %v8849 = vor.u32 1.1754944e-38, %v8848
    %v8850 = vsel %vm8847, %v8849, %v8845
    %v8851 = vmul.f32 1.0, %v8850
    %v8852 = vrcp.pop %v8836
    %v8853 = vmul.f32 %v8836, %v8852
    %v8854 = vsub.f32 1.0, %v8853
    %v8855 = vmul.f32 %v8852, %v8854
    %v8856 = vadd.f32 %v8852, %v8855
    %vm8857 = vweird.f32 %v8836
    %vm8858 = vweird.f32 %v8852
    %vm8859 = vmor %vm8857, %vm8858
    %v8860 = vsel %vm8859, %v8852, %v8856
    %v8861 = vand.u32 2147483647, %v8836
    %vm8862 = vcmp.eq.f32.partialorder %v8861, 8.507059e+37
    %v8863 = vand.u32 %v8836, 2147483648
    %v8864 = vor.u32 1.1754944e-38, %v8863
    %v8865 = vsel %vm8862, %v8864, %v8860
    %v8866 = vmul.f32 1.0, %v8865
    %v8867 = vtanh.pop %v8609
    %v8868 = vtanh.pop %v8669
    %v8869 = vxor.u32 %v8729, 2147483648
    %v8870 = vxor.u32 %v8789, 2147483648
    %v8871 = vmul.f32 %v8869, 1.442695
    %v8872 = vpow.pop %v8871
    %v8873 = vmul.f32 %v8870, 1.442695
    %v8874 = vpow.pop %v8873
    %v8875 = vadd.f32 %v8872, 1.0
    %v8876 = vadd.f32 %v8874, 1.0
    %v8877 = vrcp.pop %v8875
    %v8878 = vmul.f32 %v8875, %v8877
    %v8879 = vsub.f32 1.0, %v8878
    %v8880 = vmul.f32 %v8877, %v8879
    %v8881 = vadd.f32 %v8877, %v8880
    %vm8882 = vweird.f32 %v8875
    %vm8883 = vweird.f32 %v8877
    %vm8884 = vmor %vm8882, %vm8883
    %v8885 = vsel %vm8884, %v8877, %v8881
    %v8886 = vand.u32 2147483647, %v8875
    %vm8887 = vcmp.eq.f32.partialorder %v8886, 8.507059e+37
    %v8888 = vand.u32 %v8875, 2147483648
    %v8889 = vor.u32 1.1754944e-38, %v8888
    %v8890 = vsel %vm8887, %v8889, %v8885
    %v8891 = vmul.f32 1.0, %v8890
    %v8892 = vrcp.pop %v8876
    %v8893 = vmul.f32 %v8876, %v8892
    %v8894 = vsub.f32 1.0, %v8893
    %v8895 = vmul.f32 %v8892, %v8894
    %v8896 = vadd.f32 %v8892, %v8895
    %vm8897 = vweird.f32 %v8876
    %vm8898 = vweird.f32 %v8892
    %vm8899 = vmor %vm8897, %vm8898
    %v8900 = vsel %vm8899, %v8892, %v8896
    %v8901 = vand.u32 2147483647, %v8876
    %vm8902 = vcmp.eq.f32.partialorder %v8901, 8.507059e+37
    %v8903 = vand.u32 %v8876, 2147483648
    %v8904 = vor.u32 1.1754944e-38, %v8903
    %v8905 = vsel %vm8902, %v8904, %v8900
    %v8906 = vmul.f32 1.0, %v8905
    %v8907 = vmul.f32 %v8851, %v7928
    %v8908 = vmul.f32 %v8866, %v7929
    %v8909 = vmul.f32 %v8813, %v8867
    %v8910 = vmul.f32 %v8828, %v8868
    %v8911 = vadd.f32 %v8907, %v8909
    %v8912 = vadd.f32 %v8908, %v8910
    %v8913 = vtanh.pop %v8911
    %v8914 = vtanh.pop %v8912
    %v8915 = vmul.f32 %v8891, %v8913
    %v8916 = vmul.f32 %v8906, %v8914
    %v8917 = vld [vmem:[#allocation15] sm:$0xff]
    %v8918 = vld [vmem:[#allocation15 + $0x8] sm:$0xff]
    %v8919 = vld [vmem:[#allocation15 + $0x10] sm:$0xff]
    %v8920 = vld [vmem:[#allocation15 + $0x18] sm:$0xff]
    %v8921 = vld [vmem:[#allocation15 + $0x20] sm:$0xff]
    %v8922 = vld [vmem:[#allocation15 + $0x28] sm:$0xff]
    %v8923 = vld [vmem:[#allocation15 + $0x30] sm:$0xff]
    %v8924 = vld [vmem:[#allocation15 + $0x38] sm:$0xff]
    %v8925 = vld [vmem:[#allocation15 + $0x40] sm:$0xff]
    %v8926 = vld [vmem:[#allocation15 + $0x48] sm:$0xff]
    %v8927 = vld [vmem:[#allocation15 + $0x50] sm:$0xff]
    %v8928 = vld [vmem:[#allocation15 + $0x58] sm:$0xff]
    %v8929 = vld [vmem:[#allocation15 + $0x60] sm:$0xff]
    %v8930 = vld [vmem:[#allocation15 + $0x68] sm:$0xff]
    %v8931 = vld [vmem:[#allocation15 + $0x70] sm:$0xff]
    %v8932 = vld [vmem:[#allocation15 + $0x78] sm:$0xff]
    %v8933 = vld [vmem:[#allocation15 + $0x80] sm:$0xff]
    %v8934 = vld [vmem:[#allocation15 + $0x88] sm:$0xff]
    %v8935 = vld [vmem:[#allocation15 + $0x90] sm:$0xff]
    %v8936 = vld [vmem:[#allocation15 + $0x98] sm:$0xff]
    %v8937 = vld [vmem:[#allocation15 + $0xa0] sm:$0xff]
    %v8938 = vld [vmem:[#allocation15 + $0xa8] sm:$0xff]
    %v8939 = vld [vmem:[#allocation15 + $0xb0] sm:$0xff]
    %v8940 = vld [vmem:[#allocation15 + $0xb8] sm:$0xff]
    %v8941 = vld [vmem:[#allocation15 + $0xc0] sm:$0xff]
    %v8942 = vld [vmem:[#allocation15 + $0xc8] sm:$0xff]
    %v8943 = vld [vmem:[#allocation15 + $0xd0] sm:$0xff]
    %v8944 = vld [vmem:[#allocation15 + $0xd8] sm:$0xff]
    %v8945 = vld [vmem:[#allocation15 + $0xe0] sm:$0xff]
    %v8946 = vld [vmem:[#allocation15 + $0xe8] sm:$0xff]
    %v8947 = vld [vmem:[#allocation15 + $0xf0] sm:$0xff]
    %v8948 = vld [vmem:[#allocation15 + $0xf8] sm:$0xff]
    %v8949 = vld [vmem:[#allocation17] sm:$0x1]
    %v8951 = vperm.slane %v8949, 0
    %8953 = vmatpush.msra.mxu0 %v8932
    %8954 = vmatpush.msra.mxu0 %v8931
    %8955 = vmatpush.msra.mxu0 %v8930
    %8956 = vmatpush.msra.mxu0 %v8929
    %8957 = vmatpush.msra.mxu0 %v8928
    %8958 = vmatpush.msra.mxu0 %v8927
    %8959 = vmatpush.msra.mxu0 %v8926
    %8960 = vmatpush.msra.mxu0 %v8925
    %8961 = vmatpush.msra.mxu0 %v8924
    %8962 = vmatpush.msra.mxu0 %v8923
    %8963 = vmatpush.msra.mxu0 %v8922
    %8964 = vmatpush.msra.mxu0 %v8921
    %8965 = vmatpush.msra.mxu0 %v8920
    %8966 = vmatpush.msra.mxu0 %v8919
    %8967 = vmatpush.msra.mxu0 %v8918
    %8968 = vmatpush.msra.mxu0 %v8917
    %8969 = vmatmul.f32.gmra.mxu0 %v8915
    %v8970 = vpop.f32.mrf.mxu0
    %v8971 = vadd.f32 %v8951, %v8970
    %8972 = vdwg.mxu0
    %8973 = vmatpush.msra.mxu0 %v8948
    %8974 = vmatpush.msra.mxu0 %v8947
    %8975 = vmatpush.msra.mxu0 %v8946
    %8976 = vmatpush.msra.mxu0 %v8945
    %8977 = vmatpush.msra.mxu0 %v8944
    %8978 = vmatpush.msra.mxu0 %v8943
    %8979 = vmatpush.msra.mxu0 %v8942
    %8980 = vmatpush.msra.mxu0 %v8941
    %8981 = vmatpush.msra.mxu0 %v8940
    %8982 = vmatpush.msra.mxu0 %v8939
    %8983 = vmatpush.msra.mxu0 %v8938
    %8984 = vmatpush.msra.mxu0 %v8937
    %8985 = vmatpush.msra.mxu0 %v8936
    %8986 = vmatpush.msra.mxu0 %v8935
    %8987 = vmatpush.msra.mxu0 %v8934
    %8988 = vmatpush.msra.mxu0 %v8933
    %8989 = vmatmul.f32.gmra.mxu0 %v8916
    %v8990 = vpop.f32.mrf.mxu0
    %v8991 = vadd.f32 %v8971, %v8990
    %8992 = vdwg.mxu0
    %v8993 = vmax.f32 %v8991, 0.0
    %v8994 = vld [vmem:[%s10] sm:$0xff]
    %v8995 = vld [vmem:[%s10 + $0x8] sm:$0xff]
    %v8996 = vld [vmem:[%s10 + $0x10] sm:$0xff]
    %v8997 = vld [vmem:[%s10 + $0x18] sm:$0xff]
    %v8998 = vld [vmem:[%s10 + $0x20] sm:$0xff]
    %v8999 = vld [vmem:[%s10 + $0x28] sm:$0xff]
    %v9000 = vld [vmem:[%s10 + $0x30] sm:$0xff]
    %v9001 = vld [vmem:[%s10 + $0x38] sm:$0xff]
    %v9002 = vld [vmem:[%s10 + $0x40] sm:$0xff]
    %v9003 = vld [vmem:[%s10 + $0x48] sm:$0xff]
    %v9004 = vld [vmem:[%s10 + $0x50] sm:$0xff]
    %v9005 = vld [vmem:[%s10 + $0x58] sm:$0xff]
    %v9006 = vld [vmem:[%s10 + $0x60] sm:$0xff]
    %v9007 = vld [vmem:[%s10 + $0x68] sm:$0xff]
    %v9008 = vld [vmem:[%s10 + $0x70] sm:$0xff]
    %v9009 = vld [vmem:[%s10 + $0x78] sm:$0xff]
    %v9010 = vld [vmem:[#allocation18] sm:$0x1]
    %v9012 = vperm.slane %v9010, 0
    %9014 = vmatpush.msra.mxu0 %v9009
    %9015 = vmatpush.msra.mxu0 %v9008
    %9016 = vmatpush.msra.mxu0 %v9007
    %9017 = vmatpush.msra.mxu0 %v9006
    %9018 = vmatpush.msra.mxu0 %v9005
    %9019 = vmatpush.msra.mxu0 %v9004
    %9020 = vmatpush.msra.mxu0 %v9003
    %9021 = vmatpush.msra.mxu0 %v9002
    %9022 = vmatpush.msra.mxu0 %v9001
    %9023 = vmatpush.msra.mxu0 %v9000
    %9024 = vmatpush.msra.mxu0 %v8999
    %9025 = vmatpush.msra.mxu0 %v8998
    %9026 = vmatpush.msra.mxu0 %v8997
    %9027 = vmatpush.msra.mxu0 %v8996
    %9028 = vmatpush.msra.mxu0 %v8995
    %9029 = vmatpush.msra.mxu0 %v8994
    %9030 = vmatmul.f32.gmra.mxu0 %v8993
    %v9031 = vpop.f32.mrf.mxu0
    %v9032 = vadd.f32 %v9012, %v9031
    %9033 = vdwg.mxu0
    %v9034 = vmax.f32 %v9032, 0.0
    %v9035 = vld [vmem:[%s12] sm:$0xff]
    %v9036 = vld [vmem:[%s12 + $0x8] sm:$0xff]
    %v9037 = vld [vmem:[%s12 + $0x10] sm:$0xff]
    %v9038 = vld [vmem:[%s12 + $0x18] sm:$0xff]
    %v9039 = vld [vmem:[#allocation3] sm:$0x1]
    %v9041 = vperm.slane %v9039, 0
    %vm9043 = vcmask 261120
    %v9045 = vsel %vm9043, %v9034, 0
    %9047 = vmatpush.msra.mxu0 0.0
    %9048 = vmatpush.msra.mxu0 0.0
    %9049 = vmatpush.msra.mxu0 0.0
    %9050 = vmatpush.msra.mxu0 0.0
    %9051 = vmatpush.msra.mxu0 0.0
    %9052 = vmatpush.msra.mxu0 0.0
    %9053 = vmatpush.msra.mxu0 0.0
    %9054 = vmatpush.msra.mxu0 0.0
    %9055 = vmatpush.msra.mxu0 0.0
    %9056 = vmatpush.msra.mxu0 0.0
    %9057 = vmatpush.msra.mxu0 0.0
    %9058 = vmatpush.msra.mxu0 0.0
    %9059 = vmatpush.msra.mxu0 %v9038
    %9060 = vmatpush.msra.mxu0 %v9037
    %9061 = vmatpush.msra.mxu0 %v9036
    %9062 = vmatpush.msra.mxu0 %v9035
    %9063 = vmatmul.f32.gmra.mxu0 %v9045
    %v9064 = vpop.f32.mrf.mxu0
    %v9065 = vadd.f32 %v9041, %v9064
    %9066 = vdwg.mxu0
    %vm9067 = vcmask 7168
    %9068 = vst.msk [vmem:[%s14] sm:$0xff] %vm9067, %v9065
    // Predicated region
    $region98: #{tpu_custom_call.1} parent=1 // pred_check
      _
    $region99: #{tpu_custom_call.1} parent=1 // pred_check_branch
      %9070 = sbr.rel (0) target = $region101
    $region100: #{tpu_custom_call.1} parent=1 // pred_region
      _
    $region101: #{tpu_custom_call.1} parent=1 // pred_fallthru
      _
    // Predicated region
    $region102: #{tpu_custom_call.1} parent=1 // pred_check
      _
    $region103: #{tpu_custom_call.1} parent=1 // pred_check_branch
      %9072 = sbr.rel (0) target = $region105
    $region104: #{tpu_custom_call.1} parent=1 // pred_region
      _
    $region105: #{tpu_custom_call.1} parent=1 // pred_fallthru
      _
    %9073 = vsyncpa [#allocation5], 1
    %9074 = vsyncpa [#allocation7], 1
    %9075 = vsyncpa [#allocation10], 1
    %9076 = vsyncpa [#allocation13], 1
    %9077 = vsyncpa [#allocation16], 1
    %9078 = vsyncpa [#allocation19], 1

</llo_original>
